<compile_context>
chip_gen: v7x
topology: tpu7x:2x2x1
jax: 0.10.0
libtpu: 0.0.40
codegen_flags: <defaults>
</compile_context>

<pallas_src>
import functools
import math

import jax
import jax.numpy as jnp
from jax.experimental import pallas as pl
from jax.experimental.pallas import tpu as pltpu

BN_EPS = 1e-5
LANE = 128

_VMEM_FULL = pl.BlockSpec(memory_space=pltpu.MemorySpace.VMEM)


def _params(sem, est_bytes):
    """CompilerParams with an explicit, generation-safe VMEM limit."""
    return pltpu.CompilerParams(
        dimension_semantics=sem,
        vmem_limit_bytes=int(min(30 << 20, max(2 * est_bytes, 16 << 20))),
    )


def _subsample2(a):
    """a[0::2, 0::2, :] for a 3-D value with even leading dims, built from
    static slices + concatenate (avoids strided-slice lowering on sublanes)."""
    h, w, _ = a.shape
    a = jnp.concatenate([a[i:i + 1] for i in range(0, h, 2)], axis=0)
    a = jnp.concatenate([a[:, j:j + 1] for j in range(0, w, 2)], axis=1)
    return a


# --------------------------------------------------------------------------
# Kernel 1: tiled matmul + folded BN/bias shift (+ ReLU).  bf16 MXU, f32 acc.
# Used for the 7x7 intro conv on im2col patches.  Output columns are padded
# to a multiple of 128 in fold_params so the store is lane-dense.
# --------------------------------------------------------------------------
def _mm_kernel(a_ref, w_ref, s_ref, o_ref, *, relu):
    out = jnp.dot(a_ref[...], w_ref[...], preferred_element_type=jnp.float32)
    out = out + s_ref[...]
    if relu:
        out = jnp.maximum(out, 0.0)
    o_ref[...] = out.astype(o_ref.dtype)


def _choose_tm(m, k, ncols, budget=6 << 20):
    if m <= 16 or m % 8:
        return m
    per_row = 2 * (k + ncols) * 2 + ncols * 4     # double-buffered bf16 in/out + f32 acc
    tm = min(m, 2048)
    while tm > 8 and tm * per_row > budget:
        tm //= 2
    if tm >= m:
        tm = m // 2                               # >= 2 tiles so v7x megacore gets work
    tm = max(8, (tm // 8) * 8)
    while m % tm:
        tm -= 8
    return max(tm, 8)


def matmul_epilogue(a, w, shift, relu, out_dtype=jnp.bfloat16):
    m, k = a.shape
    ncols = w.shape[1]
    tm = _choose_tm(m, k, ncols)
    est = tm * (k + 2 * ncols) * 2 * 2 + k * ncols * 2
    return pl.pallas_call(
        functools.partial(_mm_kernel, relu=relu),
        out_shape=jax.ShapeDtypeStruct((m, ncols), out_dtype),
        grid=(pl.cdiv(m, tm),),
        in_specs=[
            pl.BlockSpec((tm, k), lambda i: (i, 0)),
            pl.BlockSpec((k, ncols), lambda i: (0, 0)),
            pl.BlockSpec((1, ncols), lambda i: (0, 0)),
        ],
        out_specs=pl.BlockSpec((tm, ncols), lambda i: (i, 0)),
        compiler_params=_params(("parallel",), est),
    )(a, w, shift)


# --------------------------------------------------------------------------
# Kernel 2: fused MaxPool(3,2,1) + 3x3/s1/p1 conv (+bias), one call per image.
# Padded maps live in VMEM scratch; the conv is a single K=9*C MXU dot.
# --------------------------------------------------------------------------
def _intro_tail_kernel(x_ref, w9_ref, s_ref, o_ref, ppad_ref, cpad_ref, *, h, w):
    c = x_ref.shape[-1]
    oh, ow = h // 2, w // 2
    x = x_ref[...].reshape(h, w, c)

    # MaxPool 3x3/s2/p1: -inf padded map, stride-1 3x3 max, keep even rows/cols.
    ppad_ref[...] = jnp.full(ppad_ref.shape, -jnp.inf, ppad_ref.dtype)
    ppad_ref[pl.ds(1, h), pl.ds(1, w), :] = x
    m = None
    for i in range(3):
        for j in range(3):
            t = ppad_ref[pl.ds(i, h), pl.ds(j, w), :]
            m = t if m is None else jnp.maximum(m, t)
    pooled = _subsample2(m)                                     # (oh, ow, c) bf16

    # 3x3 conv, stride 1, pad 1 (+bias): zero-padded map, single K=9c dot.
    cpad_ref[...] = jnp.zeros(cpad_ref.shape, cpad_ref.dtype)
    cpad_ref[pl.ds(1, oh), pl.ds(1, ow), :] = pooled
    taps = [cpad_ref[pl.ds(i, oh), pl.ds(j, ow), :].reshape(oh * ow, c)
            for i in range(3) for j in range(3)]
    patches = jnp.concatenate(taps, axis=1)                     # (oh*ow, 9c)
    out = jnp.dot(patches, w9_ref[...], preferred_element_type=jnp.float32)
    o_ref[...] = (out + s_ref[...]).astype(o_ref.dtype)


def intro_pool_conv(x, w9, shift, h, w):
    assert h % 2 == 0 and w % 2 == 0
    n, hw, c = x.shape
    oh, ow = h // 2, w // 2
    cout = w9.shape[1]
    est = (hw * c + oh * ow * cout) * 4 + w9.size * 2 + (h + 2) * (w + 2) * c * 4
    return pl.pallas_call(
        functools.partial(_intro_tail_kernel, h=h, w=w),
        out_shape=jax.ShapeDtypeStruct((n, oh * ow, cout), jnp.bfloat16),
        grid=(n,),
        in_specs=[
            pl.BlockSpec((None, hw, c), lambda i: (i, 0, 0)),
            pl.BlockSpec(w9.shape, lambda i: (0, 0)),
            pl.BlockSpec(shift.shape, lambda i: (0, 0)),
        ],
        out_specs=pl.BlockSpec((None, oh * ow, cout), lambda i: (i, 0, 0)),
        scratch_shapes=[
            pltpu.VMEM((h + 2, w + 2, c), jnp.bfloat16),
            pltpu.VMEM((oh + 2, ow + 2, c), jnp.bfloat16),
        ],
        compiler_params=_params(("parallel",), est),
    )(x, w9, shift)


# --------------------------------------------------------------------------
# Kernel 3: one fused pallas_call per (stride-1) bottleneck and image:
#   relu(x@c1w+s1) -> 3x3 conv (single K=576 dot) + relu -> @c3w + s3
#   [-> relu (b2 only)] -> + (x@idw + ids) -> relu.
# Only x and the block output cross HBM.
# TODO(synk): for large images this should be row-strip tiled instead of
# whole-image-per-grid-step (VMEM headroom on v7x); fine at these shapes.
# --------------------------------------------------------------------------
def _block_kernel(x_ref, c1w_ref, c1s_ref, idw_ref, ids_ref,
                  w9_ref, c2s_ref, c3w_ref, c3s_ref, o_ref, cpad_ref,
                  *, h, w, cmid, inner_relu):
    hw = h * w
    x = x_ref[...]                                              # (hw, cin) bf16
    y1 = jnp.dot(x, c1w_ref[...], preferred_element_type=jnp.float32) + c1s_ref[...]
    y1 = jnp.maximum(y1, 0.0)
    skip = jnp.dot(x, idw_ref[...], preferred_element_type=jnp.float32) + ids_ref[...]

    cpad_ref[...] = jnp.zeros(cpad_ref.shape, cpad_ref.dtype)
    cpad_ref[pl.ds(1, h), pl.ds(1, w), :] = y1.reshape(h, w, cmid).astype(cpad_ref.dtype)
    taps = [cpad_ref[pl.ds(i, h), pl.ds(j, w), :].reshape(hw, cmid)
            for i in range(3) for j in range(3)]
    patches = jnp.concatenate(taps, axis=1)                     # (hw, 9*cmid) bf16
    y2 = jnp.dot(patches, w9_ref[...], preferred_element_type=jnp.float32) + c2s_ref[...]
    y2 = jnp.maximum(y2, 0.0).astype(jnp.bfloat16)

    z = jnp.dot(y2, c3w_ref[...], preferred_element_type=jnp.float32) + c3s_ref[...]
    if inner_relu:                                              # bottleneck2: ReLU before the add
        z = jnp.maximum(z, 0.0)
    o_ref[...] = jnp.maximum(z + skip, 0.0).astype(o_ref.dtype)


_BLOCK_W_NAMES = ("c1w", "c1s", "idw", "ids", "w9", "c2s", "c3w", "c3s")


def _block_weight_specs(bw):
    specs, args = [], []
    for name in _BLOCK_W_NAMES:
        arr = bw[name]
        specs.append(pl.BlockSpec(arr.shape, lambda i: (0, 0)))
        args.append(arr)
    return specs, args


def bottleneck_block(x, bw, h, w, inner_relu):
    n, hw, cin = x.shape
    cmid = bw["c2s"].shape[1]
    cout = bw["c3w"].shape[1]
    wspecs, wargs = _block_weight_specs(bw)
    est = (hw * (cin + cout) * 2) * 2 + sum(a.size * 2 for a in wargs) \
        + (h + 2) * (w + 2) * cmid * 2 + hw * cout * 4
    return pl.pallas_call(
        functools.partial(_block_kernel, h=h, w=w, cmid=cmid, inner_relu=inner_relu),
        out_shape=jax.ShapeDtypeStruct((n, hw, cout), jnp.bfloat16),
        grid=(n,),
        in_specs=[pl.BlockSpec((None, hw, cin), lambda i: (i, 0, 0))] + wspecs,
        out_specs=pl.BlockSpec((None, hw, cout), lambda i: (i, 0, 0)),
        scratch_shapes=[pltpu.VMEM((h + 2, w + 2, cmid), jnp.bfloat16)],
        compiler_params=_params(("parallel",), est),
    )(x, *wargs)


# --------------------------------------------------------------------------
# Kernel 3b: bottleneck3 fused kernel: c1 + 3x3 + c3, in-VMEM MaxPool(3,2,1),
# stride-2 identity 1x1 projection, residual add + ReLU.  One call per image.
# --------------------------------------------------------------------------
def _block3_kernel(x_ref, c1w_ref, c1s_ref, idw_ref, ids_ref,
                   w9_ref, c2s_ref, c3w_ref, c3s_ref, o_ref, cpad_ref, ppad_ref,
                   *, h, w, cmid):
    hw = h * w
    oh, ow = h // 2, w // 2
    cin = x_ref.shape[-1]
    cout = c3w_ref.shape[-1]
    x = x_ref[...]                                              # (hw, cin) bf16

    y1 = jnp.dot(x, c1w_ref[...], preferred_element_type=jnp.float32) + c1s_ref[...]
    y1 = jnp.maximum(y1, 0.0)

    cpad_ref[...] = jnp.zeros(cpad_ref.shape, cpad_ref.dtype)
    cpad_ref[pl.ds(1, h), pl.ds(1, w), :] = y1.reshape(h, w, cmid).astype(cpad_ref.dtype)
    taps = [cpad_ref[pl.ds(i, h), pl.ds(j, w), :].reshape(hw, cmid)
            for i in range(3) for j in range(3)]
    patches = jnp.concatenate(taps, axis=1)
    y2 = jnp.dot(patches, w9_ref[...], preferred_element_type=jnp.float32) + c2s_ref[...]
    y2 = jnp.maximum(y2, 0.0).astype(jnp.bfloat16)

    z = jnp.dot(y2, c3w_ref[...], preferred_element_type=jnp.float32) + c3s_ref[...]

    # MaxPool 3x3/s2/p1 on z (no ReLU before the pool in the reference).
    ppad_ref[...] = jnp.full(ppad_ref.shape, -jnp.inf, ppad_ref.dtype)
    ppad_ref[pl.ds(1, h), pl.ds(1, w), :] = z.reshape(h, w, cout)
    m = None
    for i in range(3):
        for j in range(3):
            t = ppad_ref[pl.ds(i, h), pl.ds(j, w), :]
            m = t if m is None else jnp.maximum(m, t)
    pooled = _subsample2(m).reshape(oh * ow, cout)

    # stride-2 1x1 identity projection of the block input (top-left sampling).
    xs = _subsample2(x.reshape(h, w, cin)).reshape(oh * ow, cin)
    skip = jnp.dot(xs, idw_ref[...], preferred_element_type=jnp.float32) + ids_ref[...]

    o_ref[...] = jnp.maximum(pooled + skip, 0.0).astype(o_ref.dtype)


def bottleneck3_block(x, bw, h, w):
    assert h % 2 == 0 and w % 2 == 0
    n, hw, cin = x.shape
    oh, ow = h // 2, w // 2
    cmid = bw["c2s"].shape[1]
    cout = bw["c3w"].shape[1]
    wspecs, wargs = _block_weight_specs(bw)
    est = (hw * cin * 2 + oh * ow * cout * 2) * 2 + sum(a.size * 2 for a in wargs) \
        + (h + 2) * (w + 2) * (cmid * 2 + cout * 4) + hw * cout * 4
    return pl.pallas_call(
        functools.partial(_block3_kernel, h=h, w=w, cmid=cmid),
        out_shape=jax.ShapeDtypeStruct((n, oh * ow, cout), jnp.bfloat16),
        grid=(n,),
        in_specs=[pl.BlockSpec((None, hw, cin), lambda i: (i, 0, 0))] + wspecs,
        out_specs=pl.BlockSpec((None, oh * ow, cout), lambda i: (i, 0, 0)),
        scratch_shapes=[
            pltpu.VMEM((h + 2, w + 2, cmid), jnp.bfloat16),
            pltpu.VMEM((h + 2, w + 2, cout), jnp.float32),
        ],
        compiler_params=_params(("parallel",), est),
    )(x, *wargs)


# --------------------------------------------------------------------------
# Kernel 4: fused AdaptiveAvgPool((1,1)) + Linear (FC columns padded to 128).
# --------------------------------------------------------------------------
def _head_kernel(x_ref, w_ref, b_ref, o_ref):
    pooled = jnp.mean(x_ref[...].astype(jnp.float32), axis=1)          # (n, 512)
    logits = jnp.dot(pooled.astype(jnp.bfloat16), w_ref[...],
                     preferred_element_type=jnp.float32) + b_ref[...]
    o_ref[...] = logits


def head(x, fc_w, fc_b):
    n = x.shape[0]
    est = x.size * 2 + fc_w.size * 2 + n * fc_w.shape[1] * 4
    return pl.pallas_call(
        _head_kernel,
        out_shape=jax.ShapeDtypeStruct((n, fc_w.shape[1]), jnp.float32),
        in_specs=[_VMEM_FULL, _VMEM_FULL, _VMEM_FULL],
        out_specs=_VMEM_FULL,
        compiler_params=_params(None, est),
    )(x, fc_w, fc_b)


# ----------------------------- glue helpers -----------------------------
def _im2col(x_nhwc, kh, kw, stride, pad):
    n, h, w, c = x_nhwc.shape
    xp = jnp.pad(x_nhwc, ((0, 0), (pad, pad), (pad, pad), (0, 0)))
    oh = (h + 2 * pad - kh) // stride + 1
    ow = (w + 2 * pad - kw) // stride + 1
    taps = [xp[:, i:i + stride * oh:stride, j:j + stride * ow:stride, :]
            for i in range(kh) for j in range(kw)]
    patches = jnp.concatenate(taps, axis=-1).reshape(n * oh * ow, kh * kw * c)
    return patches, oh, ow


# ----------------------------- parameters -----------------------------
def _conv_init(key, cout, cin, kh, kw, bias=True):
    kw_, kb_ = jax.random.split(key)
    bound = 1.0 / math.sqrt(cin * kh * kw)
    p = {"w": jax.random.uniform(kw_, (cout, cin, kh, kw), jnp.float32, -bound, bound)}
    if bias:
        p["b"] = jax.random.uniform(kb_, (cout,), jnp.float32, -bound, bound)
    return p


def _bn_init(key, c):
    k1, k2, k3, k4 = jax.random.split(key, 4)
    return {
        "gamma": 1.0 + 0.1 * jax.random.normal(k1, (c,), jnp.float32),
        "beta": 0.1 * jax.random.normal(k2, (c,), jnp.float32),
        "mean": 0.1 * jax.random.normal(k3, (c,), jnp.float32),
        "var": jax.random.uniform(k4, (c,), jnp.float32, 0.5, 1.5),
    }


def init_params(key, num_classes=100):
    keys = jax.random.split(key, 32)
    it = iter(keys)
    p = {}
    p["intro_c1"] = _conv_init(next(it), 64, 3, 7, 7)
    p["intro_bn1"] = _bn_init(next(it), 64)
    p["intro_c2"] = _conv_init(next(it), 64, 64, 3, 3)

    p["b1_c1"] = _conv_init(next(it), 64, 64, 1, 1)
    p["b1_bn1"] = _bn_init(next(it), 64)
    p["b1_c2"] = _conv_init(next(it), 64, 64, 3, 3)
    p["b1_bn2"] = _bn_init(next(it), 64)
    p["b1_c3"] = _conv_init(next(it), 128, 64, 1, 1)
    p["b1_bn3"] = _bn_init(next(it), 128)
    p["id1"] = _conv_init(next(it), 128, 64, 1, 1, bias=False)

    p["b2_c1"] = _conv_init(next(it), 64, 128, 1, 1)
    p["b2_bn1"] = _bn_init(next(it), 64)
    p["b2_c2"] = _conv_init(next(it), 64, 64, 3, 3)
    p["b2_bn2"] = _bn_init(next(it), 64)
    p["b2_c3"] = _conv_init(next(it), 256, 64, 1, 1)
    p["b2_bn3"] = _bn_init(next(it), 256)
    p["id2"] = _conv_init(next(it), 256, 128, 1, 1, bias=False)

    p["b3_c1"] = _conv_init(next(it), 64, 256, 1, 1)
    p["b3_bn1"] = _bn_init(next(it), 64)
    p["b3_c2"] = _conv_init(next(it), 64, 64, 3, 3)
    p["b3_bn2"] = _bn_init(next(it), 64)
    p["b3_c3"] = _conv_init(next(it), 512, 64, 1, 1)
    p["b3_bn3"] = _bn_init(next(it), 512)
    p["id3"] = _conv_init(next(it), 512, 256, 1, 1, bias=False)

    kfc_w, kfc_b = jax.random.split(next(it))
    bound = 1.0 / math.sqrt(512)
    p["fc_w"] = jax.random.uniform(kfc_w, (num_classes, 512), jnp.float32, -bound, bound)
    p["fc_b"] = jax.random.uniform(kfc_b, (num_classes,), jnp.float32, -bound, bound)
    return p


# -------------------- BN/bias folding (done once, outside jit) --------------------
def _fold_bn(bn, bias, cout):
    if bn is None:
        scale = jnp.ones((cout,), jnp.float32)
        shift = jnp.zeros((cout,), jnp.float32)
    else:
        scale = bn["gamma"] / jnp.sqrt(bn["var"] + BN_EPS)
        shift = bn["beta"] - bn["mean"] * scale
    if bias is not None:
        shift = shift + bias * scale
    return scale, shift


def _fold_matmul(conv, bn, k_pad=None, n_pad=None):
    """Conv (+BN/bias) as a (KH*KW*Cin, Cout) bf16 matmul weight + (1,Cout) f32
    shift.  k_pad zero-extends input channels; n_pad zero-extends the output
    columns so every Pallas store stays lane-dense (the zero columns are
    consumed as zero rows by the next layer's weight)."""
    w = conv["w"]                                        # (Cout, Cin, KH, KW)
    cout, cin, kh, kw = w.shape
    scale, shift = _fold_bn(bn, conv.get("b"), cout)
    wt = jnp.transpose(w, (2, 3, 1, 0))                  # (KH, KW, Cin, Cout)
    if k_pad is not None and k_pad > cin:
        wt = jnp.pad(wt, ((0, 0), (0, 0), (0, k_pad - cin), (0, 0)))
        cin = k_pad
    w2 = wt.reshape(kh * kw * cin, cout) * scale[None, :]
    if n_pad is not None and n_pad > cout:
        w2 = jnp.pad(w2, ((0, 0), (0, n_pad - cout)))
        shift = jnp.pad(shift, (0, n_pad - cout))
    return w2.astype(jnp.bfloat16), shift.reshape(1, -1).astype(jnp.float32)


def fold_params(p, num_classes=100):
    prep = {}
    # intro conv7x7 + BN (ReLU in-kernel); 64 output cols padded to 128 (lane dense)
    prep["intro1_w"], prep["intro1_s"] = _fold_matmul(p["intro_c1"], p["intro_bn1"], n_pad=LANE)
    # intro conv3x3 (+bias); 128 padded input channels (zero rows), 64->128 out cols
    prep["intro2_w9"], prep["intro2_s"] = _fold_matmul(p["intro_c2"], None, k_pad=LANE, n_pad=LANE)

    def block(c1, bn1, c2, bn2, c3, bn3, idc, k_pad=None):
        b = {}
        b["c1w"], b["c1s"] = _fold_matmul(c1, bn1, k_pad=k_pad)
        b["idw"], b["ids"] = _fold_matmul(idc, None, k_pad=k_pad)
        b["w9"], b["c2s"] = _fold_matmul(c2, bn2)        # (576, 64) single-dot conv weight
        b["c3w"], b["c3s"] = _fold_matmul(c3, bn3)
        return b

    prep["b1"] = block(p["b1_c1"], p["b1_bn1"], p["b1_c2"], p["b1_bn2"],
                       p["b1_c3"], p["b1_bn3"], p["id1"], k_pad=LANE)
    prep["b2"] = block(p["b2_c1"], p["b2_bn1"], p["b2_c2"], p["b2_bn2"],
                       p["b2_c3"], p["b2_bn3"], p["id2"])
    prep["b3"] = block(p["b3_c1"], p["b3_bn1"], p["b3_c2"], p["b3_bn2"],
                       p["b3_c3"], p["b3_bn3"], p["id3"])

    npad = (-num_classes) % LANE
    prep["fc_w"] = jnp.pad(p["fc_w"].T, ((0, 0), (0, npad))).astype(jnp.bfloat16)
    prep["fc_b"] = jnp.pad(p["fc_b"], (0, npad)).reshape(1, -1).astype(jnp.float32)
    return prep


# ------------------------------- forward -------------------------------
def skipnet_forward(x_nchw, prep, num_classes=100):
    x = jnp.transpose(x_nchw, (0, 2, 3, 1)).astype(jnp.bfloat16)   # NCHW -> NHWC bf16
    n = x.shape[0]

    # introconv: conv7x7/s2/p3 + BN + ReLU (im2col matmul, lane-dense 128 cols)
    patches, oh, ow = _im2col(x, 7, 7, 2, 3)
    y = matmul_epilogue(patches, prep["intro1_w"], prep["intro1_s"], relu=True)
    y = y.reshape(n, oh * ow, y.shape[-1])

    # introconv tail: fused MaxPool(3,2,1) + conv3x3 (+bias), per image
    x = intro_pool_conv(y, prep["intro2_w9"], prep["intro2_s"], oh, ow)
    h, w = oh // 2, ow // 2

    # fused bottlenecks (one pallas_call each; residual add + ReLU in-kernel)
    x = bottleneck_block(x, prep["b1"], h, w, inner_relu=False)    # (n, hw, 128)
    x = bottleneck_block(x, prep["b2"], h, w, inner_relu=True)     # (n, hw, 256)
    x = bottleneck3_block(x, prep["b3"], h, w)                     # (n, hw/4, 512)

    # fused AdaptiveAvgPool((1,1)) + Linear(512, num_classes)
    logits = head(x, prep["fc_w"], prep["fc_b"])                   # (n, 128) f32
    return logits[:, :num_classes]


if __name__ == "__main__":
    key = jax.random.PRNGKey(0)
    kp, kx = jax.random.split(key)
    params = init_params(kp, num_classes=100)
    prep = fold_params(params, num_classes=100)     # BN/bias folded once, bf16 weights
    x = jax.random.normal(kx, (2, 3, 16, 16), jnp.float32)   # NCHW, like PyTorch

    fwd = jax.jit(functools.partial(skipnet_forward, num_classes=100))
    out = jax.block_until_ready(fwd(x, prep))

    assert out.shape == (2, 100), out.shape
    assert bool(jnp.all(jnp.isfinite(out)))
    print("KERNEL_OK")
</pallas_src>

<mosaic_0001>
module attributes {stable_mosaic.version = 11 : i64} {
  func.func @_mm_kernel(%arg0: i32, %arg1: memref<64x147xbf16, #tpu.memory_space<vmem>>, %arg2: memref<147x128xbf16, #tpu.memory_space<vmem>>, %arg3: memref<1x128xf32, #tpu.memory_space<vmem>>, %arg4: memref<64x128xbf16, #tpu.memory_space<vmem>>) attributes {dimension_semantics = [#tpu.dimension_semantics<parallel>], iteration_bounds = array<i64: 2>, scalar_prefetch = 0 : i64, scratch_operands = 0 : i64, tpu.core_type = #tpu.core_type<tc>, window_params = [{transform_indices = @transform_0, window_bounds = array<i64: 64, 147>}, {pipeline_mode = #tpu.pipeline_mode<synchronous>, transform_indices = @transform_1, window_bounds = array<i64: 147, 128>}, {pipeline_mode = #tpu.pipeline_mode<synchronous>, transform_indices = @transform_2, window_bounds = array<i64: 1, 128>}, {transform_indices = @transform_3, window_bounds = array<i64: 64, 128>}]} {
    %c0 = arith.constant 0 : index
    %c0_0 = arith.constant 0 : index
    %0 = vector.load %arg1[%c0, %c0_0] : memref<64x147xbf16, #tpu.memory_space<vmem>>, vector<64x147xbf16>
    %c0_1 = arith.constant 0 : index
    %c0_2 = arith.constant 0 : index
    %1 = vector.load %arg2[%c0_1, %c0_2] : memref<147x128xbf16, #tpu.memory_space<vmem>>, vector<147x128xbf16>
    %cst = arith.constant dense<0.000000e+00> : vector<64x128xf32>
    %2 = tpu.matmul %0, %1, %cst {dimension_numbers = #tpu.dot_dimension_numbers<[1], [0], [0], [1], [0, 0, 1, 1], [], []>} : vector<64x147xbf16>, vector<147x128xbf16>, vector<64x128xf32> -> vector<64x128xf32>
    %c0_3 = arith.constant 0 : index
    %c0_4 = arith.constant 0 : index
    %3 = vector.load %arg3[%c0_3, %c0_4] : memref<1x128xf32, #tpu.memory_space<vmem>>, vector<1x128xf32>
    %4 = vector.broadcast %3 : vector<1x128xf32> to vector<64x128xf32>
    %5 = arith.addf %2, %4 : vector<64x128xf32>
    %cst_5 = arith.constant 0.000000e+00 : f32
    %6 = vector.broadcast %cst_5 : f32 to vector<64x128xf32>
    %7 = arith.maximumf %5, %6 : vector<64x128xf32>
    %8 = arith.truncf %7 : vector<64x128xf32> to vector<64x128xbf16>
    %c0_6 = arith.constant 0 : index
    %c0_7 = arith.constant 0 : index
    %9 = vector.load %arg4[%c0_6, %c0_7] : memref<64x128xbf16, #tpu.memory_space<vmem>>, vector<64x128xbf16>
    tpu.vector_store %arg4[%c0_6, %c0_7], %8 {strides = array<i32>} : memref<64x128xbf16, #tpu.memory_space<vmem>>, vector<64x128xbf16>,
    return
  }
  func.func @transform_0(%arg0: i32) -> (i32, i32) {
    %c0_i32 = arith.constant 0 : i32
    %c0_i32_0 = arith.constant 0 : i32
    return %arg0, %c0_i32 : i32, i32
  }
  func.func @transform_1(%arg0: i32) -> (i32, i32) {
    %c0_i32 = arith.constant 0 : i32
    %c0_i32_0 = arith.constant 0 : i32
    %c0_i32_1 = arith.constant 0 : i32
    return %c0_i32, %c0_i32_0 : i32, i32
  }
  func.func @transform_2(%arg0: i32) -> (i32, i32) {
    %c0_i32 = arith.constant 0 : i32
    %c0_i32_0 = arith.constant 0 : i32
    %c0_i32_1 = arith.constant 0 : i32
    return %c0_i32, %c0_i32_0 : i32, i32
  }
  func.func @transform_3(%arg0: i32) -> (i32, i32) {
    %c0_i32 = arith.constant 0 : i32
    %c0_i32_0 = arith.constant 0 : i32
    return %arg0, %c0_i32 : i32, i32
  }
}

module attributes {stable_mosaic.version = 11 : i64} {
  func.func @_intro_tail_kernel(%arg0: i32, %arg1: memref<1x64x128xbf16, #tpu.memory_space<vmem>>, %arg2: memref<1152x128xbf16, #tpu.memory_space<vmem>>, %arg3: memref<1x128xf32, #tpu.memory_space<vmem>>, %arg4: memref<1x16x128xbf16, #tpu.memory_space<vmem>>, %arg5: memref<10x10x128xbf16, #tpu.memory_space<vmem>>, %arg6: memref<6x6x128xbf16, #tpu.memory_space<vmem>>) attributes {dimension_semantics = [#tpu.dimension_semantics<parallel>], iteration_bounds = array<i64: 2>, scalar_prefetch = 0 : i64, scratch_operands = 2 : i64, tpu.core_type = #tpu.core_type<tc>, window_params = [{transform_indices = @transform_0, window_bounds = array<i64: 1, 64, 128>}, {pipeline_mode = #tpu.pipeline_mode<synchronous>, transform_indices = @transform_1, window_bounds = array<i64: 1152, 128>}, {pipeline_mode = #tpu.pipeline_mode<synchronous>, transform_indices = @transform_2, window_bounds = array<i64: 1, 128>}, {transform_indices = @transform_3, window_bounds = array<i64: 1, 16, 128>}]} {
    %c0 = arith.constant 0 : index
    %c0_0 = arith.constant 0 : index
    %c0_1 = arith.constant 0 : index
    %0 = vector.load %arg1[%c0, %c0_0, %c0_1] : memref<1x64x128xbf16, #tpu.memory_space<vmem>>, vector<1x64x128xbf16>
    %1 = vector.shape_cast %0 : vector<1x64x128xbf16> to vector<64x128xbf16>
    %2 = vector.shape_cast %1 : vector<64x128xbf16> to vector<8x8x128xbf16>
    %cst = arith.constant 0xFF80 : bf16
    %3 = vector.broadcast %cst : bf16 to vector<10x10x128xbf16>
    %c0_2 = arith.constant 0 : index
    %c0_3 = arith.constant 0 : index
    %c0_4 = arith.constant 0 : index
    %4 = vector.load %arg5[%c0_2, %c0_3, %c0_4] : memref<10x10x128xbf16, #tpu.memory_space<vmem>>, vector<10x10x128xbf16>
    tpu.vector_store %arg5[%c0_2, %c0_3, %c0_4], %3 {strides = array<i32>} : memref<10x10x128xbf16, #tpu.memory_space<vmem>>, vector<10x10x128xbf16>,
    %c1 = arith.constant 1 : index
    %c1_5 = arith.constant 1 : index
    %c0_6 = arith.constant 0 : index
    %5 = vector.load %arg5[%c1, %c1_5, %c0_6] : memref<10x10x128xbf16, #tpu.memory_space<vmem>>, vector<8x8x128xbf16>
    tpu.vector_store %arg5[%c1, %c1_5, %c0_6], %2 {strides = array<i32>} : memref<10x10x128xbf16, #tpu.memory_space<vmem>>, vector<8x8x128xbf16>,
    %c0_7 = arith.constant 0 : index
    %c0_8 = arith.constant 0 : index
    %c0_9 = arith.constant 0 : index
    %6 = vector.load %arg5[%c0_7, %c0_8, %c0_9] : memref<10x10x128xbf16, #tpu.memory_space<vmem>>, vector<8x8x128xbf16>
    %c0_10 = arith.constant 0 : index
    %c1_11 = arith.constant 1 : index
    %c0_12 = arith.constant 0 : index
    %7 = vector.load %arg5[%c0_10, %c1_11, %c0_12] : memref<10x10x128xbf16, #tpu.memory_space<vmem>>, vector<8x8x128xbf16>
    %8 = arith.maximumf %6, %7 : vector<8x8x128xbf16>
    %c0_13 = arith.constant 0 : index
    %c2 = arith.constant 2 : index
    %c0_14 = arith.constant 0 : index
    %9 = vector.load %arg5[%c0_13, %c2, %c0_14] : memref<10x10x128xbf16, #tpu.memory_space<vmem>>, vector<8x8x128xbf16>
    %10 = arith.maximumf %8, %9 : vector<8x8x128xbf16>
    %c1_15 = arith.constant 1 : index
    %c0_16 = arith.constant 0 : index
    %c0_17 = arith.constant 0 : index
    %11 = vector.load %arg5[%c1_15, %c0_16, %c0_17] : memref<10x10x128xbf16, #tpu.memory_space<vmem>>, vector<8x8x128xbf16>
    %12 = arith.maximumf %10, %11 : vector<8x8x128xbf16>
    %c1_18 = arith.constant 1 : index
    %c1_19 = arith.constant 1 : index
    %c0_20 = arith.constant 0 : index
    %13 = vector.load %arg5[%c1_18, %c1_19, %c0_20] : memref<10x10x128xbf16, #tpu.memory_space<vmem>>, vector<8x8x128xbf16>
    %14 = arith.maximumf %12, %13 : vector<8x8x128xbf16>
    %c1_21 = arith.constant 1 : index
    %c2_22 = arith.constant 2 : index
    %c0_23 = arith.constant 0 : index
    %15 = vector.load %arg5[%c1_21, %c2_22, %c0_23] : memref<10x10x128xbf16, #tpu.memory_space<vmem>>, vector<8x8x128xbf16>
    %16 = arith.maximumf %14, %15 : vector<8x8x128xbf16>
    %c2_24 = arith.constant 2 : index
    %c0_25 = arith.constant 0 : index
    %c0_26 = arith.constant 0 : index
    %17 = vector.load %arg5[%c2_24, %c0_25, %c0_26] : memref<10x10x128xbf16, #tpu.memory_space<vmem>>, vector<8x8x128xbf16>
    %18 = arith.maximumf %16, %17 : vector<8x8x128xbf16>
    %c2_27 = arith.constant 2 : index
    %c1_28 = arith.constant 1 : index
    %c0_29 = arith.constant 0 : index
    %19 = vector.load %arg5[%c2_27, %c1_28, %c0_29] : memref<10x10x128xbf16, #tpu.memory_space<vmem>>, vector<8x8x128xbf16>
    %20 = arith.maximumf %18, %19 : vector<8x8x128xbf16>
    %c2_30 = arith.constant 2 : index
    %c2_31 = arith.constant 2 : index
    %c0_32 = arith.constant 0 : index
    %21 = vector.load %arg5[%c2_30, %c2_31, %c0_32] : memref<10x10x128xbf16, #tpu.memory_space<vmem>>, vector<8x8x128xbf16>
    %22 = arith.maximumf %20, %21 : vector<8x8x128xbf16>
    %23 = vector.extract_strided_slice %22 {offsets = [0, 0, 0], sizes = [1, 8, 128], strides = [1, 1, 1]} : vector<8x8x128xbf16> to vector<1x8x128xbf16>
    %24 = vector.extract_strided_slice %22 {offsets = [2, 0, 0], sizes = [1, 8, 128], strides = [1, 1, 1]} : vector<8x8x128xbf16> to vector<1x8x128xbf16>
    %25 = vector.extract_strided_slice %22 {offsets = [4, 0, 0], sizes = [1, 8, 128], strides = [1, 1, 1]} : vector<8x8x128xbf16> to vector<1x8x128xbf16>
    %26 = vector.extract_strided_slice %22 {offsets = [6, 0, 0], sizes = [1, 8, 128], strides = [1, 1, 1]} : vector<8x8x128xbf16> to vector<1x8x128xbf16>
    %27 = tpu.concatenate %23, %24, %25, %26 in 0 : vector<1x8x128xbf16>, vector<1x8x128xbf16>, vector<1x8x128xbf16>, vector<1x8x128xbf16> -> vector<4x8x128xbf16>
    %28 = vector.extract_strided_slice %27 {offsets = [0, 0, 0], sizes = [4, 1, 128], strides = [1, 1, 1]} : vector<4x8x128xbf16> to vector<4x1x128xbf16>
    %29 = vector.extract_strided_slice %27 {offsets = [0, 2, 0], sizes = [4, 1, 128], strides = [1, 1, 1]} : vector<4x8x128xbf16> to vector<4x1x128xbf16>
    %30 = vector.extract_strided_slice %27 {offsets = [0, 4, 0], sizes = [4, 1, 128], strides = [1, 1, 1]} : vector<4x8x128xbf16> to vector<4x1x128xbf16>
    %31 = vector.extract_strided_slice %27 {offsets = [0, 6, 0], sizes = [4, 1, 128], strides = [1, 1, 1]} : vector<4x8x128xbf16> to vector<4x1x128xbf16>
    %32 = tpu.concatenate %28, %29, %30, %31 in 1 : vector<4x1x128xbf16>, vector<4x1x128xbf16>, vector<4x1x128xbf16>, vector<4x1x128xbf16> -> vector<4x4x128xbf16>
    %cst_33 = arith.constant 0.000000e+00 : bf16
    %33 = vector.broadcast %cst_33 : bf16 to vector<6x6x128xbf16>
    %c0_34 = arith.constant 0 : index
    %c0_35 = arith.constant 0 : index
    %c0_36 = arith.constant 0 : index
    %34 = vector.load %arg6[%c0_34, %c0_35, %c0_36] : memref<6x6x128xbf16, #tpu.memory_space<vmem>>, vector<6x6x128xbf16>
    tpu.vector_store %arg6[%c0_34, %c0_35, %c0_36], %33 {strides = array<i32>} : memref<6x6x128xbf16, #tpu.memory_space<vmem>>, vector<6x6x128xbf16>,
    %c1_37 = arith.constant 1 : index
    %c1_38 = arith.constant 1 : index
    %c0_39 = arith.constant 0 : index
    %35 = vector.load %arg6[%c1_37, %c1_38, %c0_39] : memref<6x6x128xbf16, #tpu.memory_space<vmem>>, vector<4x4x128xbf16>
    tpu.vector_store %arg6[%c1_37, %c1_38, %c0_39], %32 {strides = array<i32>} : memref<6x6x128xbf16, #tpu.memory_space<vmem>>, vector<4x4x128xbf16>,
    %c0_40 = arith.constant 0 : index
    %c0_41 = arith.constant 0 : index
    %c0_42 = arith.constant 0 : index
    %36 = vector.load %arg6[%c0_40, %c0_41, %c0_42] : memref<6x6x128xbf16, #tpu.memory_space<vmem>>, vector<4x4x128xbf16>
    %37 = vector.shape_cast %36 : vector<4x4x128xbf16> to vector<16x128xbf16>
    %c0_43 = arith.constant 0 : index
    %c1_44 = arith.constant 1 : index
    %c0_45 = arith.constant 0 : index
    %38 = vector.load %arg6[%c0_43, %c1_44, %c0_45] : memref<6x6x128xbf16, #tpu.memory_space<vmem>>, vector<4x4x128xbf16>
    %39 = vector.shape_cast %38 : vector<4x4x128xbf16> to vector<16x128xbf16>
    %c0_46 = arith.constant 0 : index
    %c2_47 = arith.constant 2 : index
    %c0_48 = arith.constant 0 : index
    %40 = vector.load %arg6[%c0_46, %c2_47, %c0_48] : memref<6x6x128xbf16, #tpu.memory_space<vmem>>, vector<4x4x128xbf16>
    %41 = vector.shape_cast %40 : vector<4x4x128xbf16> to vector<16x128xbf16>
    %c1_49 = arith.constant 1 : index
    %c0_50 = arith.constant 0 : index
    %c0_51 = arith.constant 0 : index
    %42 = vector.load %arg6[%c1_49, %c0_50, %c0_51] : memref<6x6x128xbf16, #tpu.memory_space<vmem>>, vector<4x4x128xbf16>
    %43 = vector.shape_cast %42 : vector<4x4x128xbf16> to vector<16x128xbf16>
    %c1_52 = arith.constant 1 : index
    %c1_53 = arith.constant 1 : index
    %c0_54 = arith.constant 0 : index
    %44 = vector.load %arg6[%c1_52, %c1_53, %c0_54] : memref<6x6x128xbf16, #tpu.memory_space<vmem>>, vector<4x4x128xbf16>
    %45 = vector.shape_cast %44 : vector<4x4x128xbf16> to vector<16x128xbf16>
    %c1_55 = arith.constant 1 : index
    %c2_56 = arith.constant 2 : index
    %c0_57 = arith.constant 0 : index
    %46 = vector.load %arg6[%c1_55, %c2_56, %c0_57] : memref<6x6x128xbf16, #tpu.memory_space<vmem>>, vector<4x4x128xbf16>
    %47 = vector.shape_cast %46 : vector<4x4x128xbf16> to vector<16x128xbf16>
    %c2_58 = arith.constant 2 : index
    %c0_59 = arith.constant 0 : index
    %c0_60 = arith.constant 0 : index
    %48 = vector.load %arg6[%c2_58, %c0_59, %c0_60] : memref<6x6x128xbf16, #tpu.memory_space<vmem>>, vector<4x4x128xbf16>
    %49 = vector.shape_cast %48 : vector<4x4x128xbf16> to vector<16x128xbf16>
    %c2_61 = arith.constant 2 : index
    %c1_62 = arith.constant 1 : index
    %c0_63 = arith.constant 0 : index
    %50 = vector.load %arg6[%c2_61, %c1_62, %c0_63] : memref<6x6x128xbf16, #tpu.memory_space<vmem>>, vector<4x4x128xbf16>
    %51 = vector.shape_cast %50 : vector<4x4x128xbf16> to vector<16x128xbf16>
    %c2_64 = arith.constant 2 : index
    %c2_65 = arith.constant 2 : index
    %c0_66 = arith.constant 0 : index
    %52 = vector.load %arg6[%c2_64, %c2_65, %c0_66] : memref<6x6x128xbf16, #tpu.memory_space<vmem>>, vector<4x4x128xbf16>
    %53 = vector.shape_cast %52 : vector<4x4x128xbf16> to vector<16x128xbf16>
    %54 = tpu.concatenate %37, %39, %41, %43, %45, %47, %49, %51, %53 in 1 : vector<16x128xbf16>, vector<16x128xbf16>, vector<16x128xbf16>, vector<16x128xbf16>, vector<16x128xbf16>, vector<16x128xbf16>, vector<16x128xbf16>, vector<16x128xbf16>, vector<16x128xbf16> -> vector<16x1152xbf16>
    %c0_67 = arith.constant 0 : index
    %c0_68 = arith.constant 0 : index
    %55 = vector.load %arg2[%c0_67, %c0_68] : memref<1152x128xbf16, #tpu.memory_space<vmem>>, vector<1152x128xbf16>
    %cst_69 = arith.constant dense<0.000000e+00> : vector<16x128xf32>
    %56 = tpu.matmul %54, %55, %cst_69 {dimension_numbers = #tpu.dot_dimension_numbers<[1], [0], [0], [1], [0, 0, 1, 1], [], []>} : vector<16x1152xbf16>, vector<1152x128xbf16>, vector<16x128xf32> -> vector<16x128xf32>
    %c0_70 = arith.constant 0 : index
    %c0_71 = arith.constant 0 : index
    %57 = vector.load %arg3[%c0_70, %c0_71] : memref<1x128xf32, #tpu.memory_space<vmem>>, vector<1x128xf32>
    %58 = vector.broadcast %57 : vector<1x128xf32> to vector<16x128xf32>
    %59 = arith.addf %56, %58 : vector<16x128xf32>
    %60 = arith.truncf %59 : vector<16x128xf32> to vector<16x128xbf16>
    %c0_72 = arith.constant 0 : index
    %c0_73 = arith.constant 0 : index
    %c0_74 = arith.constant 0 : index
    %61 = vector.load %arg4[%c0_72, %c0_73, %c0_74] : memref<1x16x128xbf16, #tpu.memory_space<vmem>>, vector<1x16x128xbf16>
    %62 = vector.shape_cast %61 : vector<1x16x128xbf16> to vector<16x128xbf16>
    %63 = vector.shape_cast %60 : vector<16x128xbf16> to vector<1x16x128xbf16>
    tpu.vector_store %arg4[%c0_72, %c0_73, %c0_74], %63 {strides = array<i32>} : memref<1x16x128xbf16, #tpu.memory_space<vmem>>, vector<1x16x128xbf16>,
    return
  }
  func.func @transform_0(%arg0: i32) -> (i32, i32, i32) {
    %c0_i32 = arith.constant 0 : i32
    %c0_i32_0 = arith.constant 0 : i32
    %c0_i32_1 = arith.constant 0 : i32
    return %arg0, %c0_i32, %c0_i32_0 : i32, i32, i32
  }
  func.func @transform_1(%arg0: i32) -> (i32, i32) {
    %c0_i32 = arith.constant 0 : i32
    %c0_i32_0 = arith.constant 0 : i32
    %c0_i32_1 = arith.constant 0 : i32
    return %c0_i32, %c0_i32_0 : i32, i32
  }
  func.func @transform_2(%arg0: i32) -> (i32, i32) {
    %c0_i32 = arith.constant 0 : i32
    %c0_i32_0 = arith.constant 0 : i32
    %c0_i32_1 = arith.constant 0 : i32
    return %c0_i32, %c0_i32_0 : i32, i32
  }
  func.func @transform_3(%arg0: i32) -> (i32, i32, i32) {
    %c0_i32 = arith.constant 0 : i32
    %c0_i32_0 = arith.constant 0 : i32
    %c0_i32_1 = arith.constant 0 : i32
    return %arg0, %c0_i32, %c0_i32_0 : i32, i32, i32
  }
}

module attributes {stable_mosaic.version = 11 : i64} {
  func.func @_block_kernel(%arg0: i32, %arg1: memref<1x16x128xbf16, #tpu.memory_space<vmem>>, %arg2: memref<128x64xbf16, #tpu.memory_space<vmem>>, %arg3: memref<1x64xf32, #tpu.memory_space<vmem>>, %arg4: memref<128x128xbf16, #tpu.memory_space<vmem>>, %arg5: memref<1x128xf32, #tpu.memory_space<vmem>>, %arg6: memref<576x64xbf16, #tpu.memory_space<vmem>>, %arg7: memref<1x64xf32, #tpu.memory_space<vmem>>, %arg8: memref<64x128xbf16, #tpu.memory_space<vmem>>, %arg9: memref<1x128xf32, #tpu.memory_space<vmem>>, %arg10: memref<1x16x128xbf16, #tpu.memory_space<vmem>>, %arg11: memref<6x6x64xbf16, #tpu.memory_space<vmem>>) attributes {dimension_semantics = [#tpu.dimension_semantics<parallel>], iteration_bounds = array<i64: 2>, scalar_prefetch = 0 : i64, scratch_operands = 1 : i64, tpu.core_type = #tpu.core_type<tc>, window_params = [{transform_indices = @transform_0, window_bounds = array<i64: 1, 16, 128>}, {pipeline_mode = #tpu.pipeline_mode<synchronous>, transform_indices = @transform_1, window_bounds = array<i64: 128, 64>}, {pipeline_mode = #tpu.pipeline_mode<synchronous>, transform_indices = @transform_2, window_bounds = array<i64: 1, 64>}, {pipeline_mode = #tpu.pipeline_mode<synchronous>, transform_indices = @transform_3, window_bounds = array<i64: 128, 128>}, {pipeline_mode = #tpu.pipeline_mode<synchronous>, transform_indices = @transform_4, window_bounds = array<i64: 1, 128>}, {pipeline_mode = #tpu.pipeline_mode<synchronous>, transform_indices = @transform_5, window_bounds = array<i64: 576, 64>}, {pipeline_mode = #tpu.pipeline_mode<synchronous>, transform_indices = @transform_6, window_bounds = array<i64: 1, 64>}, {pipeline_mode = #tpu.pipeline_mode<synchronous>, transform_indices = @transform_7, window_bounds = array<i64: 64, 128>}, {pipeline_mode = #tpu.pipeline_mode<synchronous>, transform_indices = @transform_8, window_bounds = array<i64: 1, 128>}, {transform_indices = @transform_9, window_bounds = array<i64: 1, 16, 128>}]} {
    %c0 = arith.constant 0 : index
    %c0_0 = arith.constant 0 : index
    %c0_1 = arith.constant 0 : index
    %0 = vector.load %arg1[%c0, %c0_0, %c0_1] : memref<1x16x128xbf16, #tpu.memory_space<vmem>>, vector<1x16x128xbf16>
    %1 = vector.shape_cast %0 : vector<1x16x128xbf16> to vector<16x128xbf16>
    %c0_2 = arith.constant 0 : index
    %c0_3 = arith.constant 0 : index
    %2 = vector.load %arg2[%c0_2, %c0_3] : memref<128x64xbf16, #tpu.memory_space<vmem>>, vector<128x64xbf16>
    %cst = arith.constant dense<0.000000e+00> : vector<16x64xf32>
    %3 = tpu.matmul %1, %2, %cst {dimension_numbers = #tpu.dot_dimension_numbers<[1], [0], [0], [1], [0, 0, 1, 1], [], []>} : vector<16x128xbf16>, vector<128x64xbf16>, vector<16x64xf32> -> vector<16x64xf32>
    %c0_4 = arith.constant 0 : index
    %c0_5 = arith.constant 0 : index
    %4 = vector.load %arg3[%c0_4, %c0_5] : memref<1x64xf32, #tpu.memory_space<vmem>>, vector<1x64xf32>
    %5 = vector.broadcast %4 : vector<1x64xf32> to vector<16x64xf32>
    %6 = arith.addf %3, %5 : vector<16x64xf32>
    %cst_6 = arith.constant 0.000000e+00 : f32
    %7 = vector.broadcast %cst_6 : f32 to vector<16x64xf32>
    %8 = arith.maximumf %6, %7 : vector<16x64xf32>
    %c0_7 = arith.constant 0 : index
    %c0_8 = arith.constant 0 : index
    %9 = vector.load %arg4[%c0_7, %c0_8] : memref<128x128xbf16, #tpu.memory_space<vmem>>, vector<128x128xbf16>
    %cst_9 = arith.constant dense<0.000000e+00> : vector<16x128xf32>
    %10 = tpu.matmul %1, %9, %cst_9 {dimension_numbers = #tpu.dot_dimension_numbers<[1], [0], [0], [1], [0, 0, 1, 1], [], []>} : vector<16x128xbf16>, vector<128x128xbf16>, vector<16x128xf32> -> vector<16x128xf32>
    %c0_10 = arith.constant 0 : index
    %c0_11 = arith.constant 0 : index
    %11 = vector.load %arg5[%c0_10, %c0_11] : memref<1x128xf32, #tpu.memory_space<vmem>>, vector<1x128xf32>
    %12 = vector.broadcast %11 : vector<1x128xf32> to vector<16x128xf32>
    %13 = arith.addf %10, %12 : vector<16x128xf32>
    %cst_12 = arith.constant 0.000000e+00 : bf16
    %14 = vector.broadcast %cst_12 : bf16 to vector<6x6x64xbf16>
    %c0_13 = arith.constant 0 : index
    %c0_14 = arith.constant 0 : index
    %c0_15 = arith.constant 0 : index
    %15 = vector.load %arg11[%c0_13, %c0_14, %c0_15] : memref<6x6x64xbf16, #tpu.memory_space<vmem>>, vector<6x6x64xbf16>
    tpu.vector_store %arg11[%c0_13, %c0_14, %c0_15], %14 {strides = array<i32>} : memref<6x6x64xbf16, #tpu.memory_space<vmem>>, vector<6x6x64xbf16>,
    %16 = vector.shape_cast %8 : vector<16x64xf32> to vector<4x4x64xf32>
    %17 = arith.truncf %16 : vector<4x4x64xf32> to vector<4x4x64xbf16>
    %c1 = arith.constant 1 : index
    %c1_16 = arith.constant 1 : index
    %c0_17 = arith.constant 0 : index
    %18 = vector.load %arg11[%c1, %c1_16, %c0_17] : memref<6x6x64xbf16, #tpu.memory_space<vmem>>, vector<4x4x64xbf16>
    tpu.vector_store %arg11[%c1, %c1_16, %c0_17], %17 {strides = array<i32>} : memref<6x6x64xbf16, #tpu.memory_space<vmem>>, vector<4x4x64xbf16>,
    %c0_18 = arith.constant 0 : index
    %c0_19 = arith.constant 0 : index
    %c0_20 = arith.constant 0 : index
    %19 = vector.load %arg11[%c0_18, %c0_19, %c0_20] : memref<6x6x64xbf16, #tpu.memory_space<vmem>>, vector<4x4x64xbf16>
    %20 = vector.shape_cast %19 : vector<4x4x64xbf16> to vector<16x64xbf16>
    %c0_21 = arith.constant 0 : index
    %c1_22 = arith.constant 1 : index
    %c0_23 = arith.constant 0 : index
    %21 = vector.load %arg11[%c0_21, %c1_22, %c0_23] : memref<6x6x64xbf16, #tpu.memory_space<vmem>>, vector<4x4x64xbf16>
    %22 = vector.shape_cast %21 : vector<4x4x64xbf16> to vector<16x64xbf16>
    %c0_24 = arith.constant 0 : index
    %c2 = arith.constant 2 : index
    %c0_25 = arith.constant 0 : index
    %23 = vector.load %arg11[%c0_24, %c2, %c0_25] : memref<6x6x64xbf16, #tpu.memory_space<vmem>>, vector<4x4x64xbf16>
    %24 = vector.shape_cast %23 : vector<4x4x64xbf16> to vector<16x64xbf16>
    %c1_26 = arith.constant 1 : index
    %c0_27 = arith.constant 0 : index
    %c0_28 = arith.constant 0 : index
    %25 = vector.load %arg11[%c1_26, %c0_27, %c0_28] : memref<6x6x64xbf16, #tpu.memory_space<vmem>>, vector<4x4x64xbf16>
    %26 = vector.shape_cast %25 : vector<4x4x64xbf16> to vector<16x64xbf16>
    %c1_29 = arith.constant 1 : index
    %c1_30 = arith.constant 1 : index
    %c0_31 = arith.constant 0 : index
    %27 = vector.load %arg11[%c1_29, %c1_30, %c0_31] : memref<6x6x64xbf16, #tpu.memory_space<vmem>>, vector<4x4x64xbf16>
    %28 = vector.shape_cast %27 : vector<4x4x64xbf16> to vector<16x64xbf16>
    %c1_32 = arith.constant 1 : index
    %c2_33 = arith.constant 2 : index
    %c0_34 = arith.constant 0 : index
    %29 = vector.load %arg11[%c1_32, %c2_33, %c0_34] : memref<6x6x64xbf16, #tpu.memory_space<vmem>>, vector<4x4x64xbf16>
    %30 = vector.shape_cast %29 : vector<4x4x64xbf16> to vector<16x64xbf16>
    %c2_35 = arith.constant 2 : index
    %c0_36 = arith.constant 0 : index
    %c0_37 = arith.constant 0 : index
    %31 = vector.load %arg11[%c2_35, %c0_36, %c0_37] : memref<6x6x64xbf16, #tpu.memory_space<vmem>>, vector<4x4x64xbf16>
    %32 = vector.shape_cast %31 : vector<4x4x64xbf16> to vector<16x64xbf16>
    %c2_38 = arith.constant 2 : index
    %c1_39 = arith.constant 1 : index
    %c0_40 = arith.constant 0 : index
    %33 = vector.load %arg11[%c2_38, %c1_39, %c0_40] : memref<6x6x64xbf16, #tpu.memory_space<vmem>>, vector<4x4x64xbf16>
    %34 = vector.shape_cast %33 : vector<4x4x64xbf16> to vector<16x64xbf16>
    %c2_41 = arith.constant 2 : index
    %c2_42 = arith.constant 2 : index
    %c0_43 = arith.constant 0 : index
    %35 = vector.load %arg11[%c2_41, %c2_42, %c0_43] : memref<6x6x64xbf16, #tpu.memory_space<vmem>>, vector<4x4x64xbf16>
    %36 = vector.shape_cast %35 : vector<4x4x64xbf16> to vector<16x64xbf16>
    %37 = tpu.concatenate %20, %22, %24, %26, %28, %30, %32, %34, %36 in 1 : vector<16x64xbf16>, vector<16x64xbf16>, vector<16x64xbf16>, vector<16x64xbf16>, vector<16x64xbf16>, vector<16x64xbf16>, vector<16x64xbf16>, vector<16x64xbf16>, vector<16x64xbf16> -> vector<16x576xbf16>
    %c0_44 = arith.constant 0 : index
    %c0_45 = arith.constant 0 : index
    %38 = vector.load %arg6[%c0_44, %c0_45] : memref<576x64xbf16, #tpu.memory_space<vmem>>, vector<576x64xbf16>
    %cst_46 = arith.constant dense<0.000000e+00> : vector<16x64xf32>
    %39 = tpu.matmul %37, %38, %cst_46 {dimension_numbers = #tpu.dot_dimension_numbers<[1], [0], [0], [1], [0, 0, 1, 1], [], []>} : vector<16x576xbf16>, vector<576x64xbf16>, vector<16x64xf32> -> vector<16x64xf32>
    %c0_47 = arith.constant 0 : index
    %c0_48 = arith.constant 0 : index
    %40 = vector.load %arg7[%c0_47, %c0_48] : memref<1x64xf32, #tpu.memory_space<vmem>>, vector<1x64xf32>
    %41 = vector.broadcast %40 : vector<1x64xf32> to vector<16x64xf32>
    %42 = arith.addf %39, %41 : vector<16x64xf32>
    %cst_49 = arith.constant 0.000000e+00 : f32
    %43 = vector.broadcast %cst_49 : f32 to vector<16x64xf32>
    %44 = arith.maximumf %42, %43 : vector<16x64xf32>
    %45 = arith.truncf %44 : vector<16x64xf32> to vector<16x64xbf16>
    %c0_50 = arith.constant 0 : index
    %c0_51 = arith.constant 0 : index
    %46 = vector.load %arg8[%c0_50, %c0_51] : memref<64x128xbf16, #tpu.memory_space<vmem>>, vector<64x128xbf16>
    %cst_52 = arith.constant dense<0.000000e+00> : vector<16x128xf32>
    %47 = tpu.matmul %45, %46, %cst_52 {dimension_numbers = #tpu.dot_dimension_numbers<[1], [0], [0], [1], [0, 0, 1, 1], [], []>} : vector<16x64xbf16>, vector<64x128xbf16>, vector<16x128xf32> -> vector<16x128xf32>
    %c0_53 = arith.constant 0 : index
    %c0_54 = arith.constant 0 : index
    %48 = vector.load %arg9[%c0_53, %c0_54] : memref<1x128xf32, #tpu.memory_space<vmem>>, vector<1x128xf32>
    %49 = vector.broadcast %48 : vector<1x128xf32> to vector<16x128xf32>
    %50 = arith.addf %47, %49 : vector<16x128xf32>
    %51 = arith.addf %50, %13 : vector<16x128xf32>
    %cst_55 = arith.constant 0.000000e+00 : f32
    %52 = vector.broadcast %cst_55 : f32 to vector<16x128xf32>
    %53 = arith.maximumf %51, %52 : vector<16x128xf32>
    %54 = arith.truncf %53 : vector<16x128xf32> to vector<16x128xbf16>
    %c0_56 = arith.constant 0 : index
    %c0_57 = arith.constant 0 : index
    %c0_58 = arith.constant 0 : index
    %55 = vector.load %arg10[%c0_56, %c0_57, %c0_58] : memref<1x16x128xbf16, #tpu.memory_space<vmem>>, vector<1x16x128xbf16>
    %56 = vector.shape_cast %55 : vector<1x16x128xbf16> to vector<16x128xbf16>
    %57 = vector.shape_cast %54 : vector<16x128xbf16> to vector<1x16x128xbf16>
    tpu.vector_store %arg10[%c0_56, %c0_57, %c0_58], %57 {strides = array<i32>} : memref<1x16x128xbf16, #tpu.memory_space<vmem>>, vector<1x16x128xbf16>,
    return
  }
  func.func @transform_0(%arg0: i32) -> (i32, i32, i32) {
    %c0_i32 = arith.constant 0 : i32
    %c0_i32_0 = arith.constant 0 : i32
    %c0_i32_1 = arith.constant 0 : i32
    return %arg0, %c0_i32, %c0_i32_0 : i32, i32, i32
  }
  func.func @transform_1(%arg0: i32) -> (i32, i32) {
    %c0_i32 = arith.constant 0 : i32
    %c0_i32_0 = arith.constant 0 : i32
    %c0_i32_1 = arith.constant 0 : i32
    return %c0_i32, %c0_i32_0 : i32, i32
  }
  func.func @transform_2(%arg0: i32) -> (i32, i32) {
    %c0_i32 = arith.constant 0 : i32
    %c0_i32_0 = arith.constant 0 : i32
    %c0_i32_1 = arith.constant 0 : i32
    return %c0_i32, %c0_i32_0 : i32, i32
  }
  func.func @transform_3(%arg0: i32) -> (i32, i32) {
    %c0_i32 = arith.constant 0 : i32
    %c0_i32_0 = arith.constant 0 : i32
    %c0_i32_1 = arith.constant 0 : i32
    return %c0_i32, %c0_i32_0 : i32, i32
  }
  func.func @transform_4(%arg0: i32) -> (i32, i32) {
    %c0_i32 = arith.constant 0 : i32
    %c0_i32_0 = arith.constant 0 : i32
    %c0_i32_1 = arith.constant 0 : i32
    return %c0_i32, %c0_i32_0 : i32, i32
  }
  func.func @transform_5(%arg0: i32) -> (i32, i32) {
    %c0_i32 = arith.constant 0 : i32
    %c0_i32_0 = arith.constant 0 : i32
    %c0_i32_1 = arith.constant 0 : i32
    return %c0_i32, %c0_i32_0 : i32, i32
  }
  func.func @transform_6(%arg0: i32) -> (i32, i32) {
    %c0_i32 = arith.constant 0 : i32
    %c0_i32_0 = arith.constant 0 : i32
    %c0_i32_1 = arith.constant 0 : i32
    return %c0_i32, %c0_i32_0 : i32, i32
  }
  func.func @transform_7(%arg0: i32) -> (i32, i32) {
    %c0_i32 = arith.constant 0 : i32
    %c0_i32_0 = arith.constant 0 : i32
    %c0_i32_1 = arith.constant 0 : i32
    return %c0_i32, %c0_i32_0 : i32, i32
  }
  func.func @transform_8(%arg0: i32) -> (i32, i32) {
    %c0_i32 = arith.constant 0 : i32
    %c0_i32_0 = arith.constant 0 : i32
    %c0_i32_1 = arith.constant 0 : i32
    return %c0_i32, %c0_i32_0 : i32, i32
  }
  func.func @transform_9(%arg0: i32) -> (i32, i32, i32) {
    %c0_i32 = arith.constant 0 : i32
    %c0_i32_0 = arith.constant 0 : i32
    %c0_i32_1 = arith.constant 0 : i32
    return %arg0, %c0_i32, %c0_i32_0 : i32, i32, i32
  }
}

module attributes {stable_mosaic.version = 11 : i64} {
  func.func @_block_kernel(%arg0: i32, %arg1: memref<1x16x128xbf16, #tpu.memory_space<vmem>>, %arg2: memref<128x64xbf16, #tpu.memory_space<vmem>>, %arg3: memref<1x64xf32, #tpu.memory_space<vmem>>, %arg4: memref<128x256xbf16, #tpu.memory_space<vmem>>, %arg5: memref<1x256xf32, #tpu.memory_space<vmem>>, %arg6: memref<576x64xbf16, #tpu.memory_space<vmem>>, %arg7: memref<1x64xf32, #tpu.memory_space<vmem>>, %arg8: memref<64x256xbf16, #tpu.memory_space<vmem>>, %arg9: memref<1x256xf32, #tpu.memory_space<vmem>>, %arg10: memref<1x16x256xbf16, #tpu.memory_space<vmem>>, %arg11: memref<6x6x64xbf16, #tpu.memory_space<vmem>>) attributes {dimension_semantics = [#tpu.dimension_semantics<parallel>], iteration_bounds = array<i64: 2>, scalar_prefetch = 0 : i64, scratch_operands = 1 : i64, tpu.core_type = #tpu.core_type<tc>, window_params = [{transform_indices = @transform_0, window_bounds = array<i64: 1, 16, 128>}, {pipeline_mode = #tpu.pipeline_mode<synchronous>, transform_indices = @transform_1, window_bounds = array<i64: 128, 64>}, {pipeline_mode = #tpu.pipeline_mode<synchronous>, transform_indices = @transform_2, window_bounds = array<i64: 1, 64>}, {pipeline_mode = #tpu.pipeline_mode<synchronous>, transform_indices = @transform_3, window_bounds = array<i64: 128, 256>}, {pipeline_mode = #tpu.pipeline_mode<synchronous>, transform_indices = @transform_4, window_bounds = array<i64: 1, 256>}, {pipeline_mode = #tpu.pipeline_mode<synchronous>, transform_indices = @transform_5, window_bounds = array<i64: 576, 64>}, {pipeline_mode = #tpu.pipeline_mode<synchronous>, transform_indices = @transform_6, window_bounds = array<i64: 1, 64>}, {pipeline_mode = #tpu.pipeline_mode<synchronous>, transform_indices = @transform_7, window_bounds = array<i64: 64, 256>}, {pipeline_mode = #tpu.pipeline_mode<synchronous>, transform_indices = @transform_8, window_bounds = array<i64: 1, 256>}, {transform_indices = @transform_9, window_bounds = array<i64: 1, 16, 256>}]} {
    %c0 = arith.constant 0 : index
    %c0_0 = arith.constant 0 : index
    %c0_1 = arith.constant 0 : index
    %0 = vector.load %arg1[%c0, %c0_0, %c0_1] : memref<1x16x128xbf16, #tpu.memory_space<vmem>>, vector<1x16x128xbf16>
    %1 = vector.shape_cast %0 : vector<1x16x128xbf16> to vector<16x128xbf16>
    %c0_2 = arith.constant 0 : index
    %c0_3 = arith.constant 0 : index
    %2 = vector.load %arg2[%c0_2, %c0_3] : memref<128x64xbf16, #tpu.memory_space<vmem>>, vector<128x64xbf16>
    %cst = arith.constant dense<0.000000e+00> : vector<16x64xf32>
    %3 = tpu.matmul %1, %2, %cst {dimension_numbers = #tpu.dot_dimension_numbers<[1], [0], [0], [1], [0, 0, 1, 1], [], []>} : vector<16x128xbf16>, vector<128x64xbf16>, vector<16x64xf32> -> vector<16x64xf32>
    %c0_4 = arith.constant 0 : index
    %c0_5 = arith.constant 0 : index
    %4 = vector.load %arg3[%c0_4, %c0_5] : memref<1x64xf32, #tpu.memory_space<vmem>>, vector<1x64xf32>
    %5 = vector.broadcast %4 : vector<1x64xf32> to vector<16x64xf32>
    %6 = arith.addf %3, %5 : vector<16x64xf32>
    %cst_6 = arith.constant 0.000000e+00 : f32
    %7 = vector.broadcast %cst_6 : f32 to vector<16x64xf32>
    %8 = arith.maximumf %6, %7 : vector<16x64xf32>
    %c0_7 = arith.constant 0 : index
    %c0_8 = arith.constant 0 : index
    %9 = vector.load %arg4[%c0_7, %c0_8] : memref<128x256xbf16, #tpu.memory_space<vmem>>, vector<128x256xbf16>
    %cst_9 = arith.constant dense<0.000000e+00> : vector<16x256xf32>
    %10 = tpu.matmul %1, %9, %cst_9 {dimension_numbers = #tpu.dot_dimension_numbers<[1], [0], [0], [1], [0, 0, 1, 1], [], []>} : vector<16x128xbf16>, vector<128x256xbf16>, vector<16x256xf32> -> vector<16x256xf32>
    %c0_10 = arith.constant 0 : index
    %c0_11 = arith.constant 0 : index
    %11 = vector.load %arg5[%c0_10, %c0_11] : memref<1x256xf32, #tpu.memory_space<vmem>>, vector<1x256xf32>
    %12 = vector.broadcast %11 : vector<1x256xf32> to vector<16x256xf32>
    %13 = arith.addf %10, %12 : vector<16x256xf32>
    %cst_12 = arith.constant 0.000000e+00 : bf16
    %14 = vector.broadcast %cst_12 : bf16 to vector<6x6x64xbf16>
    %c0_13 = arith.constant 0 : index
    %c0_14 = arith.constant 0 : index
    %c0_15 = arith.constant 0 : index
    %15 = vector.load %arg11[%c0_13, %c0_14, %c0_15] : memref<6x6x64xbf16, #tpu.memory_space<vmem>>, vector<6x6x64xbf16>
    tpu.vector_store %arg11[%c0_13, %c0_14, %c0_15], %14 {strides = array<i32>} : memref<6x6x64xbf16, #tpu.memory_space<vmem>>, vector<6x6x64xbf16>,
    %16 = vector.shape_cast %8 : vector<16x64xf32> to vector<4x4x64xf32>
    %17 = arith.truncf %16 : vector<4x4x64xf32> to vector<4x4x64xbf16>
    %c1 = arith.constant 1 : index
    %c1_16 = arith.constant 1 : index
    %c0_17 = arith.constant 0 : index
    %18 = vector.load %arg11[%c1, %c1_16, %c0_17] : memref<6x6x64xbf16, #tpu.memory_space<vmem>>, vector<4x4x64xbf16>
    tpu.vector_store %arg11[%c1, %c1_16, %c0_17], %17 {strides = array<i32>} : memref<6x6x64xbf16, #tpu.memory_space<vmem>>, vector<4x4x64xbf16>,
    %c0_18 = arith.constant 0 : index
    %c0_19 = arith.constant 0 : index
    %c0_20 = arith.constant 0 : index
    %19 = vector.load %arg11[%c0_18, %c0_19, %c0_20] : memref<6x6x64xbf16, #tpu.memory_space<vmem>>, vector<4x4x64xbf16>
    %20 = vector.shape_cast %19 : vector<4x4x64xbf16> to vector<16x64xbf16>
    %c0_21 = arith.constant 0 : index
    %c1_22 = arith.constant 1 : index
    %c0_23 = arith.constant 0 : index
    %21 = vector.load %arg11[%c0_21, %c1_22, %c0_23] : memref<6x6x64xbf16, #tpu.memory_space<vmem>>, vector<4x4x64xbf16>
    %22 = vector.shape_cast %21 : vector<4x4x64xbf16> to vector<16x64xbf16>
    %c0_24 = arith.constant 0 : index
    %c2 = arith.constant 2 : index
    %c0_25 = arith.constant 0 : index
    %23 = vector.load %arg11[%c0_24, %c2, %c0_25] : memref<6x6x64xbf16, #tpu.memory_space<vmem>>, vector<4x4x64xbf16>
    %24 = vector.shape_cast %23 : vector<4x4x64xbf16> to vector<16x64xbf16>
    %c1_26 = arith.constant 1 : index
    %c0_27 = arith.constant 0 : index
    %c0_28 = arith.constant 0 : index
    %25 = vector.load %arg11[%c1_26, %c0_27, %c0_28] : memref<6x6x64xbf16, #tpu.memory_space<vmem>>, vector<4x4x64xbf16>
    %26 = vector.shape_cast %25 : vector<4x4x64xbf16> to vector<16x64xbf16>
    %c1_29 = arith.constant 1 : index
    %c1_30 = arith.constant 1 : index
    %c0_31 = arith.constant 0 : index
    %27 = vector.load %arg11[%c1_29, %c1_30, %c0_31] : memref<6x6x64xbf16, #tpu.memory_space<vmem>>, vector<4x4x64xbf16>
    %28 = vector.shape_cast %27 : vector<4x4x64xbf16> to vector<16x64xbf16>
    %c1_32 = arith.constant 1 : index
    %c2_33 = arith.constant 2 : index
    %c0_34 = arith.constant 0 : index
    %29 = vector.load %arg11[%c1_32, %c2_33, %c0_34] : memref<6x6x64xbf16, #tpu.memory_space<vmem>>, vector<4x4x64xbf16>
    %30 = vector.shape_cast %29 : vector<4x4x64xbf16> to vector<16x64xbf16>
    %c2_35 = arith.constant 2 : index
    %c0_36 = arith.constant 0 : index
    %c0_37 = arith.constant 0 : index
    %31 = vector.load %arg11[%c2_35, %c0_36, %c0_37] : memref<6x6x64xbf16, #tpu.memory_space<vmem>>, vector<4x4x64xbf16>
    %32 = vector.shape_cast %31 : vector<4x4x64xbf16> to vector<16x64xbf16>
    %c2_38 = arith.constant 2 : index
    %c1_39 = arith.constant 1 : index
    %c0_40 = arith.constant 0 : index
    %33 = vector.load %arg11[%c2_38, %c1_39, %c0_40] : memref<6x6x64xbf16, #tpu.memory_space<vmem>>, vector<4x4x64xbf16>
    %34 = vector.shape_cast %33 : vector<4x4x64xbf16> to vector<16x64xbf16>
    %c2_41 = arith.constant 2 : index
    %c2_42 = arith.constant 2 : index
    %c0_43 = arith.constant 0 : index
    %35 = vector.load %arg11[%c2_41, %c2_42, %c0_43] : memref<6x6x64xbf16, #tpu.memory_space<vmem>>, vector<4x4x64xbf16>
    %36 = vector.shape_cast %35 : vector<4x4x64xbf16> to vector<16x64xbf16>
    %37 = tpu.concatenate %20, %22, %24, %26, %28, %30, %32, %34, %36 in 1 : vector<16x64xbf16>, vector<16x64xbf16>, vector<16x64xbf16>, vector<16x64xbf16>, vector<16x64xbf16>, vector<16x64xbf16>, vector<16x64xbf16>, vector<16x64xbf16>, vector<16x64xbf16> -> vector<16x576xbf16>
    %c0_44 = arith.constant 0 : index
    %c0_45 = arith.constant 0 : index
    %38 = vector.load %arg6[%c0_44, %c0_45] : memref<576x64xbf16, #tpu.memory_space<vmem>>, vector<576x64xbf16>
    %cst_46 = arith.constant dense<0.000000e+00> : vector<16x64xf32>
    %39 = tpu.matmul %37, %38, %cst_46 {dimension_numbers = #tpu.dot_dimension_numbers<[1], [0], [0], [1], [0, 0, 1, 1], [], []>} : vector<16x576xbf16>, vector<576x64xbf16>, vector<16x64xf32> -> vector<16x64xf32>
    %c0_47 = arith.constant 0 : index
    %c0_48 = arith.constant 0 : index
    %40 = vector.load %arg7[%c0_47, %c0_48] : memref<1x64xf32, #tpu.memory_space<vmem>>, vector<1x64xf32>
    %41 = vector.broadcast %40 : vector<1x64xf32> to vector<16x64xf32>
    %42 = arith.addf %39, %41 : vector<16x64xf32>
    %cst_49 = arith.constant 0.000000e+00 : f32
    %43 = vector.broadcast %cst_49 : f32 to vector<16x64xf32>
    %44 = arith.maximumf %42, %43 : vector<16x64xf32>
    %45 = arith.truncf %44 : vector<16x64xf32> to vector<16x64xbf16>
    %c0_50 = arith.constant 0 : index
    %c0_51 = arith.constant 0 : index
    %46 = vector.load %arg8[%c0_50, %c0_51] : memref<64x256xbf16, #tpu.memory_space<vmem>>, vector<64x256xbf16>
    %cst_52 = arith.constant dense<0.000000e+00> : vector<16x256xf32>
    %47 = tpu.matmul %45, %46, %cst_52 {dimension_numbers = #tpu.dot_dimension_numbers<[1], [0], [0], [1], [0, 0, 1, 1], [], []>} : vector<16x64xbf16>, vector<64x256xbf16>, vector<16x256xf32> -> vector<16x256xf32>
    %c0_53 = arith.constant 0 : index
    %c0_54 = arith.constant 0 : index
    %48 = vector.load %arg9[%c0_53, %c0_54] : memref<1x256xf32, #tpu.memory_space<vmem>>, vector<1x256xf32>
    %49 = vector.broadcast %48 : vector<1x256xf32> to vector<16x256xf32>
    %50 = arith.addf %47, %49 : vector<16x256xf32>
    %cst_55 = arith.constant 0.000000e+00 : f32
    %51 = vector.broadcast %cst_55 : f32 to vector<16x256xf32>
    %52 = arith.maximumf %50, %51 : vector<16x256xf32>
    %53 = arith.addf %52, %13 : vector<16x256xf32>
    %cst_56 = arith.constant 0.000000e+00 : f32
    %54 = vector.broadcast %cst_56 : f32 to vector<16x256xf32>
    %55 = arith.maximumf %53, %54 : vector<16x256xf32>
    %56 = arith.truncf %55 : vector<16x256xf32> to vector<16x256xbf16>
    %c0_57 = arith.constant 0 : index
    %c0_58 = arith.constant 0 : index
    %c0_59 = arith.constant 0 : index
    %57 = vector.load %arg10[%c0_57, %c0_58, %c0_59] : memref<1x16x256xbf16, #tpu.memory_space<vmem>>, vector<1x16x256xbf16>
    %58 = vector.shape_cast %57 : vector<1x16x256xbf16> to vector<16x256xbf16>
    %59 = vector.shape_cast %56 : vector<16x256xbf16> to vector<1x16x256xbf16>
    tpu.vector_store %arg10[%c0_57, %c0_58, %c0_59], %59 {strides = array<i32>} : memref<1x16x256xbf16, #tpu.memory_space<vmem>>, vector<1x16x256xbf16>,
    return
  }
  func.func @transform_0(%arg0: i32) -> (i32, i32, i32) {
    %c0_i32 = arith.constant 0 : i32
    %c0_i32_0 = arith.constant 0 : i32
    %c0_i32_1 = arith.constant 0 : i32
    return %arg0, %c0_i32, %c0_i32_0 : i32, i32, i32
  }
  func.func @transform_1(%arg0: i32) -> (i32, i32) {
    %c0_i32 = arith.constant 0 : i32
    %c0_i32_0 = arith.constant 0 : i32
    %c0_i32_1 = arith.constant 0 : i32
    return %c0_i32, %c0_i32_0 : i32, i32
  }
  func.func @transform_2(%arg0: i32) -> (i32, i32) {
    %c0_i32 = arith.constant 0 : i32
    %c0_i32_0 = arith.constant 0 : i32
    %c0_i32_1 = arith.constant 0 : i32
    return %c0_i32, %c0_i32_0 : i32, i32
  }
  func.func @transform_3(%arg0: i32) -> (i32, i32) {
    %c0_i32 = arith.constant 0 : i32
    %c0_i32_0 = arith.constant 0 : i32
    %c0_i32_1 = arith.constant 0 : i32
    return %c0_i32, %c0_i32_0 : i32, i32
  }
  func.func @transform_4(%arg0: i32) -> (i32, i32) {
    %c0_i32 = arith.constant 0 : i32
    %c0_i32_0 = arith.constant 0 : i32
    %c0_i32_1 = arith.constant 0 : i32
    return %c0_i32, %c0_i32_0 : i32, i32
  }
  func.func @transform_5(%arg0: i32) -> (i32, i32) {
    %c0_i32 = arith.constant 0 : i32
    %c0_i32_0 = arith.constant 0 : i32
    %c0_i32_1 = arith.constant 0 : i32
    return %c0_i32, %c0_i32_0 : i32, i32
  }
  func.func @transform_6(%arg0: i32) -> (i32, i32) {
    %c0_i32 = arith.constant 0 : i32
    %c0_i32_0 = arith.constant 0 : i32
    %c0_i32_1 = arith.constant 0 : i32
    return %c0_i32, %c0_i32_0 : i32, i32
  }
  func.func @transform_7(%arg0: i32) -> (i32, i32) {
    %c0_i32 = arith.constant 0 : i32
    %c0_i32_0 = arith.constant 0 : i32
    %c0_i32_1 = arith.constant 0 : i32
    return %c0_i32, %c0_i32_0 : i32, i32
  }
  func.func @transform_8(%arg0: i32) -> (i32, i32) {
    %c0_i32 = arith.constant 0 : i32
    %c0_i32_0 = arith.constant 0 : i32
    %c0_i32_1 = arith.constant 0 : i32
    return %c0_i32, %c0_i32_0 : i32, i32
  }
  func.func @transform_9(%arg0: i32) -> (i32, i32, i32) {
    %c0_i32 = arith.constant 0 : i32
    %c0_i32_0 = arith.constant 0 : i32
    %c0_i32_1 = arith.constant 0 : i32
    return %arg0, %c0_i32, %c0_i32_0 : i32, i32, i32
  }
}

module attributes {stable_mosaic.version = 11 : i64} {
  func.func @_block3_kernel(%arg0: i32, %arg1: memref<1x16x256xbf16, #tpu.memory_space<vmem>>, %arg2: memref<256x64xbf16, #tpu.memory_space<vmem>>, %arg3: memref<1x64xf32, #tpu.memory_space<vmem>>, %arg4: memref<256x512xbf16, #tpu.memory_space<vmem>>, %arg5: memref<1x512xf32, #tpu.memory_space<vmem>>, %arg6: memref<576x64xbf16, #tpu.memory_space<vmem>>, %arg7: memref<1x64xf32, #tpu.memory_space<vmem>>, %arg8: memref<64x512xbf16, #tpu.memory_space<vmem>>, %arg9: memref<1x512xf32, #tpu.memory_space<vmem>>, %arg10: memref<1x4x512xbf16, #tpu.memory_space<vmem>>, %arg11: memref<6x6x64xbf16, #tpu.memory_space<vmem>>, %arg12: memref<6x6x512xf32, #tpu.memory_space<vmem>>) attributes {dimension_semantics = [#tpu.dimension_semantics<parallel>], iteration_bounds = array<i64: 2>, scalar_prefetch = 0 : i64, scratch_operands = 2 : i64, tpu.core_type = #tpu.core_type<tc>, window_params = [{transform_indices = @transform_0, window_bounds = array<i64: 1, 16, 256>}, {pipeline_mode = #tpu.pipeline_mode<synchronous>, transform_indices = @transform_1, window_bounds = array<i64: 256, 64>}, {pipeline_mode = #tpu.pipeline_mode<synchronous>, transform_indices = @transform_2, window_bounds = array<i64: 1, 64>}, {pipeline_mode = #tpu.pipeline_mode<synchronous>, transform_indices = @transform_3, window_bounds = array<i64: 256, 512>}, {pipeline_mode = #tpu.pipeline_mode<synchronous>, transform_indices = @transform_4, window_bounds = array<i64: 1, 512>}, {pipeline_mode = #tpu.pipeline_mode<synchronous>, transform_indices = @transform_5, window_bounds = array<i64: 576, 64>}, {pipeline_mode = #tpu.pipeline_mode<synchronous>, transform_indices = @transform_6, window_bounds = array<i64: 1, 64>}, {pipeline_mode = #tpu.pipeline_mode<synchronous>, transform_indices = @transform_7, window_bounds = array<i64: 64, 512>}, {pipeline_mode = #tpu.pipeline_mode<synchronous>, transform_indices = @transform_8, window_bounds = array<i64: 1, 512>}, {transform_indices = @transform_9, window_bounds = array<i64: 1, 4, 512>}]} {
    %c0 = arith.constant 0 : index
    %c0_0 = arith.constant 0 : index
    %c0_1 = arith.constant 0 : index
    %0 = vector.load %arg1[%c0, %c0_0, %c0_1] : memref<1x16x256xbf16, #tpu.memory_space<vmem>>, vector<1x16x256xbf16>
    %1 = vector.shape_cast %0 : vector<1x16x256xbf16> to vector<16x256xbf16>
    %c0_2 = arith.constant 0 : index
    %c0_3 = arith.constant 0 : index
    %2 = vector.load %arg2[%c0_2, %c0_3] : memref<256x64xbf16, #tpu.memory_space<vmem>>, vector<256x64xbf16>
    %cst = arith.constant dense<0.000000e+00> : vector<16x64xf32>
    %3 = tpu.matmul %1, %2, %cst {dimension_numbers = #tpu.dot_dimension_numbers<[1], [0], [0], [1], [0, 0, 1, 1], [], []>} : vector<16x256xbf16>, vector<256x64xbf16>, vector<16x64xf32> -> vector<16x64xf32>
    %c0_4 = arith.constant 0 : index
    %c0_5 = arith.constant 0 : index
    %4 = vector.load %arg3[%c0_4, %c0_5] : memref<1x64xf32, #tpu.memory_space<vmem>>, vector<1x64xf32>
    %5 = vector.broadcast %4 : vector<1x64xf32> to vector<16x64xf32>
    %6 = arith.addf %3, %5 : vector<16x64xf32>
    %cst_6 = arith.constant 0.000000e+00 : f32
    %7 = vector.broadcast %cst_6 : f32 to vector<16x64xf32>
    %8 = arith.maximumf %6, %7 : vector<16x64xf32>
    %cst_7 = arith.constant 0.000000e+00 : bf16
    %9 = vector.broadcast %cst_7 : bf16 to vector<6x6x64xbf16>
    %c0_8 = arith.constant 0 : index
    %c0_9 = arith.constant 0 : index
    %c0_10 = arith.constant 0 : index
    %10 = vector.load %arg11[%c0_8, %c0_9, %c0_10] : memref<6x6x64xbf16, #tpu.memory_space<vmem>>, vector<6x6x64xbf16>
    tpu.vector_store %arg11[%c0_8, %c0_9, %c0_10], %9 {strides = array<i32>} : memref<6x6x64xbf16, #tpu.memory_space<vmem>>, vector<6x6x64xbf16>,
    %11 = vector.shape_cast %8 : vector<16x64xf32> to vector<4x4x64xf32>
    %12 = arith.truncf %11 : vector<4x4x64xf32> to vector<4x4x64xbf16>
    %c1 = arith.constant 1 : index
    %c1_11 = arith.constant 1 : index
    %c0_12 = arith.constant 0 : index
    %13 = vector.load %arg11[%c1, %c1_11, %c0_12] : memref<6x6x64xbf16, #tpu.memory_space<vmem>>, vector<4x4x64xbf16>
    tpu.vector_store %arg11[%c1, %c1_11, %c0_12], %12 {strides = array<i32>} : memref<6x6x64xbf16, #tpu.memory_space<vmem>>, vector<4x4x64xbf16>,
    %c0_13 = arith.constant 0 : index
    %c0_14 = arith.constant 0 : index
    %c0_15 = arith.constant 0 : index
    %14 = vector.load %arg11[%c0_13, %c0_14, %c0_15] : memref<6x6x64xbf16, #tpu.memory_space<vmem>>, vector<4x4x64xbf16>
    %15 = vector.shape_cast %14 : vector<4x4x64xbf16> to vector<16x64xbf16>
    %c0_16 = arith.constant 0 : index
    %c1_17 = arith.constant 1 : index
    %c0_18 = arith.constant 0 : index
    %16 = vector.load %arg11[%c0_16, %c1_17, %c0_18] : memref<6x6x64xbf16, #tpu.memory_space<vmem>>, vector<4x4x64xbf16>
    %17 = vector.shape_cast %16 : vector<4x4x64xbf16> to vector<16x64xbf16>
    %c0_19 = arith.constant 0 : index
    %c2 = arith.constant 2 : index
    %c0_20 = arith.constant 0 : index
    %18 = vector.load %arg11[%c0_19, %c2, %c0_20] : memref<6x6x64xbf16, #tpu.memory_space<vmem>>, vector<4x4x64xbf16>
    %19 = vector.shape_cast %18 : vector<4x4x64xbf16> to vector<16x64xbf16>
    %c1_21 = arith.constant 1 : index
    %c0_22 = arith.constant 0 : index
    %c0_23 = arith.constant 0 : index
    %20 = vector.load %arg11[%c1_21, %c0_22, %c0_23] : memref<6x6x64xbf16, #tpu.memory_space<vmem>>, vector<4x4x64xbf16>
    %21 = vector.shape_cast %20 : vector<4x4x64xbf16> to vector<16x64xbf16>
    %c1_24 = arith.constant 1 : index
    %c1_25 = arith.constant 1 : index
    %c0_26 = arith.constant 0 : index
    %22 = vector.load %arg11[%c1_24, %c1_25, %c0_26] : memref<6x6x64xbf16, #tpu.memory_space<vmem>>, vector<4x4x64xbf16>
    %23 = vector.shape_cast %22 : vector<4x4x64xbf16> to vector<16x64xbf16>
    %c1_27 = arith.constant 1 : index
    %c2_28 = arith.constant 2 : index
    %c0_29 = arith.constant 0 : index
    %24 = vector.load %arg11[%c1_27, %c2_28, %c0_29] : memref<6x6x64xbf16, #tpu.memory_space<vmem>>, vector<4x4x64xbf16>
    %25 = vector.shape_cast %24 : vector<4x4x64xbf16> to vector<16x64xbf16>
    %c2_30 = arith.constant 2 : index
    %c0_31 = arith.constant 0 : index
    %c0_32 = arith.constant 0 : index
    %26 = vector.load %arg11[%c2_30, %c0_31, %c0_32] : memref<6x6x64xbf16, #tpu.memory_space<vmem>>, vector<4x4x64xbf16>
    %27 = vector.shape_cast %26 : vector<4x4x64xbf16> to vector<16x64xbf16>
    %c2_33 = arith.constant 2 : index
    %c1_34 = arith.constant 1 : index
    %c0_35 = arith.constant 0 : index
    %28 = vector.load %arg11[%c2_33, %c1_34, %c0_35] : memref<6x6x64xbf16, #tpu.memory_space<vmem>>, vector<4x4x64xbf16>
    %29 = vector.shape_cast %28 : vector<4x4x64xbf16> to vector<16x64xbf16>
    %c2_36 = arith.constant 2 : index
    %c2_37 = arith.constant 2 : index
    %c0_38 = arith.constant 0 : index
    %30 = vector.load %arg11[%c2_36, %c2_37, %c0_38] : memref<6x6x64xbf16, #tpu.memory_space<vmem>>, vector<4x4x64xbf16>
    %31 = vector.shape_cast %30 : vector<4x4x64xbf16> to vector<16x64xbf16>
    %32 = tpu.concatenate %15, %17, %19, %21, %23, %25, %27, %29, %31 in 1 : vector<16x64xbf16>, vector<16x64xbf16>, vector<16x64xbf16>, vector<16x64xbf16>, vector<16x64xbf16>, vector<16x64xbf16>, vector<16x64xbf16>, vector<16x64xbf16>, vector<16x64xbf16> -> vector<16x576xbf16>
    %c0_39 = arith.constant 0 : index
    %c0_40 = arith.constant 0 : index
    %33 = vector.load %arg6[%c0_39, %c0_40] : memref<576x64xbf16, #tpu.memory_space<vmem>>, vector<576x64xbf16>
    %cst_41 = arith.constant dense<0.000000e+00> : vector<16x64xf32>
    %34 = tpu.matmul %32, %33, %cst_41 {dimension_numbers = #tpu.dot_dimension_numbers<[1], [0], [0], [1], [0, 0, 1, 1], [], []>} : vector<16x576xbf16>, vector<576x64xbf16>, vector<16x64xf32> -> vector<16x64xf32>
    %c0_42 = arith.constant 0 : index
    %c0_43 = arith.constant 0 : index
    %35 = vector.load %arg7[%c0_42, %c0_43] : memref<1x64xf32, #tpu.memory_space<vmem>>, vector<1x64xf32>
    %36 = vector.broadcast %35 : vector<1x64xf32> to vector<16x64xf32>
    %37 = arith.addf %34, %36 : vector<16x64xf32>
    %cst_44 = arith.constant 0.000000e+00 : f32
    %38 = vector.broadcast %cst_44 : f32 to vector<16x64xf32>
    %39 = arith.maximumf %37, %38 : vector<16x64xf32>
    %40 = arith.truncf %39 : vector<16x64xf32> to vector<16x64xbf16>
    %c0_45 = arith.constant 0 : index
    %c0_46 = arith.constant 0 : index
    %41 = vector.load %arg8[%c0_45, %c0_46] : memref<64x512xbf16, #tpu.memory_space<vmem>>, vector<64x512xbf16>
    %cst_47 = arith.constant dense<0.000000e+00> : vector<16x512xf32>
    %42 = tpu.matmul %40, %41, %cst_47 {dimension_numbers = #tpu.dot_dimension_numbers<[1], [0], [0], [1], [0, 0, 1, 1], [], []>} : vector<16x64xbf16>, vector<64x512xbf16>, vector<16x512xf32> -> vector<16x512xf32>
    %c0_48 = arith.constant 0 : index
    %c0_49 = arith.constant 0 : index
    %43 = vector.load %arg9[%c0_48, %c0_49] : memref<1x512xf32, #tpu.memory_space<vmem>>, vector<1x512xf32>
    %44 = vector.broadcast %43 : vector<1x512xf32> to vector<16x512xf32>
    %45 = arith.addf %42, %44 : vector<16x512xf32>
    %cst_50 = arith.constant 0xFF800000 : f32
    %46 = vector.broadcast %cst_50 : f32 to vector<6x6x512xf32>
    %c0_51 = arith.constant 0 : index
    %c0_52 = arith.constant 0 : index
    %c0_53 = arith.constant 0 : index
    %47 = vector.load %arg12[%c0_51, %c0_52, %c0_53] : memref<6x6x512xf32, #tpu.memory_space<vmem>>, vector<6x6x512xf32>
    tpu.vector_store %arg12[%c0_51, %c0_52, %c0_53], %46 {strides = array<i32>} : memref<6x6x512xf32, #tpu.memory_space<vmem>>, vector<6x6x512xf32>,
    %48 = vector.shape_cast %45 : vector<16x512xf32> to vector<4x4x512xf32>
    %c1_54 = arith.constant 1 : index
    %c1_55 = arith.constant 1 : index
    %c0_56 = arith.constant 0 : index
    %49 = vector.load %arg12[%c1_54, %c1_55, %c0_56] : memref<6x6x512xf32, #tpu.memory_space<vmem>>, vector<4x4x512xf32>
    tpu.vector_store %arg12[%c1_54, %c1_55, %c0_56], %48 {strides = array<i32>} : memref<6x6x512xf32, #tpu.memory_space<vmem>>, vector<4x4x512xf32>,
    %c0_57 = arith.constant 0 : index
    %c0_58 = arith.constant 0 : index
    %c0_59 = arith.constant 0 : index
    %50 = vector.load %arg12[%c0_57, %c0_58, %c0_59] : memref<6x6x512xf32, #tpu.memory_space<vmem>>, vector<4x4x512xf32>
    %c0_60 = arith.constant 0 : index
    %c1_61 = arith.constant 1 : index
    %c0_62 = arith.constant 0 : index
    %51 = vector.load %arg12[%c0_60, %c1_61, %c0_62] : memref<6x6x512xf32, #tpu.memory_space<vmem>>, vector<4x4x512xf32>
    %52 = arith.maximumf %50, %51 : vector<4x4x512xf32>
    %c0_63 = arith.constant 0 : index
    %c2_64 = arith.constant 2 : index
    %c0_65 = arith.constant 0 : index
    %53 = vector.load %arg12[%c0_63, %c2_64, %c0_65] : memref<6x6x512xf32, #tpu.memory_space<vmem>>, vector<4x4x512xf32>
    %54 = arith.maximumf %52, %53 : vector<4x4x512xf32>
    %c1_66 = arith.constant 1 : index
    %c0_67 = arith.constant 0 : index
    %c0_68 = arith.constant 0 : index
    %55 = vector.load %arg12[%c1_66, %c0_67, %c0_68] : memref<6x6x512xf32, #tpu.memory_space<vmem>>, vector<4x4x512xf32>
    %56 = arith.maximumf %54, %55 : vector<4x4x512xf32>
    %c1_69 = arith.constant 1 : index
    %c1_70 = arith.constant 1 : index
    %c0_71 = arith.constant 0 : index
    %57 = vector.load %arg12[%c1_69, %c1_70, %c0_71] : memref<6x6x512xf32, #tpu.memory_space<vmem>>, vector<4x4x512xf32>
    %58 = arith.maximumf %56, %57 : vector<4x4x512xf32>
    %c1_72 = arith.constant 1 : index
    %c2_73 = arith.constant 2 : index
    %c0_74 = arith.constant 0 : index
    %59 = vector.load %arg12[%c1_72, %c2_73, %c0_74] : memref<6x6x512xf32, #tpu.memory_space<vmem>>, vector<4x4x512xf32>
    %60 = arith.maximumf %58, %59 : vector<4x4x512xf32>
    %c2_75 = arith.constant 2 : index
    %c0_76 = arith.constant 0 : index
    %c0_77 = arith.constant 0 : index
    %61 = vector.load %arg12[%c2_75, %c0_76, %c0_77] : memref<6x6x512xf32, #tpu.memory_space<vmem>>, vector<4x4x512xf32>
    %62 = arith.maximumf %60, %61 : vector<4x4x512xf32>
    %c2_78 = arith.constant 2 : index
    %c1_79 = arith.constant 1 : index
    %c0_80 = arith.constant 0 : index
    %63 = vector.load %arg12[%c2_78, %c1_79, %c0_80] : memref<6x6x512xf32, #tpu.memory_space<vmem>>, vector<4x4x512xf32>
    %64 = arith.maximumf %62, %63 : vector<4x4x512xf32>
    %c2_81 = arith.constant 2 : index
    %c2_82 = arith.constant 2 : index
    %c0_83 = arith.constant 0 : index
    %65 = vector.load %arg12[%c2_81, %c2_82, %c0_83] : memref<6x6x512xf32, #tpu.memory_space<vmem>>, vector<4x4x512xf32>
    %66 = arith.maximumf %64, %65 : vector<4x4x512xf32>
    %67 = vector.extract_strided_slice %66 {offsets = [0, 0, 0], sizes = [1, 4, 512], strides = [1, 1, 1]} : vector<4x4x512xf32> to vector<1x4x512xf32>
    %68 = vector.extract_strided_slice %66 {offsets = [2, 0, 0], sizes = [1, 4, 512], strides = [1, 1, 1]} : vector<4x4x512xf32> to vector<1x4x512xf32>
    %69 = tpu.concatenate %67, %68 in 0 : vector<1x4x512xf32>, vector<1x4x512xf32> -> vector<2x4x512xf32>
    %70 = vector.extract_strided_slice %69 {offsets = [0, 0, 0], sizes = [2, 1, 512], strides = [1, 1, 1]} : vector<2x4x512xf32> to vector<2x1x512xf32>
    %71 = vector.extract_strided_slice %69 {offsets = [0, 2, 0], sizes = [2, 1, 512], strides = [1, 1, 1]} : vector<2x4x512xf32> to vector<2x1x512xf32>
    %72 = tpu.concatenate %70, %71 in 1 : vector<2x1x512xf32>, vector<2x1x512xf32> -> vector<2x2x512xf32>
    %73 = vector.shape_cast %72 : vector<2x2x512xf32> to vector<4x512xf32>
    %74 = vector.shape_cast %1 : vector<16x256xbf16> to vector<4x4x256xbf16>
    %75 = vector.extract_strided_slice %74 {offsets = [0, 0, 0], sizes = [1, 4, 256], strides = [1, 1, 1]} : vector<4x4x256xbf16> to vector<1x4x256xbf16>
    %76 = vector.extract_strided_slice %74 {offsets = [2, 0, 0], sizes = [1, 4, 256], strides = [1, 1, 1]} : vector<4x4x256xbf16> to vector<1x4x256xbf16>
    %77 = tpu.concatenate %75, %76 in 0 : vector<1x4x256xbf16>, vector<1x4x256xbf16> -> vector<2x4x256xbf16>
    %78 = vector.extract_strided_slice %77 {offsets = [0, 0, 0], sizes = [2, 1, 256], strides = [1, 1, 1]} : vector<2x4x256xbf16> to vector<2x1x256xbf16>
    %79 = vector.extract_strided_slice %77 {offsets = [0, 2, 0], sizes = [2, 1, 256], strides = [1, 1, 1]} : vector<2x4x256xbf16> to vector<2x1x256xbf16>
    %80 = tpu.concatenate %78, %79 in 1 : vector<2x1x256xbf16>, vector<2x1x256xbf16> -> vector<2x2x256xbf16>
    %81 = vector.shape_cast %80 : vector<2x2x256xbf16> to vector<4x256xbf16>
    %c0_84 = arith.constant 0 : index
    %c0_85 = arith.constant 0 : index
    %82 = vector.load %arg4[%c0_84, %c0_85] : memref<256x512xbf16, #tpu.memory_space<vmem>>, vector<256x512xbf16>
    %cst_86 = arith.constant dense<0.000000e+00> : vector<4x512xf32>
    %83 = tpu.matmul %81, %82, %cst_86 {dimension_numbers = #tpu.dot_dimension_numbers<[1], [0], [0], [1], [0, 0, 1, 1], [], []>} : vector<4x256xbf16>, vector<256x512xbf16>, vector<4x512xf32> -> vector<4x512xf32>
    %c0_87 = arith.constant 0 : index
    %c0_88 = arith.constant 0 : index
    %84 = vector.load %arg5[%c0_87, %c0_88] : memref<1x512xf32, #tpu.memory_space<vmem>>, vector<1x512xf32>
    %85 = vector.broadcast %84 : vector<1x512xf32> to vector<4x512xf32>
    %86 = arith.addf %83, %85 : vector<4x512xf32>
    %87 = arith.addf %73, %86 : vector<4x512xf32>
    %cst_89 = arith.constant 0.000000e+00 : f32
    %88 = vector.broadcast %cst_89 : f32 to vector<4x512xf32>
    %89 = arith.maximumf %87, %88 : vector<4x512xf32>
    %90 = arith.truncf %89 : vector<4x512xf32> to vector<4x512xbf16>
    %c0_90 = arith.constant 0 : index
    %c0_91 = arith.constant 0 : index
    %c0_92 = arith.constant 0 : index
    %91 = vector.load %arg10[%c0_90, %c0_91, %c0_92] : memref<1x4x512xbf16, #tpu.memory_space<vmem>>, vector<1x4x512xbf16>
    %92 = vector.shape_cast %91 : vector<1x4x512xbf16> to vector<4x512xbf16>
    %93 = vector.shape_cast %90 : vector<4x512xbf16> to vector<1x4x512xbf16>
    tpu.vector_store %arg10[%c0_90, %c0_91, %c0_92], %93 {strides = array<i32>} : memref<1x4x512xbf16, #tpu.memory_space<vmem>>, vector<1x4x512xbf16>,
    return
  }
  func.func @transform_0(%arg0: i32) -> (i32, i32, i32) {
    %c0_i32 = arith.constant 0 : i32
    %c0_i32_0 = arith.constant 0 : i32
    %c0_i32_1 = arith.constant 0 : i32
    return %arg0, %c0_i32, %c0_i32_0 : i32, i32, i32
  }
  func.func @transform_1(%arg0: i32) -> (i32, i32) {
    %c0_i32 = arith.constant 0 : i32
    %c0_i32_0 = arith.constant 0 : i32
    %c0_i32_1 = arith.constant 0 : i32
    return %c0_i32, %c0_i32_0 : i32, i32
  }
  func.func @transform_2(%arg0: i32) -> (i32, i32) {
    %c0_i32 = arith.constant 0 : i32
    %c0_i32_0 = arith.constant 0 : i32
    %c0_i32_1 = arith.constant 0 : i32
    return %c0_i32, %c0_i32_0 : i32, i32
  }
  func.func @transform_3(%arg0: i32) -> (i32, i32) {
    %c0_i32 = arith.constant 0 : i32
    %c0_i32_0 = arith.constant 0 : i32
    %c0_i32_1 = arith.constant 0 : i32
    return %c0_i32, %c0_i32_0 : i32, i32
  }
  func.func @transform_4(%arg0: i32) -> (i32, i32) {
    %c0_i32 = arith.constant 0 : i32
    %c0_i32_0 = arith.constant 0 : i32
    %c0_i32_1 = arith.constant 0 : i32
    return %c0_i32, %c0_i32_0 : i32, i32
  }
  func.func @transform_5(%arg0: i32) -> (i32, i32) {
    %c0_i32 = arith.constant 0 : i32
    %c0_i32_0 = arith.constant 0 : i32
    %c0_i32_1 = arith.constant 0 : i32
    return %c0_i32, %c0_i32_0 : i32, i32
  }
  func.func @transform_6(%arg0: i32) -> (i32, i32) {
    %c0_i32 = arith.constant 0 : i32
    %c0_i32_0 = arith.constant 0 : i32
    %c0_i32_1 = arith.constant 0 : i32
    return %c0_i32, %c0_i32_0 : i32, i32
  }
  func.func @transform_7(%arg0: i32) -> (i32, i32) {
    %c0_i32 = arith.constant 0 : i32
    %c0_i32_0 = arith.constant 0 : i32
    %c0_i32_1 = arith.constant 0 : i32
    return %c0_i32, %c0_i32_0 : i32, i32
  }
  func.func @transform_8(%arg0: i32) -> (i32, i32) {
    %c0_i32 = arith.constant 0 : i32
    %c0_i32_0 = arith.constant 0 : i32
    %c0_i32_1 = arith.constant 0 : i32
    return %c0_i32, %c0_i32_0 : i32, i32
  }
  func.func @transform_9(%arg0: i32) -> (i32, i32, i32) {
    %c0_i32 = arith.constant 0 : i32
    %c0_i32_0 = arith.constant 0 : i32
    %c0_i32_1 = arith.constant 0 : i32
    return %arg0, %c0_i32, %c0_i32_0 : i32, i32, i32
  }
}

module attributes {stable_mosaic.version = 11 : i64} {
  func.func @_head_kernel(%arg0: memref<2x4x512xbf16, #tpu.memory_space<vmem>>, %arg1: memref<512x128xbf16, #tpu.memory_space<vmem>>, %arg2: memref<1x128xf32, #tpu.memory_space<vmem>>, %arg3: memref<2x128xf32, #tpu.memory_space<vmem>>) attributes {dimension_semantics = [], scalar_prefetch = 0 : i64, scratch_operands = 0 : i64, tpu.core_type = #tpu.core_type<tc>} {
    %c0 = arith.constant 0 : index
    %c0_0 = arith.constant 0 : index
    %c0_1 = arith.constant 0 : index
    %0 = vector.load %arg0[%c0, %c0_0, %c0_1] : memref<2x4x512xbf16, #tpu.memory_space<vmem>>, vector<2x4x512xbf16>
    %1 = arith.extf %0 : vector<2x4x512xbf16> to vector<2x4x512xf32>
    %cst = arith.constant dense<0.000000e+00> : vector<2x512xf32>
    %2 = vector.multi_reduction <add>, %1, %cst [1] : vector<2x4x512xf32> to vector<2x512xf32>
    %cst_2 = arith.constant 4.000000e+00 : f32
    %3 = vector.broadcast %cst_2 : f32 to vector<2x512xf32>
    %4 = arith.divf %2, %3 : vector<2x512xf32>
    %5 = arith.truncf %4 : vector<2x512xf32> to vector<2x512xbf16>
    %c0_3 = arith.constant 0 : index
    %c0_4 = arith.constant 0 : index
    %6 = vector.load %arg1[%c0_3, %c0_4] : memref<512x128xbf16, #tpu.memory_space<vmem>>, vector<512x128xbf16>
    %cst_5 = arith.constant dense<0.000000e+00> : vector<2x128xf32>
    %7 = tpu.matmul %5, %6, %cst_5 {dimension_numbers = #tpu.dot_dimension_numbers<[1], [0], [0], [1], [0, 0, 1, 1], [], []>} : vector<2x512xbf16>, vector<512x128xbf16>, vector<2x128xf32> -> vector<2x128xf32>
    %c0_6 = arith.constant 0 : index
    %c0_7 = arith.constant 0 : index
    %8 = vector.load %arg2[%c0_6, %c0_7] : memref<1x128xf32, #tpu.memory_space<vmem>>, vector<1x128xf32>
    %9 = vector.broadcast %8 : vector<1x128xf32> to vector<2x128xf32>
    %10 = arith.addf %7, %9 : vector<2x128xf32>
    %c0_8 = arith.constant 0 : index
    %c0_9 = arith.constant 0 : index
    %11 = vector.load %arg3[%c0_8, %c0_9] : memref<2x128xf32, #tpu.memory_space<vmem>>, vector<2x128xf32>
    tpu.vector_store %arg3[%c0_8, %c0_9], %10 {strides = array<i32>} : memref<2x128xf32, #tpu.memory_space<vmem>>, vector<2x128xf32>,
    return
  }
}

</mosaic_0001>

<llo_original>
// kernel: skipnet_forward.6
$region0: #{skipnet_forward.6}
  #allocation0 [shape = 'u32[]', space=smem, size = 0x4, offset = 0x4, fixed_abs, tag = 'smem constant byte address 0x4 - core index']
  #allocation1 [shape = 'u32[144,128]{1,0:T(1,128)}', space=vmem, size = 0x12000, scoped, tag = 'internal scratch']
  %s0 = inlined_call_operand.vmem [shape: bf16[128,147], index: 0, kind: input, shape index: {}]
  %s1 = inlined_call_operand.vmem [shape: bf16[147,128], index: 1, kind: input, shape index: {}]
  %s2 = inlined_call_operand.vmem [shape: f32[1,128], index: 2, kind: input, shape index: {}]
  %s3 = inlined_call_operand.vmem [shape: bf16[128,128], index: 3, kind: output, shape index: {}]
  %s4 = sld [smem:[#allocation0]]
  $region45: #{skipnet_forward.6} parent=0
    _
  %s6 = ssub.s32 1, %s4
  %s7 = scalar_select 0, %s6, %s4
  loop: start=0, step=1, limit=4
  $region2: #{skipnet_forward.6} parent=0 // loop_pre_header
    _
  $region3: #{skipnet_forward.6} parent=0 // loop_header
    %s9 = sphi 0, %s13
    %p10 = scmp.ge.s32.totalorder %s9, 4
    %s19 = sphi 0, %s21
    %s22 = sphi 0, %s19
    %s23 = sphi 0, %s22
    %s39 = sphi 0, %s23
    %s43 = sphi 0, %s43
    %s45 = sphi 0, %s43
    %s46 = sphi 0, %s45
    %s60 = sphi 0, %s46
    %s64 = sphi 0, %s64
    %s66 = sphi 0, %s64
    %s67 = sphi 0, %s66
    %s81 = sphi 0, %s67
    %s87 = sphi 0, %s89
    %s90 = sphi 0, %s87
    %s91 = sphi 0, %s90
    %s107 = sphi 0, %s91
  $region4: #{skipnet_forward.6} parent=0 // loop_header_branch
    %12 = sbr.rel (%p10) target = $region8
  $region5: #{skipnet_forward.6} parent=0 // loop_body
    %s14 = ssub.s32 %s9, 1
    %s15 = ssub.s32 %s9, 2
    %s16 = sadd.s32 %s9, 1
    %s17 = ssub.s32 %s9, %s16
    %p18 = scmp.eq.s32.totalorder %s17, 0
    %s20 = sadd.s32 %s19, 1
    %s21 = scalar_select %p18, %s19, %s20
    %p24 = pneg %p18
    %p25 = scmp.eq.s32.totalorder %s9, 1
    %p26 = por %p24, %p25
    %p27 = scmp.ne.s32.totalorder %s19, %s22
    %p28 = scmp.eq.s32.totalorder %s9, 0
    %p29 = por %p27, %p28
    %p30 = scmp.ne.s32.totalorder %s19, %s22
    %p31 = scmp.eq.s32.totalorder %s14, 1
    %p32 = por %p30, %p31
    %p33 = scmp.ne.s32.totalorder %s22, %s23
    %p34 = scmp.eq.s32.totalorder %s14, 0
    %p35 = por %p33, %p34
    %p36 = scmp.ne.s32.totalorder %s22, %s23
    %p37 = scmp.eq.s32.totalorder %s15, 1
    %p38 = por %p36, %p37
    %p40 = scmp.ne.s32.totalorder %s23, %s39
    %p41 = scmp.eq.s32.totalorder %s15, 0
    %p42 = por %p40, %p41
    %s44 = sadd.s32 %s43, 1
    %p47 = scmp.eq.s32.totalorder %s9, 1
    %p48 = scmp.ne.s32.totalorder %s43, %s45
    %p49 = scmp.eq.s32.totalorder %s9, 0
    %p50 = por %p48, %p49
    %p51 = scmp.ne.s32.totalorder %s43, %s45
    %p52 = scmp.eq.s32.totalorder %s14, 1
    %p53 = por %p51, %p52
    %p54 = scmp.ne.s32.totalorder %s45, %s46
    %p55 = scmp.eq.s32.totalorder %s14, 0
    %p56 = por %p54, %p55
    %p57 = scmp.ne.s32.totalorder %s45, %s46
    %p58 = scmp.eq.s32.totalorder %s15, 1
    %p59 = por %p57, %p58
    %p61 = scmp.ne.s32.totalorder %s46, %s60
    %p62 = scmp.eq.s32.totalorder %s15, 0
    %p63 = por %p61, %p62
    %s65 = sadd.s32 %s64, 1
    %p68 = scmp.eq.s32.totalorder %s9, 1
    %p69 = scmp.ne.s32.totalorder %s64, %s66
    %p70 = scmp.eq.s32.totalorder %s9, 0
    %p71 = por %p69, %p70
    %p72 = scmp.ne.s32.totalorder %s64, %s66
    %p73 = scmp.eq.s32.totalorder %s14, 1
    %p74 = por %p72, %p73
    %p75 = scmp.ne.s32.totalorder %s66, %s67
    %p76 = scmp.eq.s32.totalorder %s14, 0
    %p77 = por %p75, %p76
    %p78 = scmp.ne.s32.totalorder %s66, %s67
    %p79 = scmp.eq.s32.totalorder %s15, 1
    %p80 = por %p78, %p79
    %p82 = scmp.ne.s32.totalorder %s67, %s81
    %p83 = scmp.eq.s32.totalorder %s15, 0
    %p84 = por %p82, %p83
    %s85 = ssub.s32 %s9, %s16
    %p86 = scmp.eq.s32.totalorder %s85, 0
    %s88 = sadd.s32 %s87, 1
    %s89 = scalar_select %p86, %s87, %s88
    %p92 = pneg %p86
    %p93 = scmp.eq.s32.totalorder %s9, 1
    %p94 = por %p92, %p93
    %p95 = scmp.ne.s32.totalorder %s87, %s90
    %p96 = scmp.eq.s32.totalorder %s9, 0
    %p97 = por %p95, %p96
    %p98 = scmp.ne.s32.totalorder %s87, %s90
    %p99 = scmp.eq.s32.totalorder %s14, 1
    %p100 = por %p98, %p99
    %p101 = scmp.ne.s32.totalorder %s90, %s91
    %p102 = scmp.eq.s32.totalorder %s14, 0
    %p103 = por %p101, %p102
    %p104 = scmp.ne.s32.totalorder %s90, %s91
    %p105 = scmp.eq.s32.totalorder %s15, 1
    %p106 = por %p104, %p105
    %p108 = scmp.ne.s32.totalorder %s91, %s107
    %p109 = scmp.eq.s32.totalorder %s15, 0
    %p110 = por %p108, %p109
    %p111 = scmp.le.s32.totalorder 1, %s9
    %p112 = scmp.lt.s32.totalorder %s9, 3
    %p113 = pnand %p111, %p112
    %p114 = pneg %p113
    // Predicated region
    $region9: #{skipnet_forward.6} parent=5 // pred_check
      _
    $region10: #{skipnet_forward.6} parent=5 // pred_check_branch
      %116 = sbr.rel (%p113) target = $region12
    $region11: #{skipnet_forward.6} parent=5 // pred_region
      %s117 = ssub.s32 %s9, 1
      // Predicated region
      $region13: #{skipnet_forward.6} parent=11 // pred_check
        %p118 = pneg %p56
      $region14: #{skipnet_forward.6} parent=11 // pred_check_branch
        %120 = sbr.rel (%p118) target = $region16
      $region15: #{skipnet_forward.6} parent=11 // pred_region
        _
      $region16: #{skipnet_forward.6} parent=11 // pred_fallthru
        _
      // Predicated region
      $region17: #{skipnet_forward.6} parent=11 // pred_check
        %p121 = pneg %p77
      $region18: #{skipnet_forward.6} parent=11 // pred_check_branch
        %123 = sbr.rel (%p121) target = $region20
      $region19: #{skipnet_forward.6} parent=11 // pred_region
        _
      $region20: #{skipnet_forward.6} parent=11 // pred_fallthru
        _
    $region12: #{skipnet_forward.6} parent=5 // pred_fallthru
      _
    %p124 = scmp.lt.s32.totalorder %s9, 2
    // Predicated region
    $region21: #{skipnet_forward.6} parent=5 // pred_check
      %p125 = pneg %p124
    $region22: #{skipnet_forward.6} parent=5 // pred_check_branch
      %127 = sbr.rel (%p125) target = $region24
    $region23: #{skipnet_forward.6} parent=5 // pred_region
      // Predicated region
      $region25: #{skipnet_forward.6} parent=23 // pred_check
        %p128 = pneg %p29
      $region26: #{skipnet_forward.6} parent=23 // pred_check_branch
        %130 = sbr.rel (%p128) target = $region28
      $region27: #{skipnet_forward.6} parent=23 // pred_region
        %s131 = smul.u32 8, %s9
        %p132 = scmp.lt.s32.totalorder %s131, 15
        %s133 = scalar_select %p132, %s131, 15
        %s134 = smul.addr %s133, 2
        %s135 = smul.addr %s134, 4
        %s136 = scalar_lea.vmem %s0, %s135
        %s137 = smul.u32 8, %s9
      $region28: #{skipnet_forward.6} parent=23 // pred_fallthru
        _
    $region24: #{skipnet_forward.6} parent=5 // pred_fallthru
      _
    %p138 = scmp.le.s32.totalorder 1, %s9
    %p139 = scmp.lt.s32.totalorder %s9, 3
    %p140 = pnand %p138, %p139
    %p141 = pneg %p140
    // Predicated region
    $region29: #{skipnet_forward.6} parent=5 // pred_check
      _
    $region30: #{skipnet_forward.6} parent=5 // pred_check_branch
      %143 = sbr.rel (%p140) target = $region32
    $region31: #{skipnet_forward.6} parent=5 // pred_region
      %s144 = ssub.s32 %s9, 1
      %s145 = smul.u32 8, %s14
      %p146 = scmp.lt.s32.totalorder %s145, 15
      %s147 = scalar_select %p146, %s145, 15
      %s148 = smul.addr %s147, 2
      %s149 = smul.addr %s148, 4
      %s150 = scalar_lea.vmem %s0, %s149
      %p151 = pneg %p35
      %p152 = pneg %p32
      %p153 = pneg %p56
      %p154 = pneg %p53
      %p155 = pneg %p77
      %p156 = pneg %p74
      %p157 = pneg %p103
      %p158 = pneg %p100
      %s159 = smul.u32 8, %s14
      %p160 = scmp.lt.s32.totalorder %s159, 15
      %s161 = scalar_select %p160, %s159, 15
      %s162 = smul.addr %s161, 4
      %s163 = scalar_lea.vmem %s3, %s162
      %s164 = smul.u32 8, %s14
      %p165 = scmp.lt.s32.totalorder %s164, 15
      %s166 = scalar_select %p165, %s164, 15
      %s167 = smul.addr %s166, 2
      %s168 = smul.addr %s167, 4
      %s169 = scalar_lea.vmem %s0, %s168
      %s170 = smul.u32 8, %s14
      %s171 = smul.u32 8, %s14
      %p172 = scmp.lt.s32.totalorder %s171, 15
      %s173 = scalar_select %p172, %s171, 15
      %s174 = smul.addr %s173, 4
      %s175 = scalar_lea.vmem %s3, %s174
      %s176 = smul.u32 8, %s14
      %v178 = vld [vmem:[%s169] sm:$0xff]
      %v179 = vld [vmem:[%s169 + $0x8] sm:$0xff]
      %v180 = vld [vmem:[%s169 + $0x10] sm:$0xff]
      %v181 = vld [vmem:[%s169 + $0x18] sm:$0xff]
      %v182 = vld [vmem:[%s169 + $0x20] sm:$0xff]
      %v183 = vld [vmem:[%s169 + $0x28] sm:$0xff]
      %v184 = vld [vmem:[%s169 + $0x30] sm:$0xff]
      %v185 = vld [vmem:[%s169 + $0x38] sm:$0xff]
      %v186 = vld [vmem:[%s1] sm:$0xf]
      %v187 = vld [vmem:[%s1 + $0x4] sm:$0xf]
      %v188 = vld [vmem:[%s1 + $0x8] sm:$0xf]
      %v189 = vld [vmem:[%s1 + $0xc] sm:$0xf]
      %v190 = vld [vmem:[%s1 + $0x10] sm:$0xf]
      %v191 = vld [vmem:[%s1 + $0x14] sm:$0xf]
      %v192 = vld [vmem:[%s1 + $0x18] sm:$0xf]
      %v193 = vld [vmem:[%s1 + $0x1c] sm:$0xf]
      %v194 = vld [vmem:[%s1 + $0x20] sm:$0xf]
      %v195 = vld [vmem:[%s1 + $0x24] sm:$0xf]
      %v196 = vld [vmem:[%s1 + $0x28] sm:$0xf]
      %v197 = vld [vmem:[%s1 + $0x2c] sm:$0xf]
      %v198 = vld [vmem:[%s1 + $0x30] sm:$0xf]
      %v199 = vld [vmem:[%s1 + $0x34] sm:$0xf]
      %v200 = vld [vmem:[%s1 + $0x38] sm:$0xf]
      %v201 = vld [vmem:[%s1 + $0x3c] sm:$0xf]
      %v202 = vld [vmem:[%s1 + $0x40] sm:$0xf]
      %v203 = vld [vmem:[%s1 + $0x44] sm:$0xf]
      %v204 = vld [vmem:[%s1 + $0x48] sm:$0x3]
      %v205 = vld [vmem:[%s2] sm:$0x1]
      %v207 = vlaneseq
      %v208 = vshrl.u32 %v207, 7
      %v209 = vsub.s32 0, %v208
      %v210 = vrot.slane %v205, %v209
      %v220 = vunpack.c.l.b16 %v178
      %v221 = vunpack.c.h.b16 %v178
      %v222 = vunpack.c.l.b16 %v179
      %v223 = vunpack.c.h.b16 %v179
      %v224 = vunpack.c.l.b16 %v180
      %v225 = vunpack.c.h.b16 %v180
      %v226 = vunpack.c.l.b16 %v181
      %v227 = vunpack.c.h.b16 %v181
      %v228 = vunpack.c.l.b16 %v182
      %v229 = vunpack.c.h.b16 %v182
      %v230 = vunpack.c.l.b16 %v183
      %v231 = vunpack.c.h.b16 %v183
      %v232 = vunpack.c.l.b16 %v184
      %v233 = vunpack.c.h.b16 %v184
      %v234 = vunpack.c.l.b16 %v185
      %v235 = vunpack.c.h.b16 %v185
      %v236 = vpack.c.b16 %v222, %v220
      %v237 = vpack.c.b16 %v223, %v221
      %v238 = vpack.c.b16 %v226, %v224
      %v239 = vpack.c.b16 %v227, %v225
      %v240 = vpack.c.b16 %v230, %v228
      %v241 = vpack.c.b16 %v231, %v229
      %v242 = vpack.c.b16 %v234, %v232
      %v243 = vpack.c.b16 %v235, %v233
      %v267 = vunpack.c.l.b16 %v186
      %v268 = vunpack.c.l.b16 %v187
      %v269 = vunpack.c.l.b16 %v188
      %v270 = vunpack.c.l.b16 %v189
      %v271 = vunpack.c.l.b16 %v190
      %v272 = vunpack.c.l.b16 %v191
      %v273 = vunpack.c.l.b16 %v192
      %v274 = vunpack.c.l.b16 %v193
      %v275 = vunpack.c.l.b16 %v194
      %v276 = vunpack.c.l.b16 %v195
      %v277 = vunpack.c.l.b16 %v196
      %v278 = vunpack.c.l.b16 %v197
      %v279 = vunpack.c.l.b16 %v198
      %v280 = vunpack.c.l.b16 %v199
      %v281 = vunpack.c.l.b16 %v200
      %v282 = vunpack.c.l.b16 %v201
      %v283 = vunpack.c.l.b16 %v202
      %v284 = vunpack.c.l.b16 %v203
      %v285 = vunpack.c.l.b16 %v204
      %v286 = vpack.c.b16 %v268, %v267
      %v287 = vpack.c.b16 %v270, %v269
      %v288 = vpack.c.b16 %v272, %v271
      %v289 = vpack.c.b16 %v274, %v273
      %v290 = vpack.c.b16 %v276, %v275
      %v291 = vpack.c.b16 %v278, %v277
      %v292 = vpack.c.b16 %v280, %v279
      %v293 = vpack.c.b16 %v282, %v281
      %v294 = vpack.c.b16 %v284, %v283
      %v295 = vpack.c.b16 %v285, %v285
      %vm305 = vcmask 154624
      %v307 = vsel %vm305, %v237, 0
      %v310 = vsel %vm305, %v239, 0
      %v313 = vsel %vm305, %v241, 0
      %v316 = vsel %vm305, %v243, 0
      %vm318 = vcmask 1040384
      %vm319 = vcmask 1041408
      %v320 = vsel %vm318, 4294967295, 65535
      %v321 = vsel %vm319, %v320, 0
      %v323 = vand.u32 %v295, %v321
      %325 = vmatprep.subr.bf16.mxu0 0
      %326 = vmatpush1.bf16.msra.mxu0 %v286
      %327 = vmatprep.subr.bf16.mxu0 0
      %328 = vmatpush1.bf16.msra.mxu0 %v287
      %329 = vmatprep.subr.bf16.mxu0 0
      %330 = vmatpush1.bf16.msra.mxu0 %v288
      %331 = vmatprep.subr.bf16.mxu0 0
      %332 = vmatpush1.bf16.msra.mxu0 %v289
      %333 = vmatprep.subr.bf16.mxu0 0
      %334 = vmatpush1.bf16.msra.mxu0 %v290
      %335 = vmatprep.subr.bf16.mxu0 0
      %336 = vmatpush1.bf16.msra.mxu0 %v291
      %337 = vmatprep.subr.bf16.mxu0 0
      %338 = vmatpush1.bf16.msra.mxu0 %v292
      %339 = vmatprep.subr.bf16.mxu0 0
      %340 = vmatpush1.bf16.msra.mxu0 %v293
      %341 = vmatprep.subr.bf16.mxu0 0
      %342 = vmatpush1.bf16.msra.mxu0 %v294
      %343 = vmatprep.subr.bf16.mxu0 0
      %344 = vmatpush1.bf16.msra.mxu0 %v323
      %345 = vmatprep.subr.bf16.mxu0 0
      %346 = vmatpush1.bf16.msra.mxu0 0
      %347 = vmatprep.subr.bf16.mxu0 0
      %348 = vmatpush1.bf16.msra.mxu0 0
      %349 = vmatprep.subr.bf16.mxu0 0
      %350 = vmatpush1.bf16.msra.mxu0 0
      %351 = vmatprep.subr.bf16.mxu0 0
      %352 = vmatpush1.bf16.msra.mxu0 0
      %353 = vmatprep.subr.bf16.mxu0 0
      %354 = vmatpush1.bf16.msra.mxu0 0
      %355 = vmatprep.subr.bf16.mxu0 0
      %356 = vmatpush1.bf16.msra.mxu0 0
      %357 = vmatprep.mubr.bf16.mxu0 %v307
      %358 = vmatmul.mubr.bf16.gmra.mrb[0].mxu0 %v236
      %v359 = vpop.f32.mrb[0].mxu0
      %v360 = vadd.f32 %v210, %v359
      %v361 = vpop.f32.mrb[0].mxu0
      %v362 = vpop.f32.mrb[0].mxu0
      %v363 = vadd.f32 %v210, %v362
      %v364 = vpop.f32.mrb[0].mxu0
      %365 = vmatprep.mubr.bf16.mxu0 %v310
      %366 = vmatmul.mubr.bf16.gmra.mrb[0].mxu0 %v238
      %v367 = vpop.f32.mrb[0].mxu0
      %v368 = vadd.f32 %v210, %v367
      %v369 = vpop.f32.mrb[0].mxu0
      %v370 = vpop.f32.mrb[0].mxu0
      %v371 = vadd.f32 %v210, %v370
      %v372 = vpop.f32.mrb[0].mxu0
      %373 = vmatprep.mubr.bf16.mxu0 %v313
      %374 = vmatmul.mubr.bf16.gmra.mrb[0].mxu0 %v240
      %v375 = vpop.f32.mrb[0].mxu0
      %v376 = vadd.f32 %v210, %v375
      %v377 = vpop.f32.mrb[0].mxu0
      %v378 = vpop.f32.mrb[0].mxu0
      %v379 = vadd.f32 %v210, %v378
      %v380 = vpop.f32.mrb[0].mxu0
      %381 = vmatprep.mubr.bf16.mxu0 %v316
      %382 = vmatmul.mubr.bf16.gmra.mrb[0].mxu0 %v242
      %v383 = vpop.f32.mrb[0].mxu0
      %v384 = vadd.f32 %v210, %v383
      %v385 = vpop.f32.mrb[0].mxu0
      %v386 = vpop.f32.mrb[0].mxu0
      %v387 = vadd.f32 %v210, %v386
      %v388 = vpop.f32.mrb[0].mxu0
      %389 = vdwg.mxu0
      %v390 = vmax.f32 %v360, 0.0
      %v391 = vmax.f32 %v363, 0.0
      %v392 = vmax.f32 %v368, 0.0
      %v393 = vmax.f32 %v371, 0.0
      %v394 = vmax.f32 %v376, 0.0
      %v395 = vmax.f32 %v379, 0.0
      %v396 = vmax.f32 %v384, 0.0
      %v397 = vmax.f32 %v387, 0.0
      %v398 = vpack.c.bf16 %v391, %v390
      %v399 = vpack.c.bf16 %v393, %v392
      %v400 = vpack.c.bf16 %v395, %v394
      %v401 = vpack.c.bf16 %v397, %v396
      %v406 = vunpack.c.l.b16 %v398
      %v407 = vunpack.c.h.b16 %v398
      %v408 = vunpack.c.l.b16 %v399
      %v409 = vunpack.c.h.b16 %v399
      %v410 = vunpack.c.l.b16 %v400
      %v411 = vunpack.c.h.b16 %v400
      %v412 = vunpack.c.l.b16 %v401
      %v413 = vunpack.c.h.b16 %v401
      %v414 = vpack.c.b16 %v406, %v406
      %v415 = vpack.c.b16 %v407, %v407
      %v416 = vpack.c.b16 %v408, %v408
      %v417 = vpack.c.b16 %v409, %v409
      %v418 = vpack.c.b16 %v410, %v410
      %v419 = vpack.c.b16 %v411, %v411
      %v420 = vpack.c.b16 %v412, %v412
      %v421 = vpack.c.b16 %v413, %v413
      %430 = vst [vmem:[%s175] sm:$0xf] %v414
      %431 = vst [vmem:[%s175 + $0x4] sm:$0xf] %v415
      %432 = vst [vmem:[%s175 + $0x8] sm:$0xf] %v416
      %433 = vst [vmem:[%s175 + $0xc] sm:$0xf] %v417
      %434 = vst [vmem:[%s175 + $0x10] sm:$0xf] %v418
      %435 = vst [vmem:[%s175 + $0x14] sm:$0xf] %v419
      %436 = vst [vmem:[%s175 + $0x18] sm:$0xf] %v420
      %437 = vst [vmem:[%s175 + $0x1c] sm:$0xf] %v421
      %s438 = smul.u32 8, %s14
      %p439 = scmp.lt.s32.totalorder %s438, 15
      %s440 = scalar_select %p439, %s438, 15
      %s441 = smul.addr %s440, 4
      %s442 = scalar_lea.vmem %s3, %s441
      // Predicated region
      $region33: #{skipnet_forward.6} parent=31 // pred_check
        %p443 = pneg %p100
      $region34: #{skipnet_forward.6} parent=31 // pred_check_branch
        %445 = sbr.rel (%p443) target = $region36
      $region35: #{skipnet_forward.6} parent=31 // pred_region
        %s446 = smul.u32 8, %s14
      $region36: #{skipnet_forward.6} parent=31 // pred_fallthru
        _
    $region32: #{skipnet_forward.6} parent=5 // pred_fallthru
      _
    %p447 = scmp.le.s32.totalorder 2, %s9
    // Predicated region
    $region37: #{skipnet_forward.6} parent=5 // pred_check
      %p448 = pneg %p447
    $region38: #{skipnet_forward.6} parent=5 // pred_check_branch
      %450 = sbr.rel (%p448) target = $region40
    $region39: #{skipnet_forward.6} parent=5 // pred_region
      %s451 = ssub.s32 %s9, 2
      // Predicated region
      $region41: #{skipnet_forward.6} parent=39 // pred_check
        %p452 = pneg %p106
      $region42: #{skipnet_forward.6} parent=39 // pred_check_branch
        %454 = sbr.rel (%p452) target = $region44
      $region43: #{skipnet_forward.6} parent=39 // pred_region
        %s455 = smul.u32 8, %s15
        %p456 = scmp.lt.s32.totalorder %s455, 15
        %s457 = scalar_select %p456, %s455, 15
        %s458 = smul.addr %s457, 4
        %s459 = scalar_lea.vmem %s3, %s458
      $region44: #{skipnet_forward.6} parent=39 // pred_fallthru
        _
    $region40: #{skipnet_forward.6} parent=5 // pred_fallthru
      _
  $region6: #{skipnet_forward.6} parent=0 // loop_footer
    %s13 = sadd.s32 1, %s9
  $region7: #{skipnet_forward.6} parent=0 // loop_footer_branch
    %8 = sbr.rel target = $region3
  $region8: #{skipnet_forward.6} parent=0 // loop_exit
    _

// kernel: skipnet_forward.8
$region0: #{skipnet_forward.8}
  #allocation0 [shape = 'u32[]', space=smem, size = 0x4, offset = 0x4, fixed_abs, tag = 'smem constant byte address 0x4 - core index']
  #allocation1 [shape = 'u32[144,128]{1,0:T(1,128)}', space=vmem, size = 0x12000, scoped, tag = 'internal scratch']
  #allocation2 [shape = 'bf16[6,6,64]{2,1,0:T(8,128)(2,1)}', space=vmem, size = 0x3000, scoped, tag = 'scratch operand']
  %s0 = inlined_call_operand.vmem [shape: bf16[2,16,128], index: 0, kind: input, shape index: {}]
  %s1 = inlined_call_operand.vmem [shape: bf16[128,64], index: 1, kind: input, shape index: {}]
  %s2 = inlined_call_operand.vmem [shape: f32[1,64], index: 2, kind: input, shape index: {}]
  %s3 = inlined_call_operand.vmem [shape: bf16[128,128], index: 3, kind: input, shape index: {}]
  %s4 = inlined_call_operand.vmem [shape: f32[1,128], index: 4, kind: input, shape index: {}]
  %s5 = inlined_call_operand.vmem [shape: bf16[576,64], index: 5, kind: input, shape index: {}]
  %s6 = inlined_call_operand.vmem [shape: f32[1,64], index: 6, kind: input, shape index: {}]
  %s7 = inlined_call_operand.vmem [shape: bf16[64,128], index: 7, kind: input, shape index: {}]
  %s8 = inlined_call_operand.vmem [shape: f32[1,128], index: 8, kind: input, shape index: {}]
  %s9 = inlined_call_operand.vmem [shape: bf16[2,16,128], index: 9, kind: output, shape index: {}]
  %s10 = sld [smem:[#allocation0]]
  $region69: #{skipnet_forward.8} parent=0
    _
  %s12 = ssub.s32 1, %s10
  %s13 = scalar_select 0, %s12, %s10
  loop: start=0, step=1, limit=4
  $region2: #{skipnet_forward.8} parent=0 // loop_pre_header
    _
  $region3: #{skipnet_forward.8} parent=0 // loop_header
    %s15 = sphi 0, %s19
    %p16 = scmp.ge.s32.totalorder %s15, 4
    %s25 = sphi 0, %s27
    %s28 = sphi 0, %s25
    %s29 = sphi 0, %s28
    %s45 = sphi 0, %s29
    %s49 = sphi 0, %s49
    %s51 = sphi 0, %s49
    %s52 = sphi 0, %s51
    %s66 = sphi 0, %s52
    %s70 = sphi 0, %s70
    %s72 = sphi 0, %s70
    %s73 = sphi 0, %s72
    %s87 = sphi 0, %s73
    %s91 = sphi 0, %s91
    %s93 = sphi 0, %s91
    %s94 = sphi 0, %s93
    %s108 = sphi 0, %s94
    %s112 = sphi 0, %s112
    %s114 = sphi 0, %s112
    %s115 = sphi 0, %s114
    %s129 = sphi 0, %s115
    %s133 = sphi 0, %s133
    %s135 = sphi 0, %s133
    %s136 = sphi 0, %s135
    %s150 = sphi 0, %s136
    %s154 = sphi 0, %s154
    %s156 = sphi 0, %s154
    %s157 = sphi 0, %s156
    %s171 = sphi 0, %s157
    %s175 = sphi 0, %s175
    %s177 = sphi 0, %s175
    %s178 = sphi 0, %s177
    %s192 = sphi 0, %s178
    %s196 = sphi 0, %s196
    %s198 = sphi 0, %s196
    %s199 = sphi 0, %s198
    %s213 = sphi 0, %s199
    %s219 = sphi 0, %s221
    %s222 = sphi 0, %s219
    %s223 = sphi 0, %s222
    %s239 = sphi 0, %s223
  $region4: #{skipnet_forward.8} parent=0 // loop_header_branch
    %18 = sbr.rel (%p16) target = $region8
  $region5: #{skipnet_forward.8} parent=0 // loop_body
    %s20 = ssub.s32 %s15, 1
    %s21 = ssub.s32 %s15, 2
    %s22 = sadd.s32 %s15, 1
    %s23 = ssub.s32 %s15, %s22
    %p24 = scmp.eq.s32.totalorder %s23, 0
    %s26 = sadd.s32 %s25, 1
    %s27 = scalar_select %p24, %s25, %s26
    %p30 = pneg %p24
    %p31 = scmp.eq.s32.totalorder %s15, 1
    %p32 = por %p30, %p31
    %p33 = scmp.ne.s32.totalorder %s25, %s28
    %p34 = scmp.eq.s32.totalorder %s15, 0
    %p35 = por %p33, %p34
    %p36 = scmp.ne.s32.totalorder %s25, %s28
    %p37 = scmp.eq.s32.totalorder %s20, 1
    %p38 = por %p36, %p37
    %p39 = scmp.ne.s32.totalorder %s28, %s29
    %p40 = scmp.eq.s32.totalorder %s20, 0
    %p41 = por %p39, %p40
    %p42 = scmp.ne.s32.totalorder %s28, %s29
    %p43 = scmp.eq.s32.totalorder %s21, 1
    %p44 = por %p42, %p43
    %p46 = scmp.ne.s32.totalorder %s29, %s45
    %p47 = scmp.eq.s32.totalorder %s21, 0
    %p48 = por %p46, %p47
    %s50 = sadd.s32 %s49, 1
    %p53 = scmp.eq.s32.totalorder %s15, 1
    %p54 = scmp.ne.s32.totalorder %s49, %s51
    %p55 = scmp.eq.s32.totalorder %s15, 0
    %p56 = por %p54, %p55
    %p57 = scmp.ne.s32.totalorder %s49, %s51
    %p58 = scmp.eq.s32.totalorder %s20, 1
    %p59 = por %p57, %p58
    %p60 = scmp.ne.s32.totalorder %s51, %s52
    %p61 = scmp.eq.s32.totalorder %s20, 0
    %p62 = por %p60, %p61
    %p63 = scmp.ne.s32.totalorder %s51, %s52
    %p64 = scmp.eq.s32.totalorder %s21, 1
    %p65 = por %p63, %p64
    %p67 = scmp.ne.s32.totalorder %s52, %s66
    %p68 = scmp.eq.s32.totalorder %s21, 0
    %p69 = por %p67, %p68
    %s71 = sadd.s32 %s70, 1
    %p74 = scmp.eq.s32.totalorder %s15, 1
    %p75 = scmp.ne.s32.totalorder %s70, %s72
    %p76 = scmp.eq.s32.totalorder %s15, 0
    %p77 = por %p75, %p76
    %p78 = scmp.ne.s32.totalorder %s70, %s72
    %p79 = scmp.eq.s32.totalorder %s20, 1
    %p80 = por %p78, %p79
    %p81 = scmp.ne.s32.totalorder %s72, %s73
    %p82 = scmp.eq.s32.totalorder %s20, 0
    %p83 = por %p81, %p82
    %p84 = scmp.ne.s32.totalorder %s72, %s73
    %p85 = scmp.eq.s32.totalorder %s21, 1
    %p86 = por %p84, %p85
    %p88 = scmp.ne.s32.totalorder %s73, %s87
    %p89 = scmp.eq.s32.totalorder %s21, 0
    %p90 = por %p88, %p89
    %s92 = sadd.s32 %s91, 1
    %p95 = scmp.eq.s32.totalorder %s15, 1
    %p96 = scmp.ne.s32.totalorder %s91, %s93
    %p97 = scmp.eq.s32.totalorder %s15, 0
    %p98 = por %p96, %p97
    %p99 = scmp.ne.s32.totalorder %s91, %s93
    %p100 = scmp.eq.s32.totalorder %s20, 1
    %p101 = por %p99, %p100
    %p102 = scmp.ne.s32.totalorder %s93, %s94
    %p103 = scmp.eq.s32.totalorder %s20, 0
    %p104 = por %p102, %p103
    %p105 = scmp.ne.s32.totalorder %s93, %s94
    %p106 = scmp.eq.s32.totalorder %s21, 1
    %p107 = por %p105, %p106
    %p109 = scmp.ne.s32.totalorder %s94, %s108
    %p110 = scmp.eq.s32.totalorder %s21, 0
    %p111 = por %p109, %p110
    %s113 = sadd.s32 %s112, 1
    %p116 = scmp.eq.s32.totalorder %s15, 1
    %p117 = scmp.ne.s32.totalorder %s112, %s114
    %p118 = scmp.eq.s32.totalorder %s15, 0
    %p119 = por %p117, %p118
    %p120 = scmp.ne.s32.totalorder %s112, %s114
    %p121 = scmp.eq.s32.totalorder %s20, 1
    %p122 = por %p120, %p121
    %p123 = scmp.ne.s32.totalorder %s114, %s115
    %p124 = scmp.eq.s32.totalorder %s20, 0
    %p125 = por %p123, %p124
    %p126 = scmp.ne.s32.totalorder %s114, %s115
    %p127 = scmp.eq.s32.totalorder %s21, 1
    %p128 = por %p126, %p127
    %p130 = scmp.ne.s32.totalorder %s115, %s129
    %p131 = scmp.eq.s32.totalorder %s21, 0
    %p132 = por %p130, %p131
    %s134 = sadd.s32 %s133, 1
    %p137 = scmp.eq.s32.totalorder %s15, 1
    %p138 = scmp.ne.s32.totalorder %s133, %s135
    %p139 = scmp.eq.s32.totalorder %s15, 0
    %p140 = por %p138, %p139
    %p141 = scmp.ne.s32.totalorder %s133, %s135
    %p142 = scmp.eq.s32.totalorder %s20, 1
    %p143 = por %p141, %p142
    %p144 = scmp.ne.s32.totalorder %s135, %s136
    %p145 = scmp.eq.s32.totalorder %s20, 0
    %p146 = por %p144, %p145
    %p147 = scmp.ne.s32.totalorder %s135, %s136
    %p148 = scmp.eq.s32.totalorder %s21, 1
    %p149 = por %p147, %p148
    %p151 = scmp.ne.s32.totalorder %s136, %s150
    %p152 = scmp.eq.s32.totalorder %s21, 0
    %p153 = por %p151, %p152
    %s155 = sadd.s32 %s154, 1
    %p158 = scmp.eq.s32.totalorder %s15, 1
    %p159 = scmp.ne.s32.totalorder %s154, %s156
    %p160 = scmp.eq.s32.totalorder %s15, 0
    %p161 = por %p159, %p160
    %p162 = scmp.ne.s32.totalorder %s154, %s156
    %p163 = scmp.eq.s32.totalorder %s20, 1
    %p164 = por %p162, %p163
    %p165 = scmp.ne.s32.totalorder %s156, %s157
    %p166 = scmp.eq.s32.totalorder %s20, 0
    %p167 = por %p165, %p166
    %p168 = scmp.ne.s32.totalorder %s156, %s157
    %p169 = scmp.eq.s32.totalorder %s21, 1
    %p170 = por %p168, %p169
    %p172 = scmp.ne.s32.totalorder %s157, %s171
    %p173 = scmp.eq.s32.totalorder %s21, 0
    %p174 = por %p172, %p173
    %s176 = sadd.s32 %s175, 1
    %p179 = scmp.eq.s32.totalorder %s15, 1
    %p180 = scmp.ne.s32.totalorder %s175, %s177
    %p181 = scmp.eq.s32.totalorder %s15, 0
    %p182 = por %p180, %p181
    %p183 = scmp.ne.s32.totalorder %s175, %s177
    %p184 = scmp.eq.s32.totalorder %s20, 1
    %p185 = por %p183, %p184
    %p186 = scmp.ne.s32.totalorder %s177, %s178
    %p187 = scmp.eq.s32.totalorder %s20, 0
    %p188 = por %p186, %p187
    %p189 = scmp.ne.s32.totalorder %s177, %s178
    %p190 = scmp.eq.s32.totalorder %s21, 1
    %p191 = por %p189, %p190
    %p193 = scmp.ne.s32.totalorder %s178, %s192
    %p194 = scmp.eq.s32.totalorder %s21, 0
    %p195 = por %p193, %p194
    %s197 = sadd.s32 %s196, 1
    %p200 = scmp.eq.s32.totalorder %s15, 1
    %p201 = scmp.ne.s32.totalorder %s196, %s198
    %p202 = scmp.eq.s32.totalorder %s15, 0
    %p203 = por %p201, %p202
    %p204 = scmp.ne.s32.totalorder %s196, %s198
    %p205 = scmp.eq.s32.totalorder %s20, 1
    %p206 = por %p204, %p205
    %p207 = scmp.ne.s32.totalorder %s198, %s199
    %p208 = scmp.eq.s32.totalorder %s20, 0
    %p209 = por %p207, %p208
    %p210 = scmp.ne.s32.totalorder %s198, %s199
    %p211 = scmp.eq.s32.totalorder %s21, 1
    %p212 = por %p210, %p211
    %p214 = scmp.ne.s32.totalorder %s199, %s213
    %p215 = scmp.eq.s32.totalorder %s21, 0
    %p216 = por %p214, %p215
    %s217 = ssub.s32 %s15, %s22
    %p218 = scmp.eq.s32.totalorder %s217, 0
    %s220 = sadd.s32 %s219, 1
    %s221 = scalar_select %p218, %s219, %s220
    %p224 = pneg %p218
    %p225 = scmp.eq.s32.totalorder %s15, 1
    %p226 = por %p224, %p225
    %p227 = scmp.ne.s32.totalorder %s219, %s222
    %p228 = scmp.eq.s32.totalorder %s15, 0
    %p229 = por %p227, %p228
    %p230 = scmp.ne.s32.totalorder %s219, %s222
    %p231 = scmp.eq.s32.totalorder %s20, 1
    %p232 = por %p230, %p231
    %p233 = scmp.ne.s32.totalorder %s222, %s223
    %p234 = scmp.eq.s32.totalorder %s20, 0
    %p235 = por %p233, %p234
    %p236 = scmp.ne.s32.totalorder %s222, %s223
    %p237 = scmp.eq.s32.totalorder %s21, 1
    %p238 = por %p236, %p237
    %p240 = scmp.ne.s32.totalorder %s223, %s239
    %p241 = scmp.eq.s32.totalorder %s21, 0
    %p242 = por %p240, %p241
    %p243 = scmp.le.s32.totalorder 1, %s15
    %p244 = scmp.lt.s32.totalorder %s15, 3
    %p245 = pnand %p243, %p244
    %p246 = pneg %p245
    // Predicated region
    $region9: #{skipnet_forward.8} parent=5 // pred_check
      _
    $region10: #{skipnet_forward.8} parent=5 // pred_check_branch
      %248 = sbr.rel (%p245) target = $region12
    $region11: #{skipnet_forward.8} parent=5 // pred_region
      %s249 = ssub.s32 %s15, 1
      // Predicated region
      $region13: #{skipnet_forward.8} parent=11 // pred_check
        %p250 = pneg %p62
      $region14: #{skipnet_forward.8} parent=11 // pred_check_branch
        %252 = sbr.rel (%p250) target = $region16
      $region15: #{skipnet_forward.8} parent=11 // pred_region
        _
      $region16: #{skipnet_forward.8} parent=11 // pred_fallthru
        _
      // Predicated region
      $region17: #{skipnet_forward.8} parent=11 // pred_check
        %p253 = pneg %p83
      $region18: #{skipnet_forward.8} parent=11 // pred_check_branch
        %255 = sbr.rel (%p253) target = $region20
      $region19: #{skipnet_forward.8} parent=11 // pred_region
        _
      $region20: #{skipnet_forward.8} parent=11 // pred_fallthru
        _
      // Predicated region
      $region21: #{skipnet_forward.8} parent=11 // pred_check
        %p256 = pneg %p104
      $region22: #{skipnet_forward.8} parent=11 // pred_check_branch
        %258 = sbr.rel (%p256) target = $region24
      $region23: #{skipnet_forward.8} parent=11 // pred_region
        _
      $region24: #{skipnet_forward.8} parent=11 // pred_fallthru
        _
      // Predicated region
      $region25: #{skipnet_forward.8} parent=11 // pred_check
        %p259 = pneg %p125
      $region26: #{skipnet_forward.8} parent=11 // pred_check_branch
        %261 = sbr.rel (%p259) target = $region28
      $region27: #{skipnet_forward.8} parent=11 // pred_region
        _
      $region28: #{skipnet_forward.8} parent=11 // pred_fallthru
        _
      // Predicated region
      $region29: #{skipnet_forward.8} parent=11 // pred_check
        %p262 = pneg %p146
      $region30: #{skipnet_forward.8} parent=11 // pred_check_branch
        %264 = sbr.rel (%p262) target = $region32
      $region31: #{skipnet_forward.8} parent=11 // pred_region
        _
      $region32: #{skipnet_forward.8} parent=11 // pred_fallthru
        _
      // Predicated region
      $region33: #{skipnet_forward.8} parent=11 // pred_check
        %p265 = pneg %p167
      $region34: #{skipnet_forward.8} parent=11 // pred_check_branch
        %267 = sbr.rel (%p265) target = $region36
      $region35: #{skipnet_forward.8} parent=11 // pred_region
        _
      $region36: #{skipnet_forward.8} parent=11 // pred_fallthru
        _
      // Predicated region
      $region37: #{skipnet_forward.8} parent=11 // pred_check
        %p268 = pneg %p188
      $region38: #{skipnet_forward.8} parent=11 // pred_check_branch
        %270 = sbr.rel (%p268) target = $region40
      $region39: #{skipnet_forward.8} parent=11 // pred_region
        _
      $region40: #{skipnet_forward.8} parent=11 // pred_fallthru
        _
      // Predicated region
      $region41: #{skipnet_forward.8} parent=11 // pred_check
        %p271 = pneg %p209
      $region42: #{skipnet_forward.8} parent=11 // pred_check_branch
        %273 = sbr.rel (%p271) target = $region44
      $region43: #{skipnet_forward.8} parent=11 // pred_region
        _
      $region44: #{skipnet_forward.8} parent=11 // pred_fallthru
        _
    $region12: #{skipnet_forward.8} parent=5 // pred_fallthru
      _
    %p274 = scmp.lt.s32.totalorder %s15, 2
    // Predicated region
    $region45: #{skipnet_forward.8} parent=5 // pred_check
      %p275 = pneg %p274
    $region46: #{skipnet_forward.8} parent=5 // pred_check_branch
      %277 = sbr.rel (%p275) target = $region48
    $region47: #{skipnet_forward.8} parent=5 // pred_region
      // Predicated region
      $region49: #{skipnet_forward.8} parent=47 // pred_check
        %p278 = pneg %p35
      $region50: #{skipnet_forward.8} parent=47 // pred_check_branch
        %280 = sbr.rel (%p278) target = $region52
      $region51: #{skipnet_forward.8} parent=47 // pred_region
        %p281 = scmp.lt.s32.totalorder %s15, 1
        %s282 = scalar_select %p281, %s15, 1
        %s283 = smul.addr %s282, 2
        %s284 = smul.addr %s283, 4
        %s285 = scalar_lea.vmem %s0, %s284
      $region52: #{skipnet_forward.8} parent=47 // pred_fallthru
        _
    $region48: #{skipnet_forward.8} parent=5 // pred_fallthru
      _
    %p286 = scmp.le.s32.totalorder 1, %s15
    %p287 = scmp.lt.s32.totalorder %s15, 3
    %p288 = pnand %p286, %p287
    %p289 = pneg %p288
    // Predicated region
    $region53: #{skipnet_forward.8} parent=5 // pred_check
      _
    $region54: #{skipnet_forward.8} parent=5 // pred_check_branch
      %291 = sbr.rel (%p288) target = $region56
    $region55: #{skipnet_forward.8} parent=5 // pred_region
      %s292 = ssub.s32 %s15, 1
      %p293 = scmp.lt.s32.totalorder %s20, 1
      %s294 = scalar_select %p293, %s20, 1
      %s295 = smul.addr %s294, 2
      %s296 = smul.addr %s295, 4
      %s297 = scalar_lea.vmem %s0, %s296
      %p298 = pneg %p41
      %p299 = pneg %p38
      %p300 = pneg %p62
      %p301 = pneg %p59
      %p302 = pneg %p83
      %p303 = pneg %p80
      %p304 = pneg %p104
      %p305 = pneg %p101
      %p306 = pneg %p125
      %p307 = pneg %p122
      %p308 = pneg %p146
      %p309 = pneg %p143
      %p310 = pneg %p167
      %p311 = pneg %p164
      %p312 = pneg %p188
      %p313 = pneg %p185
      %p314 = pneg %p209
      %p315 = pneg %p206
      %p316 = pneg %p235
      %p317 = pneg %p232
      %p318 = scmp.lt.s32.totalorder %s20, 1
      %s319 = scalar_select %p318, %s20, 1
      %s320 = smul.addr %s319, 2
      %s321 = smul.addr %s320, 4
      %s322 = scalar_lea.vmem %s9, %s321
      %p323 = scmp.lt.s32.totalorder %s20, 1
      %s324 = scalar_select %p323, %s20, 1
      %s325 = smul.addr %s324, 2
      %s326 = smul.addr %s325, 4
      %s327 = scalar_lea.vmem %s0, %s326
      %p328 = scmp.lt.s32.totalorder %s20, 1
      %s329 = scalar_select %p328, %s20, 1
      %s330 = smul.addr %s329, 2
      %s331 = smul.addr %s330, 4
      %s332 = scalar_lea.vmem %s9, %s331
      %v334 = vld [vmem:[%s327] sm:$0xf]
      %v335 = vld [vmem:[%s327 + $0x4] sm:$0xf]
      %v336 = vld [vmem:[%s1] sm:$0xf]
      %v337 = vld [vmem:[%s1 + $0x4] sm:$0xf]
      %v338 = vld [vmem:[%s1 + $0x8] sm:$0xf]
      %v339 = vld [vmem:[%s1 + $0xc] sm:$0xf]
      %v340 = vld [vmem:[%s1 + $0x10] sm:$0xf]
      %v341 = vld [vmem:[%s1 + $0x14] sm:$0xf]
      %v342 = vld [vmem:[%s1 + $0x18] sm:$0xf]
      %v343 = vld [vmem:[%s1 + $0x1c] sm:$0xf]
      %v344 = vld [vmem:[%s1 + $0x20] sm:$0xf]
      %v345 = vld [vmem:[%s1 + $0x24] sm:$0xf]
      %v346 = vld [vmem:[%s1 + $0x28] sm:$0xf]
      %v347 = vld [vmem:[%s1 + $0x2c] sm:$0xf]
      %v348 = vld [vmem:[%s1 + $0x30] sm:$0xf]
      %v349 = vld [vmem:[%s1 + $0x34] sm:$0xf]
      %v350 = vld [vmem:[%s1 + $0x38] sm:$0xf]
      %v351 = vld [vmem:[%s1 + $0x3c] sm:$0xf]
      %v352 = vld [vmem:[%s2] sm:$0x1]
      %v354 = vlaneseq
      %v355 = vshrl.u32 %v354, 7
      %v356 = vsub.s32 0, %v355
      %v357 = vrot.slane %v352, %v356
      %v361 = vunpack.c.l.b16 %v334
      %v362 = vunpack.c.l.b16 %v335
      %v363 = vpack.c.b16 %v362, %v361
      %v381 = vunpack.c.l.b16 %v336
      %v382 = vunpack.c.l.b16 %v337
      %v383 = vunpack.c.l.b16 %v338
      %v384 = vunpack.c.l.b16 %v339
      %v385 = vunpack.c.l.b16 %v340
      %v386 = vunpack.c.l.b16 %v341
      %v387 = vunpack.c.l.b16 %v342
      %v388 = vunpack.c.l.b16 %v343
      %v389 = vunpack.c.l.b16 %v344
      %v390 = vunpack.c.l.b16 %v345
      %v391 = vunpack.c.l.b16 %v346
      %v392 = vunpack.c.l.b16 %v347
      %v393 = vunpack.c.l.b16 %v348
      %v394 = vunpack.c.l.b16 %v349
      %v395 = vunpack.c.l.b16 %v350
      %v396 = vunpack.c.l.b16 %v351
      %v397 = vpack.c.b16 %v382, %v381
      %v398 = vpack.c.b16 %v384, %v383
      %v399 = vpack.c.b16 %v386, %v385
      %v400 = vpack.c.b16 %v388, %v387
      %v401 = vpack.c.b16 %v390, %v389
      %v402 = vpack.c.b16 %v392, %v391
      %v403 = vpack.c.b16 %v394, %v393
      %v404 = vpack.c.b16 %v396, %v395
      %413 = vmatprep.subr.bf16.mxu0 0
      %414 = vmatpush1.bf16.msra.mxu0 %v397
      %415 = vmatprep.subr.bf16.mxu0 0
      %416 = vmatpush1.bf16.msra.mxu0 %v398
      %417 = vmatprep.subr.bf16.mxu0 0
      %418 = vmatpush1.bf16.msra.mxu0 %v399
      %419 = vmatprep.subr.bf16.mxu0 0
      %420 = vmatpush1.bf16.msra.mxu0 %v400
      %421 = vmatprep.subr.bf16.mxu0 0
      %422 = vmatpush1.bf16.msra.mxu0 %v401
      %423 = vmatprep.subr.bf16.mxu0 0
      %424 = vmatpush1.bf16.msra.mxu0 %v402
      %425 = vmatprep.subr.bf16.mxu0 0
      %426 = vmatpush1.bf16.msra.mxu0 %v403
      %427 = vmatprep.subr.bf16.mxu0 0
      %428 = vmatpush1.bf16.msra.mxu0 %v404
      %429 = vmatprep.subr.bf16.mxu0 0
      %430 = vmatpush1.bf16.msra.mxu0 0
      %431 = vmatprep.subr.bf16.mxu0 0
      %432 = vmatpush1.bf16.msra.mxu0 0
      %433 = vmatprep.subr.bf16.mxu0 0
      %434 = vmatpush1.bf16.msra.mxu0 0
      %435 = vmatprep.subr.bf16.mxu0 0
      %436 = vmatpush1.bf16.msra.mxu0 0
      %437 = vmatprep.subr.bf16.mxu0 0
      %438 = vmatpush1.bf16.msra.mxu0 0
      %439 = vmatprep.subr.bf16.mxu0 0
      %440 = vmatpush1.bf16.msra.mxu0 0
      %441 = vmatprep.subr.bf16.mxu0 0
      %442 = vmatpush1.bf16.msra.mxu0 0
      %443 = vmatprep.subr.bf16.mxu0 0
      %444 = vmatpush1.bf16.msra.mxu0 0
      %445 = vmatprep.mubr.bf16.mxu0 0
      %446 = vmatmul.mubr.bf16.gmra.mrb[0].mxu0 %v363
      %v447 = vpop.f32.mrb[0].mxu0
      %v448 = vadd.f32 %v357, %v447
      %v449 = vpop.f32.mrb[0].mxu0
      %v450 = vpop.f32.mrb[0].mxu0
      %v451 = vadd.f32 %v357, %v450
      %v452 = vpop.f32.mrb[0].mxu0
      %453 = vdwg.mxu0
      %v454 = vmax.f32 %v448, 0.0
      %v455 = vmax.f32 %v451, 0.0
      %v456 = vld [vmem:[%s3] sm:$0xf]
      %v457 = vld [vmem:[%s3 + $0x4] sm:$0xf]
      %v458 = vld [vmem:[%s3 + $0x8] sm:$0xf]
      %v459 = vld [vmem:[%s3 + $0xc] sm:$0xf]
      %v460 = vld [vmem:[%s3 + $0x10] sm:$0xf]
      %v461 = vld [vmem:[%s3 + $0x14] sm:$0xf]
      %v462 = vld [vmem:[%s3 + $0x18] sm:$0xf]
      %v463 = vld [vmem:[%s3 + $0x1c] sm:$0xf]
      %v464 = vld [vmem:[%s3 + $0x20] sm:$0xf]
      %v465 = vld [vmem:[%s3 + $0x24] sm:$0xf]
      %v466 = vld [vmem:[%s3 + $0x28] sm:$0xf]
      %v467 = vld [vmem:[%s3 + $0x2c] sm:$0xf]
      %v468 = vld [vmem:[%s3 + $0x30] sm:$0xf]
      %v469 = vld [vmem:[%s3 + $0x34] sm:$0xf]
      %v470 = vld [vmem:[%s3 + $0x38] sm:$0xf]
      %v471 = vld [vmem:[%s3 + $0x3c] sm:$0xf]
      %v472 = vld [vmem:[%s4] sm:$0x1]
      %v474 = vlaneseq
      %v475 = vshrl.u32 %v474, 7
      %v476 = vsub.s32 0, %v475
      %v477 = vrot.slane %v472, %v476
      %v495 = vunpack.c.l.b16 %v456
      %v496 = vunpack.c.l.b16 %v457
      %v497 = vunpack.c.l.b16 %v458
      %v498 = vunpack.c.l.b16 %v459
      %v499 = vunpack.c.l.b16 %v460
      %v500 = vunpack.c.l.b16 %v461
      %v501 = vunpack.c.l.b16 %v462
      %v502 = vunpack.c.l.b16 %v463
      %v503 = vunpack.c.l.b16 %v464
      %v504 = vunpack.c.l.b16 %v465
      %v505 = vunpack.c.l.b16 %v466
      %v506 = vunpack.c.l.b16 %v467
      %v507 = vunpack.c.l.b16 %v468
      %v508 = vunpack.c.l.b16 %v469
      %v509 = vunpack.c.l.b16 %v470
      %v510 = vunpack.c.l.b16 %v471
      %v511 = vpack.c.b16 %v496, %v495
      %v512 = vpack.c.b16 %v498, %v497
      %v513 = vpack.c.b16 %v500, %v499
      %v514 = vpack.c.b16 %v502, %v501
      %v515 = vpack.c.b16 %v504, %v503
      %v516 = vpack.c.b16 %v506, %v505
      %v517 = vpack.c.b16 %v508, %v507
      %v518 = vpack.c.b16 %v510, %v509
      %527 = vmatprep.subr.bf16.mxu0 0
      %528 = vmatpush1.bf16.msra.mxu0 %v511
      %529 = vmatprep.subr.bf16.mxu0 0
      %530 = vmatpush1.bf16.msra.mxu0 %v512
      %531 = vmatprep.subr.bf16.mxu0 0
      %532 = vmatpush1.bf16.msra.mxu0 %v513
      %533 = vmatprep.subr.bf16.mxu0 0
      %534 = vmatpush1.bf16.msra.mxu0 %v514
      %535 = vmatprep.subr.bf16.mxu0 0
      %536 = vmatpush1.bf16.msra.mxu0 %v515
      %537 = vmatprep.subr.bf16.mxu0 0
      %538 = vmatpush1.bf16.msra.mxu0 %v516
      %539 = vmatprep.subr.bf16.mxu0 0
      %540 = vmatpush1.bf16.msra.mxu0 %v517
      %541 = vmatprep.subr.bf16.mxu0 0
      %542 = vmatpush1.bf16.msra.mxu0 %v518
      %543 = vmatprep.subr.bf16.mxu0 0
      %544 = vmatpush1.bf16.msra.mxu0 0
      %545 = vmatprep.subr.bf16.mxu0 0
      %546 = vmatpush1.bf16.msra.mxu0 0
      %547 = vmatprep.subr.bf16.mxu0 0
      %548 = vmatpush1.bf16.msra.mxu0 0
      %549 = vmatprep.subr.bf16.mxu0 0
      %550 = vmatpush1.bf16.msra.mxu0 0
      %551 = vmatprep.subr.bf16.mxu0 0
      %552 = vmatpush1.bf16.msra.mxu0 0
      %553 = vmatprep.subr.bf16.mxu0 0
      %554 = vmatpush1.bf16.msra.mxu0 0
      %555 = vmatprep.subr.bf16.mxu0 0
      %556 = vmatpush1.bf16.msra.mxu0 0
      %557 = vmatprep.subr.bf16.mxu0 0
      %558 = vmatpush1.bf16.msra.mxu0 0
      %559 = vmatprep.mubr.bf16.mxu0 0
      %560 = vmatmul.mubr.bf16.gmra.mrb[0].mxu0 %v363
      %v561 = vpop.f32.mrb[0].mxu0
      %v562 = vadd.f32 %v477, %v561
      %v563 = vpop.f32.mrb[0].mxu0
      %v564 = vpop.f32.mrb[0].mxu0
      %v565 = vadd.f32 %v477, %v564
      %v566 = vpop.f32.mrb[0].mxu0
      %567 = vdwg.mxu0
      %vm568 = vcmask 518144
      %569 = vst.msk [vmem:[#allocation2] sm:$0x7] %vm568, 0
      %570 = vst.msk [vmem:[#allocation2 + $0x4] sm:$0x7] %vm568, 0
      %571 = vst.msk [vmem:[#allocation2 + $0x8] sm:$0x7] %vm568, 0
      %572 = vst.msk [vmem:[#allocation2 + $0xc] sm:$0x7] %vm568, 0
      %573 = vst.msk [vmem:[#allocation2 + $0x10] sm:$0x7] %vm568, 0
      %574 = vst.msk [vmem:[#allocation2 + $0x14] sm:$0x7] %vm568, 0
      %v577 = vcombine.high %v454, %v454
      %v578 = vcombine.high %v455, %v455
      %v581 = vpack.c.bf16 %v454, %v454
      %v582 = vpack.c.bf16 %v577, %v577
      %v583 = vpack.c.bf16 %v455, %v455
      %v584 = vpack.c.bf16 %v578, %v578
      %v589 = vunpack.c.l.b16 %v581
      %v590 = vunpack.c.l.b16 %v582
      %v591 = vunpack.c.l.b16 %v583
      %v592 = vunpack.c.l.b16 %v584
      %v593 = vpack.c.b16 %v589, %v589
      %v594 = vpack.c.b16 %v590, %v590
      %v595 = vpack.c.b16 %v591, %v591
      %v596 = vpack.c.b16 %v592, %v592
      %v598 = vshrl.u32 %v593, 16
      %v600 = vrot.slane %v598, 7
      %v601 = vshll.u32 %v593, 16
      %v603 = vor.u32 %v600, %v601
      %v605 = vshrl.u32 %v594, 16
      %v607 = vrot.slane %v605, 7
      %v608 = vshll.u32 %v594, 16
      %v610 = vor.u32 %v607, %v608
      %v612 = vshrl.u32 %v595, 16
      %v614 = vrot.slane %v612, 7
      %v615 = vshll.u32 %v595, 16
      %v617 = vor.u32 %v614, %v615
      %v619 = vshrl.u32 %v596, 16
      %v621 = vrot.slane %v619, 7
      %v622 = vshll.u32 %v596, 16
      %v624 = vor.u32 %v621, %v622
      %s629 = scalar_lea.vmem [#allocation2], 4
      %vm630 = vcmask 518144
      %vm631 = vsmask.f32 2306
      %vm632 = vmand %vm630, %vm631
      %v633 = vld [vmem:[%s629] sm:$0x7]
      %v634 = vsel %vm632, %v603, %v633
      %635 = vst [vmem:[%s629] sm:$0x7] %v634
      %v636 = vld [vmem:[%s629 + $0x4] sm:$0x7]
      %v637 = vsel %vm632, %v610, %v636
      %638 = vst [vmem:[%s629 + $0x4] sm:$0x7] %v637
      %v639 = vld [vmem:[%s629 + $0x8] sm:$0x7]
      %v640 = vsel %vm632, %v617, %v639
      %641 = vst [vmem:[%s629 + $0x8] sm:$0x7] %v640
      %v642 = vld [vmem:[%s629 + $0xc] sm:$0x7]
      %v643 = vsel %vm632, %v624, %v642
      %644 = vst [vmem:[%s629 + $0xc] sm:$0x7] %v643
      %v645 = vld [vmem:[#allocation2] sm:$0x3]
      %v646 = vld [vmem:[#allocation2 + $0x4] sm:$0x3]
      %v647 = vld [vmem:[#allocation2 + $0x8] sm:$0x3]
      %v648 = vld [vmem:[#allocation2 + $0xc] sm:$0x3]
      %v649 = vld [vmem:[#allocation2] sm:$0x7]
      %v650 = vld [vmem:[#allocation2 + $0x4] sm:$0x7]
      %v651 = vld [vmem:[#allocation2 + $0x8] sm:$0x7]
      %v652 = vld [vmem:[#allocation2 + $0xc] sm:$0x7]
      %v658 = vunpack.c.l.s4 1983009808
      %v659 = vunpack.c.0.s8 %v658
      %v660 = vlaneseq
      %v661 = vshrl.u32 %v660, 7
      %v662 = vsub.s32 %v659, %v661
      %v663 = vrot.slane %v649, %v662
      %v664 = vcombine.high %v663, %v663
      %v666 = vunpack.c.l.s4 1983009808
      %v667 = vunpack.c.0.s8 %v666
      %v668 = vlaneseq
      %v669 = vshrl.u32 %v668, 7
      %v670 = vsub.s32 %v667, %v669
      %v671 = vrot.slane %v650, %v670
      %v672 = vcombine.high %v671, %v671
      %v674 = vunpack.c.l.s4 1983009808
      %v675 = vunpack.c.0.s8 %v674
      %v676 = vlaneseq
      %v677 = vshrl.u32 %v676, 7
      %v678 = vsub.s32 %v675, %v677
      %v679 = vrot.slane %v651, %v678
      %v680 = vcombine.high %v679, %v679
      %v682 = vunpack.c.l.s4 1983009808
      %v683 = vunpack.c.0.s8 %v682
      %v684 = vlaneseq
      %v685 = vshrl.u32 %v684, 7
      %v686 = vsub.s32 %v683, %v685
      %v687 = vrot.slane %v652, %v686
      %v688 = vcombine.high %v687, %v687
      %vm689 = vsmask.f32 1280
      %vm690 = vsmask.f32 3336
      %vm691 = vmor %vm689, %vm690
      %vm692 = vsmask.f32 5392
      %vm693 = vmor %vm691, %vm692
      %vm694 = vsmask.f32 7448
      %vm695 = vmor %vm693, %vm694
      %v697 = vshrl.u32 %v663, 16
      %v699 = vrot.slane %v697, 6
      %v700 = vshll.u32 %v663, 16
      %v702 = vrot.slane %v700, 7
      %v703 = vor.u32 %v699, %v702
      %v704 = vrot.slane %v703, 2
      %v706 = vshll.u32 %v664, 16
      %v708 = vrot.slane %v706, 7
      %v709 = vsel %vm695, %v704, %v708
      %v711 = vshrl.u32 %v671, 16
      %v713 = vrot.slane %v711, 6
      %v714 = vshll.u32 %v671, 16
      %v716 = vrot.slane %v714, 7
      %v717 = vor.u32 %v713, %v716
      %v718 = vrot.slane %v717, 2
      %v720 = vshll.u32 %v672, 16
      %v722 = vrot.slane %v720, 7
      %v723 = vsel %vm695, %v718, %v722
      %v725 = vshrl.u32 %v679, 16
      %v727 = vrot.slane %v725, 6
      %v728 = vshll.u32 %v679, 16
      %v730 = vrot.slane %v728, 7
      %v731 = vor.u32 %v727, %v730
      %v732 = vrot.slane %v731, 2
      %v734 = vshll.u32 %v680, 16
      %v736 = vrot.slane %v734, 7
      %v737 = vsel %vm695, %v732, %v736
      %v739 = vshrl.u32 %v687, 16
      %v741 = vrot.slane %v739, 6
      %v742 = vshll.u32 %v687, 16
      %v744 = vrot.slane %v742, 7
      %v745 = vor.u32 %v741, %v744
      %v746 = vrot.slane %v745, 2
      %v748 = vshll.u32 %v688, 16
      %v750 = vrot.slane %v748, 7
      %v751 = vsel %vm695, %v746, %v750
      %v752 = vld [vmem:[#allocation2] sm:$0x6]
      %v753 = vld [vmem:[#allocation2 + $0x4] sm:$0x6]
      %v754 = vld [vmem:[#allocation2 + $0x8] sm:$0x6]
      %v755 = vld [vmem:[#allocation2 + $0xc] sm:$0x6]
      %v761 = vunpack.c.l.s4 1983009808
      %v762 = vunpack.c.0.s8 %v761
      %v763 = vlaneseq
      %v764 = vshrl.u32 %v763, 7
      %v765 = vsub.s32 %v762, %v764
      %v766 = vrot.slane %v752, %v765
      %v767 = vcombine.high %v766, %v766
      %v769 = vunpack.c.l.s4 1983009808
      %v770 = vunpack.c.0.s8 %v769
      %v771 = vlaneseq
      %v772 = vshrl.u32 %v771, 7
      %v773 = vsub.s32 %v770, %v772
      %v774 = vrot.slane %v753, %v773
      %v775 = vcombine.high %v774, %v774
      %v777 = vunpack.c.l.s4 1983009808
      %v778 = vunpack.c.0.s8 %v777
      %v779 = vlaneseq
      %v780 = vshrl.u32 %v779, 7
      %v781 = vsub.s32 %v778, %v780
      %v782 = vrot.slane %v754, %v781
      %v783 = vcombine.high %v782, %v782
      %v785 = vunpack.c.l.s4 1983009808
      %v786 = vunpack.c.0.s8 %v785
      %v787 = vlaneseq
      %v788 = vshrl.u32 %v787, 7
      %v789 = vsub.s32 %v786, %v788
      %v790 = vrot.slane %v755, %v789
      %v791 = vcombine.high %v790, %v790
      %vm792 = vcmask 1040384
      %vm793 = vcmask 1042434
      %vm794 = vmor %vm792, %vm793
      %vm795 = vcmask 1044484
      %vm796 = vmor %vm794, %vm795
      %vm797 = vcmask 1046534
      %vm798 = vmor %vm796, %vm797
      %v799 = vrot.slane %v766, 7
      %v800 = vrot.slane %v799, 2
      %v801 = vrot.slane %v767, 7
      %v802 = vsel %vm798, %v800, %v801
      %v803 = vrot.slane %v774, 7
      %v804 = vrot.slane %v803, 2
      %v805 = vrot.slane %v775, 7
      %v806 = vsel %vm798, %v804, %v805
      %v807 = vrot.slane %v782, 7
      %v808 = vrot.slane %v807, 2
      %v809 = vrot.slane %v783, 7
      %v810 = vsel %vm798, %v808, %v809
      %v811 = vrot.slane %v790, 7
      %v812 = vrot.slane %v811, 2
      %v813 = vrot.slane %v791, 7
      %v814 = vsel %vm798, %v812, %v813
      %v815 = vld [vmem:[%s629] sm:$0x3]
      %v816 = vld [vmem:[%s629 + $0x4] sm:$0x3]
      %v817 = vld [vmem:[%s629 + $0x8] sm:$0x3]
      %v818 = vld [vmem:[%s629 + $0xc] sm:$0x3]
      %v819 = vld [vmem:[%s629] sm:$0x7]
      %v820 = vld [vmem:[%s629 + $0x4] sm:$0x7]
      %v821 = vld [vmem:[%s629 + $0x8] sm:$0x7]
      %v822 = vld [vmem:[%s629 + $0xc] sm:$0x7]
      %v828 = vunpack.c.l.s4 1983009808
      %v829 = vunpack.c.0.s8 %v828
      %v830 = vlaneseq
      %v831 = vshrl.u32 %v830, 7
      %v832 = vsub.s32 %v829, %v831
      %v833 = vrot.slane %v819, %v832
      %v834 = vcombine.high %v833, %v833
      %v836 = vunpack.c.l.s4 1983009808
      %v837 = vunpack.c.0.s8 %v836
      %v838 = vlaneseq
      %v839 = vshrl.u32 %v838, 7
      %v840 = vsub.s32 %v837, %v839
      %v841 = vrot.slane %v820, %v840
      %v842 = vcombine.high %v841, %v841
      %v844 = vunpack.c.l.s4 1983009808
      %v845 = vunpack.c.0.s8 %v844
      %v846 = vlaneseq
      %v847 = vshrl.u32 %v846, 7
      %v848 = vsub.s32 %v845, %v847
      %v849 = vrot.slane %v821, %v848
      %v850 = vcombine.high %v849, %v849
      %v852 = vunpack.c.l.s4 1983009808
      %v853 = vunpack.c.0.s8 %v852
      %v854 = vlaneseq
      %v855 = vshrl.u32 %v854, 7
      %v856 = vsub.s32 %v853, %v855
      %v857 = vrot.slane %v822, %v856
      %v858 = vcombine.high %v857, %v857
      %v860 = vshrl.u32 %v833, 16
      %v862 = vrot.slane %v860, 6
      %v863 = vshll.u32 %v833, 16
      %v865 = vrot.slane %v863, 7
      %v866 = vor.u32 %v862, %v865
      %v867 = vrot.slane %v866, 2
      %v869 = vshll.u32 %v834, 16
      %v871 = vrot.slane %v869, 7
      %v872 = vsel %vm695, %v867, %v871
      %v874 = vshrl.u32 %v841, 16
      %v876 = vrot.slane %v874, 6
      %v877 = vshll.u32 %v841, 16
      %v879 = vrot.slane %v877, 7
      %v880 = vor.u32 %v876, %v879
      %v881 = vrot.slane %v880, 2
      %v883 = vshll.u32 %v842, 16
      %v885 = vrot.slane %v883, 7
      %v886 = vsel %vm695, %v881, %v885
      %v888 = vshrl.u32 %v849, 16
      %v890 = vrot.slane %v888, 6
      %v891 = vshll.u32 %v849, 16
      %v893 = vrot.slane %v891, 7
      %v894 = vor.u32 %v890, %v893
      %v895 = vrot.slane %v894, 2
      %v897 = vshll.u32 %v850, 16
      %v899 = vrot.slane %v897, 7
      %v900 = vsel %vm695, %v895, %v899
      %v902 = vshrl.u32 %v857, 16
      %v904 = vrot.slane %v902, 6
      %v905 = vshll.u32 %v857, 16
      %v907 = vrot.slane %v905, 7
      %v908 = vor.u32 %v904, %v907
      %v909 = vrot.slane %v908, 2
      %v911 = vshll.u32 %v858, 16
      %v913 = vrot.slane %v911, 7
      %v914 = vsel %vm695, %v909, %v913
      %v915 = vld [vmem:[%s629] sm:$0x6]
      %v916 = vld [vmem:[%s629 + $0x4] sm:$0x6]
      %v917 = vld [vmem:[%s629 + $0x8] sm:$0x6]
      %v918 = vld [vmem:[%s629 + $0xc] sm:$0x6]
      %v924 = vunpack.c.l.s4 1983009808
      %v925 = vunpack.c.0.s8 %v924
      %v926 = vlaneseq
      %v927 = vshrl.u32 %v926, 7
      %v928 = vsub.s32 %v925, %v927
      %v929 = vrot.slane %v915, %v928
      %v930 = vcombine.high %v929, %v929
      %v932 = vunpack.c.l.s4 1983009808
      %v933 = vunpack.c.0.s8 %v932
      %v934 = vlaneseq
      %v935 = vshrl.u32 %v934, 7
      %v936 = vsub.s32 %v933, %v935
      %v937 = vrot.slane %v916, %v936
      %v938 = vcombine.high %v937, %v937
      %v940 = vunpack.c.l.s4 1983009808
      %v941 = vunpack.c.0.s8 %v940
      %v942 = vlaneseq
      %v943 = vshrl.u32 %v942, 7
      %v944 = vsub.s32 %v941, %v943
      %v945 = vrot.slane %v917, %v944
      %v946 = vcombine.high %v945, %v945
      %v948 = vunpack.c.l.s4 1983009808
      %v949 = vunpack.c.0.s8 %v948
      %v950 = vlaneseq
      %v951 = vshrl.u32 %v950, 7
      %v952 = vsub.s32 %v949, %v951
      %v953 = vrot.slane %v918, %v952
      %v954 = vcombine.high %v953, %v953
      %v955 = vrot.slane %v929, 7
      %v956 = vrot.slane %v955, 2
      %v957 = vrot.slane %v930, 7
      %v958 = vsel %vm798, %v956, %v957
      %v959 = vrot.slane %v937, 7
      %v960 = vrot.slane %v959, 2
      %v961 = vrot.slane %v938, 7
      %v962 = vsel %vm798, %v960, %v961
      %v963 = vrot.slane %v945, 7
      %v964 = vrot.slane %v963, 2
      %v965 = vrot.slane %v946, 7
      %v966 = vsel %vm798, %v964, %v965
      %v967 = vrot.slane %v953, 7
      %v968 = vrot.slane %v967, 2
      %v969 = vrot.slane %v954, 7
      %v970 = vsel %vm798, %v968, %v969
      %s971 = scalar_lea.vmem [#allocation2], 8
      %v972 = vld [vmem:[%s971] sm:$0x3]
      %v973 = vld [vmem:[%s971 + $0x4] sm:$0x3]
      %v974 = vld [vmem:[%s971 + $0x8] sm:$0x3]
      %v975 = vld [vmem:[%s971 + $0xc] sm:$0x3]
      %v976 = vld [vmem:[%s971] sm:$0x7]
      %v977 = vld [vmem:[%s971 + $0x4] sm:$0x7]
      %v978 = vld [vmem:[%s971 + $0x8] sm:$0x7]
      %v979 = vld [vmem:[%s971 + $0xc] sm:$0x7]
      %v985 = vunpack.c.l.s4 1983009808
      %v986 = vunpack.c.0.s8 %v985
      %v987 = vlaneseq
      %v988 = vshrl.u32 %v987, 7
      %v989 = vsub.s32 %v986, %v988
      %v990 = vrot.slane %v976, %v989
      %v991 = vcombine.high %v990, %v990
      %v993 = vunpack.c.l.s4 1983009808
      %v994 = vunpack.c.0.s8 %v993
      %v995 = vlaneseq
      %v996 = vshrl.u32 %v995, 7
      %v997 = vsub.s32 %v994, %v996
      %v998 = vrot.slane %v977, %v997
      %v999 = vcombine.high %v998, %v998
      %v1001 = vunpack.c.l.s4 1983009808
      %v1002 = vunpack.c.0.s8 %v1001
      %v1003 = vlaneseq
      %v1004 = vshrl.u32 %v1003, 7
      %v1005 = vsub.s32 %v1002, %v1004
      %v1006 = vrot.slane %v978, %v1005
      %v1007 = vcombine.high %v1006, %v1006
      %v1009 = vunpack.c.l.s4 1983009808
      %v1010 = vunpack.c.0.s8 %v1009
      %v1011 = vlaneseq
      %v1012 = vshrl.u32 %v1011, 7
      %v1013 = vsub.s32 %v1010, %v1012
      %v1014 = vrot.slane %v979, %v1013
      %v1015 = vcombine.high %v1014, %v1014
      %v1017 = vshrl.u32 %v990, 16
      %v1019 = vrot.slane %v1017, 6
      %v1020 = vshll.u32 %v990, 16
      %v1022 = vrot.slane %v1020, 7
      %v1023 = vor.u32 %v1019, %v1022
      %v1024 = vrot.slane %v1023, 2
      %v1026 = vshll.u32 %v991, 16
      %v1028 = vrot.slane %v1026, 7
      %v1029 = vsel %vm695, %v1024, %v1028
      %v1031 = vshrl.u32 %v998, 16
      %v1033 = vrot.slane %v1031, 6
      %v1034 = vshll.u32 %v998, 16
      %v1036 = vrot.slane %v1034, 7
      %v1037 = vor.u32 %v1033, %v1036
      %v1038 = vrot.slane %v1037, 2
      %v1040 = vshll.u32 %v999, 16
      %v1042 = vrot.slane %v1040, 7
      %v1043 = vsel %vm695, %v1038, %v1042
      %v1045 = vshrl.u32 %v1006, 16
      %v1047 = vrot.slane %v1045, 6
      %v1048 = vshll.u32 %v1006, 16
      %v1050 = vrot.slane %v1048, 7
      %v1051 = vor.u32 %v1047, %v1050
      %v1052 = vrot.slane %v1051, 2
      %v1054 = vshll.u32 %v1007, 16
      %v1056 = vrot.slane %v1054, 7
      %v1057 = vsel %vm695, %v1052, %v1056
      %v1059 = vshrl.u32 %v1014, 16
      %v1061 = vrot.slane %v1059, 6
      %v1062 = vshll.u32 %v1014, 16
      %v1064 = vrot.slane %v1062, 7
      %v1065 = vor.u32 %v1061, %v1064
      %v1066 = vrot.slane %v1065, 2
      %v1068 = vshll.u32 %v1015, 16
      %v1070 = vrot.slane %v1068, 7
      %v1071 = vsel %vm695, %v1066, %v1070
      %v1072 = vld [vmem:[%s971] sm:$0x6]
      %v1073 = vld [vmem:[%s971 + $0x4] sm:$0x6]
      %v1074 = vld [vmem:[%s971 + $0x8] sm:$0x6]
      %v1075 = vld [vmem:[%s971 + $0xc] sm:$0x6]
      %v1081 = vunpack.c.l.s4 1983009808
      %v1082 = vunpack.c.0.s8 %v1081
      %v1083 = vlaneseq
      %v1084 = vshrl.u32 %v1083, 7
      %v1085 = vsub.s32 %v1082, %v1084
      %v1086 = vrot.slane %v1072, %v1085
      %v1087 = vcombine.high %v1086, %v1086
      %v1089 = vunpack.c.l.s4 1983009808
      %v1090 = vunpack.c.0.s8 %v1089
      %v1091 = vlaneseq
      %v1092 = vshrl.u32 %v1091, 7
      %v1093 = vsub.s32 %v1090, %v1092
      %v1094 = vrot.slane %v1073, %v1093
      %v1095 = vcombine.high %v1094, %v1094
      %v1097 = vunpack.c.l.s4 1983009808
      %v1098 = vunpack.c.0.s8 %v1097
      %v1099 = vlaneseq
      %v1100 = vshrl.u32 %v1099, 7
      %v1101 = vsub.s32 %v1098, %v1100
      %v1102 = vrot.slane %v1074, %v1101
      %v1103 = vcombine.high %v1102, %v1102
      %v1105 = vunpack.c.l.s4 1983009808
      %v1106 = vunpack.c.0.s8 %v1105
      %v1107 = vlaneseq
      %v1108 = vshrl.u32 %v1107, 7
      %v1109 = vsub.s32 %v1106, %v1108
      %v1110 = vrot.slane %v1075, %v1109
      %v1111 = vcombine.high %v1110, %v1110
      %v1112 = vrot.slane %v1086, 7
      %v1113 = vrot.slane %v1112, 2
      %v1114 = vrot.slane %v1087, 7
      %v1115 = vsel %vm798, %v1113, %v1114
      %v1116 = vrot.slane %v1094, 7
      %v1117 = vrot.slane %v1116, 2
      %v1118 = vrot.slane %v1095, 7
      %v1119 = vsel %vm798, %v1117, %v1118
      %v1120 = vrot.slane %v1102, 7
      %v1121 = vrot.slane %v1120, 2
      %v1122 = vrot.slane %v1103, 7
      %v1123 = vsel %vm798, %v1121, %v1122
      %v1124 = vrot.slane %v1110, 7
      %v1125 = vrot.slane %v1124, 2
      %v1126 = vrot.slane %v1111, 7
      %v1127 = vsel %vm798, %v1125, %v1126
      %v1132 = vcombine.low %v645, %v646
      %v1133 = vcombine.low %v647, %v648
      %v1135 = vunpack.c.l.s4 1983009808
      %v1136 = vunpack.c.0.s8 %v1135
      %v1137 = vlaneseq
      %v1138 = vshrl.u32 %v1137, 7
      %v1139 = vsub.s32 %v1136, %v1138
      %v1140 = vrot.slane %v1132, %v1139
      %v1142 = vunpack.c.l.s4 1983009808
      %v1143 = vunpack.c.0.s8 %v1142
      %v1144 = vlaneseq
      %v1145 = vshrl.u32 %v1144, 7
      %v1146 = vsub.s32 %v1143, %v1145
      %v1147 = vrot.slane %v1133, %v1146
      %v1148 = vcombine.low %v1140, %v1147
      %v1149 = vcombine.low %v709, %v723
      %v1150 = vcombine.low %v737, %v751
      %v1152 = vunpack.c.l.s4 1983009808
      %v1153 = vunpack.c.0.s8 %v1152
      %v1154 = vlaneseq
      %v1155 = vshrl.u32 %v1154, 7
      %v1156 = vsub.s32 %v1153, %v1155
      %v1157 = vrot.slane %v1149, %v1156
      %v1159 = vunpack.c.l.s4 1983009808
      %v1160 = vunpack.c.0.s8 %v1159
      %v1161 = vlaneseq
      %v1162 = vshrl.u32 %v1161, 7
      %v1163 = vsub.s32 %v1160, %v1162
      %v1164 = vrot.slane %v1150, %v1163
      %v1165 = vcombine.low %v1157, %v1164
      %1166 = vrot.lane.b32.xlu0 %v1165, 64
      %v1167 = vpop.permute.xlu0 %1166
      %v1168 = vcombine.low %v802, %v806
      %v1169 = vcombine.low %v810, %v814
      %v1171 = vunpack.c.l.s4 1983009808
      %v1172 = vunpack.c.0.s8 %v1171
      %v1173 = vlaneseq
      %v1174 = vshrl.u32 %v1173, 7
      %v1175 = vsub.s32 %v1172, %v1174
      %v1176 = vrot.slane %v1168, %v1175
      %v1178 = vunpack.c.l.s4 1983009808
      %v1179 = vunpack.c.0.s8 %v1178
      %v1180 = vlaneseq
      %v1181 = vshrl.u32 %v1180, 7
      %v1182 = vsub.s32 %v1179, %v1181
      %v1183 = vrot.slane %v1169, %v1182
      %v1184 = vcombine.low %v1176, %v1183
      %v1189 = vcombine.low %v815, %v816
      %v1190 = vcombine.low %v817, %v818
      %v1192 = vunpack.c.l.s4 1983009808
      %v1193 = vunpack.c.0.s8 %v1192
      %v1194 = vlaneseq
      %v1195 = vshrl.u32 %v1194, 7
      %v1196 = vsub.s32 %v1193, %v1195
      %v1197 = vrot.slane %v1189, %v1196
      %v1199 = vunpack.c.l.s4 1983009808
      %v1200 = vunpack.c.0.s8 %v1199
      %v1201 = vlaneseq
      %v1202 = vshrl.u32 %v1201, 7
      %v1203 = vsub.s32 %v1200, %v1202
      %v1204 = vrot.slane %v1190, %v1203
      %v1205 = vcombine.low %v1197, %v1204
      %1206 = vrot.lane.b32.xlu0 %v1205, 64
      %v1207 = vpop.permute.xlu0 %1206
      %v1208 = vcombine.low %v872, %v886
      %v1209 = vcombine.low %v900, %v914
      %v1211 = vunpack.c.l.s4 1983009808
      %v1212 = vunpack.c.0.s8 %v1211
      %v1213 = vlaneseq
      %v1214 = vshrl.u32 %v1213, 7
      %v1215 = vsub.s32 %v1212, %v1214
      %v1216 = vrot.slane %v1208, %v1215
      %v1218 = vunpack.c.l.s4 1983009808
      %v1219 = vunpack.c.0.s8 %v1218
      %v1220 = vlaneseq
      %v1221 = vshrl.u32 %v1220, 7
      %v1222 = vsub.s32 %v1219, %v1221
      %v1223 = vrot.slane %v1209, %v1222
      %v1224 = vcombine.low %v1216, %v1223
      %v1225 = vcombine.low %v958, %v962
      %v1226 = vcombine.low %v966, %v970
      %v1228 = vunpack.c.l.s4 1983009808
      %v1229 = vunpack.c.0.s8 %v1228
      %v1230 = vlaneseq
      %v1231 = vshrl.u32 %v1230, 7
      %v1232 = vsub.s32 %v1229, %v1231
      %v1233 = vrot.slane %v1225, %v1232
      %v1235 = vunpack.c.l.s4 1983009808
      %v1236 = vunpack.c.0.s8 %v1235
      %v1237 = vlaneseq
      %v1238 = vshrl.u32 %v1237, 7
      %v1239 = vsub.s32 %v1236, %v1238
      %v1240 = vrot.slane %v1226, %v1239
      %v1241 = vcombine.low %v1233, %v1240
      %1242 = vrot.lane.b32.xlu0 %v1241, 64
      %v1243 = vpop.permute.xlu0 %1242
      %v1248 = vcombine.low %v972, %v973
      %v1249 = vcombine.low %v974, %v975
      %v1251 = vunpack.c.l.s4 1983009808
      %v1252 = vunpack.c.0.s8 %v1251
      %v1253 = vlaneseq
      %v1254 = vshrl.u32 %v1253, 7
      %v1255 = vsub.s32 %v1252, %v1254
      %v1256 = vrot.slane %v1248, %v1255
      %v1258 = vunpack.c.l.s4 1983009808
      %v1259 = vunpack.c.0.s8 %v1258
      %v1260 = vlaneseq
      %v1261 = vshrl.u32 %v1260, 7
      %v1262 = vsub.s32 %v1259, %v1261
      %v1263 = vrot.slane %v1249, %v1262
      %v1264 = vcombine.low %v1256, %v1263
      %v1265 = vcombine.low %v1029, %v1043
      %v1266 = vcombine.low %v1057, %v1071
      %v1268 = vunpack.c.l.s4 1983009808
      %v1269 = vunpack.c.0.s8 %v1268
      %v1270 = vlaneseq
      %v1271 = vshrl.u32 %v1270, 7
      %v1272 = vsub.s32 %v1269, %v1271
      %v1273 = vrot.slane %v1265, %v1272
      %v1275 = vunpack.c.l.s4 1983009808
      %v1276 = vunpack.c.0.s8 %v1275
      %v1277 = vlaneseq
      %v1278 = vshrl.u32 %v1277, 7
      %v1279 = vsub.s32 %v1276, %v1278
      %v1280 = vrot.slane %v1266, %v1279
      %v1281 = vcombine.low %v1273, %v1280
      %1282 = vrot.lane.b32.xlu0 %v1281, 64
      %v1283 = vpop.permute.xlu0 %1282
      %v1284 = vcombine.low %v1115, %v1119
      %v1285 = vcombine.low %v1123, %v1127
      %v1287 = vunpack.c.l.s4 1983009808
      %v1288 = vunpack.c.0.s8 %v1287
      %v1289 = vlaneseq
      %v1290 = vshrl.u32 %v1289, 7
      %v1291 = vsub.s32 %v1288, %v1290
      %v1292 = vrot.slane %v1284, %v1291
      %v1294 = vunpack.c.l.s4 1983009808
      %v1295 = vunpack.c.0.s8 %v1294
      %v1296 = vlaneseq
      %v1297 = vshrl.u32 %v1296, 7
      %v1298 = vsub.s32 %v1295, %v1297
      %v1299 = vrot.slane %v1285, %v1298
      %v1300 = vcombine.low %v1292, %v1299
      %vm1301 = vcmask 523264
      %v1304 = vsel %vm1301, %v1148, %v1167
      %v1308 = vsel %vm1301, %v1184, %v1207
      %v1312 = vsel %vm1301, %v1224, %v1243
      %v1316 = vsel %vm1301, %v1264, %v1283
      %v1318 = vld [vmem:[%s5] sm:$0xf]
      %v1319 = vld [vmem:[%s5 + $0x4] sm:$0xf]
      %v1320 = vld [vmem:[%s5 + $0x8] sm:$0xf]
      %v1321 = vld [vmem:[%s5 + $0xc] sm:$0xf]
      %v1322 = vld [vmem:[%s5 + $0x10] sm:$0xf]
      %v1323 = vld [vmem:[%s5 + $0x14] sm:$0xf]
      %v1324 = vld [vmem:[%s5 + $0x18] sm:$0xf]
      %v1325 = vld [vmem:[%s5 + $0x1c] sm:$0xf]
      %v1326 = vld [vmem:[%s5 + $0x20] sm:$0xf]
      %v1327 = vld [vmem:[%s5 + $0x24] sm:$0xf]
      %v1328 = vld [vmem:[%s5 + $0x28] sm:$0xf]
      %v1329 = vld [vmem:[%s5 + $0x2c] sm:$0xf]
      %v1330 = vld [vmem:[%s5 + $0x30] sm:$0xf]
      %v1331 = vld [vmem:[%s5 + $0x34] sm:$0xf]
      %v1332 = vld [vmem:[%s5 + $0x38] sm:$0xf]
      %v1333 = vld [vmem:[%s5 + $0x3c] sm:$0xf]
      %v1334 = vld [vmem:[%s5 + $0x40] sm:$0xf]
      %v1335 = vld [vmem:[%s5 + $0x44] sm:$0xf]
      %v1336 = vld [vmem:[%s5 + $0x48] sm:$0xf]
      %v1337 = vld [vmem:[%s5 + $0x4c] sm:$0xf]
      %v1338 = vld [vmem:[%s5 + $0x50] sm:$0xf]
      %v1339 = vld [vmem:[%s5 + $0x54] sm:$0xf]
      %v1340 = vld [vmem:[%s5 + $0x58] sm:$0xf]
      %v1341 = vld [vmem:[%s5 + $0x5c] sm:$0xf]
      %v1342 = vld [vmem:[%s5 + $0x60] sm:$0xf]
      %v1343 = vld [vmem:[%s5 + $0x64] sm:$0xf]
      %v1344 = vld [vmem:[%s5 + $0x68] sm:$0xf]
      %v1345 = vld [vmem:[%s5 + $0x6c] sm:$0xf]
      %v1346 = vld [vmem:[%s5 + $0x70] sm:$0xf]
      %v1347 = vld [vmem:[%s5 + $0x74] sm:$0xf]
      %v1348 = vld [vmem:[%s5 + $0x78] sm:$0xf]
      %v1349 = vld [vmem:[%s5 + $0x7c] sm:$0xf]
      %v1350 = vld [vmem:[%s5 + $0x80] sm:$0xf]
      %v1351 = vld [vmem:[%s5 + $0x84] sm:$0xf]
      %v1352 = vld [vmem:[%s5 + $0x88] sm:$0xf]
      %v1353 = vld [vmem:[%s5 + $0x8c] sm:$0xf]
      %v1354 = vld [vmem:[%s5 + $0x90] sm:$0xf]
      %v1355 = vld [vmem:[%s5 + $0x94] sm:$0xf]
      %v1356 = vld [vmem:[%s5 + $0x98] sm:$0xf]
      %v1357 = vld [vmem:[%s5 + $0x9c] sm:$0xf]
      %v1358 = vld [vmem:[%s5 + $0xa0] sm:$0xf]
      %v1359 = vld [vmem:[%s5 + $0xa4] sm:$0xf]
      %v1360 = vld [vmem:[%s5 + $0xa8] sm:$0xf]
      %v1361 = vld [vmem:[%s5 + $0xac] sm:$0xf]
      %v1362 = vld [vmem:[%s5 + $0xb0] sm:$0xf]
      %v1363 = vld [vmem:[%s5 + $0xb4] sm:$0xf]
      %v1364 = vld [vmem:[%s5 + $0xb8] sm:$0xf]
      %v1365 = vld [vmem:[%s5 + $0xbc] sm:$0xf]
      %v1366 = vld [vmem:[%s5 + $0xc0] sm:$0xf]
      %v1367 = vld [vmem:[%s5 + $0xc4] sm:$0xf]
      %v1368 = vld [vmem:[%s5 + $0xc8] sm:$0xf]
      %v1369 = vld [vmem:[%s5 + $0xcc] sm:$0xf]
      %v1370 = vld [vmem:[%s5 + $0xd0] sm:$0xf]
      %v1371 = vld [vmem:[%s5 + $0xd4] sm:$0xf]
      %v1372 = vld [vmem:[%s5 + $0xd8] sm:$0xf]
      %v1373 = vld [vmem:[%s5 + $0xdc] sm:$0xf]
      %v1374 = vld [vmem:[%s5 + $0xe0] sm:$0xf]
      %v1375 = vld [vmem:[%s5 + $0xe4] sm:$0xf]
      %v1376 = vld [vmem:[%s5 + $0xe8] sm:$0xf]
      %v1377 = vld [vmem:[%s5 + $0xec] sm:$0xf]
      %v1378 = vld [vmem:[%s5 + $0xf0] sm:$0xf]
      %v1379 = vld [vmem:[%s5 + $0xf4] sm:$0xf]
      %v1380 = vld [vmem:[%s5 + $0xf8] sm:$0xf]
      %v1381 = vld [vmem:[%s5 + $0xfc] sm:$0xf]
      %v1382 = vld [vmem:[%s5 + $0x100] sm:$0xf]
      %v1383 = vld [vmem:[%s5 + $0x104] sm:$0xf]
      %v1384 = vld [vmem:[%s5 + $0x108] sm:$0xf]
      %v1385 = vld [vmem:[%s5 + $0x10c] sm:$0xf]
      %v1386 = vld [vmem:[%s5 + $0x110] sm:$0xf]
      %v1387 = vld [vmem:[%s5 + $0x114] sm:$0xf]
      %v1388 = vld [vmem:[%s5 + $0x118] sm:$0xf]
      %v1389 = vld [vmem:[%s5 + $0x11c] sm:$0xf]
      %v1390 = vld [vmem:[%s6] sm:$0x1]
      %v1392 = vlaneseq
      %v1393 = vshrl.u32 %v1392, 7
      %v1394 = vsub.s32 0, %v1393
      %v1395 = vrot.slane %v1390, %v1394
      %v1469 = vunpack.c.l.b16 %v1318
      %v1470 = vunpack.c.l.b16 %v1319
      %v1471 = vunpack.c.l.b16 %v1320
      %v1472 = vunpack.c.l.b16 %v1321
      %v1473 = vunpack.c.l.b16 %v1322
      %v1474 = vunpack.c.l.b16 %v1323
      %v1475 = vunpack.c.l.b16 %v1324
      %v1476 = vunpack.c.l.b16 %v1325
      %v1477 = vunpack.c.l.b16 %v1326
      %v1478 = vunpack.c.l.b16 %v1327
      %v1479 = vunpack.c.l.b16 %v1328
      %v1480 = vunpack.c.l.b16 %v1329
      %v1481 = vunpack.c.l.b16 %v1330
      %v1482 = vunpack.c.l.b16 %v1331
      %v1483 = vunpack.c.l.b16 %v1332
      %v1484 = vunpack.c.l.b16 %v1333
      %v1485 = vunpack.c.l.b16 %v1334
      %v1486 = vunpack.c.l.b16 %v1335
      %v1487 = vunpack.c.l.b16 %v1336
      %v1488 = vunpack.c.l.b16 %v1337
      %v1489 = vunpack.c.l.b16 %v1338
      %v1490 = vunpack.c.l.b16 %v1339
      %v1491 = vunpack.c.l.b16 %v1340
      %v1492 = vunpack.c.l.b16 %v1341
      %v1493 = vunpack.c.l.b16 %v1342
      %v1494 = vunpack.c.l.b16 %v1343
      %v1495 = vunpack.c.l.b16 %v1344
      %v1496 = vunpack.c.l.b16 %v1345
      %v1497 = vunpack.c.l.b16 %v1346
      %v1498 = vunpack.c.l.b16 %v1347
      %v1499 = vunpack.c.l.b16 %v1348
      %v1500 = vunpack.c.l.b16 %v1349
      %v1501 = vunpack.c.l.b16 %v1350
      %v1502 = vunpack.c.l.b16 %v1351
      %v1503 = vunpack.c.l.b16 %v1352
      %v1504 = vunpack.c.l.b16 %v1353
      %v1505 = vunpack.c.l.b16 %v1354
      %v1506 = vunpack.c.l.b16 %v1355
      %v1507 = vunpack.c.l.b16 %v1356
      %v1508 = vunpack.c.l.b16 %v1357
      %v1509 = vunpack.c.l.b16 %v1358
      %v1510 = vunpack.c.l.b16 %v1359
      %v1511 = vunpack.c.l.b16 %v1360
      %v1512 = vunpack.c.l.b16 %v1361
      %v1513 = vunpack.c.l.b16 %v1362
      %v1514 = vunpack.c.l.b16 %v1363
      %v1515 = vunpack.c.l.b16 %v1364
      %v1516 = vunpack.c.l.b16 %v1365
      %v1517 = vunpack.c.l.b16 %v1366
      %v1518 = vunpack.c.l.b16 %v1367
      %v1519 = vunpack.c.l.b16 %v1368
      %v1520 = vunpack.c.l.b16 %v1369
      %v1521 = vunpack.c.l.b16 %v1370
      %v1522 = vunpack.c.l.b16 %v1371
      %v1523 = vunpack.c.l.b16 %v1372
      %v1524 = vunpack.c.l.b16 %v1373
      %v1525 = vunpack.c.l.b16 %v1374
      %v1526 = vunpack.c.l.b16 %v1375
      %v1527 = vunpack.c.l.b16 %v1376
      %v1528 = vunpack.c.l.b16 %v1377
      %v1529 = vunpack.c.l.b16 %v1378
      %v1530 = vunpack.c.l.b16 %v1379
      %v1531 = vunpack.c.l.b16 %v1380
      %v1532 = vunpack.c.l.b16 %v1381
      %v1533 = vunpack.c.l.b16 %v1382
      %v1534 = vunpack.c.l.b16 %v1383
      %v1535 = vunpack.c.l.b16 %v1384
      %v1536 = vunpack.c.l.b16 %v1385
      %v1537 = vunpack.c.l.b16 %v1386
      %v1538 = vunpack.c.l.b16 %v1387
      %v1539 = vunpack.c.l.b16 %v1388
      %v1540 = vunpack.c.l.b16 %v1389
      %v1541 = vpack.c.b16 %v1470, %v1469
      %v1542 = vpack.c.b16 %v1472, %v1471
      %v1543 = vpack.c.b16 %v1474, %v1473
      %v1544 = vpack.c.b16 %v1476, %v1475
      %v1545 = vpack.c.b16 %v1478, %v1477
      %v1546 = vpack.c.b16 %v1480, %v1479
      %v1547 = vpack.c.b16 %v1482, %v1481
      %v1548 = vpack.c.b16 %v1484, %v1483
      %v1549 = vpack.c.b16 %v1486, %v1485
      %v1550 = vpack.c.b16 %v1488, %v1487
      %v1551 = vpack.c.b16 %v1490, %v1489
      %v1552 = vpack.c.b16 %v1492, %v1491
      %v1553 = vpack.c.b16 %v1494, %v1493
      %v1554 = vpack.c.b16 %v1496, %v1495
      %v1555 = vpack.c.b16 %v1498, %v1497
      %v1556 = vpack.c.b16 %v1500, %v1499
      %v1557 = vpack.c.b16 %v1502, %v1501
      %v1558 = vpack.c.b16 %v1504, %v1503
      %v1559 = vpack.c.b16 %v1506, %v1505
      %v1560 = vpack.c.b16 %v1508, %v1507
      %v1561 = vpack.c.b16 %v1510, %v1509
      %v1562 = vpack.c.b16 %v1512, %v1511
      %v1563 = vpack.c.b16 %v1514, %v1513
      %v1564 = vpack.c.b16 %v1516, %v1515
      %v1565 = vpack.c.b16 %v1518, %v1517
      %v1566 = vpack.c.b16 %v1520, %v1519
      %v1567 = vpack.c.b16 %v1522, %v1521
      %v1568 = vpack.c.b16 %v1524, %v1523
      %v1569 = vpack.c.b16 %v1526, %v1525
      %v1570 = vpack.c.b16 %v1528, %v1527
      %v1571 = vpack.c.b16 %v1530, %v1529
      %v1572 = vpack.c.b16 %v1532, %v1531
      %v1573 = vpack.c.b16 %v1534, %v1533
      %v1574 = vpack.c.b16 %v1536, %v1535
      %v1575 = vpack.c.b16 %v1538, %v1537
      %v1576 = vpack.c.b16 %v1540, %v1539
      %v1614 = vsel %vm1301, %v1300, 0
      %1616 = vmatprep.subr.bf16.mxu0 0
      %1617 = vmatpush1.bf16.msra.mxu0 %v1541
      %1618 = vmatprep.subr.bf16.mxu0 0
      %1619 = vmatpush1.bf16.msra.mxu0 %v1542
      %1620 = vmatprep.subr.bf16.mxu0 0
      %1621 = vmatpush1.bf16.msra.mxu0 %v1543
      %1622 = vmatprep.subr.bf16.mxu0 0
      %1623 = vmatpush1.bf16.msra.mxu0 %v1544
      %1624 = vmatprep.subr.bf16.mxu0 0
      %1625 = vmatpush1.bf16.msra.mxu0 %v1545
      %1626 = vmatprep.subr.bf16.mxu0 0
      %1627 = vmatpush1.bf16.msra.mxu0 %v1546
      %1628 = vmatprep.subr.bf16.mxu0 0
      %1629 = vmatpush1.bf16.msra.mxu0 %v1547
      %1630 = vmatprep.subr.bf16.mxu0 0
      %1631 = vmatpush1.bf16.msra.mxu0 %v1548
      %1632 = vmatprep.subr.bf16.mxu0 0
      %1633 = vmatpush1.bf16.msra.mxu0 %v1549
      %1634 = vmatprep.subr.bf16.mxu0 0
      %1635 = vmatpush1.bf16.msra.mxu0 %v1550
      %1636 = vmatprep.subr.bf16.mxu0 0
      %1637 = vmatpush1.bf16.msra.mxu0 %v1551
      %1638 = vmatprep.subr.bf16.mxu0 0
      %1639 = vmatpush1.bf16.msra.mxu0 %v1552
      %1640 = vmatprep.subr.bf16.mxu0 0
      %1641 = vmatpush1.bf16.msra.mxu0 %v1553
      %1642 = vmatprep.subr.bf16.mxu0 0
      %1643 = vmatpush1.bf16.msra.mxu0 %v1554
      %1644 = vmatprep.subr.bf16.mxu0 0
      %1645 = vmatpush1.bf16.msra.mxu0 %v1555
      %1646 = vmatprep.subr.bf16.mxu0 0
      %1647 = vmatpush1.bf16.msra.mxu0 %v1556
      %1648 = vmatprep.mubr.bf16.mxu0 %v1308
      %1649 = vmatmul.mubr.bf16.gmra.mrb[0].mxu0 %v1304
      %v1650 = vpop.f32.mrb[0].mxu0
      %v1651 = vadd.f32 %v1395, %v1650
      %v1652 = vpop.f32.mrb[0].mxu0
      %v1653 = vpop.f32.mrb[0].mxu0
      %v1654 = vadd.f32 %v1395, %v1653
      %v1655 = vpop.f32.mrb[0].mxu0
      %1656 = vdwg.mxu0
      %1657 = vmatprep.subr.bf16.mxu0 0
      %1658 = vmatpush1.bf16.msra.mxu0 %v1557
      %1659 = vmatprep.subr.bf16.mxu0 0
      %1660 = vmatpush1.bf16.msra.mxu0 %v1558
      %1661 = vmatprep.subr.bf16.mxu0 0
      %1662 = vmatpush1.bf16.msra.mxu0 %v1559
      %1663 = vmatprep.subr.bf16.mxu0 0
      %1664 = vmatpush1.bf16.msra.mxu0 %v1560
      %1665 = vmatprep.subr.bf16.mxu0 0
      %1666 = vmatpush1.bf16.msra.mxu0 %v1561
      %1667 = vmatprep.subr.bf16.mxu0 0
      %1668 = vmatpush1.bf16.msra.mxu0 %v1562
      %1669 = vmatprep.subr.bf16.mxu0 0
      %1670 = vmatpush1.bf16.msra.mxu0 %v1563
      %1671 = vmatprep.subr.bf16.mxu0 0
      %1672 = vmatpush1.bf16.msra.mxu0 %v1564
      %1673 = vmatprep.subr.bf16.mxu0 0
      %1674 = vmatpush1.bf16.msra.mxu0 %v1565
      %1675 = vmatprep.subr.bf16.mxu0 0
      %1676 = vmatpush1.bf16.msra.mxu0 %v1566
      %1677 = vmatprep.subr.bf16.mxu0 0
      %1678 = vmatpush1.bf16.msra.mxu0 %v1567
      %1679 = vmatprep.subr.bf16.mxu0 0
      %1680 = vmatpush1.bf16.msra.mxu0 %v1568
      %1681 = vmatprep.subr.bf16.mxu0 0
      %1682 = vmatpush1.bf16.msra.mxu0 %v1569
      %1683 = vmatprep.subr.bf16.mxu0 0
      %1684 = vmatpush1.bf16.msra.mxu0 %v1570
      %1685 = vmatprep.subr.bf16.mxu0 0
      %1686 = vmatpush1.bf16.msra.mxu0 %v1571
      %1687 = vmatprep.subr.bf16.mxu0 0
      %1688 = vmatpush1.bf16.msra.mxu0 %v1572
      %1689 = vmatprep.mubr.bf16.mxu0 %v1316
      %1690 = vmatmul.mubr.bf16.gmra.mrb[0].mxu0 %v1312
      %v1691 = vpop.f32.mrb[0].mxu0
      %v1692 = vadd.f32 %v1651, %v1691
      %v1693 = vpop.f32.mrb[0].mxu0
      %v1694 = vpop.f32.mrb[0].mxu0
      %v1695 = vadd.f32 %v1654, %v1694
      %v1696 = vpop.f32.mrb[0].mxu0
      %1697 = vdwg.mxu0
      %1698 = vmatprep.subr.bf16.mxu0 0
      %1699 = vmatpush1.bf16.msra.mxu0 %v1573
      %1700 = vmatprep.subr.bf16.mxu0 0
      %1701 = vmatpush1.bf16.msra.mxu0 %v1574
      %1702 = vmatprep.subr.bf16.mxu0 0
      %1703 = vmatpush1.bf16.msra.mxu0 %v1575
      %1704 = vmatprep.subr.bf16.mxu0 0
      %1705 = vmatpush1.bf16.msra.mxu0 %v1576
      %1706 = vmatprep.subr.bf16.mxu0 0
      %1707 = vmatpush1.bf16.msra.mxu0 0
      %1708 = vmatprep.subr.bf16.mxu0 0
      %1709 = vmatpush1.bf16.msra.mxu0 0
      %1710 = vmatprep.subr.bf16.mxu0 0
      %1711 = vmatpush1.bf16.msra.mxu0 0
      %1712 = vmatprep.subr.bf16.mxu0 0
      %1713 = vmatpush1.bf16.msra.mxu0 0
      %1714 = vmatprep.subr.bf16.mxu0 0
      %1715 = vmatpush1.bf16.msra.mxu0 0
      %1716 = vmatprep.subr.bf16.mxu0 0
      %1717 = vmatpush1.bf16.msra.mxu0 0
      %1718 = vmatprep.subr.bf16.mxu0 0
      %1719 = vmatpush1.bf16.msra.mxu0 0
      %1720 = vmatprep.subr.bf16.mxu0 0
      %1721 = vmatpush1.bf16.msra.mxu0 0
      %1722 = vmatprep.subr.bf16.mxu0 0
      %1723 = vmatpush1.bf16.msra.mxu0 0
      %1724 = vmatprep.subr.bf16.mxu0 0
      %1725 = vmatpush1.bf16.msra.mxu0 0
      %1726 = vmatprep.subr.bf16.mxu0 0
      %1727 = vmatpush1.bf16.msra.mxu0 0
      %1728 = vmatprep.subr.bf16.mxu0 0
      %1729 = vmatpush1.bf16.msra.mxu0 0
      %1730 = vmatprep.mubr.bf16.mxu0 0
      %1731 = vmatmul.mubr.bf16.gmra.mrb[0].mxu0 %v1614
      %v1732 = vpop.f32.mrb[0].mxu0
      %v1733 = vadd.f32 %v1692, %v1732
      %v1734 = vpop.f32.mrb[0].mxu0
      %v1735 = vpop.f32.mrb[0].mxu0
      %v1736 = vadd.f32 %v1695, %v1735
      %v1737 = vpop.f32.mrb[0].mxu0
      %1738 = vdwg.mxu0
      %v1739 = vmax.f32 %v1733, 0.0
      %v1740 = vmax.f32 %v1736, 0.0
      %v1741 = vpack.c.bf16 %v1740, %v1739
      %v1742 = vld [vmem:[%s7] sm:$0xf]
      %v1743 = vld [vmem:[%s7 + $0x4] sm:$0xf]
      %v1744 = vld [vmem:[%s7 + $0x8] sm:$0xf]
      %v1745 = vld [vmem:[%s7 + $0xc] sm:$0xf]
      %v1746 = vld [vmem:[%s7 + $0x10] sm:$0xf]
      %v1747 = vld [vmem:[%s7 + $0x14] sm:$0xf]
      %v1748 = vld [vmem:[%s7 + $0x18] sm:$0xf]
      %v1749 = vld [vmem:[%s7 + $0x1c] sm:$0xf]
      %v1750 = vld [vmem:[%s8] sm:$0x1]
      %v1752 = vlaneseq
      %v1753 = vshrl.u32 %v1752, 7
      %v1754 = vsub.s32 0, %v1753
      %v1755 = vrot.slane %v1750, %v1754
      %v1765 = vunpack.c.l.b16 %v1742
      %v1766 = vunpack.c.l.b16 %v1743
      %v1767 = vunpack.c.l.b16 %v1744
      %v1768 = vunpack.c.l.b16 %v1745
      %v1769 = vunpack.c.l.b16 %v1746
      %v1770 = vunpack.c.l.b16 %v1747
      %v1771 = vunpack.c.l.b16 %v1748
      %v1772 = vunpack.c.l.b16 %v1749
      %v1773 = vpack.c.b16 %v1766, %v1765
      %v1774 = vpack.c.b16 %v1768, %v1767
      %v1775 = vpack.c.b16 %v1770, %v1769
      %v1776 = vpack.c.b16 %v1772, %v1771
      %v1782 = vsel %vm1301, %v1741, 0
      %1784 = vmatprep.subr.bf16.mxu0 0
      %1785 = vmatpush1.bf16.msra.mxu0 %v1773
      %1786 = vmatprep.subr.bf16.mxu0 0
      %1787 = vmatpush1.bf16.msra.mxu0 %v1774
      %1788 = vmatprep.subr.bf16.mxu0 0
      %1789 = vmatpush1.bf16.msra.mxu0 %v1775
      %1790 = vmatprep.subr.bf16.mxu0 0
      %1791 = vmatpush1.bf16.msra.mxu0 %v1776
      %1792 = vmatprep.subr.bf16.mxu0 0
      %1793 = vmatpush1.bf16.msra.mxu0 0
      %1794 = vmatprep.subr.bf16.mxu0 0
      %1795 = vmatpush1.bf16.msra.mxu0 0
      %1796 = vmatprep.subr.bf16.mxu0 0
      %1797 = vmatpush1.bf16.msra.mxu0 0
      %1798 = vmatprep.subr.bf16.mxu0 0
      %1799 = vmatpush1.bf16.msra.mxu0 0
      %1800 = vmatprep.subr.bf16.mxu0 0
      %1801 = vmatpush1.bf16.msra.mxu0 0
      %1802 = vmatprep.subr.bf16.mxu0 0
      %1803 = vmatpush1.bf16.msra.mxu0 0
      %1804 = vmatprep.subr.bf16.mxu0 0
      %1805 = vmatpush1.bf16.msra.mxu0 0
      %1806 = vmatprep.subr.bf16.mxu0 0
      %1807 = vmatpush1.bf16.msra.mxu0 0
      %1808 = vmatprep.subr.bf16.mxu0 0
      %1809 = vmatpush1.bf16.msra.mxu0 0
      %1810 = vmatprep.subr.bf16.mxu0 0
      %1811 = vmatpush1.bf16.msra.mxu0 0
      %1812 = vmatprep.subr.bf16.mxu0 0
      %1813 = vmatpush1.bf16.msra.mxu0 0
      %1814 = vmatprep.subr.bf16.mxu0 0
      %1815 = vmatpush1.bf16.msra.mxu0 0
      %1816 = vmatprep.mubr.bf16.mxu0 0
      %1817 = vmatmul.mubr.bf16.gmra.mrb[0].mxu0 %v1782
      %v1818 = vpop.f32.mrb[0].mxu0
      %v1819 = vadd.f32 %v1755, %v1818
      %v1820 = vpop.f32.mrb[0].mxu0
      %v1821 = vpop.f32.mrb[0].mxu0
      %v1822 = vadd.f32 %v1755, %v1821
      %v1823 = vpop.f32.mrb[0].mxu0
      %1824 = vdwg.mxu0
      %v1825 = vadd.f32 %v1819, %v562
      %v1826 = vadd.f32 %v1822, %v565
      %v1827 = vmax.f32 %v1825, 0.0
      %v1828 = vmax.f32 %v1826, 0.0
      %v1829 = vpack.c.bf16 %v1828, %v1827
      %v1831 = vunpack.c.l.b16 %v1829
      %v1832 = vunpack.c.h.b16 %v1829
      %v1833 = vpack.c.b16 %v1831, %v1831
      %v1834 = vpack.c.b16 %v1832, %v1832
      %1837 = vst [vmem:[%s332] sm:$0xf] %v1833
      %1838 = vst [vmem:[%s332 + $0x4] sm:$0xf] %v1834
      %p1839 = scmp.lt.s32.totalorder %s20, 1
      %s1840 = scalar_select %p1839, %s20, 1
      %s1841 = smul.addr %s1840, 2
      %s1842 = smul.addr %s1841, 4
      %s1843 = scalar_lea.vmem %s9, %s1842
      // Predicated region
      $region57: #{skipnet_forward.8} parent=55 // pred_check
        %p1844 = pneg %p232
      $region58: #{skipnet_forward.8} parent=55 // pred_check_branch
        %1846 = sbr.rel (%p1844) target = $region60
      $region59: #{skipnet_forward.8} parent=55 // pred_region
        _
      $region60: #{skipnet_forward.8} parent=55 // pred_fallthru
        _
    $region56: #{skipnet_forward.8} parent=5 // pred_fallthru
      _
    %p1847 = scmp.le.s32.totalorder 2, %s15
    // Predicated region
    $region61: #{skipnet_forward.8} parent=5 // pred_check
      %p1848 = pneg %p1847
    $region62: #{skipnet_forward.8} parent=5 // pred_check_branch
      %1850 = sbr.rel (%p1848) target = $region64
    $region63: #{skipnet_forward.8} parent=5 // pred_region
      %s1851 = ssub.s32 %s15, 2
      // Predicated region
      $region65: #{skipnet_forward.8} parent=63 // pred_check
        %p1852 = pneg %p238
      $region66: #{skipnet_forward.8} parent=63 // pred_check_branch
        %1854 = sbr.rel (%p1852) target = $region68
      $region67: #{skipnet_forward.8} parent=63 // pred_region
        %p1855 = scmp.lt.s32.totalorder %s21, 1
        %s1856 = scalar_select %p1855, %s21, 1
        %s1857 = smul.addr %s1856, 2
        %s1858 = smul.addr %s1857, 4
        %s1859 = scalar_lea.vmem %s9, %s1858
      $region68: #{skipnet_forward.8} parent=63 // pred_fallthru
        _
    $region64: #{skipnet_forward.8} parent=5 // pred_fallthru
      _
  $region6: #{skipnet_forward.8} parent=0 // loop_footer
    %s19 = sadd.s32 1, %s15
  $region7: #{skipnet_forward.8} parent=0 // loop_footer_branch
    %14 = sbr.rel target = $region3
  $region8: #{skipnet_forward.8} parent=0 // loop_exit
    _

// kernel: skipnet_forward.7
$region0: #{skipnet_forward.7}
  #allocation0 [shape = 'u32[]', space=smem, size = 0x4, offset = 0x4, fixed_abs, tag = 'smem constant byte address 0x4 - core index']
  #allocation1 [shape = 'u32[144,128]{1,0:T(1,128)}', space=vmem, size = 0x12000, scoped, tag = 'internal scratch']
  #allocation2 [shape = 'bf16[10,10,128]{2,1,0:T(8,128)(2,1)}', space=vmem, size = 0xa000, scoped, tag = 'scratch operand']
  #allocation3 [shape = 'bf16[6,6,128]{2,1,0:T(8,128)(2,1)}', space=vmem, size = 0x3000, scoped, tag = 'scratch operand']
  %s0 = inlined_call_operand.vmem [shape: bf16[2,64,128], index: 0, kind: input, shape index: {}]
  %s1 = inlined_call_operand.vmem [shape: bf16[1152,128], index: 1, kind: input, shape index: {}]
  %s2 = inlined_call_operand.vmem [shape: f32[1,128], index: 2, kind: input, shape index: {}]
  %s3 = inlined_call_operand.vmem [shape: bf16[2,16,128], index: 3, kind: output, shape index: {}]
  %s4 = sld [smem:[#allocation0]]
  $region45: #{skipnet_forward.7} parent=0
    _
  %s6 = ssub.s32 1, %s4
  %s7 = scalar_select 0, %s6, %s4
  loop: start=0, step=1, limit=4
  $region2: #{skipnet_forward.7} parent=0 // loop_pre_header
    _
  $region3: #{skipnet_forward.7} parent=0 // loop_header
    %s9 = sphi 0, %s13
    %p10 = scmp.ge.s32.totalorder %s9, 4
    %s19 = sphi 0, %s21
    %s22 = sphi 0, %s19
    %s23 = sphi 0, %s22
    %s39 = sphi 0, %s23
    %s43 = sphi 0, %s43
    %s45 = sphi 0, %s43
    %s46 = sphi 0, %s45
    %s60 = sphi 0, %s46
    %s64 = sphi 0, %s64
    %s66 = sphi 0, %s64
    %s67 = sphi 0, %s66
    %s81 = sphi 0, %s67
    %s87 = sphi 0, %s89
    %s90 = sphi 0, %s87
    %s91 = sphi 0, %s90
    %s107 = sphi 0, %s91
  $region4: #{skipnet_forward.7} parent=0 // loop_header_branch
    %12 = sbr.rel (%p10) target = $region8
  $region5: #{skipnet_forward.7} parent=0 // loop_body
    %s14 = ssub.s32 %s9, 1
    %s15 = ssub.s32 %s9, 2
    %s16 = sadd.s32 %s9, 1
    %s17 = ssub.s32 %s9, %s16
    %p18 = scmp.eq.s32.totalorder %s17, 0
    %s20 = sadd.s32 %s19, 1
    %s21 = scalar_select %p18, %s19, %s20
    %p24 = pneg %p18
    %p25 = scmp.eq.s32.totalorder %s9, 1
    %p26 = por %p24, %p25
    %p27 = scmp.ne.s32.totalorder %s19, %s22
    %p28 = scmp.eq.s32.totalorder %s9, 0
    %p29 = por %p27, %p28
    %p30 = scmp.ne.s32.totalorder %s19, %s22
    %p31 = scmp.eq.s32.totalorder %s14, 1
    %p32 = por %p30, %p31
    %p33 = scmp.ne.s32.totalorder %s22, %s23
    %p34 = scmp.eq.s32.totalorder %s14, 0
    %p35 = por %p33, %p34
    %p36 = scmp.ne.s32.totalorder %s22, %s23
    %p37 = scmp.eq.s32.totalorder %s15, 1
    %p38 = por %p36, %p37
    %p40 = scmp.ne.s32.totalorder %s23, %s39
    %p41 = scmp.eq.s32.totalorder %s15, 0
    %p42 = por %p40, %p41
    %s44 = sadd.s32 %s43, 1
    %p47 = scmp.eq.s32.totalorder %s9, 1
    %p48 = scmp.ne.s32.totalorder %s43, %s45
    %p49 = scmp.eq.s32.totalorder %s9, 0
    %p50 = por %p48, %p49
    %p51 = scmp.ne.s32.totalorder %s43, %s45
    %p52 = scmp.eq.s32.totalorder %s14, 1
    %p53 = por %p51, %p52
    %p54 = scmp.ne.s32.totalorder %s45, %s46
    %p55 = scmp.eq.s32.totalorder %s14, 0
    %p56 = por %p54, %p55
    %p57 = scmp.ne.s32.totalorder %s45, %s46
    %p58 = scmp.eq.s32.totalorder %s15, 1
    %p59 = por %p57, %p58
    %p61 = scmp.ne.s32.totalorder %s46, %s60
    %p62 = scmp.eq.s32.totalorder %s15, 0
    %p63 = por %p61, %p62
    %s65 = sadd.s32 %s64, 1
    %p68 = scmp.eq.s32.totalorder %s9, 1
    %p69 = scmp.ne.s32.totalorder %s64, %s66
    %p70 = scmp.eq.s32.totalorder %s9, 0
    %p71 = por %p69, %p70
    %p72 = scmp.ne.s32.totalorder %s64, %s66
    %p73 = scmp.eq.s32.totalorder %s14, 1
    %p74 = por %p72, %p73
    %p75 = scmp.ne.s32.totalorder %s66, %s67
    %p76 = scmp.eq.s32.totalorder %s14, 0
    %p77 = por %p75, %p76
    %p78 = scmp.ne.s32.totalorder %s66, %s67
    %p79 = scmp.eq.s32.totalorder %s15, 1
    %p80 = por %p78, %p79
    %p82 = scmp.ne.s32.totalorder %s67, %s81
    %p83 = scmp.eq.s32.totalorder %s15, 0
    %p84 = por %p82, %p83
    %s85 = ssub.s32 %s9, %s16
    %p86 = scmp.eq.s32.totalorder %s85, 0
    %s88 = sadd.s32 %s87, 1
    %s89 = scalar_select %p86, %s87, %s88
    %p92 = pneg %p86
    %p93 = scmp.eq.s32.totalorder %s9, 1
    %p94 = por %p92, %p93
    %p95 = scmp.ne.s32.totalorder %s87, %s90
    %p96 = scmp.eq.s32.totalorder %s9, 0
    %p97 = por %p95, %p96
    %p98 = scmp.ne.s32.totalorder %s87, %s90
    %p99 = scmp.eq.s32.totalorder %s14, 1
    %p100 = por %p98, %p99
    %p101 = scmp.ne.s32.totalorder %s90, %s91
    %p102 = scmp.eq.s32.totalorder %s14, 0
    %p103 = por %p101, %p102
    %p104 = scmp.ne.s32.totalorder %s90, %s91
    %p105 = scmp.eq.s32.totalorder %s15, 1
    %p106 = por %p104, %p105
    %p108 = scmp.ne.s32.totalorder %s91, %s107
    %p109 = scmp.eq.s32.totalorder %s15, 0
    %p110 = por %p108, %p109
    %p111 = scmp.le.s32.totalorder 1, %s9
    %p112 = scmp.lt.s32.totalorder %s9, 3
    %p113 = pnand %p111, %p112
    %p114 = pneg %p113
    // Predicated region
    $region9: #{skipnet_forward.7} parent=5 // pred_check
      _
    $region10: #{skipnet_forward.7} parent=5 // pred_check_branch
      %116 = sbr.rel (%p113) target = $region12
    $region11: #{skipnet_forward.7} parent=5 // pred_region
      %s117 = ssub.s32 %s9, 1
      // Predicated region
      $region13: #{skipnet_forward.7} parent=11 // pred_check
        %p118 = pneg %p56
      $region14: #{skipnet_forward.7} parent=11 // pred_check_branch
        %120 = sbr.rel (%p118) target = $region16
      $region15: #{skipnet_forward.7} parent=11 // pred_region
        _
      $region16: #{skipnet_forward.7} parent=11 // pred_fallthru
        _
      // Predicated region
      $region17: #{skipnet_forward.7} parent=11 // pred_check
        %p121 = pneg %p77
      $region18: #{skipnet_forward.7} parent=11 // pred_check_branch
        %123 = sbr.rel (%p121) target = $region20
      $region19: #{skipnet_forward.7} parent=11 // pred_region
        _
      $region20: #{skipnet_forward.7} parent=11 // pred_fallthru
        _
    $region12: #{skipnet_forward.7} parent=5 // pred_fallthru
      _
    %p124 = scmp.lt.s32.totalorder %s9, 2
    // Predicated region
    $region21: #{skipnet_forward.7} parent=5 // pred_check
      %p125 = pneg %p124
    $region22: #{skipnet_forward.7} parent=5 // pred_check_branch
      %127 = sbr.rel (%p125) target = $region24
    $region23: #{skipnet_forward.7} parent=5 // pred_region
      // Predicated region
      $region25: #{skipnet_forward.7} parent=23 // pred_check
        %p128 = pneg %p29
      $region26: #{skipnet_forward.7} parent=23 // pred_check_branch
        %130 = sbr.rel (%p128) target = $region28
      $region27: #{skipnet_forward.7} parent=23 // pred_region
        %p131 = scmp.lt.s32.totalorder %s9, 1
        %s132 = scalar_select %p131, %s9, 1
        %s133 = smul.addr %s132, 8
        %s134 = smul.addr %s133, 4
        %s135 = scalar_lea.vmem %s0, %s134
      $region28: #{skipnet_forward.7} parent=23 // pred_fallthru
        _
    $region24: #{skipnet_forward.7} parent=5 // pred_fallthru
      _
    %p136 = scmp.le.s32.totalorder 1, %s9
    %p137 = scmp.lt.s32.totalorder %s9, 3
    %p138 = pnand %p136, %p137
    %p139 = pneg %p138
    // Predicated region
    $region29: #{skipnet_forward.7} parent=5 // pred_check
      _
    $region30: #{skipnet_forward.7} parent=5 // pred_check_branch
      %141 = sbr.rel (%p138) target = $region32
    $region31: #{skipnet_forward.7} parent=5 // pred_region
      %s142 = ssub.s32 %s9, 1
      %p143 = scmp.lt.s32.totalorder %s14, 1
      %s144 = scalar_select %p143, %s14, 1
      %s145 = smul.addr %s144, 8
      %s146 = smul.addr %s145, 4
      %s147 = scalar_lea.vmem %s0, %s146
      %p148 = pneg %p35
      %p149 = pneg %p32
      %p150 = pneg %p56
      %p151 = pneg %p53
      %p152 = pneg %p77
      %p153 = pneg %p74
      %p154 = pneg %p103
      %p155 = pneg %p100
      %p156 = scmp.lt.s32.totalorder %s14, 1
      %s157 = scalar_select %p156, %s14, 1
      %s158 = smul.addr %s157, 2
      %s159 = smul.addr %s158, 4
      %s160 = scalar_lea.vmem %s3, %s159
      %p161 = scmp.lt.s32.totalorder %s14, 1
      %s162 = scalar_select %p161, %s14, 1
      %s163 = smul.addr %s162, 8
      %s164 = smul.addr %s163, 4
      %s165 = scalar_lea.vmem %s0, %s164
      %p166 = scmp.lt.s32.totalorder %s14, 1
      %s167 = scalar_select %p166, %s14, 1
      %s168 = smul.addr %s167, 2
      %s169 = smul.addr %s168, 4
      %s170 = scalar_lea.vmem %s3, %s169
      %v173 = vld [vmem:[%s165] sm:$0xf]
      %v174 = vld [vmem:[%s165 + $0x4] sm:$0xf]
      %v175 = vld [vmem:[%s165 + $0x8] sm:$0xf]
      %v176 = vld [vmem:[%s165 + $0xc] sm:$0xf]
      %v177 = vld [vmem:[%s165 + $0x10] sm:$0xf]
      %v178 = vld [vmem:[%s165 + $0x14] sm:$0xf]
      %v179 = vld [vmem:[%s165 + $0x18] sm:$0xf]
      %v180 = vld [vmem:[%s165 + $0x1c] sm:$0xf]
      %181 = vst [vmem:[#allocation2] sm:$0xf] 4286644096
      %182 = vst [vmem:[#allocation2 + $0x4] sm:$0x1] 4286644096
      %183 = vst [vmem:[#allocation2 + $0x8] sm:$0xf] 4286644096
      %184 = vst [vmem:[#allocation2 + $0xc] sm:$0x1] 4286644096
      %185 = vst [vmem:[#allocation2 + $0x10] sm:$0xf] 4286644096
      %186 = vst [vmem:[#allocation2 + $0x14] sm:$0x1] 4286644096
      %187 = vst [vmem:[#allocation2 + $0x18] sm:$0xf] 4286644096
      %188 = vst [vmem:[#allocation2 + $0x1c] sm:$0x1] 4286644096
      %189 = vst [vmem:[#allocation2 + $0x20] sm:$0xf] 4286644096
      %190 = vst [vmem:[#allocation2 + $0x24] sm:$0x1] 4286644096
      %191 = vst [vmem:[#allocation2 + $0x28] sm:$0xf] 4286644096
      %192 = vst [vmem:[#allocation2 + $0x2c] sm:$0x1] 4286644096
      %193 = vst [vmem:[#allocation2 + $0x30] sm:$0xf] 4286644096
      %194 = vst [vmem:[#allocation2 + $0x34] sm:$0x1] 4286644096
      %195 = vst [vmem:[#allocation2 + $0x38] sm:$0xf] 4286644096
      %196 = vst [vmem:[#allocation2 + $0x3c] sm:$0x1] 4286644096
      %197 = vst [vmem:[#allocation2 + $0x40] sm:$0xf] 4286644096
      %198 = vst [vmem:[#allocation2 + $0x44] sm:$0x1] 4286644096
      %199 = vst [vmem:[#allocation2 + $0x48] sm:$0xf] 4286644096
      %200 = vst [vmem:[#allocation2 + $0x4c] sm:$0x1] 4286644096
      %v202 = vshrl.u32 %v173, 16
      %v204 = vrot.slane %v202, 7
      %v205 = vshll.u32 %v173, 16
      %v207 = vor.u32 %v204, %v205
      %v208 = vrot.slane %v204, 4
      %v210 = vshrl.u32 %v174, 16
      %v212 = vrot.slane %v210, 7
      %v213 = vshll.u32 %v174, 16
      %v215 = vor.u32 %v212, %v213
      %v216 = vrot.slane %v212, 4
      %v218 = vshrl.u32 %v175, 16
      %v220 = vrot.slane %v218, 7
      %v221 = vshll.u32 %v175, 16
      %v223 = vor.u32 %v220, %v221
      %v224 = vrot.slane %v220, 4
      %v226 = vshrl.u32 %v176, 16
      %v228 = vrot.slane %v226, 7
      %v229 = vshll.u32 %v176, 16
      %v231 = vor.u32 %v228, %v229
      %v232 = vrot.slane %v228, 4
      %v234 = vshrl.u32 %v177, 16
      %v236 = vrot.slane %v234, 7
      %v237 = vshll.u32 %v177, 16
      %v239 = vor.u32 %v236, %v237
      %v240 = vrot.slane %v236, 4
      %v242 = vshrl.u32 %v178, 16
      %v244 = vrot.slane %v242, 7
      %v245 = vshll.u32 %v178, 16
      %v247 = vor.u32 %v244, %v245
      %v248 = vrot.slane %v244, 4
      %v250 = vshrl.u32 %v179, 16
      %v252 = vrot.slane %v250, 7
      %v253 = vshll.u32 %v179, 16
      %v255 = vor.u32 %v252, %v253
      %v256 = vrot.slane %v252, 4
      %v258 = vshrl.u32 %v180, 16
      %v260 = vrot.slane %v258, 7
      %v261 = vshll.u32 %v180, 16
      %v263 = vor.u32 %v260, %v261
      %v264 = vrot.slane %v260, 4
      %s281 = scalar_lea.vmem [#allocation2], 8
      %vm282 = vcmask 1043456
      %vm283 = vsmask.f32 7938
      %vm284 = vmand %vm282, %vm283
      %v285 = vld [vmem:[%s281] sm:$0xf]
      %v286 = vsel %vm284, %v207, %v285
      %287 = vst [vmem:[%s281] sm:$0xf] %v286
      %vm288 = vcmask 1040384
      %vm289 = vsmask.f32 256
      %vm290 = vmand %vm288, %vm289
      %v291 = vld [vmem:[%s281 + $0x4] sm:$0x1]
      %v292 = vsel %vm290, %v208, %v291
      %293 = vst [vmem:[%s281 + $0x4] sm:$0x1] %v292
      %v294 = vld [vmem:[%s281 + $0x8] sm:$0xf]
      %v295 = vsel %vm284, %v215, %v294
      %296 = vst [vmem:[%s281 + $0x8] sm:$0xf] %v295
      %v297 = vld [vmem:[%s281 + $0xc] sm:$0x1]
      %v298 = vsel %vm290, %v216, %v297
      %299 = vst [vmem:[%s281 + $0xc] sm:$0x1] %v298
      %v300 = vld [vmem:[%s281 + $0x10] sm:$0xf]
      %v301 = vsel %vm284, %v223, %v300
      %302 = vst [vmem:[%s281 + $0x10] sm:$0xf] %v301
      %v303 = vld [vmem:[%s281 + $0x14] sm:$0x1]
      %v304 = vsel %vm290, %v224, %v303
      %305 = vst [vmem:[%s281 + $0x14] sm:$0x1] %v304
      %v306 = vld [vmem:[%s281 + $0x18] sm:$0xf]
      %v307 = vsel %vm284, %v231, %v306
      %308 = vst [vmem:[%s281 + $0x18] sm:$0xf] %v307
      %v309 = vld [vmem:[%s281 + $0x1c] sm:$0x1]
      %v310 = vsel %vm290, %v232, %v309
      %311 = vst [vmem:[%s281 + $0x1c] sm:$0x1] %v310
      %v312 = vld [vmem:[%s281 + $0x20] sm:$0xf]
      %v313 = vsel %vm284, %v239, %v312
      %314 = vst [vmem:[%s281 + $0x20] sm:$0xf] %v313
      %v315 = vld [vmem:[%s281 + $0x24] sm:$0x1]
      %v316 = vsel %vm290, %v240, %v315
      %317 = vst [vmem:[%s281 + $0x24] sm:$0x1] %v316
      %v318 = vld [vmem:[%s281 + $0x28] sm:$0xf]
      %v319 = vsel %vm284, %v247, %v318
      %320 = vst [vmem:[%s281 + $0x28] sm:$0xf] %v319
      %v321 = vld [vmem:[%s281 + $0x2c] sm:$0x1]
      %v322 = vsel %vm290, %v248, %v321
      %323 = vst [vmem:[%s281 + $0x2c] sm:$0x1] %v322
      %v324 = vld [vmem:[%s281 + $0x30] sm:$0xf]
      %v325 = vsel %vm284, %v255, %v324
      %326 = vst [vmem:[%s281 + $0x30] sm:$0xf] %v325
      %v327 = vld [vmem:[%s281 + $0x34] sm:$0x1]
      %v328 = vsel %vm290, %v256, %v327
      %329 = vst [vmem:[%s281 + $0x34] sm:$0x1] %v328
      %v330 = vld [vmem:[%s281 + $0x38] sm:$0xf]
      %v331 = vsel %vm284, %v263, %v330
      %332 = vst [vmem:[%s281 + $0x38] sm:$0xf] %v331
      %v333 = vld [vmem:[%s281 + $0x3c] sm:$0x1]
      %v334 = vsel %vm290, %v264, %v333
      %335 = vst [vmem:[%s281 + $0x3c] sm:$0x1] %v334
      %v336 = vld [vmem:[#allocation2] sm:$0xf]
      %v337 = vld [vmem:[#allocation2 + $0x10] sm:$0xf]
      %v338 = vld [vmem:[#allocation2 + $0x20] sm:$0xf]
      %v339 = vld [vmem:[#allocation2 + $0x30] sm:$0xf]
      %v340 = vld [vmem:[#allocation2 + $0x4] sm:$0x1]
      %v341 = vld [vmem:[#allocation2 + $0x14] sm:$0x1]
      %v342 = vld [vmem:[#allocation2 + $0x24] sm:$0x1]
      %v343 = vld [vmem:[#allocation2 + $0x34] sm:$0x1]
      %vm344 = vsmask.f32 3328
      %vm345 = vsmask.f32 7440
      %vm346 = vmor %vm344, %vm345
      %v348 = vshrl.u32 %v336, 16
      %v350 = vrot.slane %v348, 4
      %v351 = vshll.u32 %v336, 16
      %v353 = vrot.slane %v351, 5
      %v354 = vor.u32 %v350, %v353
      %v355 = vrot.slane %v354, 4
      %v357 = vshll.u32 %v340, 16
      %v359 = vrot.slane %v357, 5
      %v360 = vsel %vm346, %v355, %v359
      %v362 = vshrl.u32 %v337, 16
      %v364 = vrot.slane %v362, 4
      %v365 = vshll.u32 %v337, 16
      %v367 = vrot.slane %v365, 5
      %v368 = vor.u32 %v364, %v367
      %v369 = vrot.slane %v368, 4
      %v371 = vshll.u32 %v341, 16
      %v373 = vrot.slane %v371, 5
      %v374 = vsel %vm346, %v369, %v373
      %v376 = vshrl.u32 %v338, 16
      %v378 = vrot.slane %v376, 4
      %v379 = vshll.u32 %v338, 16
      %v381 = vrot.slane %v379, 5
      %v382 = vor.u32 %v378, %v381
      %v383 = vrot.slane %v382, 4
      %v385 = vshll.u32 %v342, 16
      %v387 = vrot.slane %v385, 5
      %v388 = vsel %vm346, %v383, %v387
      %v390 = vshrl.u32 %v339, 16
      %v392 = vrot.slane %v390, 4
      %v393 = vshll.u32 %v339, 16
      %v395 = vrot.slane %v393, 5
      %v396 = vor.u32 %v392, %v395
      %v397 = vrot.slane %v396, 4
      %v399 = vshll.u32 %v343, 16
      %v401 = vrot.slane %v399, 5
      %v402 = vsel %vm346, %v397, %v401
      %v407 = vmax.bf16 %v336, %v360
      %v408 = vmax.bf16 %v337, %v374
      %v409 = vmax.bf16 %v338, %v388
      %v410 = vmax.bf16 %v339, %v402
      %v411 = vld [vmem:[#allocation2] sm:$0xe]
      %v412 = vld [vmem:[#allocation2 + $0x10] sm:$0xe]
      %v413 = vld [vmem:[#allocation2 + $0x20] sm:$0xe]
      %v414 = vld [vmem:[#allocation2 + $0x30] sm:$0xe]
      %vm423 = vcmask 1042432
      %vm424 = vcmask 1046532
      %vm425 = vmor %vm423, %vm424
      %v426 = vrot.slane %v411, 5
      %v427 = vrot.slane %v426, 4
      %v428 = vrot.slane %v340, 5
      %v429 = vsel %vm425, %v427, %v428
      %v430 = vrot.slane %v412, 5
      %v431 = vrot.slane %v430, 4
      %v432 = vrot.slane %v341, 5
      %v433 = vsel %vm425, %v431, %v432
      %v434 = vrot.slane %v413, 5
      %v435 = vrot.slane %v434, 4
      %v436 = vrot.slane %v342, 5
      %v437 = vsel %vm425, %v435, %v436
      %v438 = vrot.slane %v414, 5
      %v439 = vrot.slane %v438, 4
      %v440 = vrot.slane %v343, 5
      %v441 = vsel %vm425, %v439, %v440
      %v446 = vmax.bf16 %v407, %v429
      %v447 = vmax.bf16 %v408, %v433
      %v448 = vmax.bf16 %v409, %v437
      %v449 = vmax.bf16 %v410, %v441
      %v450 = vld [vmem:[%s281] sm:$0xf]
      %v451 = vld [vmem:[%s281 + $0x10] sm:$0xf]
      %v452 = vld [vmem:[%s281 + $0x20] sm:$0xf]
      %v453 = vld [vmem:[%s281 + $0x30] sm:$0xf]
      %v454 = vmax.bf16 %v446, %v450
      %v455 = vmax.bf16 %v447, %v451
      %v456 = vmax.bf16 %v448, %v452
      %v457 = vmax.bf16 %v449, %v453
      %v458 = vld [vmem:[%s281 + $0x4] sm:$0x1]
      %v459 = vld [vmem:[%s281 + $0x14] sm:$0x1]
      %v460 = vld [vmem:[%s281 + $0x24] sm:$0x1]
      %v461 = vld [vmem:[%s281 + $0x34] sm:$0x1]
      %v463 = vshrl.u32 %v450, 16
      %v465 = vrot.slane %v463, 4
      %v466 = vshll.u32 %v450, 16
      %v468 = vrot.slane %v466, 5
      %v469 = vor.u32 %v465, %v468
      %v470 = vrot.slane %v469, 4
      %v472 = vshll.u32 %v458, 16
      %v474 = vrot.slane %v472, 5
      %v475 = vsel %vm346, %v470, %v474
      %v477 = vshrl.u32 %v451, 16
      %v479 = vrot.slane %v477, 4
      %v480 = vshll.u32 %v451, 16
      %v482 = vrot.slane %v480, 5
      %v483 = vor.u32 %v479, %v482
      %v484 = vrot.slane %v483, 4
      %v486 = vshll.u32 %v459, 16
      %v488 = vrot.slane %v486, 5
      %v489 = vsel %vm346, %v484, %v488
      %v491 = vshrl.u32 %v452, 16
      %v493 = vrot.slane %v491, 4
      %v494 = vshll.u32 %v452, 16
      %v496 = vrot.slane %v494, 5
      %v497 = vor.u32 %v493, %v496
      %v498 = vrot.slane %v497, 4
      %v500 = vshll.u32 %v460, 16
      %v502 = vrot.slane %v500, 5
      %v503 = vsel %vm346, %v498, %v502
      %v505 = vshrl.u32 %v453, 16
      %v507 = vrot.slane %v505, 4
      %v508 = vshll.u32 %v453, 16
      %v510 = vrot.slane %v508, 5
      %v511 = vor.u32 %v507, %v510
      %v512 = vrot.slane %v511, 4
      %v514 = vshll.u32 %v461, 16
      %v516 = vrot.slane %v514, 5
      %v517 = vsel %vm346, %v512, %v516
      %v522 = vmax.bf16 %v454, %v475
      %v523 = vmax.bf16 %v455, %v489
      %v524 = vmax.bf16 %v456, %v503
      %v525 = vmax.bf16 %v457, %v517
      %v526 = vld [vmem:[%s281] sm:$0xe]
      %v527 = vld [vmem:[%s281 + $0x10] sm:$0xe]
      %v528 = vld [vmem:[%s281 + $0x20] sm:$0xe]
      %v529 = vld [vmem:[%s281 + $0x30] sm:$0xe]
      %v538 = vrot.slane %v526, 5
      %v539 = vrot.slane %v538, 4
      %v540 = vrot.slane %v458, 5
      %v541 = vsel %vm425, %v539, %v540
      %v542 = vrot.slane %v527, 5
      %v543 = vrot.slane %v542, 4
      %v544 = vrot.slane %v459, 5
      %v545 = vsel %vm425, %v543, %v544
      %v546 = vrot.slane %v528, 5
      %v547 = vrot.slane %v546, 4
      %v548 = vrot.slane %v460, 5
      %v549 = vsel %vm425, %v547, %v548
      %v550 = vrot.slane %v529, 5
      %v551 = vrot.slane %v550, 4
      %v552 = vrot.slane %v461, 5
      %v553 = vsel %vm425, %v551, %v552
      %v558 = vmax.bf16 %v522, %v541
      %v559 = vmax.bf16 %v523, %v545
      %v560 = vmax.bf16 %v524, %v549
      %v561 = vmax.bf16 %v525, %v553
      %s562 = scalar_lea.vmem [#allocation2], 16
      %v563 = vld [vmem:[%s562] sm:$0xf]
      %v564 = vld [vmem:[%s562 + $0x10] sm:$0xf]
      %v565 = vld [vmem:[%s562 + $0x20] sm:$0xf]
      %v566 = vld [vmem:[%s562 + $0x30] sm:$0xf]
      %v567 = vmax.bf16 %v558, %v563
      %v568 = vmax.bf16 %v559, %v564
      %v569 = vmax.bf16 %v560, %v565
      %v570 = vmax.bf16 %v561, %v566
      %v571 = vld [vmem:[%s562 + $0x4] sm:$0x1]
      %v572 = vld [vmem:[%s562 + $0x14] sm:$0x1]
      %v573 = vld [vmem:[%s562 + $0x24] sm:$0x1]
      %v574 = vld [vmem:[%s562 + $0x34] sm:$0x1]
      %v576 = vshrl.u32 %v563, 16
      %v578 = vrot.slane %v576, 4
      %v579 = vshll.u32 %v563, 16
      %v581 = vrot.slane %v579, 5
      %v582 = vor.u32 %v578, %v581
      %v583 = vrot.slane %v582, 4
      %v585 = vshll.u32 %v571, 16
      %v587 = vrot.slane %v585, 5
      %v588 = vsel %vm346, %v583, %v587
      %v590 = vshrl.u32 %v564, 16
      %v592 = vrot.slane %v590, 4
      %v593 = vshll.u32 %v564, 16
      %v595 = vrot.slane %v593, 5
      %v596 = vor.u32 %v592, %v595
      %v597 = vrot.slane %v596, 4
      %v599 = vshll.u32 %v572, 16
      %v601 = vrot.slane %v599, 5
      %v602 = vsel %vm346, %v597, %v601
      %v604 = vshrl.u32 %v565, 16
      %v606 = vrot.slane %v604, 4
      %v607 = vshll.u32 %v565, 16
      %v609 = vrot.slane %v607, 5
      %v610 = vor.u32 %v606, %v609
      %v611 = vrot.slane %v610, 4
      %v613 = vshll.u32 %v573, 16
      %v615 = vrot.slane %v613, 5
      %v616 = vsel %vm346, %v611, %v615
      %v618 = vshrl.u32 %v566, 16
      %v620 = vrot.slane %v618, 4
      %v621 = vshll.u32 %v566, 16
      %v623 = vrot.slane %v621, 5
      %v624 = vor.u32 %v620, %v623
      %v625 = vrot.slane %v624, 4
      %v627 = vshll.u32 %v574, 16
      %v629 = vrot.slane %v627, 5
      %v630 = vsel %vm346, %v625, %v629
      %v635 = vmax.bf16 %v567, %v588
      %v636 = vmax.bf16 %v568, %v602
      %v637 = vmax.bf16 %v569, %v616
      %v638 = vmax.bf16 %v570, %v630
      %v639 = vld [vmem:[%s562] sm:$0xe]
      %v640 = vld [vmem:[%s562 + $0x10] sm:$0xe]
      %v641 = vld [vmem:[%s562 + $0x20] sm:$0xe]
      %v642 = vld [vmem:[%s562 + $0x30] sm:$0xe]
      %v651 = vrot.slane %v639, 5
      %v652 = vrot.slane %v651, 4
      %v653 = vrot.slane %v571, 5
      %v654 = vsel %vm425, %v652, %v653
      %v655 = vrot.slane %v640, 5
      %v656 = vrot.slane %v655, 4
      %v657 = vrot.slane %v572, 5
      %v658 = vsel %vm425, %v656, %v657
      %v659 = vrot.slane %v641, 5
      %v660 = vrot.slane %v659, 4
      %v661 = vrot.slane %v573, 5
      %v662 = vsel %vm425, %v660, %v661
      %v663 = vrot.slane %v642, 5
      %v664 = vrot.slane %v663, 4
      %v665 = vrot.slane %v574, 5
      %v666 = vsel %vm425, %v664, %v665
      %v671 = vmax.bf16 %v635, %v654
      %v672 = vmax.bf16 %v636, %v658
      %v673 = vmax.bf16 %v637, %v662
      %v674 = vmax.bf16 %v638, %v666
      %v679 = vunpack.c.l.b16 %v671
      %v680 = vunpack.c.l.b16 %v672
      %v681 = vunpack.c.l.b16 %v673
      %v682 = vunpack.c.l.b16 %v674
      %v683 = vpack.c.b16 %v679, %v679
      %v684 = vpack.c.b16 %v680, %v680
      %v685 = vpack.c.b16 %v681, %v681
      %v686 = vpack.c.b16 %v682, %v682
      %v688 = vshll.u32 %v683, 16
      %v690 = vrot.slane %v688, 1
      %v692 = vshll.u32 %v684, 16
      %v694 = vrot.slane %v692, 1
      %v696 = vshll.u32 %v685, 16
      %v698 = vrot.slane %v696, 1
      %v700 = vshll.u32 %v686, 16
      %v702 = vrot.slane %v700, 1
      %v707 = vrot.slane %v683, 1
      %v708 = vrot.slane %v684, 1
      %v709 = vrot.slane %v685, 1
      %v710 = vrot.slane %v686, 1
      %v711 = vrot.slane %v688, 2
      %v712 = vrot.slane %v692, 2
      %v713 = vrot.slane %v696, 2
      %v714 = vrot.slane %v700, 2
      %v719 = vsel %vm290, %v671, %v690
      %v720 = vsel %vm290, %v672, %v694
      %v721 = vsel %vm290, %v673, %v698
      %v722 = vsel %vm290, %v674, %v702
      %vm723 = vcmask 1040384
      %v726 = vsel %vm723, %v719, %v707
      %v730 = vsel %vm723, %v720, %v708
      %v734 = vsel %vm723, %v721, %v709
      %v738 = vsel %vm723, %v722, %v710
      %vm740 = vcmask 1041408
      %vm741 = vsmask.f32 1280
      %vm742 = vmand %vm740, %vm741
      %v743 = vsel %vm742, %v726, %v711
      %v744 = vsel %vm742, %v730, %v712
      %v745 = vsel %vm742, %v734, %v713
      %v746 = vsel %vm742, %v738, %v714
      %747 = vst [vmem:[#allocation3] sm:$0x7] 0
      %748 = vst [vmem:[#allocation3 + $0x4] sm:$0x7] 0
      %749 = vst [vmem:[#allocation3 + $0x8] sm:$0x7] 0
      %750 = vst [vmem:[#allocation3 + $0xc] sm:$0x7] 0
      %751 = vst [vmem:[#allocation3 + $0x10] sm:$0x7] 0
      %752 = vst [vmem:[#allocation3 + $0x14] sm:$0x7] 0
      %v757 = vunpack.c.l.b16 %v743
      %v758 = vunpack.c.l.b16 %v744
      %v759 = vunpack.c.l.b16 %v745
      %v760 = vunpack.c.l.b16 %v746
      %v761 = vpack.c.b16 %v757, %v757
      %v762 = vpack.c.b16 %v758, %v758
      %v763 = vpack.c.b16 %v759, %v759
      %v764 = vpack.c.b16 %v760, %v760
      %v766 = vshrl.u32 %v761, 16
      %v768 = vrot.slane %v766, 7
      %v769 = vshll.u32 %v761, 16
      %v771 = vor.u32 %v768, %v769
      %v773 = vshrl.u32 %v762, 16
      %v775 = vrot.slane %v773, 7
      %v776 = vshll.u32 %v762, 16
      %v778 = vor.u32 %v775, %v776
      %v780 = vshrl.u32 %v763, 16
      %v782 = vrot.slane %v780, 7
      %v783 = vshll.u32 %v763, 16
      %v785 = vor.u32 %v782, %v783
      %v787 = vshrl.u32 %v764, 16
      %v789 = vrot.slane %v787, 7
      %v790 = vshll.u32 %v764, 16
      %v792 = vor.u32 %v789, %v790
      %s797 = scalar_lea.vmem [#allocation3], 4
      %vm798 = vsmask.f32 2306
      %vm799 = vmand %vm423, %vm798
      %v800 = vld [vmem:[%s797] sm:$0x7]
      %v801 = vsel %vm799, %v771, %v800
      %802 = vst [vmem:[%s797] sm:$0x7] %v801
      %v803 = vld [vmem:[%s797 + $0x4] sm:$0x7]
      %v804 = vsel %vm799, %v778, %v803
      %805 = vst [vmem:[%s797 + $0x4] sm:$0x7] %v804
      %v806 = vld [vmem:[%s797 + $0x8] sm:$0x7]
      %v807 = vsel %vm799, %v785, %v806
      %808 = vst [vmem:[%s797 + $0x8] sm:$0x7] %v807
      %v809 = vld [vmem:[%s797 + $0xc] sm:$0x7]
      %v810 = vsel %vm799, %v792, %v809
      %811 = vst [vmem:[%s797 + $0xc] sm:$0x7] %v810
      %v812 = vld [vmem:[#allocation3] sm:$0x3]
      %v813 = vld [vmem:[#allocation3 + $0x4] sm:$0x3]
      %v814 = vld [vmem:[#allocation3 + $0x8] sm:$0x3]
      %v815 = vld [vmem:[#allocation3 + $0xc] sm:$0x3]
      %v816 = vld [vmem:[#allocation3] sm:$0x7]
      %v817 = vld [vmem:[#allocation3 + $0x4] sm:$0x7]
      %v818 = vld [vmem:[#allocation3 + $0x8] sm:$0x7]
      %v819 = vld [vmem:[#allocation3 + $0xc] sm:$0x7]
      %v825 = vunpack.c.l.s4 1983009808
      %v826 = vunpack.c.0.s8 %v825
      %v827 = vlaneseq
      %v828 = vshrl.u32 %v827, 7
      %v829 = vsub.s32 %v826, %v828
      %v830 = vrot.slane %v816, %v829
      %v831 = vcombine.high %v830, %v830
      %v833 = vunpack.c.l.s4 1983009808
      %v834 = vunpack.c.0.s8 %v833
      %v835 = vlaneseq
      %v836 = vshrl.u32 %v835, 7
      %v837 = vsub.s32 %v834, %v836
      %v838 = vrot.slane %v817, %v837
      %v839 = vcombine.high %v838, %v838
      %v841 = vunpack.c.l.s4 1983009808
      %v842 = vunpack.c.0.s8 %v841
      %v843 = vlaneseq
      %v844 = vshrl.u32 %v843, 7
      %v845 = vsub.s32 %v842, %v844
      %v846 = vrot.slane %v818, %v845
      %v847 = vcombine.high %v846, %v846
      %v849 = vunpack.c.l.s4 1983009808
      %v850 = vunpack.c.0.s8 %v849
      %v851 = vlaneseq
      %v852 = vshrl.u32 %v851, 7
      %v853 = vsub.s32 %v850, %v852
      %v854 = vrot.slane %v819, %v853
      %v855 = vcombine.high %v854, %v854
      %vm856 = vsmask.f32 3336
      %vm857 = vmor %vm741, %vm856
      %vm858 = vsmask.f32 5392
      %vm859 = vmor %vm857, %vm858
      %vm860 = vsmask.f32 7448
      %vm861 = vmor %vm859, %vm860
      %v863 = vshrl.u32 %v830, 16
      %v865 = vrot.slane %v863, 6
      %v866 = vshll.u32 %v830, 16
      %v868 = vrot.slane %v866, 7
      %v869 = vor.u32 %v865, %v868
      %v870 = vrot.slane %v869, 2
      %v872 = vshll.u32 %v831, 16
      %v874 = vrot.slane %v872, 7
      %v875 = vsel %vm861, %v870, %v874
      %v877 = vshrl.u32 %v838, 16
      %v879 = vrot.slane %v877, 6
      %v880 = vshll.u32 %v838, 16
      %v882 = vrot.slane %v880, 7
      %v883 = vor.u32 %v879, %v882
      %v884 = vrot.slane %v883, 2
      %v886 = vshll.u32 %v839, 16
      %v888 = vrot.slane %v886, 7
      %v889 = vsel %vm861, %v884, %v888
      %v891 = vshrl.u32 %v846, 16
      %v893 = vrot.slane %v891, 6
      %v894 = vshll.u32 %v846, 16
      %v896 = vrot.slane %v894, 7
      %v897 = vor.u32 %v893, %v896
      %v898 = vrot.slane %v897, 2
      %v900 = vshll.u32 %v847, 16
      %v902 = vrot.slane %v900, 7
      %v903 = vsel %vm861, %v898, %v902
      %v905 = vshrl.u32 %v854, 16
      %v907 = vrot.slane %v905, 6
      %v908 = vshll.u32 %v854, 16
      %v910 = vrot.slane %v908, 7
      %v911 = vor.u32 %v907, %v910
      %v912 = vrot.slane %v911, 2
      %v914 = vshll.u32 %v855, 16
      %v916 = vrot.slane %v914, 7
      %v917 = vsel %vm861, %v912, %v916
      %v918 = vld [vmem:[#allocation3] sm:$0x6]
      %v919 = vld [vmem:[#allocation3 + $0x4] sm:$0x6]
      %v920 = vld [vmem:[#allocation3 + $0x8] sm:$0x6]
      %v921 = vld [vmem:[#allocation3 + $0xc] sm:$0x6]
      %v927 = vunpack.c.l.s4 1983009808
      %v928 = vunpack.c.0.s8 %v927
      %v929 = vlaneseq
      %v930 = vshrl.u32 %v929, 7
      %v931 = vsub.s32 %v928, %v930
      %v932 = vrot.slane %v918, %v931
      %v933 = vcombine.high %v932, %v932
      %v935 = vunpack.c.l.s4 1983009808
      %v936 = vunpack.c.0.s8 %v935
      %v937 = vlaneseq
      %v938 = vshrl.u32 %v937, 7
      %v939 = vsub.s32 %v936, %v938
      %v940 = vrot.slane %v919, %v939
      %v941 = vcombine.high %v940, %v940
      %v943 = vunpack.c.l.s4 1983009808
      %v944 = vunpack.c.0.s8 %v943
      %v945 = vlaneseq
      %v946 = vshrl.u32 %v945, 7
      %v947 = vsub.s32 %v944, %v946
      %v948 = vrot.slane %v920, %v947
      %v949 = vcombine.high %v948, %v948
      %v951 = vunpack.c.l.s4 1983009808
      %v952 = vunpack.c.0.s8 %v951
      %v953 = vlaneseq
      %v954 = vshrl.u32 %v953, 7
      %v955 = vsub.s32 %v952, %v954
      %v956 = vrot.slane %v921, %v955
      %v957 = vcombine.high %v956, %v956
      %vm958 = vcmask 1042434
      %vm959 = vmor %vm288, %vm958
      %vm960 = vcmask 1044484
      %vm961 = vmor %vm959, %vm960
      %vm962 = vcmask 1046534
      %vm963 = vmor %vm961, %vm962
      %v964 = vrot.slane %v932, 7
      %v965 = vrot.slane %v964, 2
      %v966 = vrot.slane %v933, 7
      %v967 = vsel %vm963, %v965, %v966
      %v968 = vrot.slane %v940, 7
      %v969 = vrot.slane %v968, 2
      %v970 = vrot.slane %v941, 7
      %v971 = vsel %vm963, %v969, %v970
      %v972 = vrot.slane %v948, 7
      %v973 = vrot.slane %v972, 2
      %v974 = vrot.slane %v949, 7
      %v975 = vsel %vm963, %v973, %v974
      %v976 = vrot.slane %v956, 7
      %v977 = vrot.slane %v976, 2
      %v978 = vrot.slane %v957, 7
      %v979 = vsel %vm963, %v977, %v978
      %v980 = vld [vmem:[%s797] sm:$0x3]
      %v981 = vld [vmem:[%s797 + $0x4] sm:$0x3]
      %v982 = vld [vmem:[%s797 + $0x8] sm:$0x3]
      %v983 = vld [vmem:[%s797 + $0xc] sm:$0x3]
      %v984 = vld [vmem:[%s797] sm:$0x7]
      %v985 = vld [vmem:[%s797 + $0x4] sm:$0x7]
      %v986 = vld [vmem:[%s797 + $0x8] sm:$0x7]
      %v987 = vld [vmem:[%s797 + $0xc] sm:$0x7]
      %v993 = vunpack.c.l.s4 1983009808
      %v994 = vunpack.c.0.s8 %v993
      %v995 = vlaneseq
      %v996 = vshrl.u32 %v995, 7
      %v997 = vsub.s32 %v994, %v996
      %v998 = vrot.slane %v984, %v997
      %v999 = vcombine.high %v998, %v998
      %v1001 = vunpack.c.l.s4 1983009808
      %v1002 = vunpack.c.0.s8 %v1001
      %v1003 = vlaneseq
      %v1004 = vshrl.u32 %v1003, 7
      %v1005 = vsub.s32 %v1002, %v1004
      %v1006 = vrot.slane %v985, %v1005
      %v1007 = vcombine.high %v1006, %v1006
      %v1009 = vunpack.c.l.s4 1983009808
      %v1010 = vunpack.c.0.s8 %v1009
      %v1011 = vlaneseq
      %v1012 = vshrl.u32 %v1011, 7
      %v1013 = vsub.s32 %v1010, %v1012
      %v1014 = vrot.slane %v986, %v1013
      %v1015 = vcombine.high %v1014, %v1014
      %v1017 = vunpack.c.l.s4 1983009808
      %v1018 = vunpack.c.0.s8 %v1017
      %v1019 = vlaneseq
      %v1020 = vshrl.u32 %v1019, 7
      %v1021 = vsub.s32 %v1018, %v1020
      %v1022 = vrot.slane %v987, %v1021
      %v1023 = vcombine.high %v1022, %v1022
      %v1025 = vshrl.u32 %v998, 16
      %v1027 = vrot.slane %v1025, 6
      %v1028 = vshll.u32 %v998, 16
      %v1030 = vrot.slane %v1028, 7
      %v1031 = vor.u32 %v1027, %v1030
      %v1032 = vrot.slane %v1031, 2
      %v1034 = vshll.u32 %v999, 16
      %v1036 = vrot.slane %v1034, 7
      %v1037 = vsel %vm861, %v1032, %v1036
      %v1039 = vshrl.u32 %v1006, 16
      %v1041 = vrot.slane %v1039, 6
      %v1042 = vshll.u32 %v1006, 16
      %v1044 = vrot.slane %v1042, 7
      %v1045 = vor.u32 %v1041, %v1044
      %v1046 = vrot.slane %v1045, 2
      %v1048 = vshll.u32 %v1007, 16
      %v1050 = vrot.slane %v1048, 7
      %v1051 = vsel %vm861, %v1046, %v1050
      %v1053 = vshrl.u32 %v1014, 16
      %v1055 = vrot.slane %v1053, 6
      %v1056 = vshll.u32 %v1014, 16
      %v1058 = vrot.slane %v1056, 7
      %v1059 = vor.u32 %v1055, %v1058
      %v1060 = vrot.slane %v1059, 2
      %v1062 = vshll.u32 %v1015, 16
      %v1064 = vrot.slane %v1062, 7
      %v1065 = vsel %vm861, %v1060, %v1064
      %v1067 = vshrl.u32 %v1022, 16
      %v1069 = vrot.slane %v1067, 6
      %v1070 = vshll.u32 %v1022, 16
      %v1072 = vrot.slane %v1070, 7
      %v1073 = vor.u32 %v1069, %v1072
      %v1074 = vrot.slane %v1073, 2
      %v1076 = vshll.u32 %v1023, 16
      %v1078 = vrot.slane %v1076, 7
      %v1079 = vsel %vm861, %v1074, %v1078
      %v1080 = vld [vmem:[%s797] sm:$0x6]
      %v1081 = vld [vmem:[%s797 + $0x4] sm:$0x6]
      %v1082 = vld [vmem:[%s797 + $0x8] sm:$0x6]
      %v1083 = vld [vmem:[%s797 + $0xc] sm:$0x6]
      %v1089 = vunpack.c.l.s4 1983009808
      %v1090 = vunpack.c.0.s8 %v1089
      %v1091 = vlaneseq
      %v1092 = vshrl.u32 %v1091, 7
      %v1093 = vsub.s32 %v1090, %v1092
      %v1094 = vrot.slane %v1080, %v1093
      %v1095 = vcombine.high %v1094, %v1094
      %v1097 = vunpack.c.l.s4 1983009808
      %v1098 = vunpack.c.0.s8 %v1097
      %v1099 = vlaneseq
      %v1100 = vshrl.u32 %v1099, 7
      %v1101 = vsub.s32 %v1098, %v1100
      %v1102 = vrot.slane %v1081, %v1101
      %v1103 = vcombine.high %v1102, %v1102
      %v1105 = vunpack.c.l.s4 1983009808
      %v1106 = vunpack.c.0.s8 %v1105
      %v1107 = vlaneseq
      %v1108 = vshrl.u32 %v1107, 7
      %v1109 = vsub.s32 %v1106, %v1108
      %v1110 = vrot.slane %v1082, %v1109
      %v1111 = vcombine.high %v1110, %v1110
      %v1113 = vunpack.c.l.s4 1983009808
      %v1114 = vunpack.c.0.s8 %v1113
      %v1115 = vlaneseq
      %v1116 = vshrl.u32 %v1115, 7
      %v1117 = vsub.s32 %v1114, %v1116
      %v1118 = vrot.slane %v1083, %v1117
      %v1119 = vcombine.high %v1118, %v1118
      %v1120 = vrot.slane %v1094, 7
      %v1121 = vrot.slane %v1120, 2
      %v1122 = vrot.slane %v1095, 7
      %v1123 = vsel %vm963, %v1121, %v1122
      %v1124 = vrot.slane %v1102, 7
      %v1125 = vrot.slane %v1124, 2
      %v1126 = vrot.slane %v1103, 7
      %v1127 = vsel %vm963, %v1125, %v1126
      %v1128 = vrot.slane %v1110, 7
      %v1129 = vrot.slane %v1128, 2
      %v1130 = vrot.slane %v1111, 7
      %v1131 = vsel %vm963, %v1129, %v1130
      %v1132 = vrot.slane %v1118, 7
      %v1133 = vrot.slane %v1132, 2
      %v1134 = vrot.slane %v1119, 7
      %v1135 = vsel %vm963, %v1133, %v1134
      %s1136 = scalar_lea.vmem [#allocation3], 8
      %v1137 = vld [vmem:[%s1136] sm:$0x3]
      %v1138 = vld [vmem:[%s1136 + $0x4] sm:$0x3]
      %v1139 = vld [vmem:[%s1136 + $0x8] sm:$0x3]
      %v1140 = vld [vmem:[%s1136 + $0xc] sm:$0x3]
      %v1141 = vld [vmem:[%s1136] sm:$0x7]
      %v1142 = vld [vmem:[%s1136 + $0x4] sm:$0x7]
      %v1143 = vld [vmem:[%s1136 + $0x8] sm:$0x7]
      %v1144 = vld [vmem:[%s1136 + $0xc] sm:$0x7]
      %v1150 = vunpack.c.l.s4 1983009808
      %v1151 = vunpack.c.0.s8 %v1150
      %v1152 = vlaneseq
      %v1153 = vshrl.u32 %v1152, 7
      %v1154 = vsub.s32 %v1151, %v1153
      %v1155 = vrot.slane %v1141, %v1154
      %v1156 = vcombine.high %v1155, %v1155
      %v1158 = vunpack.c.l.s4 1983009808
      %v1159 = vunpack.c.0.s8 %v1158
      %v1160 = vlaneseq
      %v1161 = vshrl.u32 %v1160, 7
      %v1162 = vsub.s32 %v1159, %v1161
      %v1163 = vrot.slane %v1142, %v1162
      %v1164 = vcombine.high %v1163, %v1163
      %v1166 = vunpack.c.l.s4 1983009808
      %v1167 = vunpack.c.0.s8 %v1166
      %v1168 = vlaneseq
      %v1169 = vshrl.u32 %v1168, 7
      %v1170 = vsub.s32 %v1167, %v1169
      %v1171 = vrot.slane %v1143, %v1170
      %v1172 = vcombine.high %v1171, %v1171
      %v1174 = vunpack.c.l.s4 1983009808
      %v1175 = vunpack.c.0.s8 %v1174
      %v1176 = vlaneseq
      %v1177 = vshrl.u32 %v1176, 7
      %v1178 = vsub.s32 %v1175, %v1177
      %v1179 = vrot.slane %v1144, %v1178
      %v1180 = vcombine.high %v1179, %v1179
      %v1182 = vshrl.u32 %v1155, 16
      %v1184 = vrot.slane %v1182, 6
      %v1185 = vshll.u32 %v1155, 16
      %v1187 = vrot.slane %v1185, 7
      %v1188 = vor.u32 %v1184, %v1187
      %v1189 = vrot.slane %v1188, 2
      %v1191 = vshll.u32 %v1156, 16
      %v1193 = vrot.slane %v1191, 7
      %v1194 = vsel %vm861, %v1189, %v1193
      %v1196 = vshrl.u32 %v1163, 16
      %v1198 = vrot.slane %v1196, 6
      %v1199 = vshll.u32 %v1163, 16
      %v1201 = vrot.slane %v1199, 7
      %v1202 = vor.u32 %v1198, %v1201
      %v1203 = vrot.slane %v1202, 2
      %v1205 = vshll.u32 %v1164, 16
      %v1207 = vrot.slane %v1205, 7
      %v1208 = vsel %vm861, %v1203, %v1207
      %v1210 = vshrl.u32 %v1171, 16
      %v1212 = vrot.slane %v1210, 6
      %v1213 = vshll.u32 %v1171, 16
      %v1215 = vrot.slane %v1213, 7
      %v1216 = vor.u32 %v1212, %v1215
      %v1217 = vrot.slane %v1216, 2
      %v1219 = vshll.u32 %v1172, 16
      %v1221 = vrot.slane %v1219, 7
      %v1222 = vsel %vm861, %v1217, %v1221
      %v1224 = vshrl.u32 %v1179, 16
      %v1226 = vrot.slane %v1224, 6
      %v1227 = vshll.u32 %v1179, 16
      %v1229 = vrot.slane %v1227, 7
      %v1230 = vor.u32 %v1226, %v1229
      %v1231 = vrot.slane %v1230, 2
      %v1233 = vshll.u32 %v1180, 16
      %v1235 = vrot.slane %v1233, 7
      %v1236 = vsel %vm861, %v1231, %v1235
      %v1237 = vld [vmem:[%s1136] sm:$0x6]
      %v1238 = vld [vmem:[%s1136 + $0x4] sm:$0x6]
      %v1239 = vld [vmem:[%s1136 + $0x8] sm:$0x6]
      %v1240 = vld [vmem:[%s1136 + $0xc] sm:$0x6]
      %v1246 = vunpack.c.l.s4 1983009808
      %v1247 = vunpack.c.0.s8 %v1246
      %v1248 = vlaneseq
      %v1249 = vshrl.u32 %v1248, 7
      %v1250 = vsub.s32 %v1247, %v1249
      %v1251 = vrot.slane %v1237, %v1250
      %v1252 = vcombine.high %v1251, %v1251
      %v1254 = vunpack.c.l.s4 1983009808
      %v1255 = vunpack.c.0.s8 %v1254
      %v1256 = vlaneseq
      %v1257 = vshrl.u32 %v1256, 7
      %v1258 = vsub.s32 %v1255, %v1257
      %v1259 = vrot.slane %v1238, %v1258
      %v1260 = vcombine.high %v1259, %v1259
      %v1262 = vunpack.c.l.s4 1983009808
      %v1263 = vunpack.c.0.s8 %v1262
      %v1264 = vlaneseq
      %v1265 = vshrl.u32 %v1264, 7
      %v1266 = vsub.s32 %v1263, %v1265
      %v1267 = vrot.slane %v1239, %v1266
      %v1268 = vcombine.high %v1267, %v1267
      %v1270 = vunpack.c.l.s4 1983009808
      %v1271 = vunpack.c.0.s8 %v1270
      %v1272 = vlaneseq
      %v1273 = vshrl.u32 %v1272, 7
      %v1274 = vsub.s32 %v1271, %v1273
      %v1275 = vrot.slane %v1240, %v1274
      %v1276 = vcombine.high %v1275, %v1275
      %v1277 = vrot.slane %v1251, 7
      %v1278 = vrot.slane %v1277, 2
      %v1279 = vrot.slane %v1252, 7
      %v1280 = vsel %vm963, %v1278, %v1279
      %v1281 = vrot.slane %v1259, 7
      %v1282 = vrot.slane %v1281, 2
      %v1283 = vrot.slane %v1260, 7
      %v1284 = vsel %vm963, %v1282, %v1283
      %v1285 = vrot.slane %v1267, 7
      %v1286 = vrot.slane %v1285, 2
      %v1287 = vrot.slane %v1268, 7
      %v1288 = vsel %vm963, %v1286, %v1287
      %v1289 = vrot.slane %v1275, 7
      %v1290 = vrot.slane %v1289, 2
      %v1291 = vrot.slane %v1276, 7
      %v1292 = vsel %vm963, %v1290, %v1291
      %v1297 = vcombine.low %v812, %v813
      %v1298 = vcombine.low %v814, %v815
      %v1300 = vunpack.c.l.s4 1983009808
      %v1301 = vunpack.c.0.s8 %v1300
      %v1302 = vlaneseq
      %v1303 = vshrl.u32 %v1302, 7
      %v1304 = vsub.s32 %v1301, %v1303
      %v1305 = vrot.slane %v1297, %v1304
      %v1307 = vunpack.c.l.s4 1983009808
      %v1308 = vunpack.c.0.s8 %v1307
      %v1309 = vlaneseq
      %v1310 = vshrl.u32 %v1309, 7
      %v1311 = vsub.s32 %v1308, %v1310
      %v1312 = vrot.slane %v1298, %v1311
      %v1313 = vcombine.low %v1305, %v1312
      %v1315 = vcombine.low %v875, %v889
      %v1316 = vcombine.low %v903, %v917
      %v1318 = vunpack.c.l.s4 1983009808
      %v1319 = vunpack.c.0.s8 %v1318
      %v1320 = vlaneseq
      %v1321 = vshrl.u32 %v1320, 7
      %v1322 = vsub.s32 %v1319, %v1321
      %v1323 = vrot.slane %v1315, %v1322
      %v1325 = vunpack.c.l.s4 1983009808
      %v1326 = vunpack.c.0.s8 %v1325
      %v1327 = vlaneseq
      %v1328 = vshrl.u32 %v1327, 7
      %v1329 = vsub.s32 %v1326, %v1328
      %v1330 = vrot.slane %v1316, %v1329
      %v1331 = vcombine.low %v1323, %v1330
      %v1333 = vcombine.low %v967, %v971
      %v1334 = vcombine.low %v975, %v979
      %v1336 = vunpack.c.l.s4 1983009808
      %v1337 = vunpack.c.0.s8 %v1336
      %v1338 = vlaneseq
      %v1339 = vshrl.u32 %v1338, 7
      %v1340 = vsub.s32 %v1337, %v1339
      %v1341 = vrot.slane %v1333, %v1340
      %v1343 = vunpack.c.l.s4 1983009808
      %v1344 = vunpack.c.0.s8 %v1343
      %v1345 = vlaneseq
      %v1346 = vshrl.u32 %v1345, 7
      %v1347 = vsub.s32 %v1344, %v1346
      %v1348 = vrot.slane %v1334, %v1347
      %v1349 = vcombine.low %v1341, %v1348
      %v1355 = vcombine.low %v980, %v981
      %v1356 = vcombine.low %v982, %v983
      %v1358 = vunpack.c.l.s4 1983009808
      %v1359 = vunpack.c.0.s8 %v1358
      %v1360 = vlaneseq
      %v1361 = vshrl.u32 %v1360, 7
      %v1362 = vsub.s32 %v1359, %v1361
      %v1363 = vrot.slane %v1355, %v1362
      %v1365 = vunpack.c.l.s4 1983009808
      %v1366 = vunpack.c.0.s8 %v1365
      %v1367 = vlaneseq
      %v1368 = vshrl.u32 %v1367, 7
      %v1369 = vsub.s32 %v1366, %v1368
      %v1370 = vrot.slane %v1356, %v1369
      %v1371 = vcombine.low %v1363, %v1370
      %v1373 = vcombine.low %v1037, %v1051
      %v1374 = vcombine.low %v1065, %v1079
      %v1376 = vunpack.c.l.s4 1983009808
      %v1377 = vunpack.c.0.s8 %v1376
      %v1378 = vlaneseq
      %v1379 = vshrl.u32 %v1378, 7
      %v1380 = vsub.s32 %v1377, %v1379
      %v1381 = vrot.slane %v1373, %v1380
      %v1383 = vunpack.c.l.s4 1983009808
      %v1384 = vunpack.c.0.s8 %v1383
      %v1385 = vlaneseq
      %v1386 = vshrl.u32 %v1385, 7
      %v1387 = vsub.s32 %v1384, %v1386
      %v1388 = vrot.slane %v1374, %v1387
      %v1389 = vcombine.low %v1381, %v1388
      %v1391 = vcombine.low %v1123, %v1127
      %v1392 = vcombine.low %v1131, %v1135
      %v1394 = vunpack.c.l.s4 1983009808
      %v1395 = vunpack.c.0.s8 %v1394
      %v1396 = vlaneseq
      %v1397 = vshrl.u32 %v1396, 7
      %v1398 = vsub.s32 %v1395, %v1397
      %v1399 = vrot.slane %v1391, %v1398
      %v1401 = vunpack.c.l.s4 1983009808
      %v1402 = vunpack.c.0.s8 %v1401
      %v1403 = vlaneseq
      %v1404 = vshrl.u32 %v1403, 7
      %v1405 = vsub.s32 %v1402, %v1404
      %v1406 = vrot.slane %v1392, %v1405
      %v1407 = vcombine.low %v1399, %v1406
      %v1413 = vcombine.low %v1137, %v1138
      %v1414 = vcombine.low %v1139, %v1140
      %v1416 = vunpack.c.l.s4 1983009808
      %v1417 = vunpack.c.0.s8 %v1416
      %v1418 = vlaneseq
      %v1419 = vshrl.u32 %v1418, 7
      %v1420 = vsub.s32 %v1417, %v1419
      %v1421 = vrot.slane %v1413, %v1420
      %v1423 = vunpack.c.l.s4 1983009808
      %v1424 = vunpack.c.0.s8 %v1423
      %v1425 = vlaneseq
      %v1426 = vshrl.u32 %v1425, 7
      %v1427 = vsub.s32 %v1424, %v1426
      %v1428 = vrot.slane %v1414, %v1427
      %v1429 = vcombine.low %v1421, %v1428
      %v1431 = vcombine.low %v1194, %v1208
      %v1432 = vcombine.low %v1222, %v1236
      %v1434 = vunpack.c.l.s4 1983009808
      %v1435 = vunpack.c.0.s8 %v1434
      %v1436 = vlaneseq
      %v1437 = vshrl.u32 %v1436, 7
      %v1438 = vsub.s32 %v1435, %v1437
      %v1439 = vrot.slane %v1431, %v1438
      %v1441 = vunpack.c.l.s4 1983009808
      %v1442 = vunpack.c.0.s8 %v1441
      %v1443 = vlaneseq
      %v1444 = vshrl.u32 %v1443, 7
      %v1445 = vsub.s32 %v1442, %v1444
      %v1446 = vrot.slane %v1432, %v1445
      %v1447 = vcombine.low %v1439, %v1446
      %v1449 = vcombine.low %v1280, %v1284
      %v1450 = vcombine.low %v1288, %v1292
      %v1452 = vunpack.c.l.s4 1983009808
      %v1453 = vunpack.c.0.s8 %v1452
      %v1454 = vlaneseq
      %v1455 = vshrl.u32 %v1454, 7
      %v1456 = vsub.s32 %v1453, %v1455
      %v1457 = vrot.slane %v1449, %v1456
      %v1459 = vunpack.c.l.s4 1983009808
      %v1460 = vunpack.c.0.s8 %v1459
      %v1461 = vlaneseq
      %v1462 = vshrl.u32 %v1461, 7
      %v1463 = vsub.s32 %v1460, %v1462
      %v1464 = vrot.slane %v1450, %v1463
      %v1465 = vcombine.low %v1457, %v1464
      %v1467 = vld [vmem:[%s1] sm:$0xf]
      %v1468 = vld [vmem:[%s1 + $0x4] sm:$0xf]
      %v1469 = vld [vmem:[%s1 + $0x8] sm:$0xf]
      %v1470 = vld [vmem:[%s1 + $0xc] sm:$0xf]
      %v1471 = vld [vmem:[%s1 + $0x10] sm:$0xf]
      %v1472 = vld [vmem:[%s1 + $0x14] sm:$0xf]
      %v1473 = vld [vmem:[%s1 + $0x18] sm:$0xf]
      %v1474 = vld [vmem:[%s1 + $0x1c] sm:$0xf]
      %v1475 = vld [vmem:[%s1 + $0x20] sm:$0xf]
      %v1476 = vld [vmem:[%s1 + $0x24] sm:$0xf]
      %v1477 = vld [vmem:[%s1 + $0x28] sm:$0xf]
      %v1478 = vld [vmem:[%s1 + $0x2c] sm:$0xf]
      %v1479 = vld [vmem:[%s1 + $0x30] sm:$0xf]
      %v1480 = vld [vmem:[%s1 + $0x34] sm:$0xf]
      %v1481 = vld [vmem:[%s1 + $0x38] sm:$0xf]
      %v1482 = vld [vmem:[%s1 + $0x3c] sm:$0xf]
      %v1483 = vld [vmem:[%s1 + $0x40] sm:$0xf]
      %v1484 = vld [vmem:[%s1 + $0x44] sm:$0xf]
      %v1485 = vld [vmem:[%s1 + $0x48] sm:$0xf]
      %v1486 = vld [vmem:[%s1 + $0x4c] sm:$0xf]
      %v1487 = vld [vmem:[%s1 + $0x50] sm:$0xf]
      %v1488 = vld [vmem:[%s1 + $0x54] sm:$0xf]
      %v1489 = vld [vmem:[%s1 + $0x58] sm:$0xf]
      %v1490 = vld [vmem:[%s1 + $0x5c] sm:$0xf]
      %v1491 = vld [vmem:[%s1 + $0x60] sm:$0xf]
      %v1492 = vld [vmem:[%s1 + $0x64] sm:$0xf]
      %v1493 = vld [vmem:[%s1 + $0x68] sm:$0xf]
      %v1494 = vld [vmem:[%s1 + $0x6c] sm:$0xf]
      %v1495 = vld [vmem:[%s1 + $0x70] sm:$0xf]
      %v1496 = vld [vmem:[%s1 + $0x74] sm:$0xf]
      %v1497 = vld [vmem:[%s1 + $0x78] sm:$0xf]
      %v1498 = vld [vmem:[%s1 + $0x7c] sm:$0xf]
      %v1499 = vld [vmem:[%s1 + $0x80] sm:$0xf]
      %v1500 = vld [vmem:[%s1 + $0x84] sm:$0xf]
      %v1501 = vld [vmem:[%s1 + $0x88] sm:$0xf]
      %v1502 = vld [vmem:[%s1 + $0x8c] sm:$0xf]
      %v1503 = vld [vmem:[%s1 + $0x90] sm:$0xf]
      %v1504 = vld [vmem:[%s1 + $0x94] sm:$0xf]
      %v1505 = vld [vmem:[%s1 + $0x98] sm:$0xf]
      %v1506 = vld [vmem:[%s1 + $0x9c] sm:$0xf]
      %v1507 = vld [vmem:[%s1 + $0xa0] sm:$0xf]
      %v1508 = vld [vmem:[%s1 + $0xa4] sm:$0xf]
      %v1509 = vld [vmem:[%s1 + $0xa8] sm:$0xf]
      %v1510 = vld [vmem:[%s1 + $0xac] sm:$0xf]
      %v1511 = vld [vmem:[%s1 + $0xb0] sm:$0xf]
      %v1512 = vld [vmem:[%s1 + $0xb4] sm:$0xf]
      %v1513 = vld [vmem:[%s1 + $0xb8] sm:$0xf]
      %v1514 = vld [vmem:[%s1 + $0xbc] sm:$0xf]
      %v1515 = vld [vmem:[%s1 + $0xc0] sm:$0xf]
      %v1516 = vld [vmem:[%s1 + $0xc4] sm:$0xf]
      %v1517 = vld [vmem:[%s1 + $0xc8] sm:$0xf]
      %v1518 = vld [vmem:[%s1 + $0xcc] sm:$0xf]
      %v1519 = vld [vmem:[%s1 + $0xd0] sm:$0xf]
      %v1520 = vld [vmem:[%s1 + $0xd4] sm:$0xf]
      %v1521 = vld [vmem:[%s1 + $0xd8] sm:$0xf]
      %v1522 = vld [vmem:[%s1 + $0xdc] sm:$0xf]
      %v1523 = vld [vmem:[%s1 + $0xe0] sm:$0xf]
      %v1524 = vld [vmem:[%s1 + $0xe4] sm:$0xf]
      %v1525 = vld [vmem:[%s1 + $0xe8] sm:$0xf]
      %v1526 = vld [vmem:[%s1 + $0xec] sm:$0xf]
      %v1527 = vld [vmem:[%s1 + $0xf0] sm:$0xf]
      %v1528 = vld [vmem:[%s1 + $0xf4] sm:$0xf]
      %v1529 = vld [vmem:[%s1 + $0xf8] sm:$0xf]
      %v1530 = vld [vmem:[%s1 + $0xfc] sm:$0xf]
      %v1531 = vld [vmem:[%s1 + $0x100] sm:$0xf]
      %v1532 = vld [vmem:[%s1 + $0x104] sm:$0xf]
      %v1533 = vld [vmem:[%s1 + $0x108] sm:$0xf]
      %v1534 = vld [vmem:[%s1 + $0x10c] sm:$0xf]
      %v1535 = vld [vmem:[%s1 + $0x110] sm:$0xf]
      %v1536 = vld [vmem:[%s1 + $0x114] sm:$0xf]
      %v1537 = vld [vmem:[%s1 + $0x118] sm:$0xf]
      %v1538 = vld [vmem:[%s1 + $0x11c] sm:$0xf]
      %v1539 = vld [vmem:[%s1 + $0x120] sm:$0xf]
      %v1540 = vld [vmem:[%s1 + $0x124] sm:$0xf]
      %v1541 = vld [vmem:[%s1 + $0x128] sm:$0xf]
      %v1542 = vld [vmem:[%s1 + $0x12c] sm:$0xf]
      %v1543 = vld [vmem:[%s1 + $0x130] sm:$0xf]
      %v1544 = vld [vmem:[%s1 + $0x134] sm:$0xf]
      %v1545 = vld [vmem:[%s1 + $0x138] sm:$0xf]
      %v1546 = vld [vmem:[%s1 + $0x13c] sm:$0xf]
      %v1547 = vld [vmem:[%s1 + $0x140] sm:$0xf]
      %v1548 = vld [vmem:[%s1 + $0x144] sm:$0xf]
      %v1549 = vld [vmem:[%s1 + $0x148] sm:$0xf]
      %v1550 = vld [vmem:[%s1 + $0x14c] sm:$0xf]
      %v1551 = vld [vmem:[%s1 + $0x150] sm:$0xf]
      %v1552 = vld [vmem:[%s1 + $0x154] sm:$0xf]
      %v1553 = vld [vmem:[%s1 + $0x158] sm:$0xf]
      %v1554 = vld [vmem:[%s1 + $0x15c] sm:$0xf]
      %v1555 = vld [vmem:[%s1 + $0x160] sm:$0xf]
      %v1556 = vld [vmem:[%s1 + $0x164] sm:$0xf]
      %v1557 = vld [vmem:[%s1 + $0x168] sm:$0xf]
      %v1558 = vld [vmem:[%s1 + $0x16c] sm:$0xf]
      %v1559 = vld [vmem:[%s1 + $0x170] sm:$0xf]
      %v1560 = vld [vmem:[%s1 + $0x174] sm:$0xf]
      %v1561 = vld [vmem:[%s1 + $0x178] sm:$0xf]
      %v1562 = vld [vmem:[%s1 + $0x17c] sm:$0xf]
      %v1563 = vld [vmem:[%s1 + $0x180] sm:$0xf]
      %v1564 = vld [vmem:[%s1 + $0x184] sm:$0xf]
      %v1565 = vld [vmem:[%s1 + $0x188] sm:$0xf]
      %v1566 = vld [vmem:[%s1 + $0x18c] sm:$0xf]
      %v1567 = vld [vmem:[%s1 + $0x190] sm:$0xf]
      %v1568 = vld [vmem:[%s1 + $0x194] sm:$0xf]
      %v1569 = vld [vmem:[%s1 + $0x198] sm:$0xf]
      %v1570 = vld [vmem:[%s1 + $0x19c] sm:$0xf]
      %v1571 = vld [vmem:[%s1 + $0x1a0] sm:$0xf]
      %v1572 = vld [vmem:[%s1 + $0x1a4] sm:$0xf]
      %v1573 = vld [vmem:[%s1 + $0x1a8] sm:$0xf]
      %v1574 = vld [vmem:[%s1 + $0x1ac] sm:$0xf]
      %v1575 = vld [vmem:[%s1 + $0x1b0] sm:$0xf]
      %v1576 = vld [vmem:[%s1 + $0x1b4] sm:$0xf]
      %v1577 = vld [vmem:[%s1 + $0x1b8] sm:$0xf]
      %v1578 = vld [vmem:[%s1 + $0x1bc] sm:$0xf]
      %v1579 = vld [vmem:[%s1 + $0x1c0] sm:$0xf]
      %v1580 = vld [vmem:[%s1 + $0x1c4] sm:$0xf]
      %v1581 = vld [vmem:[%s1 + $0x1c8] sm:$0xf]
      %v1582 = vld [vmem:[%s1 + $0x1cc] sm:$0xf]
      %v1583 = vld [vmem:[%s1 + $0x1d0] sm:$0xf]
      %v1584 = vld [vmem:[%s1 + $0x1d4] sm:$0xf]
      %v1585 = vld [vmem:[%s1 + $0x1d8] sm:$0xf]
      %v1586 = vld [vmem:[%s1 + $0x1dc] sm:$0xf]
      %v1587 = vld [vmem:[%s1 + $0x1e0] sm:$0xf]
      %v1588 = vld [vmem:[%s1 + $0x1e4] sm:$0xf]
      %v1589 = vld [vmem:[%s1 + $0x1e8] sm:$0xf]
      %v1590 = vld [vmem:[%s1 + $0x1ec] sm:$0xf]
      %v1591 = vld [vmem:[%s1 + $0x1f0] sm:$0xf]
      %v1592 = vld [vmem:[%s1 + $0x1f4] sm:$0xf]
      %v1593 = vld [vmem:[%s1 + $0x1f8] sm:$0xf]
      %v1594 = vld [vmem:[%s1 + $0x1fc] sm:$0xf]
      %v1595 = vld [vmem:[%s1 + $0x200] sm:$0xf]
      %v1596 = vld [vmem:[%s1 + $0x204] sm:$0xf]
      %v1597 = vld [vmem:[%s1 + $0x208] sm:$0xf]
      %v1598 = vld [vmem:[%s1 + $0x20c] sm:$0xf]
      %v1599 = vld [vmem:[%s1 + $0x210] sm:$0xf]
      %v1600 = vld [vmem:[%s1 + $0x214] sm:$0xf]
      %v1601 = vld [vmem:[%s1 + $0x218] sm:$0xf]
      %v1602 = vld [vmem:[%s1 + $0x21c] sm:$0xf]
      %v1603 = vld [vmem:[%s1 + $0x220] sm:$0xf]
      %v1604 = vld [vmem:[%s1 + $0x224] sm:$0xf]
      %v1605 = vld [vmem:[%s1 + $0x228] sm:$0xf]
      %v1606 = vld [vmem:[%s1 + $0x22c] sm:$0xf]
      %v1607 = vld [vmem:[%s1 + $0x230] sm:$0xf]
      %v1608 = vld [vmem:[%s1 + $0x234] sm:$0xf]
      %v1609 = vld [vmem:[%s1 + $0x238] sm:$0xf]
      %v1610 = vld [vmem:[%s1 + $0x23c] sm:$0xf]
      %v1611 = vld [vmem:[%s2] sm:$0x1]
      %v1613 = vlaneseq
      %v1614 = vshrl.u32 %v1613, 7
      %v1615 = vsub.s32 0, %v1614
      %v1616 = vrot.slane %v1611, %v1615
      %v1762 = vunpack.c.l.b16 %v1467
      %v1763 = vunpack.c.l.b16 %v1468
      %v1764 = vunpack.c.l.b16 %v1469
      %v1765 = vunpack.c.l.b16 %v1470
      %v1766 = vunpack.c.l.b16 %v1471
      %v1767 = vunpack.c.l.b16 %v1472
      %v1768 = vunpack.c.l.b16 %v1473
      %v1769 = vunpack.c.l.b16 %v1474
      %v1770 = vunpack.c.l.b16 %v1475
      %v1771 = vunpack.c.l.b16 %v1476
      %v1772 = vunpack.c.l.b16 %v1477
      %v1773 = vunpack.c.l.b16 %v1478
      %v1774 = vunpack.c.l.b16 %v1479
      %v1775 = vunpack.c.l.b16 %v1480
      %v1776 = vunpack.c.l.b16 %v1481
      %v1777 = vunpack.c.l.b16 %v1482
      %v1778 = vunpack.c.l.b16 %v1483
      %v1779 = vunpack.c.l.b16 %v1484
      %v1780 = vunpack.c.l.b16 %v1485
      %v1781 = vunpack.c.l.b16 %v1486
      %v1782 = vunpack.c.l.b16 %v1487
      %v1783 = vunpack.c.l.b16 %v1488
      %v1784 = vunpack.c.l.b16 %v1489
      %v1785 = vunpack.c.l.b16 %v1490
      %v1786 = vunpack.c.l.b16 %v1491
      %v1787 = vunpack.c.l.b16 %v1492
      %v1788 = vunpack.c.l.b16 %v1493
      %v1789 = vunpack.c.l.b16 %v1494
      %v1790 = vunpack.c.l.b16 %v1495
      %v1791 = vunpack.c.l.b16 %v1496
      %v1792 = vunpack.c.l.b16 %v1497
      %v1793 = vunpack.c.l.b16 %v1498
      %v1794 = vunpack.c.l.b16 %v1499
      %v1795 = vunpack.c.l.b16 %v1500
      %v1796 = vunpack.c.l.b16 %v1501
      %v1797 = vunpack.c.l.b16 %v1502
      %v1798 = vunpack.c.l.b16 %v1503
      %v1799 = vunpack.c.l.b16 %v1504
      %v1800 = vunpack.c.l.b16 %v1505
      %v1801 = vunpack.c.l.b16 %v1506
      %v1802 = vunpack.c.l.b16 %v1507
      %v1803 = vunpack.c.l.b16 %v1508
      %v1804 = vunpack.c.l.b16 %v1509
      %v1805 = vunpack.c.l.b16 %v1510
      %v1806 = vunpack.c.l.b16 %v1511
      %v1807 = vunpack.c.l.b16 %v1512
      %v1808 = vunpack.c.l.b16 %v1513
      %v1809 = vunpack.c.l.b16 %v1514
      %v1810 = vunpack.c.l.b16 %v1515
      %v1811 = vunpack.c.l.b16 %v1516
      %v1812 = vunpack.c.l.b16 %v1517
      %v1813 = vunpack.c.l.b16 %v1518
      %v1814 = vunpack.c.l.b16 %v1519
      %v1815 = vunpack.c.l.b16 %v1520
      %v1816 = vunpack.c.l.b16 %v1521
      %v1817 = vunpack.c.l.b16 %v1522
      %v1818 = vunpack.c.l.b16 %v1523
      %v1819 = vunpack.c.l.b16 %v1524
      %v1820 = vunpack.c.l.b16 %v1525
      %v1821 = vunpack.c.l.b16 %v1526
      %v1822 = vunpack.c.l.b16 %v1527
      %v1823 = vunpack.c.l.b16 %v1528
      %v1824 = vunpack.c.l.b16 %v1529
      %v1825 = vunpack.c.l.b16 %v1530
      %v1826 = vunpack.c.l.b16 %v1531
      %v1827 = vunpack.c.l.b16 %v1532
      %v1828 = vunpack.c.l.b16 %v1533
      %v1829 = vunpack.c.l.b16 %v1534
      %v1830 = vunpack.c.l.b16 %v1535
      %v1831 = vunpack.c.l.b16 %v1536
      %v1832 = vunpack.c.l.b16 %v1537
      %v1833 = vunpack.c.l.b16 %v1538
      %v1834 = vunpack.c.l.b16 %v1539
      %v1835 = vunpack.c.l.b16 %v1540
      %v1836 = vunpack.c.l.b16 %v1541
      %v1837 = vunpack.c.l.b16 %v1542
      %v1838 = vunpack.c.l.b16 %v1543
      %v1839 = vunpack.c.l.b16 %v1544
      %v1840 = vunpack.c.l.b16 %v1545
      %v1841 = vunpack.c.l.b16 %v1546
      %v1842 = vunpack.c.l.b16 %v1547
      %v1843 = vunpack.c.l.b16 %v1548
      %v1844 = vunpack.c.l.b16 %v1549
      %v1845 = vunpack.c.l.b16 %v1550
      %v1846 = vunpack.c.l.b16 %v1551
      %v1847 = vunpack.c.l.b16 %v1552
      %v1848 = vunpack.c.l.b16 %v1553
      %v1849 = vunpack.c.l.b16 %v1554
      %v1850 = vunpack.c.l.b16 %v1555
      %v1851 = vunpack.c.l.b16 %v1556
      %v1852 = vunpack.c.l.b16 %v1557
      %v1853 = vunpack.c.l.b16 %v1558
      %v1854 = vunpack.c.l.b16 %v1559
      %v1855 = vunpack.c.l.b16 %v1560
      %v1856 = vunpack.c.l.b16 %v1561
      %v1857 = vunpack.c.l.b16 %v1562
      %v1858 = vunpack.c.l.b16 %v1563
      %v1859 = vunpack.c.l.b16 %v1564
      %v1860 = vunpack.c.l.b16 %v1565
      %v1861 = vunpack.c.l.b16 %v1566
      %v1862 = vunpack.c.l.b16 %v1567
      %v1863 = vunpack.c.l.b16 %v1568
      %v1864 = vunpack.c.l.b16 %v1569
      %v1865 = vunpack.c.l.b16 %v1570
      %v1866 = vunpack.c.l.b16 %v1571
      %v1867 = vunpack.c.l.b16 %v1572
      %v1868 = vunpack.c.l.b16 %v1573
      %v1869 = vunpack.c.l.b16 %v1574
      %v1870 = vunpack.c.l.b16 %v1575
      %v1871 = vunpack.c.l.b16 %v1576
      %v1872 = vunpack.c.l.b16 %v1577
      %v1873 = vunpack.c.l.b16 %v1578
      %v1874 = vunpack.c.l.b16 %v1579
      %v1875 = vunpack.c.l.b16 %v1580
      %v1876 = vunpack.c.l.b16 %v1581
      %v1877 = vunpack.c.l.b16 %v1582
      %v1878 = vunpack.c.l.b16 %v1583
      %v1879 = vunpack.c.l.b16 %v1584
      %v1880 = vunpack.c.l.b16 %v1585
      %v1881 = vunpack.c.l.b16 %v1586
      %v1882 = vunpack.c.l.b16 %v1587
      %v1883 = vunpack.c.l.b16 %v1588
      %v1884 = vunpack.c.l.b16 %v1589
      %v1885 = vunpack.c.l.b16 %v1590
      %v1886 = vunpack.c.l.b16 %v1591
      %v1887 = vunpack.c.l.b16 %v1592
      %v1888 = vunpack.c.l.b16 %v1593
      %v1889 = vunpack.c.l.b16 %v1594
      %v1890 = vunpack.c.l.b16 %v1595
      %v1891 = vunpack.c.l.b16 %v1596
      %v1892 = vunpack.c.l.b16 %v1597
      %v1893 = vunpack.c.l.b16 %v1598
      %v1894 = vunpack.c.l.b16 %v1599
      %v1895 = vunpack.c.l.b16 %v1600
      %v1896 = vunpack.c.l.b16 %v1601
      %v1897 = vunpack.c.l.b16 %v1602
      %v1898 = vunpack.c.l.b16 %v1603
      %v1899 = vunpack.c.l.b16 %v1604
      %v1900 = vunpack.c.l.b16 %v1605
      %v1901 = vunpack.c.l.b16 %v1606
      %v1902 = vunpack.c.l.b16 %v1607
      %v1903 = vunpack.c.l.b16 %v1608
      %v1904 = vunpack.c.l.b16 %v1609
      %v1905 = vunpack.c.l.b16 %v1610
      %v1906 = vpack.c.b16 %v1763, %v1762
      %v1907 = vpack.c.b16 %v1765, %v1764
      %v1908 = vpack.c.b16 %v1767, %v1766
      %v1909 = vpack.c.b16 %v1769, %v1768
      %v1910 = vpack.c.b16 %v1771, %v1770
      %v1911 = vpack.c.b16 %v1773, %v1772
      %v1912 = vpack.c.b16 %v1775, %v1774
      %v1913 = vpack.c.b16 %v1777, %v1776
      %v1914 = vpack.c.b16 %v1779, %v1778
      %v1915 = vpack.c.b16 %v1781, %v1780
      %v1916 = vpack.c.b16 %v1783, %v1782
      %v1917 = vpack.c.b16 %v1785, %v1784
      %v1918 = vpack.c.b16 %v1787, %v1786
      %v1919 = vpack.c.b16 %v1789, %v1788
      %v1920 = vpack.c.b16 %v1791, %v1790
      %v1921 = vpack.c.b16 %v1793, %v1792
      %v1922 = vpack.c.b16 %v1795, %v1794
      %v1923 = vpack.c.b16 %v1797, %v1796
      %v1924 = vpack.c.b16 %v1799, %v1798
      %v1925 = vpack.c.b16 %v1801, %v1800
      %v1926 = vpack.c.b16 %v1803, %v1802
      %v1927 = vpack.c.b16 %v1805, %v1804
      %v1928 = vpack.c.b16 %v1807, %v1806
      %v1929 = vpack.c.b16 %v1809, %v1808
      %v1930 = vpack.c.b16 %v1811, %v1810
      %v1931 = vpack.c.b16 %v1813, %v1812
      %v1932 = vpack.c.b16 %v1815, %v1814
      %v1933 = vpack.c.b16 %v1817, %v1816
      %v1934 = vpack.c.b16 %v1819, %v1818
      %v1935 = vpack.c.b16 %v1821, %v1820
      %v1936 = vpack.c.b16 %v1823, %v1822
      %v1937 = vpack.c.b16 %v1825, %v1824
      %v1938 = vpack.c.b16 %v1827, %v1826
      %v1939 = vpack.c.b16 %v1829, %v1828
      %v1940 = vpack.c.b16 %v1831, %v1830
      %v1941 = vpack.c.b16 %v1833, %v1832
      %v1942 = vpack.c.b16 %v1835, %v1834
      %v1943 = vpack.c.b16 %v1837, %v1836
      %v1944 = vpack.c.b16 %v1839, %v1838
      %v1945 = vpack.c.b16 %v1841, %v1840
      %v1946 = vpack.c.b16 %v1843, %v1842
      %v1947 = vpack.c.b16 %v1845, %v1844
      %v1948 = vpack.c.b16 %v1847, %v1846
      %v1949 = vpack.c.b16 %v1849, %v1848
      %v1950 = vpack.c.b16 %v1851, %v1850
      %v1951 = vpack.c.b16 %v1853, %v1852
      %v1952 = vpack.c.b16 %v1855, %v1854
      %v1953 = vpack.c.b16 %v1857, %v1856
      %v1954 = vpack.c.b16 %v1859, %v1858
      %v1955 = vpack.c.b16 %v1861, %v1860
      %v1956 = vpack.c.b16 %v1863, %v1862
      %v1957 = vpack.c.b16 %v1865, %v1864
      %v1958 = vpack.c.b16 %v1867, %v1866
      %v1959 = vpack.c.b16 %v1869, %v1868
      %v1960 = vpack.c.b16 %v1871, %v1870
      %v1961 = vpack.c.b16 %v1873, %v1872
      %v1962 = vpack.c.b16 %v1875, %v1874
      %v1963 = vpack.c.b16 %v1877, %v1876
      %v1964 = vpack.c.b16 %v1879, %v1878
      %v1965 = vpack.c.b16 %v1881, %v1880
      %v1966 = vpack.c.b16 %v1883, %v1882
      %v1967 = vpack.c.b16 %v1885, %v1884
      %v1968 = vpack.c.b16 %v1887, %v1886
      %v1969 = vpack.c.b16 %v1889, %v1888
      %v1970 = vpack.c.b16 %v1891, %v1890
      %v1971 = vpack.c.b16 %v1893, %v1892
      %v1972 = vpack.c.b16 %v1895, %v1894
      %v1973 = vpack.c.b16 %v1897, %v1896
      %v1974 = vpack.c.b16 %v1899, %v1898
      %v1975 = vpack.c.b16 %v1901, %v1900
      %v1976 = vpack.c.b16 %v1903, %v1902
      %v1977 = vpack.c.b16 %v1905, %v1904
      %2050 = vmatprep.subr.bf16.mxu0 0
      %2051 = vmatpush1.bf16.msra.mxu0 %v1906
      %2052 = vmatprep.subr.bf16.mxu0 0
      %2053 = vmatpush1.bf16.msra.mxu0 %v1907
      %2054 = vmatprep.subr.bf16.mxu0 0
      %2055 = vmatpush1.bf16.msra.mxu0 %v1908
      %2056 = vmatprep.subr.bf16.mxu0 0
      %2057 = vmatpush1.bf16.msra.mxu0 %v1909
      %2058 = vmatprep.subr.bf16.mxu0 0
      %2059 = vmatpush1.bf16.msra.mxu0 %v1910
      %2060 = vmatprep.subr.bf16.mxu0 0
      %2061 = vmatpush1.bf16.msra.mxu0 %v1911
      %2062 = vmatprep.subr.bf16.mxu0 0
      %2063 = vmatpush1.bf16.msra.mxu0 %v1912
      %2064 = vmatprep.subr.bf16.mxu0 0
      %2065 = vmatpush1.bf16.msra.mxu0 %v1913
      %2066 = vmatprep.subr.bf16.mxu0 0
      %2067 = vmatpush1.bf16.msra.mxu0 %v1914
      %2068 = vmatprep.subr.bf16.mxu0 0
      %2069 = vmatpush1.bf16.msra.mxu0 %v1915
      %2070 = vmatprep.subr.bf16.mxu0 0
      %2071 = vmatpush1.bf16.msra.mxu0 %v1916
      %2072 = vmatprep.subr.bf16.mxu0 0
      %2073 = vmatpush1.bf16.msra.mxu0 %v1917
      %2074 = vmatprep.subr.bf16.mxu0 0
      %2075 = vmatpush1.bf16.msra.mxu0 %v1918
      %2076 = vmatprep.subr.bf16.mxu0 0
      %2077 = vmatpush1.bf16.msra.mxu0 %v1919
      %2078 = vmatprep.subr.bf16.mxu0 0
      %2079 = vmatpush1.bf16.msra.mxu0 %v1920
      %2080 = vmatprep.subr.bf16.mxu0 0
      %2081 = vmatpush1.bf16.msra.mxu0 %v1921
      %2082 = vmatprep.mubr.bf16.mxu0 %v1331
      %2083 = vmatmul.mubr.bf16.gmra.mrb[0].mxu0 %v1313
      %v2084 = vpop.f32.mrb[0].mxu0
      %v2085 = vadd.f32 %v1616, %v2084
      %v2086 = vpop.f32.mrb[0].mxu0
      %v2087 = vpop.f32.mrb[0].mxu0
      %v2088 = vadd.f32 %v1616, %v2087
      %v2089 = vpop.f32.mrb[0].mxu0
      %2090 = vdwg.mxu0
      %2091 = vmatprep.subr.bf16.mxu0 0
      %2092 = vmatpush1.bf16.msra.mxu0 %v1922
      %2093 = vmatprep.subr.bf16.mxu0 0
      %2094 = vmatpush1.bf16.msra.mxu0 %v1923
      %2095 = vmatprep.subr.bf16.mxu0 0
      %2096 = vmatpush1.bf16.msra.mxu0 %v1924
      %2097 = vmatprep.subr.bf16.mxu0 0
      %2098 = vmatpush1.bf16.msra.mxu0 %v1925
      %2099 = vmatprep.subr.bf16.mxu0 0
      %2100 = vmatpush1.bf16.msra.mxu0 %v1926
      %2101 = vmatprep.subr.bf16.mxu0 0
      %2102 = vmatpush1.bf16.msra.mxu0 %v1927
      %2103 = vmatprep.subr.bf16.mxu0 0
      %2104 = vmatpush1.bf16.msra.mxu0 %v1928
      %2105 = vmatprep.subr.bf16.mxu0 0
      %2106 = vmatpush1.bf16.msra.mxu0 %v1929
      %2107 = vmatprep.subr.bf16.mxu0 0
      %2108 = vmatpush1.bf16.msra.mxu0 %v1930
      %2109 = vmatprep.subr.bf16.mxu0 0
      %2110 = vmatpush1.bf16.msra.mxu0 %v1931
      %2111 = vmatprep.subr.bf16.mxu0 0
      %2112 = vmatpush1.bf16.msra.mxu0 %v1932
      %2113 = vmatprep.subr.bf16.mxu0 0
      %2114 = vmatpush1.bf16.msra.mxu0 %v1933
      %2115 = vmatprep.subr.bf16.mxu0 0
      %2116 = vmatpush1.bf16.msra.mxu0 %v1934
      %2117 = vmatprep.subr.bf16.mxu0 0
      %2118 = vmatpush1.bf16.msra.mxu0 %v1935
      %2119 = vmatprep.subr.bf16.mxu0 0
      %2120 = vmatpush1.bf16.msra.mxu0 %v1936
      %2121 = vmatprep.subr.bf16.mxu0 0
      %2122 = vmatpush1.bf16.msra.mxu0 %v1937
      %2123 = vmatprep.mubr.bf16.mxu0 %v1371
      %2124 = vmatmul.mubr.bf16.gmra.mrb[0].mxu0 %v1349
      %v2125 = vpop.f32.mrb[0].mxu0
      %v2126 = vadd.f32 %v2085, %v2125
      %v2127 = vpop.f32.mrb[0].mxu0
      %v2128 = vpop.f32.mrb[0].mxu0
      %v2129 = vadd.f32 %v2088, %v2128
      %v2130 = vpop.f32.mrb[0].mxu0
      %2131 = vdwg.mxu0
      %2132 = vmatprep.subr.bf16.mxu0 0
      %2133 = vmatpush1.bf16.msra.mxu0 %v1938
      %2134 = vmatprep.subr.bf16.mxu0 0
      %2135 = vmatpush1.bf16.msra.mxu0 %v1939
      %2136 = vmatprep.subr.bf16.mxu0 0
      %2137 = vmatpush1.bf16.msra.mxu0 %v1940
      %2138 = vmatprep.subr.bf16.mxu0 0
      %2139 = vmatpush1.bf16.msra.mxu0 %v1941
      %2140 = vmatprep.subr.bf16.mxu0 0
      %2141 = vmatpush1.bf16.msra.mxu0 %v1942
      %2142 = vmatprep.subr.bf16.mxu0 0
      %2143 = vmatpush1.bf16.msra.mxu0 %v1943
      %2144 = vmatprep.subr.bf16.mxu0 0
      %2145 = vmatpush1.bf16.msra.mxu0 %v1944
      %2146 = vmatprep.subr.bf16.mxu0 0
      %2147 = vmatpush1.bf16.msra.mxu0 %v1945
      %2148 = vmatprep.subr.bf16.mxu0 0
      %2149 = vmatpush1.bf16.msra.mxu0 %v1946
      %2150 = vmatprep.subr.bf16.mxu0 0
      %2151 = vmatpush1.bf16.msra.mxu0 %v1947
      %2152 = vmatprep.subr.bf16.mxu0 0
      %2153 = vmatpush1.bf16.msra.mxu0 %v1948
      %2154 = vmatprep.subr.bf16.mxu0 0
      %2155 = vmatpush1.bf16.msra.mxu0 %v1949
      %2156 = vmatprep.subr.bf16.mxu0 0
      %2157 = vmatpush1.bf16.msra.mxu0 %v1950
      %2158 = vmatprep.subr.bf16.mxu0 0
      %2159 = vmatpush1.bf16.msra.mxu0 %v1951
      %2160 = vmatprep.subr.bf16.mxu0 0
      %2161 = vmatpush1.bf16.msra.mxu0 %v1952
      %2162 = vmatprep.subr.bf16.mxu0 0
      %2163 = vmatpush1.bf16.msra.mxu0 %v1953
      %2164 = vmatprep.mubr.bf16.mxu0 %v1407
      %2165 = vmatmul.mubr.bf16.gmra.mrb[0].mxu0 %v1389
      %v2166 = vpop.f32.mrb[0].mxu0
      %v2167 = vadd.f32 %v2126, %v2166
      %v2168 = vpop.f32.mrb[0].mxu0
      %v2169 = vpop.f32.mrb[0].mxu0
      %v2170 = vadd.f32 %v2129, %v2169
      %v2171 = vpop.f32.mrb[0].mxu0
      %2172 = vdwg.mxu0
      %2173 = vmatprep.subr.bf16.mxu0 0
      %2174 = vmatpush1.bf16.msra.mxu0 %v1954
      %2175 = vmatprep.subr.bf16.mxu0 0
      %2176 = vmatpush1.bf16.msra.mxu0 %v1955
      %2177 = vmatprep.subr.bf16.mxu0 0
      %2178 = vmatpush1.bf16.msra.mxu0 %v1956
      %2179 = vmatprep.subr.bf16.mxu0 0
      %2180 = vmatpush1.bf16.msra.mxu0 %v1957
      %2181 = vmatprep.subr.bf16.mxu0 0
      %2182 = vmatpush1.bf16.msra.mxu0 %v1958
      %2183 = vmatprep.subr.bf16.mxu0 0
      %2184 = vmatpush1.bf16.msra.mxu0 %v1959
      %2185 = vmatprep.subr.bf16.mxu0 0
      %2186 = vmatpush1.bf16.msra.mxu0 %v1960
      %2187 = vmatprep.subr.bf16.mxu0 0
      %2188 = vmatpush1.bf16.msra.mxu0 %v1961
      %2189 = vmatprep.subr.bf16.mxu0 0
      %2190 = vmatpush1.bf16.msra.mxu0 %v1962
      %2191 = vmatprep.subr.bf16.mxu0 0
      %2192 = vmatpush1.bf16.msra.mxu0 %v1963
      %2193 = vmatprep.subr.bf16.mxu0 0
      %2194 = vmatpush1.bf16.msra.mxu0 %v1964
      %2195 = vmatprep.subr.bf16.mxu0 0
      %2196 = vmatpush1.bf16.msra.mxu0 %v1965
      %2197 = vmatprep.subr.bf16.mxu0 0
      %2198 = vmatpush1.bf16.msra.mxu0 %v1966
      %2199 = vmatprep.subr.bf16.mxu0 0
      %2200 = vmatpush1.bf16.msra.mxu0 %v1967
      %2201 = vmatprep.subr.bf16.mxu0 0
      %2202 = vmatpush1.bf16.msra.mxu0 %v1968
      %2203 = vmatprep.subr.bf16.mxu0 0
      %2204 = vmatpush1.bf16.msra.mxu0 %v1969
      %2205 = vmatprep.mubr.bf16.mxu0 %v1447
      %2206 = vmatmul.mubr.bf16.gmra.mrb[0].mxu0 %v1429
      %v2207 = vpop.f32.mrb[0].mxu0
      %v2208 = vadd.f32 %v2167, %v2207
      %v2209 = vpop.f32.mrb[0].mxu0
      %v2210 = vpop.f32.mrb[0].mxu0
      %v2211 = vadd.f32 %v2170, %v2210
      %v2212 = vpop.f32.mrb[0].mxu0
      %2213 = vdwg.mxu0
      %2214 = vmatprep.subr.bf16.mxu0 0
      %2215 = vmatpush1.bf16.msra.mxu0 %v1970
      %2216 = vmatprep.subr.bf16.mxu0 0
      %2217 = vmatpush1.bf16.msra.mxu0 %v1971
      %2218 = vmatprep.subr.bf16.mxu0 0
      %2219 = vmatpush1.bf16.msra.mxu0 %v1972
      %2220 = vmatprep.subr.bf16.mxu0 0
      %2221 = vmatpush1.bf16.msra.mxu0 %v1973
      %2222 = vmatprep.subr.bf16.mxu0 0
      %2223 = vmatpush1.bf16.msra.mxu0 %v1974
      %2224 = vmatprep.subr.bf16.mxu0 0
      %2225 = vmatpush1.bf16.msra.mxu0 %v1975
      %2226 = vmatprep.subr.bf16.mxu0 0
      %2227 = vmatpush1.bf16.msra.mxu0 %v1976
      %2228 = vmatprep.subr.bf16.mxu0 0
      %2229 = vmatpush1.bf16.msra.mxu0 %v1977
      %2230 = vmatprep.subr.bf16.mxu0 0
      %2231 = vmatpush1.bf16.msra.mxu0 0
      %2232 = vmatprep.subr.bf16.mxu0 0
      %2233 = vmatpush1.bf16.msra.mxu0 0
      %2234 = vmatprep.subr.bf16.mxu0 0
      %2235 = vmatpush1.bf16.msra.mxu0 0
      %2236 = vmatprep.subr.bf16.mxu0 0
      %2237 = vmatpush1.bf16.msra.mxu0 0
      %2238 = vmatprep.subr.bf16.mxu0 0
      %2239 = vmatpush1.bf16.msra.mxu0 0
      %2240 = vmatprep.subr.bf16.mxu0 0
      %2241 = vmatpush1.bf16.msra.mxu0 0
      %2242 = vmatprep.subr.bf16.mxu0 0
      %2243 = vmatpush1.bf16.msra.mxu0 0
      %2244 = vmatprep.subr.bf16.mxu0 0
      %2245 = vmatpush1.bf16.msra.mxu0 0
      %2246 = vmatprep.mubr.bf16.mxu0 0
      %2247 = vmatmul.mubr.bf16.gmra.mrb[0].mxu0 %v1465
      %v2248 = vpop.f32.mrb[0].mxu0
      %v2249 = vadd.f32 %v2208, %v2248
      %v2250 = vpop.f32.mrb[0].mxu0
      %v2251 = vpop.f32.mrb[0].mxu0
      %v2252 = vadd.f32 %v2211, %v2251
      %v2253 = vpop.f32.mrb[0].mxu0
      %2254 = vdwg.mxu0
      %v2255 = vpack.c.bf16 %v2252, %v2249
      %v2257 = vunpack.c.l.b16 %v2255
      %v2258 = vunpack.c.h.b16 %v2255
      %v2259 = vpack.c.b16 %v2257, %v2257
      %v2260 = vpack.c.b16 %v2258, %v2258
      %2263 = vst [vmem:[%s170] sm:$0xf] %v2259
      %2264 = vst [vmem:[%s170 + $0x4] sm:$0xf] %v2260
      %p2265 = scmp.lt.s32.totalorder %s14, 1
      %s2266 = scalar_select %p2265, %s14, 1
      %s2267 = smul.addr %s2266, 2
      %s2268 = smul.addr %s2267, 4
      %s2269 = scalar_lea.vmem %s3, %s2268
      // Predicated region
      $region33: #{skipnet_forward.7} parent=31 // pred_check
        %p2270 = pneg %p100
      $region34: #{skipnet_forward.7} parent=31 // pred_check_branch
        %2272 = sbr.rel (%p2270) target = $region36
      $region35: #{skipnet_forward.7} parent=31 // pred_region
        _
      $region36: #{skipnet_forward.7} parent=31 // pred_fallthru
        _
    $region32: #{skipnet_forward.7} parent=5 // pred_fallthru
      _
    %p2273 = scmp.le.s32.totalorder 2, %s9
    // Predicated region
    $region37: #{skipnet_forward.7} parent=5 // pred_check
      %p2274 = pneg %p2273
    $region38: #{skipnet_forward.7} parent=5 // pred_check_branch
      %2276 = sbr.rel (%p2274) target = $region40
    $region39: #{skipnet_forward.7} parent=5 // pred_region
      %s2277 = ssub.s32 %s9, 2
      // Predicated region
      $region41: #{skipnet_forward.7} parent=39 // pred_check
        %p2278 = pneg %p106
      $region42: #{skipnet_forward.7} parent=39 // pred_check_branch
        %2280 = sbr.rel (%p2278) target = $region44
      $region43: #{skipnet_forward.7} parent=39 // pred_region
        %p2281 = scmp.lt.s32.totalorder %s15, 1
        %s2282 = scalar_select %p2281, %s15, 1
        %s2283 = smul.addr %s2282, 2
        %s2284 = smul.addr %s2283, 4
        %s2285 = scalar_lea.vmem %s3, %s2284
      $region44: #{skipnet_forward.7} parent=39 // pred_fallthru
        _
    $region40: #{skipnet_forward.7} parent=5 // pred_fallthru
      _
  $region6: #{skipnet_forward.7} parent=0 // loop_footer
    %s13 = sadd.s32 1, %s9
  $region7: #{skipnet_forward.7} parent=0 // loop_footer_branch
    %8 = sbr.rel target = $region3
  $region8: #{skipnet_forward.7} parent=0 // loop_exit
    _

// kernel: skipnet_forward.9
$region0: #{skipnet_forward.9}
  #allocation0 [shape = 'u32[]', space=smem, size = 0x4, offset = 0x4, fixed_abs, tag = 'smem constant byte address 0x4 - core index']
  #allocation1 [shape = 'u32[144,128]{1,0:T(1,128)}', space=vmem, size = 0x12000, scoped, tag = 'internal scratch']
  #allocation2 [shape = 'bf16[6,6,64]{2,1,0:T(8,128)(2,1)}', space=vmem, size = 0x3000, scoped, tag = 'scratch operand']
  %s0 = inlined_call_operand.vmem [shape: bf16[2,16,128], index: 0, kind: input, shape index: {}]
  %s1 = inlined_call_operand.vmem [shape: bf16[128,64], index: 1, kind: input, shape index: {}]
  %s2 = inlined_call_operand.vmem [shape: f32[1,64], index: 2, kind: input, shape index: {}]
  %s3 = inlined_call_operand.vmem [shape: bf16[128,256], index: 3, kind: input, shape index: {}]
  %s4 = inlined_call_operand.vmem [shape: f32[1,256], index: 4, kind: input, shape index: {}]
  %s5 = inlined_call_operand.vmem [shape: bf16[576,64], index: 5, kind: input, shape index: {}]
  %s6 = inlined_call_operand.vmem [shape: f32[1,64], index: 6, kind: input, shape index: {}]
  %s7 = inlined_call_operand.vmem [shape: bf16[64,256], index: 7, kind: input, shape index: {}]
  %s8 = inlined_call_operand.vmem [shape: f32[1,256], index: 8, kind: input, shape index: {}]
  %s9 = inlined_call_operand.vmem [shape: bf16[2,16,256], index: 9, kind: output, shape index: {}]
  %s10 = sld [smem:[#allocation0]]
  $region69: #{skipnet_forward.9} parent=0
    _
  %s12 = ssub.s32 1, %s10
  %s13 = scalar_select 0, %s12, %s10
  loop: start=0, step=1, limit=4
  $region2: #{skipnet_forward.9} parent=0 // loop_pre_header
    _
  $region3: #{skipnet_forward.9} parent=0 // loop_header
    %s15 = sphi 0, %s19
    %p16 = scmp.ge.s32.totalorder %s15, 4
    %s25 = sphi 0, %s27
    %s28 = sphi 0, %s25
    %s29 = sphi 0, %s28
    %s45 = sphi 0, %s29
    %s49 = sphi 0, %s49
    %s51 = sphi 0, %s49
    %s52 = sphi 0, %s51
    %s66 = sphi 0, %s52
    %s70 = sphi 0, %s70
    %s72 = sphi 0, %s70
    %s73 = sphi 0, %s72
    %s87 = sphi 0, %s73
    %s91 = sphi 0, %s91
    %s93 = sphi 0, %s91
    %s94 = sphi 0, %s93
    %s108 = sphi 0, %s94
    %s112 = sphi 0, %s112
    %s114 = sphi 0, %s112
    %s115 = sphi 0, %s114
    %s129 = sphi 0, %s115
    %s133 = sphi 0, %s133
    %s135 = sphi 0, %s133
    %s136 = sphi 0, %s135
    %s150 = sphi 0, %s136
    %s154 = sphi 0, %s154
    %s156 = sphi 0, %s154
    %s157 = sphi 0, %s156
    %s171 = sphi 0, %s157
    %s175 = sphi 0, %s175
    %s177 = sphi 0, %s175
    %s178 = sphi 0, %s177
    %s192 = sphi 0, %s178
    %s196 = sphi 0, %s196
    %s198 = sphi 0, %s196
    %s199 = sphi 0, %s198
    %s213 = sphi 0, %s199
    %s219 = sphi 0, %s221
    %s222 = sphi 0, %s219
    %s223 = sphi 0, %s222
    %s239 = sphi 0, %s223
  $region4: #{skipnet_forward.9} parent=0 // loop_header_branch
    %18 = sbr.rel (%p16) target = $region8
  $region5: #{skipnet_forward.9} parent=0 // loop_body
    %s20 = ssub.s32 %s15, 1
    %s21 = ssub.s32 %s15, 2
    %s22 = sadd.s32 %s15, 1
    %s23 = ssub.s32 %s15, %s22
    %p24 = scmp.eq.s32.totalorder %s23, 0
    %s26 = sadd.s32 %s25, 1
    %s27 = scalar_select %p24, %s25, %s26
    %p30 = pneg %p24
    %p31 = scmp.eq.s32.totalorder %s15, 1
    %p32 = por %p30, %p31
    %p33 = scmp.ne.s32.totalorder %s25, %s28
    %p34 = scmp.eq.s32.totalorder %s15, 0
    %p35 = por %p33, %p34
    %p36 = scmp.ne.s32.totalorder %s25, %s28
    %p37 = scmp.eq.s32.totalorder %s20, 1
    %p38 = por %p36, %p37
    %p39 = scmp.ne.s32.totalorder %s28, %s29
    %p40 = scmp.eq.s32.totalorder %s20, 0
    %p41 = por %p39, %p40
    %p42 = scmp.ne.s32.totalorder %s28, %s29
    %p43 = scmp.eq.s32.totalorder %s21, 1
    %p44 = por %p42, %p43
    %p46 = scmp.ne.s32.totalorder %s29, %s45
    %p47 = scmp.eq.s32.totalorder %s21, 0
    %p48 = por %p46, %p47
    %s50 = sadd.s32 %s49, 1
    %p53 = scmp.eq.s32.totalorder %s15, 1
    %p54 = scmp.ne.s32.totalorder %s49, %s51
    %p55 = scmp.eq.s32.totalorder %s15, 0
    %p56 = por %p54, %p55
    %p57 = scmp.ne.s32.totalorder %s49, %s51
    %p58 = scmp.eq.s32.totalorder %s20, 1
    %p59 = por %p57, %p58
    %p60 = scmp.ne.s32.totalorder %s51, %s52
    %p61 = scmp.eq.s32.totalorder %s20, 0
    %p62 = por %p60, %p61
    %p63 = scmp.ne.s32.totalorder %s51, %s52
    %p64 = scmp.eq.s32.totalorder %s21, 1
    %p65 = por %p63, %p64
    %p67 = scmp.ne.s32.totalorder %s52, %s66
    %p68 = scmp.eq.s32.totalorder %s21, 0
    %p69 = por %p67, %p68
    %s71 = sadd.s32 %s70, 1
    %p74 = scmp.eq.s32.totalorder %s15, 1
    %p75 = scmp.ne.s32.totalorder %s70, %s72
    %p76 = scmp.eq.s32.totalorder %s15, 0
    %p77 = por %p75, %p76
    %p78 = scmp.ne.s32.totalorder %s70, %s72
    %p79 = scmp.eq.s32.totalorder %s20, 1
    %p80 = por %p78, %p79
    %p81 = scmp.ne.s32.totalorder %s72, %s73
    %p82 = scmp.eq.s32.totalorder %s20, 0
    %p83 = por %p81, %p82
    %p84 = scmp.ne.s32.totalorder %s72, %s73
    %p85 = scmp.eq.s32.totalorder %s21, 1
    %p86 = por %p84, %p85
    %p88 = scmp.ne.s32.totalorder %s73, %s87
    %p89 = scmp.eq.s32.totalorder %s21, 0
    %p90 = por %p88, %p89
    %s92 = sadd.s32 %s91, 1
    %p95 = scmp.eq.s32.totalorder %s15, 1
    %p96 = scmp.ne.s32.totalorder %s91, %s93
    %p97 = scmp.eq.s32.totalorder %s15, 0
    %p98 = por %p96, %p97
    %p99 = scmp.ne.s32.totalorder %s91, %s93
    %p100 = scmp.eq.s32.totalorder %s20, 1
    %p101 = por %p99, %p100
    %p102 = scmp.ne.s32.totalorder %s93, %s94
    %p103 = scmp.eq.s32.totalorder %s20, 0
    %p104 = por %p102, %p103
    %p105 = scmp.ne.s32.totalorder %s93, %s94
    %p106 = scmp.eq.s32.totalorder %s21, 1
    %p107 = por %p105, %p106
    %p109 = scmp.ne.s32.totalorder %s94, %s108
    %p110 = scmp.eq.s32.totalorder %s21, 0
    %p111 = por %p109, %p110
    %s113 = sadd.s32 %s112, 1
    %p116 = scmp.eq.s32.totalorder %s15, 1
    %p117 = scmp.ne.s32.totalorder %s112, %s114
    %p118 = scmp.eq.s32.totalorder %s15, 0
    %p119 = por %p117, %p118
    %p120 = scmp.ne.s32.totalorder %s112, %s114
    %p121 = scmp.eq.s32.totalorder %s20, 1
    %p122 = por %p120, %p121
    %p123 = scmp.ne.s32.totalorder %s114, %s115
    %p124 = scmp.eq.s32.totalorder %s20, 0
    %p125 = por %p123, %p124
    %p126 = scmp.ne.s32.totalorder %s114, %s115
    %p127 = scmp.eq.s32.totalorder %s21, 1
    %p128 = por %p126, %p127
    %p130 = scmp.ne.s32.totalorder %s115, %s129
    %p131 = scmp.eq.s32.totalorder %s21, 0
    %p132 = por %p130, %p131
    %s134 = sadd.s32 %s133, 1
    %p137 = scmp.eq.s32.totalorder %s15, 1
    %p138 = scmp.ne.s32.totalorder %s133, %s135
    %p139 = scmp.eq.s32.totalorder %s15, 0
    %p140 = por %p138, %p139
    %p141 = scmp.ne.s32.totalorder %s133, %s135
    %p142 = scmp.eq.s32.totalorder %s20, 1
    %p143 = por %p141, %p142
    %p144 = scmp.ne.s32.totalorder %s135, %s136
    %p145 = scmp.eq.s32.totalorder %s20, 0
    %p146 = por %p144, %p145
    %p147 = scmp.ne.s32.totalorder %s135, %s136
    %p148 = scmp.eq.s32.totalorder %s21, 1
    %p149 = por %p147, %p148
    %p151 = scmp.ne.s32.totalorder %s136, %s150
    %p152 = scmp.eq.s32.totalorder %s21, 0
    %p153 = por %p151, %p152
    %s155 = sadd.s32 %s154, 1
    %p158 = scmp.eq.s32.totalorder %s15, 1
    %p159 = scmp.ne.s32.totalorder %s154, %s156
    %p160 = scmp.eq.s32.totalorder %s15, 0
    %p161 = por %p159, %p160
    %p162 = scmp.ne.s32.totalorder %s154, %s156
    %p163 = scmp.eq.s32.totalorder %s20, 1
    %p164 = por %p162, %p163
    %p165 = scmp.ne.s32.totalorder %s156, %s157
    %p166 = scmp.eq.s32.totalorder %s20, 0
    %p167 = por %p165, %p166
    %p168 = scmp.ne.s32.totalorder %s156, %s157
    %p169 = scmp.eq.s32.totalorder %s21, 1
    %p170 = por %p168, %p169
    %p172 = scmp.ne.s32.totalorder %s157, %s171
    %p173 = scmp.eq.s32.totalorder %s21, 0
    %p174 = por %p172, %p173
    %s176 = sadd.s32 %s175, 1
    %p179 = scmp.eq.s32.totalorder %s15, 1
    %p180 = scmp.ne.s32.totalorder %s175, %s177
    %p181 = scmp.eq.s32.totalorder %s15, 0
    %p182 = por %p180, %p181
    %p183 = scmp.ne.s32.totalorder %s175, %s177
    %p184 = scmp.eq.s32.totalorder %s20, 1
    %p185 = por %p183, %p184
    %p186 = scmp.ne.s32.totalorder %s177, %s178
    %p187 = scmp.eq.s32.totalorder %s20, 0
    %p188 = por %p186, %p187
    %p189 = scmp.ne.s32.totalorder %s177, %s178
    %p190 = scmp.eq.s32.totalorder %s21, 1
    %p191 = por %p189, %p190
    %p193 = scmp.ne.s32.totalorder %s178, %s192
    %p194 = scmp.eq.s32.totalorder %s21, 0
    %p195 = por %p193, %p194
    %s197 = sadd.s32 %s196, 1
    %p200 = scmp.eq.s32.totalorder %s15, 1
    %p201 = scmp.ne.s32.totalorder %s196, %s198
    %p202 = scmp.eq.s32.totalorder %s15, 0
    %p203 = por %p201, %p202
    %p204 = scmp.ne.s32.totalorder %s196, %s198
    %p205 = scmp.eq.s32.totalorder %s20, 1
    %p206 = por %p204, %p205
    %p207 = scmp.ne.s32.totalorder %s198, %s199
    %p208 = scmp.eq.s32.totalorder %s20, 0
    %p209 = por %p207, %p208
    %p210 = scmp.ne.s32.totalorder %s198, %s199
    %p211 = scmp.eq.s32.totalorder %s21, 1
    %p212 = por %p210, %p211
    %p214 = scmp.ne.s32.totalorder %s199, %s213
    %p215 = scmp.eq.s32.totalorder %s21, 0
    %p216 = por %p214, %p215
    %s217 = ssub.s32 %s15, %s22
    %p218 = scmp.eq.s32.totalorder %s217, 0
    %s220 = sadd.s32 %s219, 1
    %s221 = scalar_select %p218, %s219, %s220
    %p224 = pneg %p218
    %p225 = scmp.eq.s32.totalorder %s15, 1
    %p226 = por %p224, %p225
    %p227 = scmp.ne.s32.totalorder %s219, %s222
    %p228 = scmp.eq.s32.totalorder %s15, 0
    %p229 = por %p227, %p228
    %p230 = scmp.ne.s32.totalorder %s219, %s222
    %p231 = scmp.eq.s32.totalorder %s20, 1
    %p232 = por %p230, %p231
    %p233 = scmp.ne.s32.totalorder %s222, %s223
    %p234 = scmp.eq.s32.totalorder %s20, 0
    %p235 = por %p233, %p234
    %p236 = scmp.ne.s32.totalorder %s222, %s223
    %p237 = scmp.eq.s32.totalorder %s21, 1
    %p238 = por %p236, %p237
    %p240 = scmp.ne.s32.totalorder %s223, %s239
    %p241 = scmp.eq.s32.totalorder %s21, 0
    %p242 = por %p240, %p241
    %p243 = scmp.le.s32.totalorder 1, %s15
    %p244 = scmp.lt.s32.totalorder %s15, 3
    %p245 = pnand %p243, %p244
    %p246 = pneg %p245
    // Predicated region
    $region9: #{skipnet_forward.9} parent=5 // pred_check
      _
    $region10: #{skipnet_forward.9} parent=5 // pred_check_branch
      %248 = sbr.rel (%p245) target = $region12
    $region11: #{skipnet_forward.9} parent=5 // pred_region
      %s249 = ssub.s32 %s15, 1
      // Predicated region
      $region13: #{skipnet_forward.9} parent=11 // pred_check
        %p250 = pneg %p62
      $region14: #{skipnet_forward.9} parent=11 // pred_check_branch
        %252 = sbr.rel (%p250) target = $region16
      $region15: #{skipnet_forward.9} parent=11 // pred_region
        _
      $region16: #{skipnet_forward.9} parent=11 // pred_fallthru
        _
      // Predicated region
      $region17: #{skipnet_forward.9} parent=11 // pred_check
        %p253 = pneg %p83
      $region18: #{skipnet_forward.9} parent=11 // pred_check_branch
        %255 = sbr.rel (%p253) target = $region20
      $region19: #{skipnet_forward.9} parent=11 // pred_region
        _
      $region20: #{skipnet_forward.9} parent=11 // pred_fallthru
        _
      // Predicated region
      $region21: #{skipnet_forward.9} parent=11 // pred_check
        %p256 = pneg %p104
      $region22: #{skipnet_forward.9} parent=11 // pred_check_branch
        %258 = sbr.rel (%p256) target = $region24
      $region23: #{skipnet_forward.9} parent=11 // pred_region
        _
      $region24: #{skipnet_forward.9} parent=11 // pred_fallthru
        _
      // Predicated region
      $region25: #{skipnet_forward.9} parent=11 // pred_check
        %p259 = pneg %p125
      $region26: #{skipnet_forward.9} parent=11 // pred_check_branch
        %261 = sbr.rel (%p259) target = $region28
      $region27: #{skipnet_forward.9} parent=11 // pred_region
        _
      $region28: #{skipnet_forward.9} parent=11 // pred_fallthru
        _
      // Predicated region
      $region29: #{skipnet_forward.9} parent=11 // pred_check
        %p262 = pneg %p146
      $region30: #{skipnet_forward.9} parent=11 // pred_check_branch
        %264 = sbr.rel (%p262) target = $region32
      $region31: #{skipnet_forward.9} parent=11 // pred_region
        _
      $region32: #{skipnet_forward.9} parent=11 // pred_fallthru
        _
      // Predicated region
      $region33: #{skipnet_forward.9} parent=11 // pred_check
        %p265 = pneg %p167
      $region34: #{skipnet_forward.9} parent=11 // pred_check_branch
        %267 = sbr.rel (%p265) target = $region36
      $region35: #{skipnet_forward.9} parent=11 // pred_region
        _
      $region36: #{skipnet_forward.9} parent=11 // pred_fallthru
        _
      // Predicated region
      $region37: #{skipnet_forward.9} parent=11 // pred_check
        %p268 = pneg %p188
      $region38: #{skipnet_forward.9} parent=11 // pred_check_branch
        %270 = sbr.rel (%p268) target = $region40
      $region39: #{skipnet_forward.9} parent=11 // pred_region
        _
      $region40: #{skipnet_forward.9} parent=11 // pred_fallthru
        _
      // Predicated region
      $region41: #{skipnet_forward.9} parent=11 // pred_check
        %p271 = pneg %p209
      $region42: #{skipnet_forward.9} parent=11 // pred_check_branch
        %273 = sbr.rel (%p271) target = $region44
      $region43: #{skipnet_forward.9} parent=11 // pred_region
        _
      $region44: #{skipnet_forward.9} parent=11 // pred_fallthru
        _
    $region12: #{skipnet_forward.9} parent=5 // pred_fallthru
      _
    %p274 = scmp.lt.s32.totalorder %s15, 2
    // Predicated region
    $region45: #{skipnet_forward.9} parent=5 // pred_check
      %p275 = pneg %p274
    $region46: #{skipnet_forward.9} parent=5 // pred_check_branch
      %277 = sbr.rel (%p275) target = $region48
    $region47: #{skipnet_forward.9} parent=5 // pred_region
      // Predicated region
      $region49: #{skipnet_forward.9} parent=47 // pred_check
        %p278 = pneg %p35
      $region50: #{skipnet_forward.9} parent=47 // pred_check_branch
        %280 = sbr.rel (%p278) target = $region52
      $region51: #{skipnet_forward.9} parent=47 // pred_region
        %p281 = scmp.lt.s32.totalorder %s15, 1
        %s282 = scalar_select %p281, %s15, 1
        %s283 = smul.addr %s282, 2
        %s284 = smul.addr %s283, 4
        %s285 = scalar_lea.vmem %s0, %s284
      $region52: #{skipnet_forward.9} parent=47 // pred_fallthru
        _
    $region48: #{skipnet_forward.9} parent=5 // pred_fallthru
      _
    %p286 = scmp.le.s32.totalorder 1, %s15
    %p287 = scmp.lt.s32.totalorder %s15, 3
    %p288 = pnand %p286, %p287
    %p289 = pneg %p288
    // Predicated region
    $region53: #{skipnet_forward.9} parent=5 // pred_check
      _
    $region54: #{skipnet_forward.9} parent=5 // pred_check_branch
      %291 = sbr.rel (%p288) target = $region56
    $region55: #{skipnet_forward.9} parent=5 // pred_region
      %s292 = ssub.s32 %s15, 1
      %p293 = scmp.lt.s32.totalorder %s20, 1
      %s294 = scalar_select %p293, %s20, 1
      %s295 = smul.addr %s294, 2
      %s296 = smul.addr %s295, 4
      %s297 = scalar_lea.vmem %s0, %s296
      %p298 = pneg %p41
      %p299 = pneg %p38
      %p300 = pneg %p62
      %p301 = pneg %p59
      %p302 = pneg %p83
      %p303 = pneg %p80
      %p304 = pneg %p104
      %p305 = pneg %p101
      %p306 = pneg %p125
      %p307 = pneg %p122
      %p308 = pneg %p146
      %p309 = pneg %p143
      %p310 = pneg %p167
      %p311 = pneg %p164
      %p312 = pneg %p188
      %p313 = pneg %p185
      %p314 = pneg %p209
      %p315 = pneg %p206
      %p316 = pneg %p235
      %p317 = pneg %p232
      %p318 = scmp.lt.s32.totalorder %s20, 1
      %s319 = scalar_select %p318, %s20, 1
      %s320 = smul.addr %s319, 4
      %s321 = smul.addr %s320, 4
      %s322 = scalar_lea.vmem %s9, %s321
      %p323 = scmp.lt.s32.totalorder %s20, 1
      %s324 = scalar_select %p323, %s20, 1
      %s325 = smul.addr %s324, 2
      %s326 = smul.addr %s325, 4
      %s327 = scalar_lea.vmem %s0, %s326
      %p328 = scmp.lt.s32.totalorder %s20, 1
      %s329 = scalar_select %p328, %s20, 1
      %s330 = smul.addr %s329, 4
      %s331 = smul.addr %s330, 4
      %s332 = scalar_lea.vmem %s9, %s331
      %v334 = vld [vmem:[%s327] sm:$0xf]
      %v335 = vld [vmem:[%s327 + $0x4] sm:$0xf]
      %v336 = vld [vmem:[%s1] sm:$0xf]
      %v337 = vld [vmem:[%s1 + $0x4] sm:$0xf]
      %v338 = vld [vmem:[%s1 + $0x8] sm:$0xf]
      %v339 = vld [vmem:[%s1 + $0xc] sm:$0xf]
      %v340 = vld [vmem:[%s1 + $0x10] sm:$0xf]
      %v341 = vld [vmem:[%s1 + $0x14] sm:$0xf]
      %v342 = vld [vmem:[%s1 + $0x18] sm:$0xf]
      %v343 = vld [vmem:[%s1 + $0x1c] sm:$0xf]
      %v344 = vld [vmem:[%s1 + $0x20] sm:$0xf]
      %v345 = vld [vmem:[%s1 + $0x24] sm:$0xf]
      %v346 = vld [vmem:[%s1 + $0x28] sm:$0xf]
      %v347 = vld [vmem:[%s1 + $0x2c] sm:$0xf]
      %v348 = vld [vmem:[%s1 + $0x30] sm:$0xf]
      %v349 = vld [vmem:[%s1 + $0x34] sm:$0xf]
      %v350 = vld [vmem:[%s1 + $0x38] sm:$0xf]
      %v351 = vld [vmem:[%s1 + $0x3c] sm:$0xf]
      %v352 = vld [vmem:[%s2] sm:$0x1]
      %v354 = vlaneseq
      %v355 = vshrl.u32 %v354, 7
      %v356 = vsub.s32 0, %v355
      %v357 = vrot.slane %v352, %v356
      %v361 = vunpack.c.l.b16 %v334
      %v362 = vunpack.c.l.b16 %v335
      %v363 = vpack.c.b16 %v362, %v361
      %v381 = vunpack.c.l.b16 %v336
      %v382 = vunpack.c.l.b16 %v337
      %v383 = vunpack.c.l.b16 %v338
      %v384 = vunpack.c.l.b16 %v339
      %v385 = vunpack.c.l.b16 %v340
      %v386 = vunpack.c.l.b16 %v341
      %v387 = vunpack.c.l.b16 %v342
      %v388 = vunpack.c.l.b16 %v343
      %v389 = vunpack.c.l.b16 %v344
      %v390 = vunpack.c.l.b16 %v345
      %v391 = vunpack.c.l.b16 %v346
      %v392 = vunpack.c.l.b16 %v347
      %v393 = vunpack.c.l.b16 %v348
      %v394 = vunpack.c.l.b16 %v349
      %v395 = vunpack.c.l.b16 %v350
      %v396 = vunpack.c.l.b16 %v351
      %v397 = vpack.c.b16 %v382, %v381
      %v398 = vpack.c.b16 %v384, %v383
      %v399 = vpack.c.b16 %v386, %v385
      %v400 = vpack.c.b16 %v388, %v387
      %v401 = vpack.c.b16 %v390, %v389
      %v402 = vpack.c.b16 %v392, %v391
      %v403 = vpack.c.b16 %v394, %v393
      %v404 = vpack.c.b16 %v396, %v395
      %413 = vmatprep.subr.bf16.mxu0 0
      %414 = vmatpush1.bf16.msra.mxu0 %v397
      %415 = vmatprep.subr.bf16.mxu0 0
      %416 = vmatpush1.bf16.msra.mxu0 %v398
      %417 = vmatprep.subr.bf16.mxu0 0
      %418 = vmatpush1.bf16.msra.mxu0 %v399
      %419 = vmatprep.subr.bf16.mxu0 0
      %420 = vmatpush1.bf16.msra.mxu0 %v400
      %421 = vmatprep.subr.bf16.mxu0 0
      %422 = vmatpush1.bf16.msra.mxu0 %v401
      %423 = vmatprep.subr.bf16.mxu0 0
      %424 = vmatpush1.bf16.msra.mxu0 %v402
      %425 = vmatprep.subr.bf16.mxu0 0
      %426 = vmatpush1.bf16.msra.mxu0 %v403
      %427 = vmatprep.subr.bf16.mxu0 0
      %428 = vmatpush1.bf16.msra.mxu0 %v404
      %429 = vmatprep.subr.bf16.mxu0 0
      %430 = vmatpush1.bf16.msra.mxu0 0
      %431 = vmatprep.subr.bf16.mxu0 0
      %432 = vmatpush1.bf16.msra.mxu0 0
      %433 = vmatprep.subr.bf16.mxu0 0
      %434 = vmatpush1.bf16.msra.mxu0 0
      %435 = vmatprep.subr.bf16.mxu0 0
      %436 = vmatpush1.bf16.msra.mxu0 0
      %437 = vmatprep.subr.bf16.mxu0 0
      %438 = vmatpush1.bf16.msra.mxu0 0
      %439 = vmatprep.subr.bf16.mxu0 0
      %440 = vmatpush1.bf16.msra.mxu0 0
      %441 = vmatprep.subr.bf16.mxu0 0
      %442 = vmatpush1.bf16.msra.mxu0 0
      %443 = vmatprep.subr.bf16.mxu0 0
      %444 = vmatpush1.bf16.msra.mxu0 0
      %445 = vmatprep.mubr.bf16.mxu0 0
      %446 = vmatmul.mubr.bf16.gmra.mrb[0].mxu0 %v363
      %v447 = vpop.f32.mrb[0].mxu0
      %v448 = vadd.f32 %v357, %v447
      %v449 = vpop.f32.mrb[0].mxu0
      %v450 = vpop.f32.mrb[0].mxu0
      %v451 = vadd.f32 %v357, %v450
      %v452 = vpop.f32.mrb[0].mxu0
      %453 = vdwg.mxu0
      %v454 = vmax.f32 %v448, 0.0
      %v455 = vmax.f32 %v451, 0.0
      %v456 = vld [vmem:[%s3] sm:$0xff]
      %v457 = vld [vmem:[%s3 + $0x8] sm:$0xff]
      %v458 = vld [vmem:[%s3 + $0x10] sm:$0xff]
      %v459 = vld [vmem:[%s3 + $0x18] sm:$0xff]
      %v460 = vld [vmem:[%s3 + $0x20] sm:$0xff]
      %v461 = vld [vmem:[%s3 + $0x28] sm:$0xff]
      %v462 = vld [vmem:[%s3 + $0x30] sm:$0xff]
      %v463 = vld [vmem:[%s3 + $0x38] sm:$0xff]
      %v464 = vld [vmem:[%s3 + $0x40] sm:$0xff]
      %v465 = vld [vmem:[%s3 + $0x48] sm:$0xff]
      %v466 = vld [vmem:[%s3 + $0x50] sm:$0xff]
      %v467 = vld [vmem:[%s3 + $0x58] sm:$0xff]
      %v468 = vld [vmem:[%s3 + $0x60] sm:$0xff]
      %v469 = vld [vmem:[%s3 + $0x68] sm:$0xff]
      %v470 = vld [vmem:[%s3 + $0x70] sm:$0xff]
      %v471 = vld [vmem:[%s3 + $0x78] sm:$0xff]
      %v472 = vld [vmem:[%s4] sm:$0x3]
      %v474 = vlaneseq
      %v475 = vshrl.u32 %v474, 7
      %v476 = vsub.s32 0, %v475
      %v477 = vrot.slane %v472, %v476
      %v478 = vlaneseq
      %v479 = vshrl.u32 %v478, 7
      %v480 = vsub.s32 1, %v479
      %v481 = vrot.slane %v472, %v480
      %v500 = vunpack.c.l.b16 %v456
      %v501 = vunpack.c.h.b16 %v456
      %v502 = vunpack.c.l.b16 %v457
      %v503 = vunpack.c.h.b16 %v457
      %v504 = vunpack.c.l.b16 %v458
      %v505 = vunpack.c.h.b16 %v458
      %v506 = vunpack.c.l.b16 %v459
      %v507 = vunpack.c.h.b16 %v459
      %v508 = vunpack.c.l.b16 %v460
      %v509 = vunpack.c.h.b16 %v460
      %v510 = vunpack.c.l.b16 %v461
      %v511 = vunpack.c.h.b16 %v461
      %v512 = vunpack.c.l.b16 %v462
      %v513 = vunpack.c.h.b16 %v462
      %v514 = vunpack.c.l.b16 %v463
      %v515 = vunpack.c.h.b16 %v463
      %v516 = vunpack.c.l.b16 %v464
      %v517 = vunpack.c.h.b16 %v464
      %v518 = vunpack.c.l.b16 %v465
      %v519 = vunpack.c.h.b16 %v465
      %v520 = vunpack.c.l.b16 %v466
      %v521 = vunpack.c.h.b16 %v466
      %v522 = vunpack.c.l.b16 %v467
      %v523 = vunpack.c.h.b16 %v467
      %v524 = vunpack.c.l.b16 %v468
      %v525 = vunpack.c.h.b16 %v468
      %v526 = vunpack.c.l.b16 %v469
      %v527 = vunpack.c.h.b16 %v469
      %v528 = vunpack.c.l.b16 %v470
      %v529 = vunpack.c.h.b16 %v470
      %v530 = vunpack.c.l.b16 %v471
      %v531 = vunpack.c.h.b16 %v471
      %v532 = vpack.c.b16 %v502, %v500
      %v533 = vpack.c.b16 %v503, %v501
      %v534 = vpack.c.b16 %v506, %v504
      %v535 = vpack.c.b16 %v507, %v505
      %v536 = vpack.c.b16 %v510, %v508
      %v537 = vpack.c.b16 %v511, %v509
      %v538 = vpack.c.b16 %v514, %v512
      %v539 = vpack.c.b16 %v515, %v513
      %v540 = vpack.c.b16 %v518, %v516
      %v541 = vpack.c.b16 %v519, %v517
      %v542 = vpack.c.b16 %v522, %v520
      %v543 = vpack.c.b16 %v523, %v521
      %v544 = vpack.c.b16 %v526, %v524
      %v545 = vpack.c.b16 %v527, %v525
      %v546 = vpack.c.b16 %v530, %v528
      %v547 = vpack.c.b16 %v531, %v529
      %564 = vmatprep.subr.bf16.mxu0 %v533
      %565 = vmatpush1.bf16.msra.mxu0 %v532
      %566 = vmatprep.subr.bf16.mxu0 %v535
      %567 = vmatpush1.bf16.msra.mxu0 %v534
      %568 = vmatprep.subr.bf16.mxu0 %v537
      %569 = vmatpush1.bf16.msra.mxu0 %v536
      %570 = vmatprep.subr.bf16.mxu0 %v539
      %571 = vmatpush1.bf16.msra.mxu0 %v538
      %572 = vmatprep.subr.bf16.mxu0 %v541
      %573 = vmatpush1.bf16.msra.mxu0 %v540
      %574 = vmatprep.subr.bf16.mxu0 %v543
      %575 = vmatpush1.bf16.msra.mxu0 %v542
      %576 = vmatprep.subr.bf16.mxu0 %v545
      %577 = vmatpush1.bf16.msra.mxu0 %v544
      %578 = vmatprep.subr.bf16.mxu0 %v547
      %579 = vmatpush1.bf16.msra.mxu0 %v546
      %580 = vmatprep.subr.bf16.mxu0 0
      %581 = vmatpush1.bf16.msra.mxu0 0
      %582 = vmatprep.subr.bf16.mxu0 0
      %583 = vmatpush1.bf16.msra.mxu0 0
      %584 = vmatprep.subr.bf16.mxu0 0
      %585 = vmatpush1.bf16.msra.mxu0 0
      %586 = vmatprep.subr.bf16.mxu0 0
      %587 = vmatpush1.bf16.msra.mxu0 0
      %588 = vmatprep.subr.bf16.mxu0 0
      %589 = vmatpush1.bf16.msra.mxu0 0
      %590 = vmatprep.subr.bf16.mxu0 0
      %591 = vmatpush1.bf16.msra.mxu0 0
      %592 = vmatprep.subr.bf16.mxu0 0
      %593 = vmatpush1.bf16.msra.mxu0 0
      %594 = vmatprep.subr.bf16.mxu0 0
      %595 = vmatpush1.bf16.msra.mxu0 0
      %596 = vmatprep.mubr.bf16.mxu0 0
      %597 = vmatmul.mubr.bf16.gmra.mrb[0].mxu0 %v363
      %v598 = vpop.f32.mrb[0].mxu0
      %v599 = vadd.f32 %v477, %v598
      %v600 = vpop.f32.mrb[0].mxu0
      %v601 = vadd.f32 %v481, %v600
      %v602 = vpop.f32.mrb[0].mxu0
      %v603 = vadd.f32 %v477, %v602
      %v604 = vpop.f32.mrb[0].mxu0
      %v605 = vadd.f32 %v481, %v604
      %606 = vdwg.mxu0
      %vm607 = vcmask 518144
      %608 = vst.msk [vmem:[#allocation2] sm:$0x7] %vm607, 0
      %609 = vst.msk [vmem:[#allocation2 + $0x4] sm:$0x7] %vm607, 0
      %610 = vst.msk [vmem:[#allocation2 + $0x8] sm:$0x7] %vm607, 0
      %611 = vst.msk [vmem:[#allocation2 + $0xc] sm:$0x7] %vm607, 0
      %612 = vst.msk [vmem:[#allocation2 + $0x10] sm:$0x7] %vm607, 0
      %613 = vst.msk [vmem:[#allocation2 + $0x14] sm:$0x7] %vm607, 0
      %v616 = vcombine.high %v454, %v454
      %v617 = vcombine.high %v455, %v455
      %v620 = vpack.c.bf16 %v454, %v454
      %v621 = vpack.c.bf16 %v616, %v616
      %v622 = vpack.c.bf16 %v455, %v455
      %v623 = vpack.c.bf16 %v617, %v617
      %v628 = vunpack.c.l.b16 %v620
      %v629 = vunpack.c.l.b16 %v621
      %v630 = vunpack.c.l.b16 %v622
      %v631 = vunpack.c.l.b16 %v623
      %v632 = vpack.c.b16 %v628, %v628
      %v633 = vpack.c.b16 %v629, %v629
      %v634 = vpack.c.b16 %v630, %v630
      %v635 = vpack.c.b16 %v631, %v631
      %v637 = vshrl.u32 %v632, 16
      %v639 = vrot.slane %v637, 7
      %v640 = vshll.u32 %v632, 16
      %v642 = vor.u32 %v639, %v640
      %v644 = vshrl.u32 %v633, 16
      %v646 = vrot.slane %v644, 7
      %v647 = vshll.u32 %v633, 16
      %v649 = vor.u32 %v646, %v647
      %v651 = vshrl.u32 %v634, 16
      %v653 = vrot.slane %v651, 7
      %v654 = vshll.u32 %v634, 16
      %v656 = vor.u32 %v653, %v654
      %v658 = vshrl.u32 %v635, 16
      %v660 = vrot.slane %v658, 7
      %v661 = vshll.u32 %v635, 16
      %v663 = vor.u32 %v660, %v661
      %s668 = scalar_lea.vmem [#allocation2], 4
      %vm669 = vcmask 518144
      %vm670 = vsmask.f32 2306
      %vm671 = vmand %vm669, %vm670
      %v672 = vld [vmem:[%s668] sm:$0x7]
      %v673 = vsel %vm671, %v642, %v672
      %674 = vst [vmem:[%s668] sm:$0x7] %v673
      %v675 = vld [vmem:[%s668 + $0x4] sm:$0x7]
      %v676 = vsel %vm671, %v649, %v675
      %677 = vst [vmem:[%s668 + $0x4] sm:$0x7] %v676
      %v678 = vld [vmem:[%s668 + $0x8] sm:$0x7]
      %v679 = vsel %vm671, %v656, %v678
      %680 = vst [vmem:[%s668 + $0x8] sm:$0x7] %v679
      %v681 = vld [vmem:[%s668 + $0xc] sm:$0x7]
      %v682 = vsel %vm671, %v663, %v681
      %683 = vst [vmem:[%s668 + $0xc] sm:$0x7] %v682
      %v684 = vld [vmem:[#allocation2] sm:$0x3]
      %v685 = vld [vmem:[#allocation2 + $0x4] sm:$0x3]
      %v686 = vld [vmem:[#allocation2 + $0x8] sm:$0x3]
      %v687 = vld [vmem:[#allocation2 + $0xc] sm:$0x3]
      %v688 = vld [vmem:[#allocation2] sm:$0x7]
      %v689 = vld [vmem:[#allocation2 + $0x4] sm:$0x7]
      %v690 = vld [vmem:[#allocation2 + $0x8] sm:$0x7]
      %v691 = vld [vmem:[#allocation2 + $0xc] sm:$0x7]
      %v697 = vunpack.c.l.s4 1983009808
      %v698 = vunpack.c.0.s8 %v697
      %v699 = vlaneseq
      %v700 = vshrl.u32 %v699, 7
      %v701 = vsub.s32 %v698, %v700
      %v702 = vrot.slane %v688, %v701
      %v703 = vcombine.high %v702, %v702
      %v705 = vunpack.c.l.s4 1983009808
      %v706 = vunpack.c.0.s8 %v705
      %v707 = vlaneseq
      %v708 = vshrl.u32 %v707, 7
      %v709 = vsub.s32 %v706, %v708
      %v710 = vrot.slane %v689, %v709
      %v711 = vcombine.high %v710, %v710
      %v713 = vunpack.c.l.s4 1983009808
      %v714 = vunpack.c.0.s8 %v713
      %v715 = vlaneseq
      %v716 = vshrl.u32 %v715, 7
      %v717 = vsub.s32 %v714, %v716
      %v718 = vrot.slane %v690, %v717
      %v719 = vcombine.high %v718, %v718
      %v721 = vunpack.c.l.s4 1983009808
      %v722 = vunpack.c.0.s8 %v721
      %v723 = vlaneseq
      %v724 = vshrl.u32 %v723, 7
      %v725 = vsub.s32 %v722, %v724
      %v726 = vrot.slane %v691, %v725
      %v727 = vcombine.high %v726, %v726
      %vm728 = vsmask.f32 1280
      %vm729 = vsmask.f32 3336
      %vm730 = vmor %vm728, %vm729
      %vm731 = vsmask.f32 5392
      %vm732 = vmor %vm730, %vm731
      %vm733 = vsmask.f32 7448
      %vm734 = vmor %vm732, %vm733
      %v736 = vshrl.u32 %v702, 16
      %v738 = vrot.slane %v736, 6
      %v739 = vshll.u32 %v702, 16
      %v741 = vrot.slane %v739, 7
      %v742 = vor.u32 %v738, %v741
      %v743 = vrot.slane %v742, 2
      %v745 = vshll.u32 %v703, 16
      %v747 = vrot.slane %v745, 7
      %v748 = vsel %vm734, %v743, %v747
      %v750 = vshrl.u32 %v710, 16
      %v752 = vrot.slane %v750, 6
      %v753 = vshll.u32 %v710, 16
      %v755 = vrot.slane %v753, 7
      %v756 = vor.u32 %v752, %v755
      %v757 = vrot.slane %v756, 2
      %v759 = vshll.u32 %v711, 16
      %v761 = vrot.slane %v759, 7
      %v762 = vsel %vm734, %v757, %v761
      %v764 = vshrl.u32 %v718, 16
      %v766 = vrot.slane %v764, 6
      %v767 = vshll.u32 %v718, 16
      %v769 = vrot.slane %v767, 7
      %v770 = vor.u32 %v766, %v769
      %v771 = vrot.slane %v770, 2
      %v773 = vshll.u32 %v719, 16
      %v775 = vrot.slane %v773, 7
      %v776 = vsel %vm734, %v771, %v775
      %v778 = vshrl.u32 %v726, 16
      %v780 = vrot.slane %v778, 6
      %v781 = vshll.u32 %v726, 16
      %v783 = vrot.slane %v781, 7
      %v784 = vor.u32 %v780, %v783
      %v785 = vrot.slane %v784, 2
      %v787 = vshll.u32 %v727, 16
      %v789 = vrot.slane %v787, 7
      %v790 = vsel %vm734, %v785, %v789
      %v791 = vld [vmem:[#allocation2] sm:$0x6]
      %v792 = vld [vmem:[#allocation2 + $0x4] sm:$0x6]
      %v793 = vld [vmem:[#allocation2 + $0x8] sm:$0x6]
      %v794 = vld [vmem:[#allocation2 + $0xc] sm:$0x6]
      %v800 = vunpack.c.l.s4 1983009808
      %v801 = vunpack.c.0.s8 %v800
      %v802 = vlaneseq
      %v803 = vshrl.u32 %v802, 7
      %v804 = vsub.s32 %v801, %v803
      %v805 = vrot.slane %v791, %v804
      %v806 = vcombine.high %v805, %v805
      %v808 = vunpack.c.l.s4 1983009808
      %v809 = vunpack.c.0.s8 %v808
      %v810 = vlaneseq
      %v811 = vshrl.u32 %v810, 7
      %v812 = vsub.s32 %v809, %v811
      %v813 = vrot.slane %v792, %v812
      %v814 = vcombine.high %v813, %v813
      %v816 = vunpack.c.l.s4 1983009808
      %v817 = vunpack.c.0.s8 %v816
      %v818 = vlaneseq
      %v819 = vshrl.u32 %v818, 7
      %v820 = vsub.s32 %v817, %v819
      %v821 = vrot.slane %v793, %v820
      %v822 = vcombine.high %v821, %v821
      %v824 = vunpack.c.l.s4 1983009808
      %v825 = vunpack.c.0.s8 %v824
      %v826 = vlaneseq
      %v827 = vshrl.u32 %v826, 7
      %v828 = vsub.s32 %v825, %v827
      %v829 = vrot.slane %v794, %v828
      %v830 = vcombine.high %v829, %v829
      %vm831 = vcmask 1040384
      %vm832 = vcmask 1042434
      %vm833 = vmor %vm831, %vm832
      %vm834 = vcmask 1044484
      %vm835 = vmor %vm833, %vm834
      %vm836 = vcmask 1046534
      %vm837 = vmor %vm835, %vm836
      %v838 = vrot.slane %v805, 7
      %v839 = vrot.slane %v838, 2
      %v840 = vrot.slane %v806, 7
      %v841 = vsel %vm837, %v839, %v840
      %v842 = vrot.slane %v813, 7
      %v843 = vrot.slane %v842, 2
      %v844 = vrot.slane %v814, 7
      %v845 = vsel %vm837, %v843, %v844
      %v846 = vrot.slane %v821, 7
      %v847 = vrot.slane %v846, 2
      %v848 = vrot.slane %v822, 7
      %v849 = vsel %vm837, %v847, %v848
      %v850 = vrot.slane %v829, 7
      %v851 = vrot.slane %v850, 2
      %v852 = vrot.slane %v830, 7
      %v853 = vsel %vm837, %v851, %v852
      %v854 = vld [vmem:[%s668] sm:$0x3]
      %v855 = vld [vmem:[%s668 + $0x4] sm:$0x3]
      %v856 = vld [vmem:[%s668 + $0x8] sm:$0x3]
      %v857 = vld [vmem:[%s668 + $0xc] sm:$0x3]
      %v858 = vld [vmem:[%s668] sm:$0x7]
      %v859 = vld [vmem:[%s668 + $0x4] sm:$0x7]
      %v860 = vld [vmem:[%s668 + $0x8] sm:$0x7]
      %v861 = vld [vmem:[%s668 + $0xc] sm:$0x7]
      %v867 = vunpack.c.l.s4 1983009808
      %v868 = vunpack.c.0.s8 %v867
      %v869 = vlaneseq
      %v870 = vshrl.u32 %v869, 7
      %v871 = vsub.s32 %v868, %v870
      %v872 = vrot.slane %v858, %v871
      %v873 = vcombine.high %v872, %v872
      %v875 = vunpack.c.l.s4 1983009808
      %v876 = vunpack.c.0.s8 %v875
      %v877 = vlaneseq
      %v878 = vshrl.u32 %v877, 7
      %v879 = vsub.s32 %v876, %v878
      %v880 = vrot.slane %v859, %v879
      %v881 = vcombine.high %v880, %v880
      %v883 = vunpack.c.l.s4 1983009808
      %v884 = vunpack.c.0.s8 %v883
      %v885 = vlaneseq
      %v886 = vshrl.u32 %v885, 7
      %v887 = vsub.s32 %v884, %v886
      %v888 = vrot.slane %v860, %v887
      %v889 = vcombine.high %v888, %v888
      %v891 = vunpack.c.l.s4 1983009808
      %v892 = vunpack.c.0.s8 %v891
      %v893 = vlaneseq
      %v894 = vshrl.u32 %v893, 7
      %v895 = vsub.s32 %v892, %v894
      %v896 = vrot.slane %v861, %v895
      %v897 = vcombine.high %v896, %v896
      %v899 = vshrl.u32 %v872, 16
      %v901 = vrot.slane %v899, 6
      %v902 = vshll.u32 %v872, 16
      %v904 = vrot.slane %v902, 7
      %v905 = vor.u32 %v901, %v904
      %v906 = vrot.slane %v905, 2
      %v908 = vshll.u32 %v873, 16
      %v910 = vrot.slane %v908, 7
      %v911 = vsel %vm734, %v906, %v910
      %v913 = vshrl.u32 %v880, 16
      %v915 = vrot.slane %v913, 6
      %v916 = vshll.u32 %v880, 16
      %v918 = vrot.slane %v916, 7
      %v919 = vor.u32 %v915, %v918
      %v920 = vrot.slane %v919, 2
      %v922 = vshll.u32 %v881, 16
      %v924 = vrot.slane %v922, 7
      %v925 = vsel %vm734, %v920, %v924
      %v927 = vshrl.u32 %v888, 16
      %v929 = vrot.slane %v927, 6
      %v930 = vshll.u32 %v888, 16
      %v932 = vrot.slane %v930, 7
      %v933 = vor.u32 %v929, %v932
      %v934 = vrot.slane %v933, 2
      %v936 = vshll.u32 %v889, 16
      %v938 = vrot.slane %v936, 7
      %v939 = vsel %vm734, %v934, %v938
      %v941 = vshrl.u32 %v896, 16
      %v943 = vrot.slane %v941, 6
      %v944 = vshll.u32 %v896, 16
      %v946 = vrot.slane %v944, 7
      %v947 = vor.u32 %v943, %v946
      %v948 = vrot.slane %v947, 2
      %v950 = vshll.u32 %v897, 16
      %v952 = vrot.slane %v950, 7
      %v953 = vsel %vm734, %v948, %v952
      %v954 = vld [vmem:[%s668] sm:$0x6]
      %v955 = vld [vmem:[%s668 + $0x4] sm:$0x6]
      %v956 = vld [vmem:[%s668 + $0x8] sm:$0x6]
      %v957 = vld [vmem:[%s668 + $0xc] sm:$0x6]
      %v963 = vunpack.c.l.s4 1983009808
      %v964 = vunpack.c.0.s8 %v963
      %v965 = vlaneseq
      %v966 = vshrl.u32 %v965, 7
      %v967 = vsub.s32 %v964, %v966
      %v968 = vrot.slane %v954, %v967
      %v969 = vcombine.high %v968, %v968
      %v971 = vunpack.c.l.s4 1983009808
      %v972 = vunpack.c.0.s8 %v971
      %v973 = vlaneseq
      %v974 = vshrl.u32 %v973, 7
      %v975 = vsub.s32 %v972, %v974
      %v976 = vrot.slane %v955, %v975
      %v977 = vcombine.high %v976, %v976
      %v979 = vunpack.c.l.s4 1983009808
      %v980 = vunpack.c.0.s8 %v979
      %v981 = vlaneseq
      %v982 = vshrl.u32 %v981, 7
      %v983 = vsub.s32 %v980, %v982
      %v984 = vrot.slane %v956, %v983
      %v985 = vcombine.high %v984, %v984
      %v987 = vunpack.c.l.s4 1983009808
      %v988 = vunpack.c.0.s8 %v987
      %v989 = vlaneseq
      %v990 = vshrl.u32 %v989, 7
      %v991 = vsub.s32 %v988, %v990
      %v992 = vrot.slane %v957, %v991
      %v993 = vcombine.high %v992, %v992
      %v994 = vrot.slane %v968, 7
      %v995 = vrot.slane %v994, 2
      %v996 = vrot.slane %v969, 7
      %v997 = vsel %vm837, %v995, %v996
      %v998 = vrot.slane %v976, 7
      %v999 = vrot.slane %v998, 2
      %v1000 = vrot.slane %v977, 7
      %v1001 = vsel %vm837, %v999, %v1000
      %v1002 = vrot.slane %v984, 7
      %v1003 = vrot.slane %v1002, 2
      %v1004 = vrot.slane %v985, 7
      %v1005 = vsel %vm837, %v1003, %v1004
      %v1006 = vrot.slane %v992, 7
      %v1007 = vrot.slane %v1006, 2
      %v1008 = vrot.slane %v993, 7
      %v1009 = vsel %vm837, %v1007, %v1008
      %s1010 = scalar_lea.vmem [#allocation2], 8
      %v1011 = vld [vmem:[%s1010] sm:$0x3]
      %v1012 = vld [vmem:[%s1010 + $0x4] sm:$0x3]
      %v1013 = vld [vmem:[%s1010 + $0x8] sm:$0x3]
      %v1014 = vld [vmem:[%s1010 + $0xc] sm:$0x3]
      %v1015 = vld [vmem:[%s1010] sm:$0x7]
      %v1016 = vld [vmem:[%s1010 + $0x4] sm:$0x7]
      %v1017 = vld [vmem:[%s1010 + $0x8] sm:$0x7]
      %v1018 = vld [vmem:[%s1010 + $0xc] sm:$0x7]
      %v1024 = vunpack.c.l.s4 1983009808
      %v1025 = vunpack.c.0.s8 %v1024
      %v1026 = vlaneseq
      %v1027 = vshrl.u32 %v1026, 7
      %v1028 = vsub.s32 %v1025, %v1027
      %v1029 = vrot.slane %v1015, %v1028
      %v1030 = vcombine.high %v1029, %v1029
      %v1032 = vunpack.c.l.s4 1983009808
      %v1033 = vunpack.c.0.s8 %v1032
      %v1034 = vlaneseq
      %v1035 = vshrl.u32 %v1034, 7
      %v1036 = vsub.s32 %v1033, %v1035
      %v1037 = vrot.slane %v1016, %v1036
      %v1038 = vcombine.high %v1037, %v1037
      %v1040 = vunpack.c.l.s4 1983009808
      %v1041 = vunpack.c.0.s8 %v1040
      %v1042 = vlaneseq
      %v1043 = vshrl.u32 %v1042, 7
      %v1044 = vsub.s32 %v1041, %v1043
      %v1045 = vrot.slane %v1017, %v1044
      %v1046 = vcombine.high %v1045, %v1045
      %v1048 = vunpack.c.l.s4 1983009808
      %v1049 = vunpack.c.0.s8 %v1048
      %v1050 = vlaneseq
      %v1051 = vshrl.u32 %v1050, 7
      %v1052 = vsub.s32 %v1049, %v1051
      %v1053 = vrot.slane %v1018, %v1052
      %v1054 = vcombine.high %v1053, %v1053
      %v1056 = vshrl.u32 %v1029, 16
      %v1058 = vrot.slane %v1056, 6
      %v1059 = vshll.u32 %v1029, 16
      %v1061 = vrot.slane %v1059, 7
      %v1062 = vor.u32 %v1058, %v1061
      %v1063 = vrot.slane %v1062, 2
      %v1065 = vshll.u32 %v1030, 16
      %v1067 = vrot.slane %v1065, 7
      %v1068 = vsel %vm734, %v1063, %v1067
      %v1070 = vshrl.u32 %v1037, 16
      %v1072 = vrot.slane %v1070, 6
      %v1073 = vshll.u32 %v1037, 16
      %v1075 = vrot.slane %v1073, 7
      %v1076 = vor.u32 %v1072, %v1075
      %v1077 = vrot.slane %v1076, 2
      %v1079 = vshll.u32 %v1038, 16
      %v1081 = vrot.slane %v1079, 7
      %v1082 = vsel %vm734, %v1077, %v1081
      %v1084 = vshrl.u32 %v1045, 16
      %v1086 = vrot.slane %v1084, 6
      %v1087 = vshll.u32 %v1045, 16
      %v1089 = vrot.slane %v1087, 7
      %v1090 = vor.u32 %v1086, %v1089
      %v1091 = vrot.slane %v1090, 2
      %v1093 = vshll.u32 %v1046, 16
      %v1095 = vrot.slane %v1093, 7
      %v1096 = vsel %vm734, %v1091, %v1095
      %v1098 = vshrl.u32 %v1053, 16
      %v1100 = vrot.slane %v1098, 6
      %v1101 = vshll.u32 %v1053, 16
      %v1103 = vrot.slane %v1101, 7
      %v1104 = vor.u32 %v1100, %v1103
      %v1105 = vrot.slane %v1104, 2
      %v1107 = vshll.u32 %v1054, 16
      %v1109 = vrot.slane %v1107, 7
      %v1110 = vsel %vm734, %v1105, %v1109
      %v1111 = vld [vmem:[%s1010] sm:$0x6]
      %v1112 = vld [vmem:[%s1010 + $0x4] sm:$0x6]
      %v1113 = vld [vmem:[%s1010 + $0x8] sm:$0x6]
      %v1114 = vld [vmem:[%s1010 + $0xc] sm:$0x6]
      %v1120 = vunpack.c.l.s4 1983009808
      %v1121 = vunpack.c.0.s8 %v1120
      %v1122 = vlaneseq
      %v1123 = vshrl.u32 %v1122, 7
      %v1124 = vsub.s32 %v1121, %v1123
      %v1125 = vrot.slane %v1111, %v1124
      %v1126 = vcombine.high %v1125, %v1125
      %v1128 = vunpack.c.l.s4 1983009808
      %v1129 = vunpack.c.0.s8 %v1128
      %v1130 = vlaneseq
      %v1131 = vshrl.u32 %v1130, 7
      %v1132 = vsub.s32 %v1129, %v1131
      %v1133 = vrot.slane %v1112, %v1132
      %v1134 = vcombine.high %v1133, %v1133
      %v1136 = vunpack.c.l.s4 1983009808
      %v1137 = vunpack.c.0.s8 %v1136
      %v1138 = vlaneseq
      %v1139 = vshrl.u32 %v1138, 7
      %v1140 = vsub.s32 %v1137, %v1139
      %v1141 = vrot.slane %v1113, %v1140
      %v1142 = vcombine.high %v1141, %v1141
      %v1144 = vunpack.c.l.s4 1983009808
      %v1145 = vunpack.c.0.s8 %v1144
      %v1146 = vlaneseq
      %v1147 = vshrl.u32 %v1146, 7
      %v1148 = vsub.s32 %v1145, %v1147
      %v1149 = vrot.slane %v1114, %v1148
      %v1150 = vcombine.high %v1149, %v1149
      %v1151 = vrot.slane %v1125, 7
      %v1152 = vrot.slane %v1151, 2
      %v1153 = vrot.slane %v1126, 7
      %v1154 = vsel %vm837, %v1152, %v1153
      %v1155 = vrot.slane %v1133, 7
      %v1156 = vrot.slane %v1155, 2
      %v1157 = vrot.slane %v1134, 7
      %v1158 = vsel %vm837, %v1156, %v1157
      %v1159 = vrot.slane %v1141, 7
      %v1160 = vrot.slane %v1159, 2
      %v1161 = vrot.slane %v1142, 7
      %v1162 = vsel %vm837, %v1160, %v1161
      %v1163 = vrot.slane %v1149, 7
      %v1164 = vrot.slane %v1163, 2
      %v1165 = vrot.slane %v1150, 7
      %v1166 = vsel %vm837, %v1164, %v1165
      %v1171 = vcombine.low %v684, %v685
      %v1172 = vcombine.low %v686, %v687
      %v1174 = vunpack.c.l.s4 1983009808
      %v1175 = vunpack.c.0.s8 %v1174
      %v1176 = vlaneseq
      %v1177 = vshrl.u32 %v1176, 7
      %v1178 = vsub.s32 %v1175, %v1177
      %v1179 = vrot.slane %v1171, %v1178
      %v1181 = vunpack.c.l.s4 1983009808
      %v1182 = vunpack.c.0.s8 %v1181
      %v1183 = vlaneseq
      %v1184 = vshrl.u32 %v1183, 7
      %v1185 = vsub.s32 %v1182, %v1184
      %v1186 = vrot.slane %v1172, %v1185
      %v1187 = vcombine.low %v1179, %v1186
      %v1188 = vcombine.low %v748, %v762
      %v1189 = vcombine.low %v776, %v790
      %v1191 = vunpack.c.l.s4 1983009808
      %v1192 = vunpack.c.0.s8 %v1191
      %v1193 = vlaneseq
      %v1194 = vshrl.u32 %v1193, 7
      %v1195 = vsub.s32 %v1192, %v1194
      %v1196 = vrot.slane %v1188, %v1195
      %v1198 = vunpack.c.l.s4 1983009808
      %v1199 = vunpack.c.0.s8 %v1198
      %v1200 = vlaneseq
      %v1201 = vshrl.u32 %v1200, 7
      %v1202 = vsub.s32 %v1199, %v1201
      %v1203 = vrot.slane %v1189, %v1202
      %v1204 = vcombine.low %v1196, %v1203
      %1205 = vrot.lane.b32.xlu0 %v1204, 64
      %v1206 = vpop.permute.xlu0 %1205
      %v1207 = vcombine.low %v841, %v845
      %v1208 = vcombine.low %v849, %v853
      %v1210 = vunpack.c.l.s4 1983009808
      %v1211 = vunpack.c.0.s8 %v1210
      %v1212 = vlaneseq
      %v1213 = vshrl.u32 %v1212, 7
      %v1214 = vsub.s32 %v1211, %v1213
      %v1215 = vrot.slane %v1207, %v1214
      %v1217 = vunpack.c.l.s4 1983009808
      %v1218 = vunpack.c.0.s8 %v1217
      %v1219 = vlaneseq
      %v1220 = vshrl.u32 %v1219, 7
      %v1221 = vsub.s32 %v1218, %v1220
      %v1222 = vrot.slane %v1208, %v1221
      %v1223 = vcombine.low %v1215, %v1222
      %v1228 = vcombine.low %v854, %v855
      %v1229 = vcombine.low %v856, %v857
      %v1231 = vunpack.c.l.s4 1983009808
      %v1232 = vunpack.c.0.s8 %v1231
      %v1233 = vlaneseq
      %v1234 = vshrl.u32 %v1233, 7
      %v1235 = vsub.s32 %v1232, %v1234
      %v1236 = vrot.slane %v1228, %v1235
      %v1238 = vunpack.c.l.s4 1983009808
      %v1239 = vunpack.c.0.s8 %v1238
      %v1240 = vlaneseq
      %v1241 = vshrl.u32 %v1240, 7
      %v1242 = vsub.s32 %v1239, %v1241
      %v1243 = vrot.slane %v1229, %v1242
      %v1244 = vcombine.low %v1236, %v1243
      %1245 = vrot.lane.b32.xlu0 %v1244, 64
      %v1246 = vpop.permute.xlu0 %1245
      %v1247 = vcombine.low %v911, %v925
      %v1248 = vcombine.low %v939, %v953
      %v1250 = vunpack.c.l.s4 1983009808
      %v1251 = vunpack.c.0.s8 %v1250
      %v1252 = vlaneseq
      %v1253 = vshrl.u32 %v1252, 7
      %v1254 = vsub.s32 %v1251, %v1253
      %v1255 = vrot.slane %v1247, %v1254
      %v1257 = vunpack.c.l.s4 1983009808
      %v1258 = vunpack.c.0.s8 %v1257
      %v1259 = vlaneseq
      %v1260 = vshrl.u32 %v1259, 7
      %v1261 = vsub.s32 %v1258, %v1260
      %v1262 = vrot.slane %v1248, %v1261
      %v1263 = vcombine.low %v1255, %v1262
      %v1264 = vcombine.low %v997, %v1001
      %v1265 = vcombine.low %v1005, %v1009
      %v1267 = vunpack.c.l.s4 1983009808
      %v1268 = vunpack.c.0.s8 %v1267
      %v1269 = vlaneseq
      %v1270 = vshrl.u32 %v1269, 7
      %v1271 = vsub.s32 %v1268, %v1270
      %v1272 = vrot.slane %v1264, %v1271
      %v1274 = vunpack.c.l.s4 1983009808
      %v1275 = vunpack.c.0.s8 %v1274
      %v1276 = vlaneseq
      %v1277 = vshrl.u32 %v1276, 7
      %v1278 = vsub.s32 %v1275, %v1277
      %v1279 = vrot.slane %v1265, %v1278
      %v1280 = vcombine.low %v1272, %v1279
      %1281 = vrot.lane.b32.xlu0 %v1280, 64
      %v1282 = vpop.permute.xlu0 %1281
      %v1287 = vcombine.low %v1011, %v1012
      %v1288 = vcombine.low %v1013, %v1014
      %v1290 = vunpack.c.l.s4 1983009808
      %v1291 = vunpack.c.0.s8 %v1290
      %v1292 = vlaneseq
      %v1293 = vshrl.u32 %v1292, 7
      %v1294 = vsub.s32 %v1291, %v1293
      %v1295 = vrot.slane %v1287, %v1294
      %v1297 = vunpack.c.l.s4 1983009808
      %v1298 = vunpack.c.0.s8 %v1297
      %v1299 = vlaneseq
      %v1300 = vshrl.u32 %v1299, 7
      %v1301 = vsub.s32 %v1298, %v1300
      %v1302 = vrot.slane %v1288, %v1301
      %v1303 = vcombine.low %v1295, %v1302
      %v1304 = vcombine.low %v1068, %v1082
      %v1305 = vcombine.low %v1096, %v1110
      %v1307 = vunpack.c.l.s4 1983009808
      %v1308 = vunpack.c.0.s8 %v1307
      %v1309 = vlaneseq
      %v1310 = vshrl.u32 %v1309, 7
      %v1311 = vsub.s32 %v1308, %v1310
      %v1312 = vrot.slane %v1304, %v1311
      %v1314 = vunpack.c.l.s4 1983009808
      %v1315 = vunpack.c.0.s8 %v1314
      %v1316 = vlaneseq
      %v1317 = vshrl.u32 %v1316, 7
      %v1318 = vsub.s32 %v1315, %v1317
      %v1319 = vrot.slane %v1305, %v1318
      %v1320 = vcombine.low %v1312, %v1319
      %1321 = vrot.lane.b32.xlu0 %v1320, 64
      %v1322 = vpop.permute.xlu0 %1321
      %v1323 = vcombine.low %v1154, %v1158
      %v1324 = vcombine.low %v1162, %v1166
      %v1326 = vunpack.c.l.s4 1983009808
      %v1327 = vunpack.c.0.s8 %v1326
      %v1328 = vlaneseq
      %v1329 = vshrl.u32 %v1328, 7
      %v1330 = vsub.s32 %v1327, %v1329
      %v1331 = vrot.slane %v1323, %v1330
      %v1333 = vunpack.c.l.s4 1983009808
      %v1334 = vunpack.c.0.s8 %v1333
      %v1335 = vlaneseq
      %v1336 = vshrl.u32 %v1335, 7
      %v1337 = vsub.s32 %v1334, %v1336
      %v1338 = vrot.slane %v1324, %v1337
      %v1339 = vcombine.low %v1331, %v1338
      %vm1340 = vcmask 523264
      %v1343 = vsel %vm1340, %v1187, %v1206
      %v1347 = vsel %vm1340, %v1223, %v1246
      %v1351 = vsel %vm1340, %v1263, %v1282
      %v1355 = vsel %vm1340, %v1303, %v1322
      %v1357 = vld [vmem:[%s5] sm:$0xf]
      %v1358 = vld [vmem:[%s5 + $0x4] sm:$0xf]
      %v1359 = vld [vmem:[%s5 + $0x8] sm:$0xf]
      %v1360 = vld [vmem:[%s5 + $0xc] sm:$0xf]
      %v1361 = vld [vmem:[%s5 + $0x10] sm:$0xf]
      %v1362 = vld [vmem:[%s5 + $0x14] sm:$0xf]
      %v1363 = vld [vmem:[%s5 + $0x18] sm:$0xf]
      %v1364 = vld [vmem:[%s5 + $0x1c] sm:$0xf]
      %v1365 = vld [vmem:[%s5 + $0x20] sm:$0xf]
      %v1366 = vld [vmem:[%s5 + $0x24] sm:$0xf]
      %v1367 = vld [vmem:[%s5 + $0x28] sm:$0xf]
      %v1368 = vld [vmem:[%s5 + $0x2c] sm:$0xf]
      %v1369 = vld [vmem:[%s5 + $0x30] sm:$0xf]
      %v1370 = vld [vmem:[%s5 + $0x34] sm:$0xf]
      %v1371 = vld [vmem:[%s5 + $0x38] sm:$0xf]
      %v1372 = vld [vmem:[%s5 + $0x3c] sm:$0xf]
      %v1373 = vld [vmem:[%s5 + $0x40] sm:$0xf]
      %v1374 = vld [vmem:[%s5 + $0x44] sm:$0xf]
      %v1375 = vld [vmem:[%s5 + $0x48] sm:$0xf]
      %v1376 = vld [vmem:[%s5 + $0x4c] sm:$0xf]
      %v1377 = vld [vmem:[%s5 + $0x50] sm:$0xf]
      %v1378 = vld [vmem:[%s5 + $0x54] sm:$0xf]
      %v1379 = vld [vmem:[%s5 + $0x58] sm:$0xf]
      %v1380 = vld [vmem:[%s5 + $0x5c] sm:$0xf]
      %v1381 = vld [vmem:[%s5 + $0x60] sm:$0xf]
      %v1382 = vld [vmem:[%s5 + $0x64] sm:$0xf]
      %v1383 = vld [vmem:[%s5 + $0x68] sm:$0xf]
      %v1384 = vld [vmem:[%s5 + $0x6c] sm:$0xf]
      %v1385 = vld [vmem:[%s5 + $0x70] sm:$0xf]
      %v1386 = vld [vmem:[%s5 + $0x74] sm:$0xf]
      %v1387 = vld [vmem:[%s5 + $0x78] sm:$0xf]
      %v1388 = vld [vmem:[%s5 + $0x7c] sm:$0xf]
      %v1389 = vld [vmem:[%s5 + $0x80] sm:$0xf]
      %v1390 = vld [vmem:[%s5 + $0x84] sm:$0xf]
      %v1391 = vld [vmem:[%s5 + $0x88] sm:$0xf]
      %v1392 = vld [vmem:[%s5 + $0x8c] sm:$0xf]
      %v1393 = vld [vmem:[%s5 + $0x90] sm:$0xf]
      %v1394 = vld [vmem:[%s5 + $0x94] sm:$0xf]
      %v1395 = vld [vmem:[%s5 + $0x98] sm:$0xf]
      %v1396 = vld [vmem:[%s5 + $0x9c] sm:$0xf]
      %v1397 = vld [vmem:[%s5 + $0xa0] sm:$0xf]
      %v1398 = vld [vmem:[%s5 + $0xa4] sm:$0xf]
      %v1399 = vld [vmem:[%s5 + $0xa8] sm:$0xf]
      %v1400 = vld [vmem:[%s5 + $0xac] sm:$0xf]
      %v1401 = vld [vmem:[%s5 + $0xb0] sm:$0xf]
      %v1402 = vld [vmem:[%s5 + $0xb4] sm:$0xf]
      %v1403 = vld [vmem:[%s5 + $0xb8] sm:$0xf]
      %v1404 = vld [vmem:[%s5 + $0xbc] sm:$0xf]
      %v1405 = vld [vmem:[%s5 + $0xc0] sm:$0xf]
      %v1406 = vld [vmem:[%s5 + $0xc4] sm:$0xf]
      %v1407 = vld [vmem:[%s5 + $0xc8] sm:$0xf]
      %v1408 = vld [vmem:[%s5 + $0xcc] sm:$0xf]
      %v1409 = vld [vmem:[%s5 + $0xd0] sm:$0xf]
      %v1410 = vld [vmem:[%s5 + $0xd4] sm:$0xf]
      %v1411 = vld [vmem:[%s5 + $0xd8] sm:$0xf]
      %v1412 = vld [vmem:[%s5 + $0xdc] sm:$0xf]
      %v1413 = vld [vmem:[%s5 + $0xe0] sm:$0xf]
      %v1414 = vld [vmem:[%s5 + $0xe4] sm:$0xf]
      %v1415 = vld [vmem:[%s5 + $0xe8] sm:$0xf]
      %v1416 = vld [vmem:[%s5 + $0xec] sm:$0xf]
      %v1417 = vld [vmem:[%s5 + $0xf0] sm:$0xf]
      %v1418 = vld [vmem:[%s5 + $0xf4] sm:$0xf]
      %v1419 = vld [vmem:[%s5 + $0xf8] sm:$0xf]
      %v1420 = vld [vmem:[%s5 + $0xfc] sm:$0xf]
      %v1421 = vld [vmem:[%s5 + $0x100] sm:$0xf]
      %v1422 = vld [vmem:[%s5 + $0x104] sm:$0xf]
      %v1423 = vld [vmem:[%s5 + $0x108] sm:$0xf]
      %v1424 = vld [vmem:[%s5 + $0x10c] sm:$0xf]
      %v1425 = vld [vmem:[%s5 + $0x110] sm:$0xf]
      %v1426 = vld [vmem:[%s5 + $0x114] sm:$0xf]
      %v1427 = vld [vmem:[%s5 + $0x118] sm:$0xf]
      %v1428 = vld [vmem:[%s5 + $0x11c] sm:$0xf]
      %v1429 = vld [vmem:[%s6] sm:$0x1]
      %v1431 = vlaneseq
      %v1432 = vshrl.u32 %v1431, 7
      %v1433 = vsub.s32 0, %v1432
      %v1434 = vrot.slane %v1429, %v1433
      %v1508 = vunpack.c.l.b16 %v1357
      %v1509 = vunpack.c.l.b16 %v1358
      %v1510 = vunpack.c.l.b16 %v1359
      %v1511 = vunpack.c.l.b16 %v1360
      %v1512 = vunpack.c.l.b16 %v1361
      %v1513 = vunpack.c.l.b16 %v1362
      %v1514 = vunpack.c.l.b16 %v1363
      %v1515 = vunpack.c.l.b16 %v1364
      %v1516 = vunpack.c.l.b16 %v1365
      %v1517 = vunpack.c.l.b16 %v1366
      %v1518 = vunpack.c.l.b16 %v1367
      %v1519 = vunpack.c.l.b16 %v1368
      %v1520 = vunpack.c.l.b16 %v1369
      %v1521 = vunpack.c.l.b16 %v1370
      %v1522 = vunpack.c.l.b16 %v1371
      %v1523 = vunpack.c.l.b16 %v1372
      %v1524 = vunpack.c.l.b16 %v1373
      %v1525 = vunpack.c.l.b16 %v1374
      %v1526 = vunpack.c.l.b16 %v1375
      %v1527 = vunpack.c.l.b16 %v1376
      %v1528 = vunpack.c.l.b16 %v1377
      %v1529 = vunpack.c.l.b16 %v1378
      %v1530 = vunpack.c.l.b16 %v1379
      %v1531 = vunpack.c.l.b16 %v1380
      %v1532 = vunpack.c.l.b16 %v1381
      %v1533 = vunpack.c.l.b16 %v1382
      %v1534 = vunpack.c.l.b16 %v1383
      %v1535 = vunpack.c.l.b16 %v1384
      %v1536 = vunpack.c.l.b16 %v1385
      %v1537 = vunpack.c.l.b16 %v1386
      %v1538 = vunpack.c.l.b16 %v1387
      %v1539 = vunpack.c.l.b16 %v1388
      %v1540 = vunpack.c.l.b16 %v1389
      %v1541 = vunpack.c.l.b16 %v1390
      %v1542 = vunpack.c.l.b16 %v1391
      %v1543 = vunpack.c.l.b16 %v1392
      %v1544 = vunpack.c.l.b16 %v1393
      %v1545 = vunpack.c.l.b16 %v1394
      %v1546 = vunpack.c.l.b16 %v1395
      %v1547 = vunpack.c.l.b16 %v1396
      %v1548 = vunpack.c.l.b16 %v1397
      %v1549 = vunpack.c.l.b16 %v1398
      %v1550 = vunpack.c.l.b16 %v1399
      %v1551 = vunpack.c.l.b16 %v1400
      %v1552 = vunpack.c.l.b16 %v1401
      %v1553 = vunpack.c.l.b16 %v1402
      %v1554 = vunpack.c.l.b16 %v1403
      %v1555 = vunpack.c.l.b16 %v1404
      %v1556 = vunpack.c.l.b16 %v1405
      %v1557 = vunpack.c.l.b16 %v1406
      %v1558 = vunpack.c.l.b16 %v1407
      %v1559 = vunpack.c.l.b16 %v1408
      %v1560 = vunpack.c.l.b16 %v1409
      %v1561 = vunpack.c.l.b16 %v1410
      %v1562 = vunpack.c.l.b16 %v1411
      %v1563 = vunpack.c.l.b16 %v1412
      %v1564 = vunpack.c.l.b16 %v1413
      %v1565 = vunpack.c.l.b16 %v1414
      %v1566 = vunpack.c.l.b16 %v1415
      %v1567 = vunpack.c.l.b16 %v1416
      %v1568 = vunpack.c.l.b16 %v1417
      %v1569 = vunpack.c.l.b16 %v1418
      %v1570 = vunpack.c.l.b16 %v1419
      %v1571 = vunpack.c.l.b16 %v1420
      %v1572 = vunpack.c.l.b16 %v1421
      %v1573 = vunpack.c.l.b16 %v1422
      %v1574 = vunpack.c.l.b16 %v1423
      %v1575 = vunpack.c.l.b16 %v1424
      %v1576 = vunpack.c.l.b16 %v1425
      %v1577 = vunpack.c.l.b16 %v1426
      %v1578 = vunpack.c.l.b16 %v1427
      %v1579 = vunpack.c.l.b16 %v1428
      %v1580 = vpack.c.b16 %v1509, %v1508
      %v1581 = vpack.c.b16 %v1511, %v1510
      %v1582 = vpack.c.b16 %v1513, %v1512
      %v1583 = vpack.c.b16 %v1515, %v1514
      %v1584 = vpack.c.b16 %v1517, %v1516
      %v1585 = vpack.c.b16 %v1519, %v1518
      %v1586 = vpack.c.b16 %v1521, %v1520
      %v1587 = vpack.c.b16 %v1523, %v1522
      %v1588 = vpack.c.b16 %v1525, %v1524
      %v1589 = vpack.c.b16 %v1527, %v1526
      %v1590 = vpack.c.b16 %v1529, %v1528
      %v1591 = vpack.c.b16 %v1531, %v1530
      %v1592 = vpack.c.b16 %v1533, %v1532
      %v1593 = vpack.c.b16 %v1535, %v1534
      %v1594 = vpack.c.b16 %v1537, %v1536
      %v1595 = vpack.c.b16 %v1539, %v1538
      %v1596 = vpack.c.b16 %v1541, %v1540
      %v1597 = vpack.c.b16 %v1543, %v1542
      %v1598 = vpack.c.b16 %v1545, %v1544
      %v1599 = vpack.c.b16 %v1547, %v1546
      %v1600 = vpack.c.b16 %v1549, %v1548
      %v1601 = vpack.c.b16 %v1551, %v1550
      %v1602 = vpack.c.b16 %v1553, %v1552
      %v1603 = vpack.c.b16 %v1555, %v1554
      %v1604 = vpack.c.b16 %v1557, %v1556
      %v1605 = vpack.c.b16 %v1559, %v1558
      %v1606 = vpack.c.b16 %v1561, %v1560
      %v1607 = vpack.c.b16 %v1563, %v1562
      %v1608 = vpack.c.b16 %v1565, %v1564
      %v1609 = vpack.c.b16 %v1567, %v1566
      %v1610 = vpack.c.b16 %v1569, %v1568
      %v1611 = vpack.c.b16 %v1571, %v1570
      %v1612 = vpack.c.b16 %v1573, %v1572
      %v1613 = vpack.c.b16 %v1575, %v1574
      %v1614 = vpack.c.b16 %v1577, %v1576
      %v1615 = vpack.c.b16 %v1579, %v1578
      %v1653 = vsel %vm1340, %v1339, 0
      %1655 = vmatprep.subr.bf16.mxu0 0
      %1656 = vmatpush1.bf16.msra.mxu0 %v1580
      %1657 = vmatprep.subr.bf16.mxu0 0
      %1658 = vmatpush1.bf16.msra.mxu0 %v1581
      %1659 = vmatprep.subr.bf16.mxu0 0
      %1660 = vmatpush1.bf16.msra.mxu0 %v1582
      %1661 = vmatprep.subr.bf16.mxu0 0
      %1662 = vmatpush1.bf16.msra.mxu0 %v1583
      %1663 = vmatprep.subr.bf16.mxu0 0
      %1664 = vmatpush1.bf16.msra.mxu0 %v1584
      %1665 = vmatprep.subr.bf16.mxu0 0
      %1666 = vmatpush1.bf16.msra.mxu0 %v1585
      %1667 = vmatprep.subr.bf16.mxu0 0
      %1668 = vmatpush1.bf16.msra.mxu0 %v1586
      %1669 = vmatprep.subr.bf16.mxu0 0
      %1670 = vmatpush1.bf16.msra.mxu0 %v1587
      %1671 = vmatprep.subr.bf16.mxu0 0
      %1672 = vmatpush1.bf16.msra.mxu0 %v1588
      %1673 = vmatprep.subr.bf16.mxu0 0
      %1674 = vmatpush1.bf16.msra.mxu0 %v1589
      %1675 = vmatprep.subr.bf16.mxu0 0
      %1676 = vmatpush1.bf16.msra.mxu0 %v1590
      %1677 = vmatprep.subr.bf16.mxu0 0
      %1678 = vmatpush1.bf16.msra.mxu0 %v1591
      %1679 = vmatprep.subr.bf16.mxu0 0
      %1680 = vmatpush1.bf16.msra.mxu0 %v1592
      %1681 = vmatprep.subr.bf16.mxu0 0
      %1682 = vmatpush1.bf16.msra.mxu0 %v1593
      %1683 = vmatprep.subr.bf16.mxu0 0
      %1684 = vmatpush1.bf16.msra.mxu0 %v1594
      %1685 = vmatprep.subr.bf16.mxu0 0
      %1686 = vmatpush1.bf16.msra.mxu0 %v1595
      %1687 = vmatprep.mubr.bf16.mxu0 %v1347
      %1688 = vmatmul.mubr.bf16.gmra.mrb[0].mxu0 %v1343
      %v1689 = vpop.f32.mrb[0].mxu0
      %v1690 = vadd.f32 %v1434, %v1689
      %v1691 = vpop.f32.mrb[0].mxu0
      %v1692 = vpop.f32.mrb[0].mxu0
      %v1693 = vadd.f32 %v1434, %v1692
      %v1694 = vpop.f32.mrb[0].mxu0
      %1695 = vdwg.mxu0
      %1696 = vmatprep.subr.bf16.mxu0 0
      %1697 = vmatpush1.bf16.msra.mxu0 %v1596
      %1698 = vmatprep.subr.bf16.mxu0 0
      %1699 = vmatpush1.bf16.msra.mxu0 %v1597
      %1700 = vmatprep.subr.bf16.mxu0 0
      %1701 = vmatpush1.bf16.msra.mxu0 %v1598
      %1702 = vmatprep.subr.bf16.mxu0 0
      %1703 = vmatpush1.bf16.msra.mxu0 %v1599
      %1704 = vmatprep.subr.bf16.mxu0 0
      %1705 = vmatpush1.bf16.msra.mxu0 %v1600
      %1706 = vmatprep.subr.bf16.mxu0 0
      %1707 = vmatpush1.bf16.msra.mxu0 %v1601
      %1708 = vmatprep.subr.bf16.mxu0 0
      %1709 = vmatpush1.bf16.msra.mxu0 %v1602
      %1710 = vmatprep.subr.bf16.mxu0 0
      %1711 = vmatpush1.bf16.msra.mxu0 %v1603
      %1712 = vmatprep.subr.bf16.mxu0 0
      %1713 = vmatpush1.bf16.msra.mxu0 %v1604
      %1714 = vmatprep.subr.bf16.mxu0 0
      %1715 = vmatpush1.bf16.msra.mxu0 %v1605
      %1716 = vmatprep.subr.bf16.mxu0 0
      %1717 = vmatpush1.bf16.msra.mxu0 %v1606
      %1718 = vmatprep.subr.bf16.mxu0 0
      %1719 = vmatpush1.bf16.msra.mxu0 %v1607
      %1720 = vmatprep.subr.bf16.mxu0 0
      %1721 = vmatpush1.bf16.msra.mxu0 %v1608
      %1722 = vmatprep.subr.bf16.mxu0 0
      %1723 = vmatpush1.bf16.msra.mxu0 %v1609
      %1724 = vmatprep.subr.bf16.mxu0 0
      %1725 = vmatpush1.bf16.msra.mxu0 %v1610
      %1726 = vmatprep.subr.bf16.mxu0 0
      %1727 = vmatpush1.bf16.msra.mxu0 %v1611
      %1728 = vmatprep.mubr.bf16.mxu0 %v1355
      %1729 = vmatmul.mubr.bf16.gmra.mrb[0].mxu0 %v1351
      %v1730 = vpop.f32.mrb[0].mxu0
      %v1731 = vadd.f32 %v1690, %v1730
      %v1732 = vpop.f32.mrb[0].mxu0
      %v1733 = vpop.f32.mrb[0].mxu0
      %v1734 = vadd.f32 %v1693, %v1733
      %v1735 = vpop.f32.mrb[0].mxu0
      %1736 = vdwg.mxu0
      %1737 = vmatprep.subr.bf16.mxu0 0
      %1738 = vmatpush1.bf16.msra.mxu0 %v1612
      %1739 = vmatprep.subr.bf16.mxu0 0
      %1740 = vmatpush1.bf16.msra.mxu0 %v1613
      %1741 = vmatprep.subr.bf16.mxu0 0
      %1742 = vmatpush1.bf16.msra.mxu0 %v1614
      %1743 = vmatprep.subr.bf16.mxu0 0
      %1744 = vmatpush1.bf16.msra.mxu0 %v1615
      %1745 = vmatprep.subr.bf16.mxu0 0
      %1746 = vmatpush1.bf16.msra.mxu0 0
      %1747 = vmatprep.subr.bf16.mxu0 0
      %1748 = vmatpush1.bf16.msra.mxu0 0
      %1749 = vmatprep.subr.bf16.mxu0 0
      %1750 = vmatpush1.bf16.msra.mxu0 0
      %1751 = vmatprep.subr.bf16.mxu0 0
      %1752 = vmatpush1.bf16.msra.mxu0 0
      %1753 = vmatprep.subr.bf16.mxu0 0
      %1754 = vmatpush1.bf16.msra.mxu0 0
      %1755 = vmatprep.subr.bf16.mxu0 0
      %1756 = vmatpush1.bf16.msra.mxu0 0
      %1757 = vmatprep.subr.bf16.mxu0 0
      %1758 = vmatpush1.bf16.msra.mxu0 0
      %1759 = vmatprep.subr.bf16.mxu0 0
      %1760 = vmatpush1.bf16.msra.mxu0 0
      %1761 = vmatprep.subr.bf16.mxu0 0
      %1762 = vmatpush1.bf16.msra.mxu0 0
      %1763 = vmatprep.subr.bf16.mxu0 0
      %1764 = vmatpush1.bf16.msra.mxu0 0
      %1765 = vmatprep.subr.bf16.mxu0 0
      %1766 = vmatpush1.bf16.msra.mxu0 0
      %1767 = vmatprep.subr.bf16.mxu0 0
      %1768 = vmatpush1.bf16.msra.mxu0 0
      %1769 = vmatprep.mubr.bf16.mxu0 0
      %1770 = vmatmul.mubr.bf16.gmra.mrb[0].mxu0 %v1653
      %v1771 = vpop.f32.mrb[0].mxu0
      %v1772 = vadd.f32 %v1731, %v1771
      %v1773 = vpop.f32.mrb[0].mxu0
      %v1774 = vpop.f32.mrb[0].mxu0
      %v1775 = vadd.f32 %v1734, %v1774
      %v1776 = vpop.f32.mrb[0].mxu0
      %1777 = vdwg.mxu0
      %v1778 = vmax.f32 %v1772, 0.0
      %v1779 = vmax.f32 %v1775, 0.0
      %v1780 = vpack.c.bf16 %v1779, %v1778
      %v1781 = vld [vmem:[%s7] sm:$0xff]
      %v1782 = vld [vmem:[%s7 + $0x8] sm:$0xff]
      %v1783 = vld [vmem:[%s7 + $0x10] sm:$0xff]
      %v1784 = vld [vmem:[%s7 + $0x18] sm:$0xff]
      %v1785 = vld [vmem:[%s7 + $0x20] sm:$0xff]
      %v1786 = vld [vmem:[%s7 + $0x28] sm:$0xff]
      %v1787 = vld [vmem:[%s7 + $0x30] sm:$0xff]
      %v1788 = vld [vmem:[%s7 + $0x38] sm:$0xff]
      %v1789 = vld [vmem:[%s8] sm:$0x3]
      %v1791 = vlaneseq
      %v1792 = vshrl.u32 %v1791, 7
      %v1793 = vsub.s32 0, %v1792
      %v1794 = vrot.slane %v1789, %v1793
      %v1795 = vlaneseq
      %v1796 = vshrl.u32 %v1795, 7
      %v1797 = vsub.s32 1, %v1796
      %v1798 = vrot.slane %v1789, %v1797
      %v1809 = vunpack.c.l.b16 %v1781
      %v1810 = vunpack.c.h.b16 %v1781
      %v1811 = vunpack.c.l.b16 %v1782
      %v1812 = vunpack.c.h.b16 %v1782
      %v1813 = vunpack.c.l.b16 %v1783
      %v1814 = vunpack.c.h.b16 %v1783
      %v1815 = vunpack.c.l.b16 %v1784
      %v1816 = vunpack.c.h.b16 %v1784
      %v1817 = vunpack.c.l.b16 %v1785
      %v1818 = vunpack.c.h.b16 %v1785
      %v1819 = vunpack.c.l.b16 %v1786
      %v1820 = vunpack.c.h.b16 %v1786
      %v1821 = vunpack.c.l.b16 %v1787
      %v1822 = vunpack.c.h.b16 %v1787
      %v1823 = vunpack.c.l.b16 %v1788
      %v1824 = vunpack.c.h.b16 %v1788
      %v1825 = vpack.c.b16 %v1811, %v1809
      %v1826 = vpack.c.b16 %v1812, %v1810
      %v1827 = vpack.c.b16 %v1815, %v1813
      %v1828 = vpack.c.b16 %v1816, %v1814
      %v1829 = vpack.c.b16 %v1819, %v1817
      %v1830 = vpack.c.b16 %v1820, %v1818
      %v1831 = vpack.c.b16 %v1823, %v1821
      %v1832 = vpack.c.b16 %v1824, %v1822
      %v1842 = vsel %vm1340, %v1780, 0
      %1844 = vmatprep.subr.bf16.mxu0 %v1826
      %1845 = vmatpush1.bf16.msra.mxu0 %v1825
      %1846 = vmatprep.subr.bf16.mxu0 %v1828
      %1847 = vmatpush1.bf16.msra.mxu0 %v1827
      %1848 = vmatprep.subr.bf16.mxu0 %v1830
      %1849 = vmatpush1.bf16.msra.mxu0 %v1829
      %1850 = vmatprep.subr.bf16.mxu0 %v1832
      %1851 = vmatpush1.bf16.msra.mxu0 %v1831
      %1852 = vmatprep.subr.bf16.mxu0 0
      %1853 = vmatpush1.bf16.msra.mxu0 0
      %1854 = vmatprep.subr.bf16.mxu0 0
      %1855 = vmatpush1.bf16.msra.mxu0 0
      %1856 = vmatprep.subr.bf16.mxu0 0
      %1857 = vmatpush1.bf16.msra.mxu0 0
      %1858 = vmatprep.subr.bf16.mxu0 0
      %1859 = vmatpush1.bf16.msra.mxu0 0
      %1860 = vmatprep.subr.bf16.mxu0 0
      %1861 = vmatpush1.bf16.msra.mxu0 0
      %1862 = vmatprep.subr.bf16.mxu0 0
      %1863 = vmatpush1.bf16.msra.mxu0 0
      %1864 = vmatprep.subr.bf16.mxu0 0
      %1865 = vmatpush1.bf16.msra.mxu0 0
      %1866 = vmatprep.subr.bf16.mxu0 0
      %1867 = vmatpush1.bf16.msra.mxu0 0
      %1868 = vmatprep.subr.bf16.mxu0 0
      %1869 = vmatpush1.bf16.msra.mxu0 0
      %1870 = vmatprep.subr.bf16.mxu0 0
      %1871 = vmatpush1.bf16.msra.mxu0 0
      %1872 = vmatprep.subr.bf16.mxu0 0
      %1873 = vmatpush1.bf16.msra.mxu0 0
      %1874 = vmatprep.subr.bf16.mxu0 0
      %1875 = vmatpush1.bf16.msra.mxu0 0
      %1876 = vmatprep.mubr.bf16.mxu0 0
      %1877 = vmatmul.mubr.bf16.gmra.mrb[0].mxu0 %v1842
      %v1878 = vpop.f32.mrb[0].mxu0
      %v1879 = vadd.f32 %v1794, %v1878
      %v1880 = vpop.f32.mrb[0].mxu0
      %v1881 = vadd.f32 %v1798, %v1880
      %v1882 = vpop.f32.mrb[0].mxu0
      %v1883 = vadd.f32 %v1794, %v1882
      %v1884 = vpop.f32.mrb[0].mxu0
      %v1885 = vadd.f32 %v1798, %v1884
      %1886 = vdwg.mxu0
      %v1887 = vmax.f32 %v1879, 0.0
      %v1888 = vmax.f32 %v1881, 0.0
      %v1889 = vmax.f32 %v1883, 0.0
      %v1890 = vmax.f32 %v1885, 0.0
      %v1891 = vadd.f32 %v1887, %v599
      %v1892 = vadd.f32 %v1888, %v601
      %v1893 = vadd.f32 %v1889, %v603
      %v1894 = vadd.f32 %v1890, %v605
      %v1895 = vmax.f32 %v1891, 0.0
      %v1896 = vmax.f32 %v1892, 0.0
      %v1897 = vmax.f32 %v1893, 0.0
      %v1898 = vmax.f32 %v1894, 0.0
      %v1899 = vpack.c.bf16 %v1897, %v1895
      %v1900 = vpack.c.bf16 %v1898, %v1896
      %v1903 = vunpack.c.l.b16 %v1899
      %v1904 = vunpack.c.l.b16 %v1900
      %v1905 = vunpack.c.h.b16 %v1899
      %v1906 = vunpack.c.h.b16 %v1900
      %v1907 = vpack.c.b16 %v1904, %v1903
      %v1908 = vpack.c.b16 %v1906, %v1905
      %1911 = vst [vmem:[%s332] sm:$0xff] %v1907
      %1912 = vst [vmem:[%s332 + $0x8] sm:$0xff] %v1908
      %p1913 = scmp.lt.s32.totalorder %s20, 1
      %s1914 = scalar_select %p1913, %s20, 1
      %s1915 = smul.addr %s1914, 4
      %s1916 = smul.addr %s1915, 4
      %s1917 = scalar_lea.vmem %s9, %s1916
      // Predicated region
      $region57: #{skipnet_forward.9} parent=55 // pred_check
        %p1918 = pneg %p232
      $region58: #{skipnet_forward.9} parent=55 // pred_check_branch
        %1920 = sbr.rel (%p1918) target = $region60
      $region59: #{skipnet_forward.9} parent=55 // pred_region
        _
      $region60: #{skipnet_forward.9} parent=55 // pred_fallthru
        _
    $region56: #{skipnet_forward.9} parent=5 // pred_fallthru
      _
    %p1921 = scmp.le.s32.totalorder 2, %s15
    // Predicated region
    $region61: #{skipnet_forward.9} parent=5 // pred_check
      %p1922 = pneg %p1921
    $region62: #{skipnet_forward.9} parent=5 // pred_check_branch
      %1924 = sbr.rel (%p1922) target = $region64
    $region63: #{skipnet_forward.9} parent=5 // pred_region
      %s1925 = ssub.s32 %s15, 2
      // Predicated region
      $region65: #{skipnet_forward.9} parent=63 // pred_check
        %p1926 = pneg %p238
      $region66: #{skipnet_forward.9} parent=63 // pred_check_branch
        %1928 = sbr.rel (%p1926) target = $region68
      $region67: #{skipnet_forward.9} parent=63 // pred_region
        %p1929 = scmp.lt.s32.totalorder %s21, 1
        %s1930 = scalar_select %p1929, %s21, 1
        %s1931 = smul.addr %s1930, 4
        %s1932 = smul.addr %s1931, 4
        %s1933 = scalar_lea.vmem %s9, %s1932
      $region68: #{skipnet_forward.9} parent=63 // pred_fallthru
        _
    $region64: #{skipnet_forward.9} parent=5 // pred_fallthru
      _
  $region6: #{skipnet_forward.9} parent=0 // loop_footer
    %s19 = sadd.s32 1, %s15
  $region7: #{skipnet_forward.9} parent=0 // loop_footer_branch
    %14 = sbr.rel target = $region3
  $region8: #{skipnet_forward.9} parent=0 // loop_exit
    _

// kernel: skipnet_forward.11
$region0: #{skipnet_forward.11}
  #allocation0 [shape = 'u32[]', space=smem, size = 0x4, offset = 0x4, fixed_abs, tag = 'smem constant byte address 0x4 - core index']
  #allocation1 [shape = 'u32[144,128]{1,0:T(1,128)}', space=vmem, size = 0x12000, scoped, tag = 'internal scratch']
  %s0 = inlined_call_operand.vmem [shape: bf16[2,4,512], index: 0, kind: input, shape index: {}]
  %s1 = inlined_call_operand.vmem [shape: bf16[512,128], index: 1, kind: input, shape index: {}]
  %s2 = inlined_call_operand.vmem [shape: f32[1,128], index: 2, kind: input, shape index: {}]
  %s3 = inlined_call_operand.hbm [shape: f32[2,128], index: 3, kind: output, shape index: {}]
  %s4 = sld [smem:[#allocation0]]
  $region22: #{skipnet_forward.11} parent=0
    _
  %s6 = ssub.s32 1, %s4
  %s7 = scalar_select 0, %s6, %s4
  $region1: #{skipnet_forward.11} parent=0
    #allocation2 [shape = 'u8[1024]{0}', space=vmem, size = 0x400, scoped, tag = 'output window, operand 0, single buffered']
    #allocation3 [shape = 's32[1]{0}', space=sflag, size = 0x4, scoped, tag = 'scoped memory for skipnet_forward.11']
    %8 = vsyncpa [#allocation3], 0
    // Predicated region
    $region2: #{skipnet_forward.11} parent=1 // pred_check
      _
    $region3: #{skipnet_forward.11} parent=1 // pred_check_branch
      %10 = sbr.rel (0) target = $region5
    $region4: #{skipnet_forward.11} parent=1 // pred_region
      _
    $region5: #{skipnet_forward.11} parent=1 // pred_fallthru
      _
    // Predicated region
    $region6: #{skipnet_forward.11} parent=1 // pred_check
      _
    $region7: #{skipnet_forward.11} parent=1 // pred_check_branch
      %12 = sbr.rel (0) target = $region9
    $region8: #{skipnet_forward.11} parent=1 // pred_region
      _
    $region9: #{skipnet_forward.11} parent=1 // pred_fallthru
      _
    // Predicated region
    $region10: #{skipnet_forward.11} parent=1 // pred_check
      _
    $region11: #{skipnet_forward.11} parent=1 // pred_check_branch
      %14 = sbr.rel (0) target = $region13
    $region12: #{skipnet_forward.11} parent=1 // pred_region
      _
    $region13: #{skipnet_forward.11} parent=1 // pred_fallthru
      _
    %v16 = vld [vmem:[%s0] sm:$0xff]
    %v17 = vld [vmem:[%s0 + $0x8] sm:$0xff]
    %v18 = vunpack.c.l.bf16 %v16
    %v19 = vunpack.c.h.bf16 %v16
    %v20 = vunpack.c.l.bf16 %v17
    %v21 = vunpack.c.h.bf16 %v17
    %v26 = vcombine.high %v18, %v18
    %v27 = vcombine.high %v19, %v19
    %v28 = vcombine.high %v20, %v20
    %v29 = vcombine.high %v21, %v21
    %vm34 = vcmask 1043456
    %v35 = vsel %vm34, %v18, 0.0
    %v36 = vrot.slane %v35, 4
    %v37 = vadd.f32 %v35, %v36
    %v38 = vrot.slane %v37, 2
    %v39 = vadd.f32 %v37, %v38
    %v40 = vrot.slane %v39, 1
    %v41 = vadd.f32 %v39, %v40
    %v42 = vsel %vm34, %v26, 0.0
    %v43 = vrot.slane %v42, 4
    %v44 = vadd.f32 %v42, %v43
    %v45 = vrot.slane %v44, 2
    %v46 = vadd.f32 %v44, %v45
    %v47 = vrot.slane %v46, 1
    %v48 = vadd.f32 %v46, %v47
    %v49 = vsel %vm34, %v19, 0.0
    %v50 = vrot.slane %v49, 4
    %v51 = vadd.f32 %v49, %v50
    %v52 = vrot.slane %v51, 2
    %v53 = vadd.f32 %v51, %v52
    %v54 = vrot.slane %v53, 1
    %v55 = vadd.f32 %v53, %v54
    %v56 = vsel %vm34, %v27, 0.0
    %v57 = vrot.slane %v56, 4
    %v58 = vadd.f32 %v56, %v57
    %v59 = vrot.slane %v58, 2
    %v60 = vadd.f32 %v58, %v59
    %v61 = vrot.slane %v60, 1
    %v62 = vadd.f32 %v60, %v61
    %v63 = vsel %vm34, %v20, 0.0
    %v64 = vrot.slane %v63, 4
    %v65 = vadd.f32 %v63, %v64
    %v66 = vrot.slane %v65, 2
    %v67 = vadd.f32 %v65, %v66
    %v68 = vrot.slane %v67, 1
    %v69 = vadd.f32 %v67, %v68
    %v70 = vsel %vm34, %v28, 0.0
    %v71 = vrot.slane %v70, 4
    %v72 = vadd.f32 %v70, %v71
    %v73 = vrot.slane %v72, 2
    %v74 = vadd.f32 %v72, %v73
    %v75 = vrot.slane %v74, 1
    %v76 = vadd.f32 %v74, %v75
    %v77 = vsel %vm34, %v21, 0.0
    %v78 = vrot.slane %v77, 4
    %v79 = vadd.f32 %v77, %v78
    %v80 = vrot.slane %v79, 2
    %v81 = vadd.f32 %v79, %v80
    %v82 = vrot.slane %v81, 1
    %v83 = vadd.f32 %v81, %v82
    %v84 = vsel %vm34, %v29, 0.0
    %v85 = vrot.slane %v84, 4
    %v86 = vadd.f32 %v84, %v85
    %v87 = vrot.slane %v86, 2
    %v88 = vadd.f32 %v86, %v87
    %v89 = vrot.slane %v88, 1
    %v90 = vadd.f32 %v88, %v89
    %v91 = vrcp.pop 4.0
    %v92 = vmul.f32 %v41, %v91
    %v93 = vmul.f32 %v48, %v91
    %v94 = vmul.f32 %v55, %v91
    %v95 = vmul.f32 %v62, %v91
    %v96 = vmul.f32 %v69, %v91
    %v97 = vmul.f32 %v76, %v91
    %v98 = vmul.f32 %v83, %v91
    %v99 = vmul.f32 %v90, %v91
    %v100 = vpack.c.bf16 %v92, %v92
    %v101 = vpack.c.bf16 %v93, %v93
    %v102 = vpack.c.bf16 %v94, %v94
    %v103 = vpack.c.bf16 %v95, %v95
    %v104 = vpack.c.bf16 %v96, %v96
    %v105 = vpack.c.bf16 %v97, %v97
    %v106 = vpack.c.bf16 %v98, %v98
    %v107 = vpack.c.bf16 %v99, %v99
    %v108 = vld [vmem:[%s1] sm:$0xf]
    %v109 = vld [vmem:[%s1 + $0x4] sm:$0xf]
    %v110 = vld [vmem:[%s1 + $0x8] sm:$0xf]
    %v111 = vld [vmem:[%s1 + $0xc] sm:$0xf]
    %v112 = vld [vmem:[%s1 + $0x10] sm:$0xf]
    %v113 = vld [vmem:[%s1 + $0x14] sm:$0xf]
    %v114 = vld [vmem:[%s1 + $0x18] sm:$0xf]
    %v115 = vld [vmem:[%s1 + $0x1c] sm:$0xf]
    %v116 = vld [vmem:[%s1 + $0x20] sm:$0xf]
    %v117 = vld [vmem:[%s1 + $0x24] sm:$0xf]
    %v118 = vld [vmem:[%s1 + $0x28] sm:$0xf]
    %v119 = vld [vmem:[%s1 + $0x2c] sm:$0xf]
    %v120 = vld [vmem:[%s1 + $0x30] sm:$0xf]
    %v121 = vld [vmem:[%s1 + $0x34] sm:$0xf]
    %v122 = vld [vmem:[%s1 + $0x38] sm:$0xf]
    %v123 = vld [vmem:[%s1 + $0x3c] sm:$0xf]
    %v124 = vld [vmem:[%s1 + $0x40] sm:$0xf]
    %v125 = vld [vmem:[%s1 + $0x44] sm:$0xf]
    %v126 = vld [vmem:[%s1 + $0x48] sm:$0xf]
    %v127 = vld [vmem:[%s1 + $0x4c] sm:$0xf]
    %v128 = vld [vmem:[%s1 + $0x50] sm:$0xf]
    %v129 = vld [vmem:[%s1 + $0x54] sm:$0xf]
    %v130 = vld [vmem:[%s1 + $0x58] sm:$0xf]
    %v131 = vld [vmem:[%s1 + $0x5c] sm:$0xf]
    %v132 = vld [vmem:[%s1 + $0x60] sm:$0xf]
    %v133 = vld [vmem:[%s1 + $0x64] sm:$0xf]
    %v134 = vld [vmem:[%s1 + $0x68] sm:$0xf]
    %v135 = vld [vmem:[%s1 + $0x6c] sm:$0xf]
    %v136 = vld [vmem:[%s1 + $0x70] sm:$0xf]
    %v137 = vld [vmem:[%s1 + $0x74] sm:$0xf]
    %v138 = vld [vmem:[%s1 + $0x78] sm:$0xf]
    %v139 = vld [vmem:[%s1 + $0x7c] sm:$0xf]
    %v140 = vld [vmem:[%s1 + $0x80] sm:$0xf]
    %v141 = vld [vmem:[%s1 + $0x84] sm:$0xf]
    %v142 = vld [vmem:[%s1 + $0x88] sm:$0xf]
    %v143 = vld [vmem:[%s1 + $0x8c] sm:$0xf]
    %v144 = vld [vmem:[%s1 + $0x90] sm:$0xf]
    %v145 = vld [vmem:[%s1 + $0x94] sm:$0xf]
    %v146 = vld [vmem:[%s1 + $0x98] sm:$0xf]
    %v147 = vld [vmem:[%s1 + $0x9c] sm:$0xf]
    %v148 = vld [vmem:[%s1 + $0xa0] sm:$0xf]
    %v149 = vld [vmem:[%s1 + $0xa4] sm:$0xf]
    %v150 = vld [vmem:[%s1 + $0xa8] sm:$0xf]
    %v151 = vld [vmem:[%s1 + $0xac] sm:$0xf]
    %v152 = vld [vmem:[%s1 + $0xb0] sm:$0xf]
    %v153 = vld [vmem:[%s1 + $0xb4] sm:$0xf]
    %v154 = vld [vmem:[%s1 + $0xb8] sm:$0xf]
    %v155 = vld [vmem:[%s1 + $0xbc] sm:$0xf]
    %v156 = vld [vmem:[%s1 + $0xc0] sm:$0xf]
    %v157 = vld [vmem:[%s1 + $0xc4] sm:$0xf]
    %v158 = vld [vmem:[%s1 + $0xc8] sm:$0xf]
    %v159 = vld [vmem:[%s1 + $0xcc] sm:$0xf]
    %v160 = vld [vmem:[%s1 + $0xd0] sm:$0xf]
    %v161 = vld [vmem:[%s1 + $0xd4] sm:$0xf]
    %v162 = vld [vmem:[%s1 + $0xd8] sm:$0xf]
    %v163 = vld [vmem:[%s1 + $0xdc] sm:$0xf]
    %v164 = vld [vmem:[%s1 + $0xe0] sm:$0xf]
    %v165 = vld [vmem:[%s1 + $0xe4] sm:$0xf]
    %v166 = vld [vmem:[%s1 + $0xe8] sm:$0xf]
    %v167 = vld [vmem:[%s1 + $0xec] sm:$0xf]
    %v168 = vld [vmem:[%s1 + $0xf0] sm:$0xf]
    %v169 = vld [vmem:[%s1 + $0xf4] sm:$0xf]
    %v170 = vld [vmem:[%s1 + $0xf8] sm:$0xf]
    %v171 = vld [vmem:[%s1 + $0xfc] sm:$0xf]
    %v172 = vld [vmem:[%s2] sm:$0x1]
    %v174 = vlaneseq
    %v175 = vshrl.u32 %v174, 7
    %v176 = vsub.s32 0, %v175
    %v177 = vrot.slane %v172, %v176
    %v187 = vunpack.c.l.b16 %v100
    %v188 = vunpack.c.l.b16 %v101
    %v189 = vunpack.c.l.b16 %v102
    %v190 = vunpack.c.l.b16 %v103
    %v191 = vunpack.c.l.b16 %v104
    %v192 = vunpack.c.l.b16 %v105
    %v193 = vunpack.c.l.b16 %v106
    %v194 = vunpack.c.l.b16 %v107
    %vm195 = vcmask 1041409
    %v196 = vsel %vm195, %v191, %v187
    %v197 = vsel %vm195, %v192, %v188
    %v198 = vsel %vm195, %v193, %v189
    %v199 = vsel %vm195, %v194, %v190
    %v200 = vpack.c.b16 %v196, %v196
    %v201 = vpack.c.b16 %v197, %v197
    %v202 = vpack.c.b16 %v198, %v198
    %v203 = vpack.c.b16 %v199, %v199
    %v272 = vunpack.c.l.b16 %v108
    %v273 = vunpack.c.l.b16 %v109
    %v274 = vunpack.c.l.b16 %v110
    %v275 = vunpack.c.l.b16 %v111
    %v276 = vunpack.c.l.b16 %v112
    %v277 = vunpack.c.l.b16 %v113
    %v278 = vunpack.c.l.b16 %v114
    %v279 = vunpack.c.l.b16 %v115
    %v280 = vunpack.c.l.b16 %v116
    %v281 = vunpack.c.l.b16 %v117
    %v282 = vunpack.c.l.b16 %v118
    %v283 = vunpack.c.l.b16 %v119
    %v284 = vunpack.c.l.b16 %v120
    %v285 = vunpack.c.l.b16 %v121
    %v286 = vunpack.c.l.b16 %v122
    %v287 = vunpack.c.l.b16 %v123
    %v288 = vunpack.c.l.b16 %v124
    %v289 = vunpack.c.l.b16 %v125
    %v290 = vunpack.c.l.b16 %v126
    %v291 = vunpack.c.l.b16 %v127
    %v292 = vunpack.c.l.b16 %v128
    %v293 = vunpack.c.l.b16 %v129
    %v294 = vunpack.c.l.b16 %v130
    %v295 = vunpack.c.l.b16 %v131
    %v296 = vunpack.c.l.b16 %v132
    %v297 = vunpack.c.l.b16 %v133
    %v298 = vunpack.c.l.b16 %v134
    %v299 = vunpack.c.l.b16 %v135
    %v300 = vunpack.c.l.b16 %v136
    %v301 = vunpack.c.l.b16 %v137
    %v302 = vunpack.c.l.b16 %v138
    %v303 = vunpack.c.l.b16 %v139
    %v304 = vunpack.c.l.b16 %v140
    %v305 = vunpack.c.l.b16 %v141
    %v306 = vunpack.c.l.b16 %v142
    %v307 = vunpack.c.l.b16 %v143
    %v308 = vunpack.c.l.b16 %v144
    %v309 = vunpack.c.l.b16 %v145
    %v310 = vunpack.c.l.b16 %v146
    %v311 = vunpack.c.l.b16 %v147
    %v312 = vunpack.c.l.b16 %v148
    %v313 = vunpack.c.l.b16 %v149
    %v314 = vunpack.c.l.b16 %v150
    %v315 = vunpack.c.l.b16 %v151
    %v316 = vunpack.c.l.b16 %v152
    %v317 = vunpack.c.l.b16 %v153
    %v318 = vunpack.c.l.b16 %v154
    %v319 = vunpack.c.l.b16 %v155
    %v320 = vunpack.c.l.b16 %v156
    %v321 = vunpack.c.l.b16 %v157
    %v322 = vunpack.c.l.b16 %v158
    %v323 = vunpack.c.l.b16 %v159
    %v324 = vunpack.c.l.b16 %v160
    %v325 = vunpack.c.l.b16 %v161
    %v326 = vunpack.c.l.b16 %v162
    %v327 = vunpack.c.l.b16 %v163
    %v328 = vunpack.c.l.b16 %v164
    %v329 = vunpack.c.l.b16 %v165
    %v330 = vunpack.c.l.b16 %v166
    %v331 = vunpack.c.l.b16 %v167
    %v332 = vunpack.c.l.b16 %v168
    %v333 = vunpack.c.l.b16 %v169
    %v334 = vunpack.c.l.b16 %v170
    %v335 = vunpack.c.l.b16 %v171
    %v336 = vpack.c.b16 %v273, %v272
    %v337 = vpack.c.b16 %v275, %v274
    %v338 = vpack.c.b16 %v277, %v276
    %v339 = vpack.c.b16 %v279, %v278
    %v340 = vpack.c.b16 %v281, %v280
    %v341 = vpack.c.b16 %v283, %v282
    %v342 = vpack.c.b16 %v285, %v284
    %v343 = vpack.c.b16 %v287, %v286
    %v344 = vpack.c.b16 %v289, %v288
    %v345 = vpack.c.b16 %v291, %v290
    %v346 = vpack.c.b16 %v293, %v292
    %v347 = vpack.c.b16 %v295, %v294
    %v348 = vpack.c.b16 %v297, %v296
    %v349 = vpack.c.b16 %v299, %v298
    %v350 = vpack.c.b16 %v301, %v300
    %v351 = vpack.c.b16 %v303, %v302
    %v352 = vpack.c.b16 %v305, %v304
    %v353 = vpack.c.b16 %v307, %v306
    %v354 = vpack.c.b16 %v309, %v308
    %v355 = vpack.c.b16 %v311, %v310
    %v356 = vpack.c.b16 %v313, %v312
    %v357 = vpack.c.b16 %v315, %v314
    %v358 = vpack.c.b16 %v317, %v316
    %v359 = vpack.c.b16 %v319, %v318
    %v360 = vpack.c.b16 %v321, %v320
    %v361 = vpack.c.b16 %v323, %v322
    %v362 = vpack.c.b16 %v325, %v324
    %v363 = vpack.c.b16 %v327, %v326
    %v364 = vpack.c.b16 %v329, %v328
    %v365 = vpack.c.b16 %v331, %v330
    %v366 = vpack.c.b16 %v333, %v332
    %v367 = vpack.c.b16 %v335, %v334
    %400 = vmatprep.subr.bf16.mxu0 0
    %401 = vmatpush1.bf16.msra.mxu0 %v336
    %402 = vmatprep.subr.bf16.mxu0 0
    %403 = vmatpush1.bf16.msra.mxu0 %v337
    %404 = vmatprep.subr.bf16.mxu0 0
    %405 = vmatpush1.bf16.msra.mxu0 %v338
    %406 = vmatprep.subr.bf16.mxu0 0
    %407 = vmatpush1.bf16.msra.mxu0 %v339
    %408 = vmatprep.subr.bf16.mxu0 0
    %409 = vmatpush1.bf16.msra.mxu0 %v340
    %410 = vmatprep.subr.bf16.mxu0 0
    %411 = vmatpush1.bf16.msra.mxu0 %v341
    %412 = vmatprep.subr.bf16.mxu0 0
    %413 = vmatpush1.bf16.msra.mxu0 %v342
    %414 = vmatprep.subr.bf16.mxu0 0
    %415 = vmatpush1.bf16.msra.mxu0 %v343
    %416 = vmatprep.subr.bf16.mxu0 0
    %417 = vmatpush1.bf16.msra.mxu0 %v344
    %418 = vmatprep.subr.bf16.mxu0 0
    %419 = vmatpush1.bf16.msra.mxu0 %v345
    %420 = vmatprep.subr.bf16.mxu0 0
    %421 = vmatpush1.bf16.msra.mxu0 %v346
    %422 = vmatprep.subr.bf16.mxu0 0
    %423 = vmatpush1.bf16.msra.mxu0 %v347
    %424 = vmatprep.subr.bf16.mxu0 0
    %425 = vmatpush1.bf16.msra.mxu0 %v348
    %426 = vmatprep.subr.bf16.mxu0 0
    %427 = vmatpush1.bf16.msra.mxu0 %v349
    %428 = vmatprep.subr.bf16.mxu0 0
    %429 = vmatpush1.bf16.msra.mxu0 %v350
    %430 = vmatprep.subr.bf16.mxu0 0
    %431 = vmatpush1.bf16.msra.mxu0 %v351
    %432 = vmatprep.mubr.bf16.mxu0 %v201
    %433 = vmatmul.mubr.bf16.gmra.mrb[0].mxu0 %v200
    %v434 = vpop.f32.mrb[0].mxu0
    %v435 = vadd.f32 %v177, %v434
    %v436 = vpop.f32.mrb[0].mxu0
    %v437 = vpop.f32.mrb[0].mxu0
    %v438 = vpop.f32.mrb[0].mxu0
    %439 = vdwg.mxu0
    %440 = vmatprep.subr.bf16.mxu0 0
    %441 = vmatpush1.bf16.msra.mxu0 %v352
    %442 = vmatprep.subr.bf16.mxu0 0
    %443 = vmatpush1.bf16.msra.mxu0 %v353
    %444 = vmatprep.subr.bf16.mxu0 0
    %445 = vmatpush1.bf16.msra.mxu0 %v354
    %446 = vmatprep.subr.bf16.mxu0 0
    %447 = vmatpush1.bf16.msra.mxu0 %v355
    %448 = vmatprep.subr.bf16.mxu0 0
    %449 = vmatpush1.bf16.msra.mxu0 %v356
    %450 = vmatprep.subr.bf16.mxu0 0
    %451 = vmatpush1.bf16.msra.mxu0 %v357
    %452 = vmatprep.subr.bf16.mxu0 0
    %453 = vmatpush1.bf16.msra.mxu0 %v358
    %454 = vmatprep.subr.bf16.mxu0 0
    %455 = vmatpush1.bf16.msra.mxu0 %v359
    %456 = vmatprep.subr.bf16.mxu0 0
    %457 = vmatpush1.bf16.msra.mxu0 %v360
    %458 = vmatprep.subr.bf16.mxu0 0
    %459 = vmatpush1.bf16.msra.mxu0 %v361
    %460 = vmatprep.subr.bf16.mxu0 0
    %461 = vmatpush1.bf16.msra.mxu0 %v362
    %462 = vmatprep.subr.bf16.mxu0 0
    %463 = vmatpush1.bf16.msra.mxu0 %v363
    %464 = vmatprep.subr.bf16.mxu0 0
    %465 = vmatpush1.bf16.msra.mxu0 %v364
    %466 = vmatprep.subr.bf16.mxu0 0
    %467 = vmatpush1.bf16.msra.mxu0 %v365
    %468 = vmatprep.subr.bf16.mxu0 0
    %469 = vmatpush1.bf16.msra.mxu0 %v366
    %470 = vmatprep.subr.bf16.mxu0 0
    %471 = vmatpush1.bf16.msra.mxu0 %v367
    %472 = vmatprep.mubr.bf16.mxu0 %v203
    %473 = vmatmul.mubr.bf16.gmra.mrb[0].mxu0 %v202
    %v474 = vpop.f32.mrb[0].mxu0
    %v475 = vadd.f32 %v435, %v474
    %v476 = vpop.f32.mrb[0].mxu0
    %v477 = vpop.f32.mrb[0].mxu0
    %v478 = vpop.f32.mrb[0].mxu0
    %479 = vdwg.mxu0
    %480 = vst [vmem:[#allocation2] sm:$0x3] %v475
    // Predicated region
    $region14: #{skipnet_forward.11} parent=1 // pred_check
      _
    $region15: #{skipnet_forward.11} parent=1 // pred_check_branch
      %482 = sbr.rel (0) target = $region17
    $region16: #{skipnet_forward.11} parent=1 // pred_region
      %s484 = ssub.s32 32, 32
      %485 = vsyncadd [#allocation3], %s484
      %s487 = sshll.u32 [#allocation2], 4
      %s488 = int_to_ptr.vmem [resolvable:$true] %s487
      %490 = dma.vmem_to_hbm [thread:$0]  %s488, 32, %s3, [#allocation3]
    $region17: #{skipnet_forward.11} parent=1 // pred_fallthru
      _
    // Predicated region
    $region18: #{skipnet_forward.11} parent=1 // pred_check
      _
    $region19: #{skipnet_forward.11} parent=1 // pred_check_branch
      %492 = sbr.rel (0) target = $region21
    $region20: #{skipnet_forward.11} parent=1 // pred_region
      %493 = dma.done [#allocation3], 32
    $region21: #{skipnet_forward.11} parent=1 // pred_fallthru
      _
    %494 = vsyncpa [#allocation3], 1

// kernel: skipnet_forward.10
$region0: #{skipnet_forward.10}
  #allocation0 [shape = 'u32[]', space=smem, size = 0x4, offset = 0x4, fixed_abs, tag = 'smem constant byte address 0x4 - core index']
  #allocation1 [shape = 'u32[144,128]{1,0:T(1,128)}', space=vmem, size = 0x12000, scoped, tag = 'internal scratch']
  #allocation2 [shape = 'bf16[6,6,64]{2,1,0:T(8,128)(2,1)}', space=vmem, size = 0x3000, scoped, tag = 'scratch operand']
  #allocation3 [shape = 'f32[6,6,512]{2,1,0:T(8,128)}', space=vmem, size = 0x18000, scoped, tag = 'scratch operand']
  %s0 = inlined_call_operand.vmem [shape: bf16[2,16,256], index: 0, kind: input, shape index: {}]
  %s1 = inlined_call_operand.vmem [shape: bf16[256,64], index: 1, kind: input, shape index: {}]
  %s2 = inlined_call_operand.vmem [shape: f32[1,64], index: 2, kind: input, shape index: {}]
  %s3 = inlined_call_operand.vmem [shape: bf16[256,512], index: 3, kind: input, shape index: {}]
  %s4 = inlined_call_operand.vmem [shape: f32[1,512], index: 4, kind: input, shape index: {}]
  %s5 = inlined_call_operand.vmem [shape: bf16[576,64], index: 5, kind: input, shape index: {}]
  %s6 = inlined_call_operand.vmem [shape: f32[1,64], index: 6, kind: input, shape index: {}]
  %s7 = inlined_call_operand.vmem [shape: bf16[64,512], index: 7, kind: input, shape index: {}]
  %s8 = inlined_call_operand.vmem [shape: f32[1,512], index: 8, kind: input, shape index: {}]
  %s9 = inlined_call_operand.vmem [shape: bf16[2,4,512], index: 9, kind: output, shape index: {}]
  %s10 = sld [smem:[#allocation0]]
  $region69: #{skipnet_forward.10} parent=0
    _
  %s12 = ssub.s32 1, %s10
  %s13 = scalar_select 0, %s12, %s10
  loop: start=0, step=1, limit=4
  $region2: #{skipnet_forward.10} parent=0 // loop_pre_header
    _
  $region3: #{skipnet_forward.10} parent=0 // loop_header
    %s15 = sphi 0, %s19
    %p16 = scmp.ge.s32.totalorder %s15, 4
    %s25 = sphi 0, %s27
    %s28 = sphi 0, %s25
    %s29 = sphi 0, %s28
    %s45 = sphi 0, %s29
    %s49 = sphi 0, %s49
    %s51 = sphi 0, %s49
    %s52 = sphi 0, %s51
    %s66 = sphi 0, %s52
    %s70 = sphi 0, %s70
    %s72 = sphi 0, %s70
    %s73 = sphi 0, %s72
    %s87 = sphi 0, %s73
    %s91 = sphi 0, %s91
    %s93 = sphi 0, %s91
    %s94 = sphi 0, %s93
    %s108 = sphi 0, %s94
    %s112 = sphi 0, %s112
    %s114 = sphi 0, %s112
    %s115 = sphi 0, %s114
    %s129 = sphi 0, %s115
    %s133 = sphi 0, %s133
    %s135 = sphi 0, %s133
    %s136 = sphi 0, %s135
    %s150 = sphi 0, %s136
    %s154 = sphi 0, %s154
    %s156 = sphi 0, %s154
    %s157 = sphi 0, %s156
    %s171 = sphi 0, %s157
    %s175 = sphi 0, %s175
    %s177 = sphi 0, %s175
    %s178 = sphi 0, %s177
    %s192 = sphi 0, %s178
    %s196 = sphi 0, %s196
    %s198 = sphi 0, %s196
    %s199 = sphi 0, %s198
    %s213 = sphi 0, %s199
    %s219 = sphi 0, %s221
    %s222 = sphi 0, %s219
    %s223 = sphi 0, %s222
    %s239 = sphi 0, %s223
  $region4: #{skipnet_forward.10} parent=0 // loop_header_branch
    %18 = sbr.rel (%p16) target = $region8
  $region5: #{skipnet_forward.10} parent=0 // loop_body
    %s20 = ssub.s32 %s15, 1
    %s21 = ssub.s32 %s15, 2
    %s22 = sadd.s32 %s15, 1
    %s23 = ssub.s32 %s15, %s22
    %p24 = scmp.eq.s32.totalorder %s23, 0
    %s26 = sadd.s32 %s25, 1
    %s27 = scalar_select %p24, %s25, %s26
    %p30 = pneg %p24
    %p31 = scmp.eq.s32.totalorder %s15, 1
    %p32 = por %p30, %p31
    %p33 = scmp.ne.s32.totalorder %s25, %s28
    %p34 = scmp.eq.s32.totalorder %s15, 0
    %p35 = por %p33, %p34
    %p36 = scmp.ne.s32.totalorder %s25, %s28
    %p37 = scmp.eq.s32.totalorder %s20, 1
    %p38 = por %p36, %p37
    %p39 = scmp.ne.s32.totalorder %s28, %s29
    %p40 = scmp.eq.s32.totalorder %s20, 0
    %p41 = por %p39, %p40
    %p42 = scmp.ne.s32.totalorder %s28, %s29
    %p43 = scmp.eq.s32.totalorder %s21, 1
    %p44 = por %p42, %p43
    %p46 = scmp.ne.s32.totalorder %s29, %s45
    %p47 = scmp.eq.s32.totalorder %s21, 0
    %p48 = por %p46, %p47
    %s50 = sadd.s32 %s49, 1
    %p53 = scmp.eq.s32.totalorder %s15, 1
    %p54 = scmp.ne.s32.totalorder %s49, %s51
    %p55 = scmp.eq.s32.totalorder %s15, 0
    %p56 = por %p54, %p55
    %p57 = scmp.ne.s32.totalorder %s49, %s51
    %p58 = scmp.eq.s32.totalorder %s20, 1
    %p59 = por %p57, %p58
    %p60 = scmp.ne.s32.totalorder %s51, %s52
    %p61 = scmp.eq.s32.totalorder %s20, 0
    %p62 = por %p60, %p61
    %p63 = scmp.ne.s32.totalorder %s51, %s52
    %p64 = scmp.eq.s32.totalorder %s21, 1
    %p65 = por %p63, %p64
    %p67 = scmp.ne.s32.totalorder %s52, %s66
    %p68 = scmp.eq.s32.totalorder %s21, 0
    %p69 = por %p67, %p68
    %s71 = sadd.s32 %s70, 1
    %p74 = scmp.eq.s32.totalorder %s15, 1
    %p75 = scmp.ne.s32.totalorder %s70, %s72
    %p76 = scmp.eq.s32.totalorder %s15, 0
    %p77 = por %p75, %p76
    %p78 = scmp.ne.s32.totalorder %s70, %s72
    %p79 = scmp.eq.s32.totalorder %s20, 1
    %p80 = por %p78, %p79
    %p81 = scmp.ne.s32.totalorder %s72, %s73
    %p82 = scmp.eq.s32.totalorder %s20, 0
    %p83 = por %p81, %p82
    %p84 = scmp.ne.s32.totalorder %s72, %s73
    %p85 = scmp.eq.s32.totalorder %s21, 1
    %p86 = por %p84, %p85
    %p88 = scmp.ne.s32.totalorder %s73, %s87
    %p89 = scmp.eq.s32.totalorder %s21, 0
    %p90 = por %p88, %p89
    %s92 = sadd.s32 %s91, 1
    %p95 = scmp.eq.s32.totalorder %s15, 1
    %p96 = scmp.ne.s32.totalorder %s91, %s93
    %p97 = scmp.eq.s32.totalorder %s15, 0
    %p98 = por %p96, %p97
    %p99 = scmp.ne.s32.totalorder %s91, %s93
    %p100 = scmp.eq.s32.totalorder %s20, 1
    %p101 = por %p99, %p100
    %p102 = scmp.ne.s32.totalorder %s93, %s94
    %p103 = scmp.eq.s32.totalorder %s20, 0
    %p104 = por %p102, %p103
    %p105 = scmp.ne.s32.totalorder %s93, %s94
    %p106 = scmp.eq.s32.totalorder %s21, 1
    %p107 = por %p105, %p106
    %p109 = scmp.ne.s32.totalorder %s94, %s108
    %p110 = scmp.eq.s32.totalorder %s21, 0
    %p111 = por %p109, %p110
    %s113 = sadd.s32 %s112, 1
    %p116 = scmp.eq.s32.totalorder %s15, 1
    %p117 = scmp.ne.s32.totalorder %s112, %s114
    %p118 = scmp.eq.s32.totalorder %s15, 0
    %p119 = por %p117, %p118
    %p120 = scmp.ne.s32.totalorder %s112, %s114
    %p121 = scmp.eq.s32.totalorder %s20, 1
    %p122 = por %p120, %p121
    %p123 = scmp.ne.s32.totalorder %s114, %s115
    %p124 = scmp.eq.s32.totalorder %s20, 0
    %p125 = por %p123, %p124
    %p126 = scmp.ne.s32.totalorder %s114, %s115
    %p127 = scmp.eq.s32.totalorder %s21, 1
    %p128 = por %p126, %p127
    %p130 = scmp.ne.s32.totalorder %s115, %s129
    %p131 = scmp.eq.s32.totalorder %s21, 0
    %p132 = por %p130, %p131
    %s134 = sadd.s32 %s133, 1
    %p137 = scmp.eq.s32.totalorder %s15, 1
    %p138 = scmp.ne.s32.totalorder %s133, %s135
    %p139 = scmp.eq.s32.totalorder %s15, 0
    %p140 = por %p138, %p139
    %p141 = scmp.ne.s32.totalorder %s133, %s135
    %p142 = scmp.eq.s32.totalorder %s20, 1
    %p143 = por %p141, %p142
    %p144 = scmp.ne.s32.totalorder %s135, %s136
    %p145 = scmp.eq.s32.totalorder %s20, 0
    %p146 = por %p144, %p145
    %p147 = scmp.ne.s32.totalorder %s135, %s136
    %p148 = scmp.eq.s32.totalorder %s21, 1
    %p149 = por %p147, %p148
    %p151 = scmp.ne.s32.totalorder %s136, %s150
    %p152 = scmp.eq.s32.totalorder %s21, 0
    %p153 = por %p151, %p152
    %s155 = sadd.s32 %s154, 1
    %p158 = scmp.eq.s32.totalorder %s15, 1
    %p159 = scmp.ne.s32.totalorder %s154, %s156
    %p160 = scmp.eq.s32.totalorder %s15, 0
    %p161 = por %p159, %p160
    %p162 = scmp.ne.s32.totalorder %s154, %s156
    %p163 = scmp.eq.s32.totalorder %s20, 1
    %p164 = por %p162, %p163
    %p165 = scmp.ne.s32.totalorder %s156, %s157
    %p166 = scmp.eq.s32.totalorder %s20, 0
    %p167 = por %p165, %p166
    %p168 = scmp.ne.s32.totalorder %s156, %s157
    %p169 = scmp.eq.s32.totalorder %s21, 1
    %p170 = por %p168, %p169
    %p172 = scmp.ne.s32.totalorder %s157, %s171
    %p173 = scmp.eq.s32.totalorder %s21, 0
    %p174 = por %p172, %p173
    %s176 = sadd.s32 %s175, 1
    %p179 = scmp.eq.s32.totalorder %s15, 1
    %p180 = scmp.ne.s32.totalorder %s175, %s177
    %p181 = scmp.eq.s32.totalorder %s15, 0
    %p182 = por %p180, %p181
    %p183 = scmp.ne.s32.totalorder %s175, %s177
    %p184 = scmp.eq.s32.totalorder %s20, 1
    %p185 = por %p183, %p184
    %p186 = scmp.ne.s32.totalorder %s177, %s178
    %p187 = scmp.eq.s32.totalorder %s20, 0
    %p188 = por %p186, %p187
    %p189 = scmp.ne.s32.totalorder %s177, %s178
    %p190 = scmp.eq.s32.totalorder %s21, 1
    %p191 = por %p189, %p190
    %p193 = scmp.ne.s32.totalorder %s178, %s192
    %p194 = scmp.eq.s32.totalorder %s21, 0
    %p195 = por %p193, %p194
    %s197 = sadd.s32 %s196, 1
    %p200 = scmp.eq.s32.totalorder %s15, 1
    %p201 = scmp.ne.s32.totalorder %s196, %s198
    %p202 = scmp.eq.s32.totalorder %s15, 0
    %p203 = por %p201, %p202
    %p204 = scmp.ne.s32.totalorder %s196, %s198
    %p205 = scmp.eq.s32.totalorder %s20, 1
    %p206 = por %p204, %p205
    %p207 = scmp.ne.s32.totalorder %s198, %s199
    %p208 = scmp.eq.s32.totalorder %s20, 0
    %p209 = por %p207, %p208
    %p210 = scmp.ne.s32.totalorder %s198, %s199
    %p211 = scmp.eq.s32.totalorder %s21, 1
    %p212 = por %p210, %p211
    %p214 = scmp.ne.s32.totalorder %s199, %s213
    %p215 = scmp.eq.s32.totalorder %s21, 0
    %p216 = por %p214, %p215
    %s217 = ssub.s32 %s15, %s22
    %p218 = scmp.eq.s32.totalorder %s217, 0
    %s220 = sadd.s32 %s219, 1
    %s221 = scalar_select %p218, %s219, %s220
    %p224 = pneg %p218
    %p225 = scmp.eq.s32.totalorder %s15, 1
    %p226 = por %p224, %p225
    %p227 = scmp.ne.s32.totalorder %s219, %s222
    %p228 = scmp.eq.s32.totalorder %s15, 0
    %p229 = por %p227, %p228
    %p230 = scmp.ne.s32.totalorder %s219, %s222
    %p231 = scmp.eq.s32.totalorder %s20, 1
    %p232 = por %p230, %p231
    %p233 = scmp.ne.s32.totalorder %s222, %s223
    %p234 = scmp.eq.s32.totalorder %s20, 0
    %p235 = por %p233, %p234
    %p236 = scmp.ne.s32.totalorder %s222, %s223
    %p237 = scmp.eq.s32.totalorder %s21, 1
    %p238 = por %p236, %p237
    %p240 = scmp.ne.s32.totalorder %s223, %s239
    %p241 = scmp.eq.s32.totalorder %s21, 0
    %p242 = por %p240, %p241
    %p243 = scmp.le.s32.totalorder 1, %s15
    %p244 = scmp.lt.s32.totalorder %s15, 3
    %p245 = pnand %p243, %p244
    %p246 = pneg %p245
    // Predicated region
    $region9: #{skipnet_forward.10} parent=5 // pred_check
      _
    $region10: #{skipnet_forward.10} parent=5 // pred_check_branch
      %248 = sbr.rel (%p245) target = $region12
    $region11: #{skipnet_forward.10} parent=5 // pred_region
      %s249 = ssub.s32 %s15, 1
      // Predicated region
      $region13: #{skipnet_forward.10} parent=11 // pred_check
        %p250 = pneg %p62
      $region14: #{skipnet_forward.10} parent=11 // pred_check_branch
        %252 = sbr.rel (%p250) target = $region16
      $region15: #{skipnet_forward.10} parent=11 // pred_region
        _
      $region16: #{skipnet_forward.10} parent=11 // pred_fallthru
        _
      // Predicated region
      $region17: #{skipnet_forward.10} parent=11 // pred_check
        %p253 = pneg %p83
      $region18: #{skipnet_forward.10} parent=11 // pred_check_branch
        %255 = sbr.rel (%p253) target = $region20
      $region19: #{skipnet_forward.10} parent=11 // pred_region
        _
      $region20: #{skipnet_forward.10} parent=11 // pred_fallthru
        _
      // Predicated region
      $region21: #{skipnet_forward.10} parent=11 // pred_check
        %p256 = pneg %p104
      $region22: #{skipnet_forward.10} parent=11 // pred_check_branch
        %258 = sbr.rel (%p256) target = $region24
      $region23: #{skipnet_forward.10} parent=11 // pred_region
        _
      $region24: #{skipnet_forward.10} parent=11 // pred_fallthru
        _
      // Predicated region
      $region25: #{skipnet_forward.10} parent=11 // pred_check
        %p259 = pneg %p125
      $region26: #{skipnet_forward.10} parent=11 // pred_check_branch
        %261 = sbr.rel (%p259) target = $region28
      $region27: #{skipnet_forward.10} parent=11 // pred_region
        _
      $region28: #{skipnet_forward.10} parent=11 // pred_fallthru
        _
      // Predicated region
      $region29: #{skipnet_forward.10} parent=11 // pred_check
        %p262 = pneg %p146
      $region30: #{skipnet_forward.10} parent=11 // pred_check_branch
        %264 = sbr.rel (%p262) target = $region32
      $region31: #{skipnet_forward.10} parent=11 // pred_region
        _
      $region32: #{skipnet_forward.10} parent=11 // pred_fallthru
        _
      // Predicated region
      $region33: #{skipnet_forward.10} parent=11 // pred_check
        %p265 = pneg %p167
      $region34: #{skipnet_forward.10} parent=11 // pred_check_branch
        %267 = sbr.rel (%p265) target = $region36
      $region35: #{skipnet_forward.10} parent=11 // pred_region
        _
      $region36: #{skipnet_forward.10} parent=11 // pred_fallthru
        _
      // Predicated region
      $region37: #{skipnet_forward.10} parent=11 // pred_check
        %p268 = pneg %p188
      $region38: #{skipnet_forward.10} parent=11 // pred_check_branch
        %270 = sbr.rel (%p268) target = $region40
      $region39: #{skipnet_forward.10} parent=11 // pred_region
        _
      $region40: #{skipnet_forward.10} parent=11 // pred_fallthru
        _
      // Predicated region
      $region41: #{skipnet_forward.10} parent=11 // pred_check
        %p271 = pneg %p209
      $region42: #{skipnet_forward.10} parent=11 // pred_check_branch
        %273 = sbr.rel (%p271) target = $region44
      $region43: #{skipnet_forward.10} parent=11 // pred_region
        _
      $region44: #{skipnet_forward.10} parent=11 // pred_fallthru
        _
    $region12: #{skipnet_forward.10} parent=5 // pred_fallthru
      _
    %p274 = scmp.lt.s32.totalorder %s15, 2
    // Predicated region
    $region45: #{skipnet_forward.10} parent=5 // pred_check
      %p275 = pneg %p274
    $region46: #{skipnet_forward.10} parent=5 // pred_check_branch
      %277 = sbr.rel (%p275) target = $region48
    $region47: #{skipnet_forward.10} parent=5 // pred_region
      // Predicated region
      $region49: #{skipnet_forward.10} parent=47 // pred_check
        %p278 = pneg %p35
      $region50: #{skipnet_forward.10} parent=47 // pred_check_branch
        %280 = sbr.rel (%p278) target = $region52
      $region51: #{skipnet_forward.10} parent=47 // pred_region
        %p281 = scmp.lt.s32.totalorder %s15, 1
        %s282 = scalar_select %p281, %s15, 1
        %s283 = smul.addr %s282, 4
        %s284 = smul.addr %s283, 4
        %s285 = scalar_lea.vmem %s0, %s284
      $region52: #{skipnet_forward.10} parent=47 // pred_fallthru
        _
    $region48: #{skipnet_forward.10} parent=5 // pred_fallthru
      _
    %p286 = scmp.le.s32.totalorder 1, %s15
    %p287 = scmp.lt.s32.totalorder %s15, 3
    %p288 = pnand %p286, %p287
    %p289 = pneg %p288
    // Predicated region
    $region53: #{skipnet_forward.10} parent=5 // pred_check
      _
    $region54: #{skipnet_forward.10} parent=5 // pred_check_branch
      %291 = sbr.rel (%p288) target = $region56
    $region55: #{skipnet_forward.10} parent=5 // pred_region
      %s292 = ssub.s32 %s15, 1
      %p293 = scmp.lt.s32.totalorder %s20, 1
      %s294 = scalar_select %p293, %s20, 1
      %s295 = smul.addr %s294, 4
      %s296 = smul.addr %s295, 4
      %s297 = scalar_lea.vmem %s0, %s296
      %p298 = pneg %p41
      %p299 = pneg %p38
      %p300 = pneg %p62
      %p301 = pneg %p59
      %p302 = pneg %p83
      %p303 = pneg %p80
      %p304 = pneg %p104
      %p305 = pneg %p101
      %p306 = pneg %p125
      %p307 = pneg %p122
      %p308 = pneg %p146
      %p309 = pneg %p143
      %p310 = pneg %p167
      %p311 = pneg %p164
      %p312 = pneg %p188
      %p313 = pneg %p185
      %p314 = pneg %p209
      %p315 = pneg %p206
      %p316 = pneg %p235
      %p317 = pneg %p232
      %p318 = scmp.lt.s32.totalorder %s20, 1
      %s319 = scalar_select %p318, %s20, 1
      %s320 = smul.addr %s319, 4
      %s321 = smul.addr %s320, 2
      %s322 = scalar_lea.vmem %s9, %s321
      %p323 = scmp.lt.s32.totalorder %s20, 1
      %s324 = scalar_select %p323, %s20, 1
      %s325 = smul.addr %s324, 4
      %s326 = smul.addr %s325, 4
      %s327 = scalar_lea.vmem %s0, %s326
      %p328 = scmp.lt.s32.totalorder %s20, 1
      %s329 = scalar_select %p328, %s20, 1
      %s330 = smul.addr %s329, 4
      %s331 = smul.addr %s330, 2
      %s332 = scalar_lea.vmem %s9, %s331
      %v334 = vld [vmem:[%s327] sm:$0xff]
      %v335 = vld [vmem:[%s327 + $0x8] sm:$0xff]
      %v336 = vld [vmem:[%s1] sm:$0xf]
      %v337 = vld [vmem:[%s1 + $0x4] sm:$0xf]
      %v338 = vld [vmem:[%s1 + $0x8] sm:$0xf]
      %v339 = vld [vmem:[%s1 + $0xc] sm:$0xf]
      %v340 = vld [vmem:[%s1 + $0x10] sm:$0xf]
      %v341 = vld [vmem:[%s1 + $0x14] sm:$0xf]
      %v342 = vld [vmem:[%s1 + $0x18] sm:$0xf]
      %v343 = vld [vmem:[%s1 + $0x1c] sm:$0xf]
      %v344 = vld [vmem:[%s1 + $0x20] sm:$0xf]
      %v345 = vld [vmem:[%s1 + $0x24] sm:$0xf]
      %v346 = vld [vmem:[%s1 + $0x28] sm:$0xf]
      %v347 = vld [vmem:[%s1 + $0x2c] sm:$0xf]
      %v348 = vld [vmem:[%s1 + $0x30] sm:$0xf]
      %v349 = vld [vmem:[%s1 + $0x34] sm:$0xf]
      %v350 = vld [vmem:[%s1 + $0x38] sm:$0xf]
      %v351 = vld [vmem:[%s1 + $0x3c] sm:$0xf]
      %v352 = vld [vmem:[%s1 + $0x40] sm:$0xf]
      %v353 = vld [vmem:[%s1 + $0x44] sm:$0xf]
      %v354 = vld [vmem:[%s1 + $0x48] sm:$0xf]
      %v355 = vld [vmem:[%s1 + $0x4c] sm:$0xf]
      %v356 = vld [vmem:[%s1 + $0x50] sm:$0xf]
      %v357 = vld [vmem:[%s1 + $0x54] sm:$0xf]
      %v358 = vld [vmem:[%s1 + $0x58] sm:$0xf]
      %v359 = vld [vmem:[%s1 + $0x5c] sm:$0xf]
      %v360 = vld [vmem:[%s1 + $0x60] sm:$0xf]
      %v361 = vld [vmem:[%s1 + $0x64] sm:$0xf]
      %v362 = vld [vmem:[%s1 + $0x68] sm:$0xf]
      %v363 = vld [vmem:[%s1 + $0x6c] sm:$0xf]
      %v364 = vld [vmem:[%s1 + $0x70] sm:$0xf]
      %v365 = vld [vmem:[%s1 + $0x74] sm:$0xf]
      %v366 = vld [vmem:[%s1 + $0x78] sm:$0xf]
      %v367 = vld [vmem:[%s1 + $0x7c] sm:$0xf]
      %v368 = vld [vmem:[%s2] sm:$0x1]
      %v370 = vlaneseq
      %v371 = vshrl.u32 %v370, 7
      %v372 = vsub.s32 0, %v371
      %v373 = vrot.slane %v368, %v372
      %v377 = vunpack.c.l.b16 %v334
      %v378 = vunpack.c.h.b16 %v334
      %v379 = vunpack.c.l.b16 %v335
      %v380 = vunpack.c.h.b16 %v335
      %v381 = vpack.c.b16 %v379, %v377
      %v382 = vpack.c.b16 %v380, %v378
      %v417 = vunpack.c.l.b16 %v336
      %v418 = vunpack.c.l.b16 %v337
      %v419 = vunpack.c.l.b16 %v338
      %v420 = vunpack.c.l.b16 %v339
      %v421 = vunpack.c.l.b16 %v340
      %v422 = vunpack.c.l.b16 %v341
      %v423 = vunpack.c.l.b16 %v342
      %v424 = vunpack.c.l.b16 %v343
      %v425 = vunpack.c.l.b16 %v344
      %v426 = vunpack.c.l.b16 %v345
      %v427 = vunpack.c.l.b16 %v346
      %v428 = vunpack.c.l.b16 %v347
      %v429 = vunpack.c.l.b16 %v348
      %v430 = vunpack.c.l.b16 %v349
      %v431 = vunpack.c.l.b16 %v350
      %v432 = vunpack.c.l.b16 %v351
      %v433 = vunpack.c.l.b16 %v352
      %v434 = vunpack.c.l.b16 %v353
      %v435 = vunpack.c.l.b16 %v354
      %v436 = vunpack.c.l.b16 %v355
      %v437 = vunpack.c.l.b16 %v356
      %v438 = vunpack.c.l.b16 %v357
      %v439 = vunpack.c.l.b16 %v358
      %v440 = vunpack.c.l.b16 %v359
      %v441 = vunpack.c.l.b16 %v360
      %v442 = vunpack.c.l.b16 %v361
      %v443 = vunpack.c.l.b16 %v362
      %v444 = vunpack.c.l.b16 %v363
      %v445 = vunpack.c.l.b16 %v364
      %v446 = vunpack.c.l.b16 %v365
      %v447 = vunpack.c.l.b16 %v366
      %v448 = vunpack.c.l.b16 %v367
      %v449 = vpack.c.b16 %v418, %v417
      %v450 = vpack.c.b16 %v420, %v419
      %v451 = vpack.c.b16 %v422, %v421
      %v452 = vpack.c.b16 %v424, %v423
      %v453 = vpack.c.b16 %v426, %v425
      %v454 = vpack.c.b16 %v428, %v427
      %v455 = vpack.c.b16 %v430, %v429
      %v456 = vpack.c.b16 %v432, %v431
      %v457 = vpack.c.b16 %v434, %v433
      %v458 = vpack.c.b16 %v436, %v435
      %v459 = vpack.c.b16 %v438, %v437
      %v460 = vpack.c.b16 %v440, %v439
      %v461 = vpack.c.b16 %v442, %v441
      %v462 = vpack.c.b16 %v444, %v443
      %v463 = vpack.c.b16 %v446, %v445
      %v464 = vpack.c.b16 %v448, %v447
      %481 = vmatprep.subr.bf16.mxu0 0
      %482 = vmatpush1.bf16.msra.mxu0 %v449
      %483 = vmatprep.subr.bf16.mxu0 0
      %484 = vmatpush1.bf16.msra.mxu0 %v450
      %485 = vmatprep.subr.bf16.mxu0 0
      %486 = vmatpush1.bf16.msra.mxu0 %v451
      %487 = vmatprep.subr.bf16.mxu0 0
      %488 = vmatpush1.bf16.msra.mxu0 %v452
      %489 = vmatprep.subr.bf16.mxu0 0
      %490 = vmatpush1.bf16.msra.mxu0 %v453
      %491 = vmatprep.subr.bf16.mxu0 0
      %492 = vmatpush1.bf16.msra.mxu0 %v454
      %493 = vmatprep.subr.bf16.mxu0 0
      %494 = vmatpush1.bf16.msra.mxu0 %v455
      %495 = vmatprep.subr.bf16.mxu0 0
      %496 = vmatpush1.bf16.msra.mxu0 %v456
      %497 = vmatprep.subr.bf16.mxu0 0
      %498 = vmatpush1.bf16.msra.mxu0 %v457
      %499 = vmatprep.subr.bf16.mxu0 0
      %500 = vmatpush1.bf16.msra.mxu0 %v458
      %501 = vmatprep.subr.bf16.mxu0 0
      %502 = vmatpush1.bf16.msra.mxu0 %v459
      %503 = vmatprep.subr.bf16.mxu0 0
      %504 = vmatpush1.bf16.msra.mxu0 %v460
      %505 = vmatprep.subr.bf16.mxu0 0
      %506 = vmatpush1.bf16.msra.mxu0 %v461
      %507 = vmatprep.subr.bf16.mxu0 0
      %508 = vmatpush1.bf16.msra.mxu0 %v462
      %509 = vmatprep.subr.bf16.mxu0 0
      %510 = vmatpush1.bf16.msra.mxu0 %v463
      %511 = vmatprep.subr.bf16.mxu0 0
      %512 = vmatpush1.bf16.msra.mxu0 %v464
      %513 = vmatprep.mubr.bf16.mxu0 %v382
      %514 = vmatmul.mubr.bf16.gmra.mrb[0].mxu0 %v381
      %v515 = vpop.f32.mrb[0].mxu0
      %v516 = vadd.f32 %v373, %v515
      %v517 = vpop.f32.mrb[0].mxu0
      %v518 = vpop.f32.mrb[0].mxu0
      %v519 = vadd.f32 %v373, %v518
      %v520 = vpop.f32.mrb[0].mxu0
      %521 = vdwg.mxu0
      %v522 = vmax.f32 %v516, 0.0
      %v523 = vmax.f32 %v519, 0.0
      %vm524 = vcmask 518144
      %525 = vst.msk [vmem:[#allocation2] sm:$0x7] %vm524, 0
      %526 = vst.msk [vmem:[#allocation2 + $0x4] sm:$0x7] %vm524, 0
      %527 = vst.msk [vmem:[#allocation2 + $0x8] sm:$0x7] %vm524, 0
      %528 = vst.msk [vmem:[#allocation2 + $0xc] sm:$0x7] %vm524, 0
      %529 = vst.msk [vmem:[#allocation2 + $0x10] sm:$0x7] %vm524, 0
      %530 = vst.msk [vmem:[#allocation2 + $0x14] sm:$0x7] %vm524, 0
      %v533 = vcombine.high %v522, %v522
      %v534 = vcombine.high %v523, %v523
      %v537 = vpack.c.bf16 %v522, %v522
      %v538 = vpack.c.bf16 %v533, %v533
      %v539 = vpack.c.bf16 %v523, %v523
      %v540 = vpack.c.bf16 %v534, %v534
      %v545 = vunpack.c.l.b16 %v537
      %v546 = vunpack.c.l.b16 %v538
      %v547 = vunpack.c.l.b16 %v539
      %v548 = vunpack.c.l.b16 %v540
      %v549 = vpack.c.b16 %v545, %v545
      %v550 = vpack.c.b16 %v546, %v546
      %v551 = vpack.c.b16 %v547, %v547
      %v552 = vpack.c.b16 %v548, %v548
      %v554 = vshrl.u32 %v549, 16
      %v556 = vrot.slane %v554, 7
      %v557 = vshll.u32 %v549, 16
      %v559 = vor.u32 %v556, %v557
      %v561 = vshrl.u32 %v550, 16
      %v563 = vrot.slane %v561, 7
      %v564 = vshll.u32 %v550, 16
      %v566 = vor.u32 %v563, %v564
      %v568 = vshrl.u32 %v551, 16
      %v570 = vrot.slane %v568, 7
      %v571 = vshll.u32 %v551, 16
      %v573 = vor.u32 %v570, %v571
      %v575 = vshrl.u32 %v552, 16
      %v577 = vrot.slane %v575, 7
      %v578 = vshll.u32 %v552, 16
      %v580 = vor.u32 %v577, %v578
      %s585 = scalar_lea.vmem [#allocation2], 4
      %vm586 = vcmask 518144
      %vm587 = vsmask.f32 2306
      %vm588 = vmand %vm586, %vm587
      %v589 = vld [vmem:[%s585] sm:$0x7]
      %v590 = vsel %vm588, %v559, %v589
      %591 = vst [vmem:[%s585] sm:$0x7] %v590
      %v592 = vld [vmem:[%s585 + $0x4] sm:$0x7]
      %v593 = vsel %vm588, %v566, %v592
      %594 = vst [vmem:[%s585 + $0x4] sm:$0x7] %v593
      %v595 = vld [vmem:[%s585 + $0x8] sm:$0x7]
      %v596 = vsel %vm588, %v573, %v595
      %597 = vst [vmem:[%s585 + $0x8] sm:$0x7] %v596
      %v598 = vld [vmem:[%s585 + $0xc] sm:$0x7]
      %v599 = vsel %vm588, %v580, %v598
      %600 = vst [vmem:[%s585 + $0xc] sm:$0x7] %v599
      %v601 = vld [vmem:[#allocation2] sm:$0x3]
      %v602 = vld [vmem:[#allocation2 + $0x4] sm:$0x3]
      %v603 = vld [vmem:[#allocation2 + $0x8] sm:$0x3]
      %v604 = vld [vmem:[#allocation2 + $0xc] sm:$0x3]
      %v605 = vld [vmem:[#allocation2] sm:$0x7]
      %v606 = vld [vmem:[#allocation2 + $0x4] sm:$0x7]
      %v607 = vld [vmem:[#allocation2 + $0x8] sm:$0x7]
      %v608 = vld [vmem:[#allocation2 + $0xc] sm:$0x7]
      %v614 = vunpack.c.l.s4 1983009808
      %v615 = vunpack.c.0.s8 %v614
      %v616 = vlaneseq
      %v617 = vshrl.u32 %v616, 7
      %v618 = vsub.s32 %v615, %v617
      %v619 = vrot.slane %v605, %v618
      %v620 = vcombine.high %v619, %v619
      %v622 = vunpack.c.l.s4 1983009808
      %v623 = vunpack.c.0.s8 %v622
      %v624 = vlaneseq
      %v625 = vshrl.u32 %v624, 7
      %v626 = vsub.s32 %v623, %v625
      %v627 = vrot.slane %v606, %v626
      %v628 = vcombine.high %v627, %v627
      %v630 = vunpack.c.l.s4 1983009808
      %v631 = vunpack.c.0.s8 %v630
      %v632 = vlaneseq
      %v633 = vshrl.u32 %v632, 7
      %v634 = vsub.s32 %v631, %v633
      %v635 = vrot.slane %v607, %v634
      %v636 = vcombine.high %v635, %v635
      %v638 = vunpack.c.l.s4 1983009808
      %v639 = vunpack.c.0.s8 %v638
      %v640 = vlaneseq
      %v641 = vshrl.u32 %v640, 7
      %v642 = vsub.s32 %v639, %v641
      %v643 = vrot.slane %v608, %v642
      %v644 = vcombine.high %v643, %v643
      %vm645 = vsmask.f32 1280
      %vm646 = vsmask.f32 3336
      %vm647 = vmor %vm645, %vm646
      %vm648 = vsmask.f32 5392
      %vm649 = vmor %vm647, %vm648
      %vm650 = vsmask.f32 7448
      %vm651 = vmor %vm649, %vm650
      %v653 = vshrl.u32 %v619, 16
      %v655 = vrot.slane %v653, 6
      %v656 = vshll.u32 %v619, 16
      %v658 = vrot.slane %v656, 7
      %v659 = vor.u32 %v655, %v658
      %v660 = vrot.slane %v659, 2
      %v662 = vshll.u32 %v620, 16
      %v664 = vrot.slane %v662, 7
      %v665 = vsel %vm651, %v660, %v664
      %v667 = vshrl.u32 %v627, 16
      %v669 = vrot.slane %v667, 6
      %v670 = vshll.u32 %v627, 16
      %v672 = vrot.slane %v670, 7
      %v673 = vor.u32 %v669, %v672
      %v674 = vrot.slane %v673, 2
      %v676 = vshll.u32 %v628, 16
      %v678 = vrot.slane %v676, 7
      %v679 = vsel %vm651, %v674, %v678
      %v681 = vshrl.u32 %v635, 16
      %v683 = vrot.slane %v681, 6
      %v684 = vshll.u32 %v635, 16
      %v686 = vrot.slane %v684, 7
      %v687 = vor.u32 %v683, %v686
      %v688 = vrot.slane %v687, 2
      %v690 = vshll.u32 %v636, 16
      %v692 = vrot.slane %v690, 7
      %v693 = vsel %vm651, %v688, %v692
      %v695 = vshrl.u32 %v643, 16
      %v697 = vrot.slane %v695, 6
      %v698 = vshll.u32 %v643, 16
      %v700 = vrot.slane %v698, 7
      %v701 = vor.u32 %v697, %v700
      %v702 = vrot.slane %v701, 2
      %v704 = vshll.u32 %v644, 16
      %v706 = vrot.slane %v704, 7
      %v707 = vsel %vm651, %v702, %v706
      %v708 = vld [vmem:[#allocation2] sm:$0x6]
      %v709 = vld [vmem:[#allocation2 + $0x4] sm:$0x6]
      %v710 = vld [vmem:[#allocation2 + $0x8] sm:$0x6]
      %v711 = vld [vmem:[#allocation2 + $0xc] sm:$0x6]
      %v717 = vunpack.c.l.s4 1983009808
      %v718 = vunpack.c.0.s8 %v717
      %v719 = vlaneseq
      %v720 = vshrl.u32 %v719, 7
      %v721 = vsub.s32 %v718, %v720
      %v722 = vrot.slane %v708, %v721
      %v723 = vcombine.high %v722, %v722
      %v725 = vunpack.c.l.s4 1983009808
      %v726 = vunpack.c.0.s8 %v725
      %v727 = vlaneseq
      %v728 = vshrl.u32 %v727, 7
      %v729 = vsub.s32 %v726, %v728
      %v730 = vrot.slane %v709, %v729
      %v731 = vcombine.high %v730, %v730
      %v733 = vunpack.c.l.s4 1983009808
      %v734 = vunpack.c.0.s8 %v733
      %v735 = vlaneseq
      %v736 = vshrl.u32 %v735, 7
      %v737 = vsub.s32 %v734, %v736
      %v738 = vrot.slane %v710, %v737
      %v739 = vcombine.high %v738, %v738
      %v741 = vunpack.c.l.s4 1983009808
      %v742 = vunpack.c.0.s8 %v741
      %v743 = vlaneseq
      %v744 = vshrl.u32 %v743, 7
      %v745 = vsub.s32 %v742, %v744
      %v746 = vrot.slane %v711, %v745
      %v747 = vcombine.high %v746, %v746
      %vm748 = vcmask 1040384
      %vm749 = vcmask 1042434
      %vm750 = vmor %vm748, %vm749
      %vm751 = vcmask 1044484
      %vm752 = vmor %vm750, %vm751
      %vm753 = vcmask 1046534
      %vm754 = vmor %vm752, %vm753
      %v755 = vrot.slane %v722, 7
      %v756 = vrot.slane %v755, 2
      %v757 = vrot.slane %v723, 7
      %v758 = vsel %vm754, %v756, %v757
      %v759 = vrot.slane %v730, 7
      %v760 = vrot.slane %v759, 2
      %v761 = vrot.slane %v731, 7
      %v762 = vsel %vm754, %v760, %v761
      %v763 = vrot.slane %v738, 7
      %v764 = vrot.slane %v763, 2
      %v765 = vrot.slane %v739, 7
      %v766 = vsel %vm754, %v764, %v765
      %v767 = vrot.slane %v746, 7
      %v768 = vrot.slane %v767, 2
      %v769 = vrot.slane %v747, 7
      %v770 = vsel %vm754, %v768, %v769
      %v771 = vld [vmem:[%s585] sm:$0x3]
      %v772 = vld [vmem:[%s585 + $0x4] sm:$0x3]
      %v773 = vld [vmem:[%s585 + $0x8] sm:$0x3]
      %v774 = vld [vmem:[%s585 + $0xc] sm:$0x3]
      %v775 = vld [vmem:[%s585] sm:$0x7]
      %v776 = vld [vmem:[%s585 + $0x4] sm:$0x7]
      %v777 = vld [vmem:[%s585 + $0x8] sm:$0x7]
      %v778 = vld [vmem:[%s585 + $0xc] sm:$0x7]
      %v784 = vunpack.c.l.s4 1983009808
      %v785 = vunpack.c.0.s8 %v784
      %v786 = vlaneseq
      %v787 = vshrl.u32 %v786, 7
      %v788 = vsub.s32 %v785, %v787
      %v789 = vrot.slane %v775, %v788
      %v790 = vcombine.high %v789, %v789
      %v792 = vunpack.c.l.s4 1983009808
      %v793 = vunpack.c.0.s8 %v792
      %v794 = vlaneseq
      %v795 = vshrl.u32 %v794, 7
      %v796 = vsub.s32 %v793, %v795
      %v797 = vrot.slane %v776, %v796
      %v798 = vcombine.high %v797, %v797
      %v800 = vunpack.c.l.s4 1983009808
      %v801 = vunpack.c.0.s8 %v800
      %v802 = vlaneseq
      %v803 = vshrl.u32 %v802, 7
      %v804 = vsub.s32 %v801, %v803
      %v805 = vrot.slane %v777, %v804
      %v806 = vcombine.high %v805, %v805
      %v808 = vunpack.c.l.s4 1983009808
      %v809 = vunpack.c.0.s8 %v808
      %v810 = vlaneseq
      %v811 = vshrl.u32 %v810, 7
      %v812 = vsub.s32 %v809, %v811
      %v813 = vrot.slane %v778, %v812
      %v814 = vcombine.high %v813, %v813
      %v816 = vshrl.u32 %v789, 16
      %v818 = vrot.slane %v816, 6
      %v819 = vshll.u32 %v789, 16
      %v821 = vrot.slane %v819, 7
      %v822 = vor.u32 %v818, %v821
      %v823 = vrot.slane %v822, 2
      %v825 = vshll.u32 %v790, 16
      %v827 = vrot.slane %v825, 7
      %v828 = vsel %vm651, %v823, %v827
      %v830 = vshrl.u32 %v797, 16
      %v832 = vrot.slane %v830, 6
      %v833 = vshll.u32 %v797, 16
      %v835 = vrot.slane %v833, 7
      %v836 = vor.u32 %v832, %v835
      %v837 = vrot.slane %v836, 2
      %v839 = vshll.u32 %v798, 16
      %v841 = vrot.slane %v839, 7
      %v842 = vsel %vm651, %v837, %v841
      %v844 = vshrl.u32 %v805, 16
      %v846 = vrot.slane %v844, 6
      %v847 = vshll.u32 %v805, 16
      %v849 = vrot.slane %v847, 7
      %v850 = vor.u32 %v846, %v849
      %v851 = vrot.slane %v850, 2
      %v853 = vshll.u32 %v806, 16
      %v855 = vrot.slane %v853, 7
      %v856 = vsel %vm651, %v851, %v855
      %v858 = vshrl.u32 %v813, 16
      %v860 = vrot.slane %v858, 6
      %v861 = vshll.u32 %v813, 16
      %v863 = vrot.slane %v861, 7
      %v864 = vor.u32 %v860, %v863
      %v865 = vrot.slane %v864, 2
      %v867 = vshll.u32 %v814, 16
      %v869 = vrot.slane %v867, 7
      %v870 = vsel %vm651, %v865, %v869
      %v871 = vld [vmem:[%s585] sm:$0x6]
      %v872 = vld [vmem:[%s585 + $0x4] sm:$0x6]
      %v873 = vld [vmem:[%s585 + $0x8] sm:$0x6]
      %v874 = vld [vmem:[%s585 + $0xc] sm:$0x6]
      %v880 = vunpack.c.l.s4 1983009808
      %v881 = vunpack.c.0.s8 %v880
      %v882 = vlaneseq
      %v883 = vshrl.u32 %v882, 7
      %v884 = vsub.s32 %v881, %v883
      %v885 = vrot.slane %v871, %v884
      %v886 = vcombine.high %v885, %v885
      %v888 = vunpack.c.l.s4 1983009808
      %v889 = vunpack.c.0.s8 %v888
      %v890 = vlaneseq
      %v891 = vshrl.u32 %v890, 7
      %v892 = vsub.s32 %v889, %v891
      %v893 = vrot.slane %v872, %v892
      %v894 = vcombine.high %v893, %v893
      %v896 = vunpack.c.l.s4 1983009808
      %v897 = vunpack.c.0.s8 %v896
      %v898 = vlaneseq
      %v899 = vshrl.u32 %v898, 7
      %v900 = vsub.s32 %v897, %v899
      %v901 = vrot.slane %v873, %v900
      %v902 = vcombine.high %v901, %v901
      %v904 = vunpack.c.l.s4 1983009808
      %v905 = vunpack.c.0.s8 %v904
      %v906 = vlaneseq
      %v907 = vshrl.u32 %v906, 7
      %v908 = vsub.s32 %v905, %v907
      %v909 = vrot.slane %v874, %v908
      %v910 = vcombine.high %v909, %v909
      %v911 = vrot.slane %v885, 7
      %v912 = vrot.slane %v911, 2
      %v913 = vrot.slane %v886, 7
      %v914 = vsel %vm754, %v912, %v913
      %v915 = vrot.slane %v893, 7
      %v916 = vrot.slane %v915, 2
      %v917 = vrot.slane %v894, 7
      %v918 = vsel %vm754, %v916, %v917
      %v919 = vrot.slane %v901, 7
      %v920 = vrot.slane %v919, 2
      %v921 = vrot.slane %v902, 7
      %v922 = vsel %vm754, %v920, %v921
      %v923 = vrot.slane %v909, 7
      %v924 = vrot.slane %v923, 2
      %v925 = vrot.slane %v910, 7
      %v926 = vsel %vm754, %v924, %v925
      %s927 = scalar_lea.vmem [#allocation2], 8
      %v928 = vld [vmem:[%s927] sm:$0x3]
      %v929 = vld [vmem:[%s927 + $0x4] sm:$0x3]
      %v930 = vld [vmem:[%s927 + $0x8] sm:$0x3]
      %v931 = vld [vmem:[%s927 + $0xc] sm:$0x3]
      %v932 = vld [vmem:[%s927] sm:$0x7]
      %v933 = vld [vmem:[%s927 + $0x4] sm:$0x7]
      %v934 = vld [vmem:[%s927 + $0x8] sm:$0x7]
      %v935 = vld [vmem:[%s927 + $0xc] sm:$0x7]
      %v941 = vunpack.c.l.s4 1983009808
      %v942 = vunpack.c.0.s8 %v941
      %v943 = vlaneseq
      %v944 = vshrl.u32 %v943, 7
      %v945 = vsub.s32 %v942, %v944
      %v946 = vrot.slane %v932, %v945
      %v947 = vcombine.high %v946, %v946
      %v949 = vunpack.c.l.s4 1983009808
      %v950 = vunpack.c.0.s8 %v949
      %v951 = vlaneseq
      %v952 = vshrl.u32 %v951, 7
      %v953 = vsub.s32 %v950, %v952
      %v954 = vrot.slane %v933, %v953
      %v955 = vcombine.high %v954, %v954
      %v957 = vunpack.c.l.s4 1983009808
      %v958 = vunpack.c.0.s8 %v957
      %v959 = vlaneseq
      %v960 = vshrl.u32 %v959, 7
      %v961 = vsub.s32 %v958, %v960
      %v962 = vrot.slane %v934, %v961
      %v963 = vcombine.high %v962, %v962
      %v965 = vunpack.c.l.s4 1983009808
      %v966 = vunpack.c.0.s8 %v965
      %v967 = vlaneseq
      %v968 = vshrl.u32 %v967, 7
      %v969 = vsub.s32 %v966, %v968
      %v970 = vrot.slane %v935, %v969
      %v971 = vcombine.high %v970, %v970
      %v973 = vshrl.u32 %v946, 16
      %v975 = vrot.slane %v973, 6
      %v976 = vshll.u32 %v946, 16
      %v978 = vrot.slane %v976, 7
      %v979 = vor.u32 %v975, %v978
      %v980 = vrot.slane %v979, 2
      %v982 = vshll.u32 %v947, 16
      %v984 = vrot.slane %v982, 7
      %v985 = vsel %vm651, %v980, %v984
      %v987 = vshrl.u32 %v954, 16
      %v989 = vrot.slane %v987, 6
      %v990 = vshll.u32 %v954, 16
      %v992 = vrot.slane %v990, 7
      %v993 = vor.u32 %v989, %v992
      %v994 = vrot.slane %v993, 2
      %v996 = vshll.u32 %v955, 16
      %v998 = vrot.slane %v996, 7
      %v999 = vsel %vm651, %v994, %v998
      %v1001 = vshrl.u32 %v962, 16
      %v1003 = vrot.slane %v1001, 6
      %v1004 = vshll.u32 %v962, 16
      %v1006 = vrot.slane %v1004, 7
      %v1007 = vor.u32 %v1003, %v1006
      %v1008 = vrot.slane %v1007, 2
      %v1010 = vshll.u32 %v963, 16
      %v1012 = vrot.slane %v1010, 7
      %v1013 = vsel %vm651, %v1008, %v1012
      %v1015 = vshrl.u32 %v970, 16
      %v1017 = vrot.slane %v1015, 6
      %v1018 = vshll.u32 %v970, 16
      %v1020 = vrot.slane %v1018, 7
      %v1021 = vor.u32 %v1017, %v1020
      %v1022 = vrot.slane %v1021, 2
      %v1024 = vshll.u32 %v971, 16
      %v1026 = vrot.slane %v1024, 7
      %v1027 = vsel %vm651, %v1022, %v1026
      %v1028 = vld [vmem:[%s927] sm:$0x6]
      %v1029 = vld [vmem:[%s927 + $0x4] sm:$0x6]
      %v1030 = vld [vmem:[%s927 + $0x8] sm:$0x6]
      %v1031 = vld [vmem:[%s927 + $0xc] sm:$0x6]
      %v1037 = vunpack.c.l.s4 1983009808
      %v1038 = vunpack.c.0.s8 %v1037
      %v1039 = vlaneseq
      %v1040 = vshrl.u32 %v1039, 7
      %v1041 = vsub.s32 %v1038, %v1040
      %v1042 = vrot.slane %v1028, %v1041
      %v1043 = vcombine.high %v1042, %v1042
      %v1045 = vunpack.c.l.s4 1983009808
      %v1046 = vunpack.c.0.s8 %v1045
      %v1047 = vlaneseq
      %v1048 = vshrl.u32 %v1047, 7
      %v1049 = vsub.s32 %v1046, %v1048
      %v1050 = vrot.slane %v1029, %v1049
      %v1051 = vcombine.high %v1050, %v1050
      %v1053 = vunpack.c.l.s4 1983009808
      %v1054 = vunpack.c.0.s8 %v1053
      %v1055 = vlaneseq
      %v1056 = vshrl.u32 %v1055, 7
      %v1057 = vsub.s32 %v1054, %v1056
      %v1058 = vrot.slane %v1030, %v1057
      %v1059 = vcombine.high %v1058, %v1058
      %v1061 = vunpack.c.l.s4 1983009808
      %v1062 = vunpack.c.0.s8 %v1061
      %v1063 = vlaneseq
      %v1064 = vshrl.u32 %v1063, 7
      %v1065 = vsub.s32 %v1062, %v1064
      %v1066 = vrot.slane %v1031, %v1065
      %v1067 = vcombine.high %v1066, %v1066
      %v1068 = vrot.slane %v1042, 7
      %v1069 = vrot.slane %v1068, 2
      %v1070 = vrot.slane %v1043, 7
      %v1071 = vsel %vm754, %v1069, %v1070
      %v1072 = vrot.slane %v1050, 7
      %v1073 = vrot.slane %v1072, 2
      %v1074 = vrot.slane %v1051, 7
      %v1075 = vsel %vm754, %v1073, %v1074
      %v1076 = vrot.slane %v1058, 7
      %v1077 = vrot.slane %v1076, 2
      %v1078 = vrot.slane %v1059, 7
      %v1079 = vsel %vm754, %v1077, %v1078
      %v1080 = vrot.slane %v1066, 7
      %v1081 = vrot.slane %v1080, 2
      %v1082 = vrot.slane %v1067, 7
      %v1083 = vsel %vm754, %v1081, %v1082
      %v1088 = vcombine.low %v601, %v602
      %v1089 = vcombine.low %v603, %v604
      %v1091 = vunpack.c.l.s4 1983009808
      %v1092 = vunpack.c.0.s8 %v1091
      %v1093 = vlaneseq
      %v1094 = vshrl.u32 %v1093, 7
      %v1095 = vsub.s32 %v1092, %v1094
      %v1096 = vrot.slane %v1088, %v1095
      %v1098 = vunpack.c.l.s4 1983009808
      %v1099 = vunpack.c.0.s8 %v1098
      %v1100 = vlaneseq
      %v1101 = vshrl.u32 %v1100, 7
      %v1102 = vsub.s32 %v1099, %v1101
      %v1103 = vrot.slane %v1089, %v1102
      %v1104 = vcombine.low %v1096, %v1103
      %v1105 = vcombine.low %v665, %v679
      %v1106 = vcombine.low %v693, %v707
      %v1108 = vunpack.c.l.s4 1983009808
      %v1109 = vunpack.c.0.s8 %v1108
      %v1110 = vlaneseq
      %v1111 = vshrl.u32 %v1110, 7
      %v1112 = vsub.s32 %v1109, %v1111
      %v1113 = vrot.slane %v1105, %v1112
      %v1115 = vunpack.c.l.s4 1983009808
      %v1116 = vunpack.c.0.s8 %v1115
      %v1117 = vlaneseq
      %v1118 = vshrl.u32 %v1117, 7
      %v1119 = vsub.s32 %v1116, %v1118
      %v1120 = vrot.slane %v1106, %v1119
      %v1121 = vcombine.low %v1113, %v1120
      %1122 = vrot.lane.b32.xlu0 %v1121, 64
      %v1123 = vpop.permute.xlu0 %1122
      %v1124 = vcombine.low %v758, %v762
      %v1125 = vcombine.low %v766, %v770
      %v1127 = vunpack.c.l.s4 1983009808
      %v1128 = vunpack.c.0.s8 %v1127
      %v1129 = vlaneseq
      %v1130 = vshrl.u32 %v1129, 7
      %v1131 = vsub.s32 %v1128, %v1130
      %v1132 = vrot.slane %v1124, %v1131
      %v1134 = vunpack.c.l.s4 1983009808
      %v1135 = vunpack.c.0.s8 %v1134
      %v1136 = vlaneseq
      %v1137 = vshrl.u32 %v1136, 7
      %v1138 = vsub.s32 %v1135, %v1137
      %v1139 = vrot.slane %v1125, %v1138
      %v1140 = vcombine.low %v1132, %v1139
      %v1145 = vcombine.low %v771, %v772
      %v1146 = vcombine.low %v773, %v774
      %v1148 = vunpack.c.l.s4 1983009808
      %v1149 = vunpack.c.0.s8 %v1148
      %v1150 = vlaneseq
      %v1151 = vshrl.u32 %v1150, 7
      %v1152 = vsub.s32 %v1149, %v1151
      %v1153 = vrot.slane %v1145, %v1152
      %v1155 = vunpack.c.l.s4 1983009808
      %v1156 = vunpack.c.0.s8 %v1155
      %v1157 = vlaneseq
      %v1158 = vshrl.u32 %v1157, 7
      %v1159 = vsub.s32 %v1156, %v1158
      %v1160 = vrot.slane %v1146, %v1159
      %v1161 = vcombine.low %v1153, %v1160
      %1162 = vrot.lane.b32.xlu0 %v1161, 64
      %v1163 = vpop.permute.xlu0 %1162
      %v1164 = vcombine.low %v828, %v842
      %v1165 = vcombine.low %v856, %v870
      %v1167 = vunpack.c.l.s4 1983009808
      %v1168 = vunpack.c.0.s8 %v1167
      %v1169 = vlaneseq
      %v1170 = vshrl.u32 %v1169, 7
      %v1171 = vsub.s32 %v1168, %v1170
      %v1172 = vrot.slane %v1164, %v1171
      %v1174 = vunpack.c.l.s4 1983009808
      %v1175 = vunpack.c.0.s8 %v1174
      %v1176 = vlaneseq
      %v1177 = vshrl.u32 %v1176, 7
      %v1178 = vsub.s32 %v1175, %v1177
      %v1179 = vrot.slane %v1165, %v1178
      %v1180 = vcombine.low %v1172, %v1179
      %v1181 = vcombine.low %v914, %v918
      %v1182 = vcombine.low %v922, %v926
      %v1184 = vunpack.c.l.s4 1983009808
      %v1185 = vunpack.c.0.s8 %v1184
      %v1186 = vlaneseq
      %v1187 = vshrl.u32 %v1186, 7
      %v1188 = vsub.s32 %v1185, %v1187
      %v1189 = vrot.slane %v1181, %v1188
      %v1191 = vunpack.c.l.s4 1983009808
      %v1192 = vunpack.c.0.s8 %v1191
      %v1193 = vlaneseq
      %v1194 = vshrl.u32 %v1193, 7
      %v1195 = vsub.s32 %v1192, %v1194
      %v1196 = vrot.slane %v1182, %v1195
      %v1197 = vcombine.low %v1189, %v1196
      %1198 = vrot.lane.b32.xlu0 %v1197, 64
      %v1199 = vpop.permute.xlu0 %1198
      %v1204 = vcombine.low %v928, %v929
      %v1205 = vcombine.low %v930, %v931
      %v1207 = vunpack.c.l.s4 1983009808
      %v1208 = vunpack.c.0.s8 %v1207
      %v1209 = vlaneseq
      %v1210 = vshrl.u32 %v1209, 7
      %v1211 = vsub.s32 %v1208, %v1210
      %v1212 = vrot.slane %v1204, %v1211
      %v1214 = vunpack.c.l.s4 1983009808
      %v1215 = vunpack.c.0.s8 %v1214
      %v1216 = vlaneseq
      %v1217 = vshrl.u32 %v1216, 7
      %v1218 = vsub.s32 %v1215, %v1217
      %v1219 = vrot.slane %v1205, %v1218
      %v1220 = vcombine.low %v1212, %v1219
      %v1221 = vcombine.low %v985, %v999
      %v1222 = vcombine.low %v1013, %v1027
      %v1224 = vunpack.c.l.s4 1983009808
      %v1225 = vunpack.c.0.s8 %v1224
      %v1226 = vlaneseq
      %v1227 = vshrl.u32 %v1226, 7
      %v1228 = vsub.s32 %v1225, %v1227
      %v1229 = vrot.slane %v1221, %v1228
      %v1231 = vunpack.c.l.s4 1983009808
      %v1232 = vunpack.c.0.s8 %v1231
      %v1233 = vlaneseq
      %v1234 = vshrl.u32 %v1233, 7
      %v1235 = vsub.s32 %v1232, %v1234
      %v1236 = vrot.slane %v1222, %v1235
      %v1237 = vcombine.low %v1229, %v1236
      %1238 = vrot.lane.b32.xlu0 %v1237, 64
      %v1239 = vpop.permute.xlu0 %1238
      %v1240 = vcombine.low %v1071, %v1075
      %v1241 = vcombine.low %v1079, %v1083
      %v1243 = vunpack.c.l.s4 1983009808
      %v1244 = vunpack.c.0.s8 %v1243
      %v1245 = vlaneseq
      %v1246 = vshrl.u32 %v1245, 7
      %v1247 = vsub.s32 %v1244, %v1246
      %v1248 = vrot.slane %v1240, %v1247
      %v1250 = vunpack.c.l.s4 1983009808
      %v1251 = vunpack.c.0.s8 %v1250
      %v1252 = vlaneseq
      %v1253 = vshrl.u32 %v1252, 7
      %v1254 = vsub.s32 %v1251, %v1253
      %v1255 = vrot.slane %v1241, %v1254
      %v1256 = vcombine.low %v1248, %v1255
      %vm1257 = vcmask 523264
      %v1260 = vsel %vm1257, %v1104, %v1123
      %v1264 = vsel %vm1257, %v1140, %v1163
      %v1268 = vsel %vm1257, %v1180, %v1199
      %v1272 = vsel %vm1257, %v1220, %v1239
      %v1274 = vld [vmem:[%s5] sm:$0xf]
      %v1275 = vld [vmem:[%s5 + $0x4] sm:$0xf]
      %v1276 = vld [vmem:[%s5 + $0x8] sm:$0xf]
      %v1277 = vld [vmem:[%s5 + $0xc] sm:$0xf]
      %v1278 = vld [vmem:[%s5 + $0x10] sm:$0xf]
      %v1279 = vld [vmem:[%s5 + $0x14] sm:$0xf]
      %v1280 = vld [vmem:[%s5 + $0x18] sm:$0xf]
      %v1281 = vld [vmem:[%s5 + $0x1c] sm:$0xf]
      %v1282 = vld [vmem:[%s5 + $0x20] sm:$0xf]
      %v1283 = vld [vmem:[%s5 + $0x24] sm:$0xf]
      %v1284 = vld [vmem:[%s5 + $0x28] sm:$0xf]
      %v1285 = vld [vmem:[%s5 + $0x2c] sm:$0xf]
      %v1286 = vld [vmem:[%s5 + $0x30] sm:$0xf]
      %v1287 = vld [vmem:[%s5 + $0x34] sm:$0xf]
      %v1288 = vld [vmem:[%s5 + $0x38] sm:$0xf]
      %v1289 = vld [vmem:[%s5 + $0x3c] sm:$0xf]
      %v1290 = vld [vmem:[%s5 + $0x40] sm:$0xf]
      %v1291 = vld [vmem:[%s5 + $0x44] sm:$0xf]
      %v1292 = vld [vmem:[%s5 + $0x48] sm:$0xf]
      %v1293 = vld [vmem:[%s5 + $0x4c] sm:$0xf]
      %v1294 = vld [vmem:[%s5 + $0x50] sm:$0xf]
      %v1295 = vld [vmem:[%s5 + $0x54] sm:$0xf]
      %v1296 = vld [vmem:[%s5 + $0x58] sm:$0xf]
      %v1297 = vld [vmem:[%s5 + $0x5c] sm:$0xf]
      %v1298 = vld [vmem:[%s5 + $0x60] sm:$0xf]
      %v1299 = vld [vmem:[%s5 + $0x64] sm:$0xf]
      %v1300 = vld [vmem:[%s5 + $0x68] sm:$0xf]
      %v1301 = vld [vmem:[%s5 + $0x6c] sm:$0xf]
      %v1302 = vld [vmem:[%s5 + $0x70] sm:$0xf]
      %v1303 = vld [vmem:[%s5 + $0x74] sm:$0xf]
      %v1304 = vld [vmem:[%s5 + $0x78] sm:$0xf]
      %v1305 = vld [vmem:[%s5 + $0x7c] sm:$0xf]
      %v1306 = vld [vmem:[%s5 + $0x80] sm:$0xf]
      %v1307 = vld [vmem:[%s5 + $0x84] sm:$0xf]
      %v1308 = vld [vmem:[%s5 + $0x88] sm:$0xf]
      %v1309 = vld [vmem:[%s5 + $0x8c] sm:$0xf]
      %v1310 = vld [vmem:[%s5 + $0x90] sm:$0xf]
      %v1311 = vld [vmem:[%s5 + $0x94] sm:$0xf]
      %v1312 = vld [vmem:[%s5 + $0x98] sm:$0xf]
      %v1313 = vld [vmem:[%s5 + $0x9c] sm:$0xf]
      %v1314 = vld [vmem:[%s5 + $0xa0] sm:$0xf]
      %v1315 = vld [vmem:[%s5 + $0xa4] sm:$0xf]
      %v1316 = vld [vmem:[%s5 + $0xa8] sm:$0xf]
      %v1317 = vld [vmem:[%s5 + $0xac] sm:$0xf]
      %v1318 = vld [vmem:[%s5 + $0xb0] sm:$0xf]
      %v1319 = vld [vmem:[%s5 + $0xb4] sm:$0xf]
      %v1320 = vld [vmem:[%s5 + $0xb8] sm:$0xf]
      %v1321 = vld [vmem:[%s5 + $0xbc] sm:$0xf]
      %v1322 = vld [vmem:[%s5 + $0xc0] sm:$0xf]
      %v1323 = vld [vmem:[%s5 + $0xc4] sm:$0xf]
      %v1324 = vld [vmem:[%s5 + $0xc8] sm:$0xf]
      %v1325 = vld [vmem:[%s5 + $0xcc] sm:$0xf]
      %v1326 = vld [vmem:[%s5 + $0xd0] sm:$0xf]
      %v1327 = vld [vmem:[%s5 + $0xd4] sm:$0xf]
      %v1328 = vld [vmem:[%s5 + $0xd8] sm:$0xf]
      %v1329 = vld [vmem:[%s5 + $0xdc] sm:$0xf]
      %v1330 = vld [vmem:[%s5 + $0xe0] sm:$0xf]
      %v1331 = vld [vmem:[%s5 + $0xe4] sm:$0xf]
      %v1332 = vld [vmem:[%s5 + $0xe8] sm:$0xf]
      %v1333 = vld [vmem:[%s5 + $0xec] sm:$0xf]
      %v1334 = vld [vmem:[%s5 + $0xf0] sm:$0xf]
      %v1335 = vld [vmem:[%s5 + $0xf4] sm:$0xf]
      %v1336 = vld [vmem:[%s5 + $0xf8] sm:$0xf]
      %v1337 = vld [vmem:[%s5 + $0xfc] sm:$0xf]
      %v1338 = vld [vmem:[%s5 + $0x100] sm:$0xf]
      %v1339 = vld [vmem:[%s5 + $0x104] sm:$0xf]
      %v1340 = vld [vmem:[%s5 + $0x108] sm:$0xf]
      %v1341 = vld [vmem:[%s5 + $0x10c] sm:$0xf]
      %v1342 = vld [vmem:[%s5 + $0x110] sm:$0xf]
      %v1343 = vld [vmem:[%s5 + $0x114] sm:$0xf]
      %v1344 = vld [vmem:[%s5 + $0x118] sm:$0xf]
      %v1345 = vld [vmem:[%s5 + $0x11c] sm:$0xf]
      %v1346 = vld [vmem:[%s6] sm:$0x1]
      %v1348 = vlaneseq
      %v1349 = vshrl.u32 %v1348, 7
      %v1350 = vsub.s32 0, %v1349
      %v1351 = vrot.slane %v1346, %v1350
      %v1425 = vunpack.c.l.b16 %v1274
      %v1426 = vunpack.c.l.b16 %v1275
      %v1427 = vunpack.c.l.b16 %v1276
      %v1428 = vunpack.c.l.b16 %v1277
      %v1429 = vunpack.c.l.b16 %v1278
      %v1430 = vunpack.c.l.b16 %v1279
      %v1431 = vunpack.c.l.b16 %v1280
      %v1432 = vunpack.c.l.b16 %v1281
      %v1433 = vunpack.c.l.b16 %v1282
      %v1434 = vunpack.c.l.b16 %v1283
      %v1435 = vunpack.c.l.b16 %v1284
      %v1436 = vunpack.c.l.b16 %v1285
      %v1437 = vunpack.c.l.b16 %v1286
      %v1438 = vunpack.c.l.b16 %v1287
      %v1439 = vunpack.c.l.b16 %v1288
      %v1440 = vunpack.c.l.b16 %v1289
      %v1441 = vunpack.c.l.b16 %v1290
      %v1442 = vunpack.c.l.b16 %v1291
      %v1443 = vunpack.c.l.b16 %v1292
      %v1444 = vunpack.c.l.b16 %v1293
      %v1445 = vunpack.c.l.b16 %v1294
      %v1446 = vunpack.c.l.b16 %v1295
      %v1447 = vunpack.c.l.b16 %v1296
      %v1448 = vunpack.c.l.b16 %v1297
      %v1449 = vunpack.c.l.b16 %v1298
      %v1450 = vunpack.c.l.b16 %v1299
      %v1451 = vunpack.c.l.b16 %v1300
      %v1452 = vunpack.c.l.b16 %v1301
      %v1453 = vunpack.c.l.b16 %v1302
      %v1454 = vunpack.c.l.b16 %v1303
      %v1455 = vunpack.c.l.b16 %v1304
      %v1456 = vunpack.c.l.b16 %v1305
      %v1457 = vunpack.c.l.b16 %v1306
      %v1458 = vunpack.c.l.b16 %v1307
      %v1459 = vunpack.c.l.b16 %v1308
      %v1460 = vunpack.c.l.b16 %v1309
      %v1461 = vunpack.c.l.b16 %v1310
      %v1462 = vunpack.c.l.b16 %v1311
      %v1463 = vunpack.c.l.b16 %v1312
      %v1464 = vunpack.c.l.b16 %v1313
      %v1465 = vunpack.c.l.b16 %v1314
      %v1466 = vunpack.c.l.b16 %v1315
      %v1467 = vunpack.c.l.b16 %v1316
      %v1468 = vunpack.c.l.b16 %v1317
      %v1469 = vunpack.c.l.b16 %v1318
      %v1470 = vunpack.c.l.b16 %v1319
      %v1471 = vunpack.c.l.b16 %v1320
      %v1472 = vunpack.c.l.b16 %v1321
      %v1473 = vunpack.c.l.b16 %v1322
      %v1474 = vunpack.c.l.b16 %v1323
      %v1475 = vunpack.c.l.b16 %v1324
      %v1476 = vunpack.c.l.b16 %v1325
      %v1477 = vunpack.c.l.b16 %v1326
      %v1478 = vunpack.c.l.b16 %v1327
      %v1479 = vunpack.c.l.b16 %v1328
      %v1480 = vunpack.c.l.b16 %v1329
      %v1481 = vunpack.c.l.b16 %v1330
      %v1482 = vunpack.c.l.b16 %v1331
      %v1483 = vunpack.c.l.b16 %v1332
      %v1484 = vunpack.c.l.b16 %v1333
      %v1485 = vunpack.c.l.b16 %v1334
      %v1486 = vunpack.c.l.b16 %v1335
      %v1487 = vunpack.c.l.b16 %v1336
      %v1488 = vunpack.c.l.b16 %v1337
      %v1489 = vunpack.c.l.b16 %v1338
      %v1490 = vunpack.c.l.b16 %v1339
      %v1491 = vunpack.c.l.b16 %v1340
      %v1492 = vunpack.c.l.b16 %v1341
      %v1493 = vunpack.c.l.b16 %v1342
      %v1494 = vunpack.c.l.b16 %v1343
      %v1495 = vunpack.c.l.b16 %v1344
      %v1496 = vunpack.c.l.b16 %v1345
      %v1497 = vpack.c.b16 %v1426, %v1425
      %v1498 = vpack.c.b16 %v1428, %v1427
      %v1499 = vpack.c.b16 %v1430, %v1429
      %v1500 = vpack.c.b16 %v1432, %v1431
      %v1501 = vpack.c.b16 %v1434, %v1433
      %v1502 = vpack.c.b16 %v1436, %v1435
      %v1503 = vpack.c.b16 %v1438, %v1437
      %v1504 = vpack.c.b16 %v1440, %v1439
      %v1505 = vpack.c.b16 %v1442, %v1441
      %v1506 = vpack.c.b16 %v1444, %v1443
      %v1507 = vpack.c.b16 %v1446, %v1445
      %v1508 = vpack.c.b16 %v1448, %v1447
      %v1509 = vpack.c.b16 %v1450, %v1449
      %v1510 = vpack.c.b16 %v1452, %v1451
      %v1511 = vpack.c.b16 %v1454, %v1453
      %v1512 = vpack.c.b16 %v1456, %v1455
      %v1513 = vpack.c.b16 %v1458, %v1457
      %v1514 = vpack.c.b16 %v1460, %v1459
      %v1515 = vpack.c.b16 %v1462, %v1461
      %v1516 = vpack.c.b16 %v1464, %v1463
      %v1517 = vpack.c.b16 %v1466, %v1465
      %v1518 = vpack.c.b16 %v1468, %v1467
      %v1519 = vpack.c.b16 %v1470, %v1469
      %v1520 = vpack.c.b16 %v1472, %v1471
      %v1521 = vpack.c.b16 %v1474, %v1473
      %v1522 = vpack.c.b16 %v1476, %v1475
      %v1523 = vpack.c.b16 %v1478, %v1477
      %v1524 = vpack.c.b16 %v1480, %v1479
      %v1525 = vpack.c.b16 %v1482, %v1481
      %v1526 = vpack.c.b16 %v1484, %v1483
      %v1527 = vpack.c.b16 %v1486, %v1485
      %v1528 = vpack.c.b16 %v1488, %v1487
      %v1529 = vpack.c.b16 %v1490, %v1489
      %v1530 = vpack.c.b16 %v1492, %v1491
      %v1531 = vpack.c.b16 %v1494, %v1493
      %v1532 = vpack.c.b16 %v1496, %v1495
      %v1570 = vsel %vm1257, %v1256, 0
      %1572 = vmatprep.subr.bf16.mxu0 0
      %1573 = vmatpush1.bf16.msra.mxu0 %v1497
      %1574 = vmatprep.subr.bf16.mxu0 0
      %1575 = vmatpush1.bf16.msra.mxu0 %v1498
      %1576 = vmatprep.subr.bf16.mxu0 0
      %1577 = vmatpush1.bf16.msra.mxu0 %v1499
      %1578 = vmatprep.subr.bf16.mxu0 0
      %1579 = vmatpush1.bf16.msra.mxu0 %v1500
      %1580 = vmatprep.subr.bf16.mxu0 0
      %1581 = vmatpush1.bf16.msra.mxu0 %v1501
      %1582 = vmatprep.subr.bf16.mxu0 0
      %1583 = vmatpush1.bf16.msra.mxu0 %v1502
      %1584 = vmatprep.subr.bf16.mxu0 0
      %1585 = vmatpush1.bf16.msra.mxu0 %v1503
      %1586 = vmatprep.subr.bf16.mxu0 0
      %1587 = vmatpush1.bf16.msra.mxu0 %v1504
      %1588 = vmatprep.subr.bf16.mxu0 0
      %1589 = vmatpush1.bf16.msra.mxu0 %v1505
      %1590 = vmatprep.subr.bf16.mxu0 0
      %1591 = vmatpush1.bf16.msra.mxu0 %v1506
      %1592 = vmatprep.subr.bf16.mxu0 0
      %1593 = vmatpush1.bf16.msra.mxu0 %v1507
      %1594 = vmatprep.subr.bf16.mxu0 0
      %1595 = vmatpush1.bf16.msra.mxu0 %v1508
      %1596 = vmatprep.subr.bf16.mxu0 0
      %1597 = vmatpush1.bf16.msra.mxu0 %v1509
      %1598 = vmatprep.subr.bf16.mxu0 0
      %1599 = vmatpush1.bf16.msra.mxu0 %v1510
      %1600 = vmatprep.subr.bf16.mxu0 0
      %1601 = vmatpush1.bf16.msra.mxu0 %v1511
      %1602 = vmatprep.subr.bf16.mxu0 0
      %1603 = vmatpush1.bf16.msra.mxu0 %v1512
      %1604 = vmatprep.mubr.bf16.mxu0 %v1264
      %1605 = vmatmul.mubr.bf16.gmra.mrb[0].mxu0 %v1260
      %v1606 = vpop.f32.mrb[0].mxu0
      %v1607 = vadd.f32 %v1351, %v1606
      %v1608 = vpop.f32.mrb[0].mxu0
      %v1609 = vpop.f32.mrb[0].mxu0
      %v1610 = vadd.f32 %v1351, %v1609
      %v1611 = vpop.f32.mrb[0].mxu0
      %1612 = vdwg.mxu0
      %1613 = vmatprep.subr.bf16.mxu0 0
      %1614 = vmatpush1.bf16.msra.mxu0 %v1513
      %1615 = vmatprep.subr.bf16.mxu0 0
      %1616 = vmatpush1.bf16.msra.mxu0 %v1514
      %1617 = vmatprep.subr.bf16.mxu0 0
      %1618 = vmatpush1.bf16.msra.mxu0 %v1515
      %1619 = vmatprep.subr.bf16.mxu0 0
      %1620 = vmatpush1.bf16.msra.mxu0 %v1516
      %1621 = vmatprep.subr.bf16.mxu0 0
      %1622 = vmatpush1.bf16.msra.mxu0 %v1517
      %1623 = vmatprep.subr.bf16.mxu0 0
      %1624 = vmatpush1.bf16.msra.mxu0 %v1518
      %1625 = vmatprep.subr.bf16.mxu0 0
      %1626 = vmatpush1.bf16.msra.mxu0 %v1519
      %1627 = vmatprep.subr.bf16.mxu0 0
      %1628 = vmatpush1.bf16.msra.mxu0 %v1520
      %1629 = vmatprep.subr.bf16.mxu0 0
      %1630 = vmatpush1.bf16.msra.mxu0 %v1521
      %1631 = vmatprep.subr.bf16.mxu0 0
      %1632 = vmatpush1.bf16.msra.mxu0 %v1522
      %1633 = vmatprep.subr.bf16.mxu0 0
      %1634 = vmatpush1.bf16.msra.mxu0 %v1523
      %1635 = vmatprep.subr.bf16.mxu0 0
      %1636 = vmatpush1.bf16.msra.mxu0 %v1524
      %1637 = vmatprep.subr.bf16.mxu0 0
      %1638 = vmatpush1.bf16.msra.mxu0 %v1525
      %1639 = vmatprep.subr.bf16.mxu0 0
      %1640 = vmatpush1.bf16.msra.mxu0 %v1526
      %1641 = vmatprep.subr.bf16.mxu0 0
      %1642 = vmatpush1.bf16.msra.mxu0 %v1527
      %1643 = vmatprep.subr.bf16.mxu0 0
      %1644 = vmatpush1.bf16.msra.mxu0 %v1528
      %1645 = vmatprep.mubr.bf16.mxu0 %v1272
      %1646 = vmatmul.mubr.bf16.gmra.mrb[0].mxu0 %v1268
      %v1647 = vpop.f32.mrb[0].mxu0
      %v1648 = vadd.f32 %v1607, %v1647
      %v1649 = vpop.f32.mrb[0].mxu0
      %v1650 = vpop.f32.mrb[0].mxu0
      %v1651 = vadd.f32 %v1610, %v1650
      %v1652 = vpop.f32.mrb[0].mxu0
      %1653 = vdwg.mxu0
      %1654 = vmatprep.subr.bf16.mxu0 0
      %1655 = vmatpush1.bf16.msra.mxu0 %v1529
      %1656 = vmatprep.subr.bf16.mxu0 0
      %1657 = vmatpush1.bf16.msra.mxu0 %v1530
      %1658 = vmatprep.subr.bf16.mxu0 0
      %1659 = vmatpush1.bf16.msra.mxu0 %v1531
      %1660 = vmatprep.subr.bf16.mxu0 0
      %1661 = vmatpush1.bf16.msra.mxu0 %v1532
      %1662 = vmatprep.subr.bf16.mxu0 0
      %1663 = vmatpush1.bf16.msra.mxu0 0
      %1664 = vmatprep.subr.bf16.mxu0 0
      %1665 = vmatpush1.bf16.msra.mxu0 0
      %1666 = vmatprep.subr.bf16.mxu0 0
      %1667 = vmatpush1.bf16.msra.mxu0 0
      %1668 = vmatprep.subr.bf16.mxu0 0
      %1669 = vmatpush1.bf16.msra.mxu0 0
      %1670 = vmatprep.subr.bf16.mxu0 0
      %1671 = vmatpush1.bf16.msra.mxu0 0
      %1672 = vmatprep.subr.bf16.mxu0 0
      %1673 = vmatpush1.bf16.msra.mxu0 0
      %1674 = vmatprep.subr.bf16.mxu0 0
      %1675 = vmatpush1.bf16.msra.mxu0 0
      %1676 = vmatprep.subr.bf16.mxu0 0
      %1677 = vmatpush1.bf16.msra.mxu0 0
      %1678 = vmatprep.subr.bf16.mxu0 0
      %1679 = vmatpush1.bf16.msra.mxu0 0
      %1680 = vmatprep.subr.bf16.mxu0 0
      %1681 = vmatpush1.bf16.msra.mxu0 0
      %1682 = vmatprep.subr.bf16.mxu0 0
      %1683 = vmatpush1.bf16.msra.mxu0 0
      %1684 = vmatprep.subr.bf16.mxu0 0
      %1685 = vmatpush1.bf16.msra.mxu0 0
      %1686 = vmatprep.mubr.bf16.mxu0 0
      %1687 = vmatmul.mubr.bf16.gmra.mrb[0].mxu0 %v1570
      %v1688 = vpop.f32.mrb[0].mxu0
      %v1689 = vadd.f32 %v1648, %v1688
      %v1690 = vpop.f32.mrb[0].mxu0
      %v1691 = vpop.f32.mrb[0].mxu0
      %v1692 = vadd.f32 %v1651, %v1691
      %v1693 = vpop.f32.mrb[0].mxu0
      %1694 = vdwg.mxu0
      %v1695 = vmax.f32 %v1689, 0.0
      %v1696 = vmax.f32 %v1692, 0.0
      %v1697 = vpack.c.bf16 %v1696, %v1695
      %v1698 = vld [vmem:[%s7] sm:$0xff]
      %v1699 = vld [vmem:[%s7 + $0x8] sm:$0xff]
      %v1700 = vld [vmem:[%s7 + $0x10] sm:$0xff]
      %v1701 = vld [vmem:[%s7 + $0x18] sm:$0xff]
      %v1702 = vld [vmem:[%s7 + $0x20] sm:$0xff]
      %v1703 = vld [vmem:[%s7 + $0x28] sm:$0xff]
      %v1704 = vld [vmem:[%s7 + $0x30] sm:$0xff]
      %v1705 = vld [vmem:[%s7 + $0x38] sm:$0xff]
      %v1706 = vld [vmem:[%s7 + $0x40] sm:$0xff]
      %v1707 = vld [vmem:[%s7 + $0x48] sm:$0xff]
      %v1708 = vld [vmem:[%s7 + $0x50] sm:$0xff]
      %v1709 = vld [vmem:[%s7 + $0x58] sm:$0xff]
      %v1710 = vld [vmem:[%s7 + $0x60] sm:$0xff]
      %v1711 = vld [vmem:[%s7 + $0x68] sm:$0xff]
      %v1712 = vld [vmem:[%s7 + $0x70] sm:$0xff]
      %v1713 = vld [vmem:[%s7 + $0x78] sm:$0xff]
      %v1714 = vld [vmem:[%s8] sm:$0xf]
      %v1716 = vlaneseq
      %v1717 = vshrl.u32 %v1716, 7
      %v1718 = vsub.s32 0, %v1717
      %v1719 = vrot.slane %v1714, %v1718
      %v1720 = vlaneseq
      %v1721 = vshrl.u32 %v1720, 7
      %v1722 = vsub.s32 1, %v1721
      %v1723 = vrot.slane %v1714, %v1722
      %v1724 = vlaneseq
      %v1725 = vshrl.u32 %v1724, 7
      %v1726 = vsub.s32 2, %v1725
      %v1727 = vrot.slane %v1714, %v1726
      %v1728 = vlaneseq
      %v1729 = vshrl.u32 %v1728, 7
      %v1730 = vsub.s32 3, %v1729
      %v1731 = vrot.slane %v1714, %v1730
      %v1752 = vunpack.c.l.b16 %v1698
      %v1753 = vunpack.c.h.b16 %v1698
      %v1754 = vunpack.c.l.b16 %v1699
      %v1755 = vunpack.c.h.b16 %v1699
      %v1756 = vunpack.c.l.b16 %v1700
      %v1757 = vunpack.c.h.b16 %v1700
      %v1758 = vunpack.c.l.b16 %v1701
      %v1759 = vunpack.c.h.b16 %v1701
      %v1760 = vunpack.c.l.b16 %v1702
      %v1761 = vunpack.c.h.b16 %v1702
      %v1762 = vunpack.c.l.b16 %v1703
      %v1763 = vunpack.c.h.b16 %v1703
      %v1764 = vunpack.c.l.b16 %v1704
      %v1765 = vunpack.c.h.b16 %v1704
      %v1766 = vunpack.c.l.b16 %v1705
      %v1767 = vunpack.c.h.b16 %v1705
      %v1768 = vunpack.c.l.b16 %v1706
      %v1769 = vunpack.c.h.b16 %v1706
      %v1770 = vunpack.c.l.b16 %v1707
      %v1771 = vunpack.c.h.b16 %v1707
      %v1772 = vunpack.c.l.b16 %v1708
      %v1773 = vunpack.c.h.b16 %v1708
      %v1774 = vunpack.c.l.b16 %v1709
      %v1775 = vunpack.c.h.b16 %v1709
      %v1776 = vunpack.c.l.b16 %v1710
      %v1777 = vunpack.c.h.b16 %v1710
      %v1778 = vunpack.c.l.b16 %v1711
      %v1779 = vunpack.c.h.b16 %v1711
      %v1780 = vunpack.c.l.b16 %v1712
      %v1781 = vunpack.c.h.b16 %v1712
      %v1782 = vunpack.c.l.b16 %v1713
      %v1783 = vunpack.c.h.b16 %v1713
      %v1784 = vpack.c.b16 %v1756, %v1752
      %v1785 = vpack.c.b16 %v1757, %v1753
      %v1786 = vpack.c.b16 %v1758, %v1754
      %v1787 = vpack.c.b16 %v1759, %v1755
      %v1788 = vpack.c.b16 %v1764, %v1760
      %v1789 = vpack.c.b16 %v1765, %v1761
      %v1790 = vpack.c.b16 %v1766, %v1762
      %v1791 = vpack.c.b16 %v1767, %v1763
      %v1792 = vpack.c.b16 %v1772, %v1768
      %v1793 = vpack.c.b16 %v1773, %v1769
      %v1794 = vpack.c.b16 %v1774, %v1770
      %v1795 = vpack.c.b16 %v1775, %v1771
      %v1796 = vpack.c.b16 %v1780, %v1776
      %v1797 = vpack.c.b16 %v1781, %v1777
      %v1798 = vpack.c.b16 %v1782, %v1778
      %v1799 = vpack.c.b16 %v1783, %v1779
      %v1817 = vsel %vm1257, %v1697, 0
      %1819 = vmatprep.subr.bf16.mxu0 %v1785
      %1820 = vmatpush1.bf16.msra.mxu0 %v1784
      %1821 = vmatprep.subr.bf16.mxu0 %v1789
      %1822 = vmatpush1.bf16.msra.mxu0 %v1788
      %1823 = vmatprep.subr.bf16.mxu0 %v1793
      %1824 = vmatpush1.bf16.msra.mxu0 %v1792
      %1825 = vmatprep.subr.bf16.mxu0 %v1797
      %1826 = vmatpush1.bf16.msra.mxu0 %v1796
      %1827 = vmatprep.subr.bf16.mxu0 0
      %1828 = vmatpush1.bf16.msra.mxu0 0
      %1829 = vmatprep.subr.bf16.mxu0 0
      %1830 = vmatpush1.bf16.msra.mxu0 0
      %1831 = vmatprep.subr.bf16.mxu0 0
      %1832 = vmatpush1.bf16.msra.mxu0 0
      %1833 = vmatprep.subr.bf16.mxu0 0
      %1834 = vmatpush1.bf16.msra.mxu0 0
      %1835 = vmatprep.subr.bf16.mxu0 0
      %1836 = vmatpush1.bf16.msra.mxu0 0
      %1837 = vmatprep.subr.bf16.mxu0 0
      %1838 = vmatpush1.bf16.msra.mxu0 0
      %1839 = vmatprep.subr.bf16.mxu0 0
      %1840 = vmatpush1.bf16.msra.mxu0 0
      %1841 = vmatprep.subr.bf16.mxu0 0
      %1842 = vmatpush1.bf16.msra.mxu0 0
      %1843 = vmatprep.subr.bf16.mxu0 0
      %1844 = vmatpush1.bf16.msra.mxu0 0
      %1845 = vmatprep.subr.bf16.mxu0 0
      %1846 = vmatpush1.bf16.msra.mxu0 0
      %1847 = vmatprep.subr.bf16.mxu0 0
      %1848 = vmatpush1.bf16.msra.mxu0 0
      %1849 = vmatprep.subr.bf16.mxu0 0
      %1850 = vmatpush1.bf16.msra.mxu0 0
      %1851 = vmatprep.mubr.bf16.mxu0 0
      %1852 = vmatmul.mubr.bf16.gmra.mrb[0].mxu0 %v1817
      %v1853 = vpop.f32.mrb[0].mxu0
      %v1854 = vadd.f32 %v1719, %v1853
      %v1855 = vpop.f32.mrb[0].mxu0
      %v1856 = vadd.f32 %v1723, %v1855
      %v1857 = vpop.f32.mrb[0].mxu0
      %v1858 = vadd.f32 %v1719, %v1857
      %v1859 = vpop.f32.mrb[0].mxu0
      %v1860 = vadd.f32 %v1723, %v1859
      %1861 = vdwg.mxu0
      %1862 = vmatprep.subr.bf16.mxu0 %v1787
      %1863 = vmatpush1.bf16.msra.mxu0 %v1786
      %1864 = vmatprep.subr.bf16.mxu0 %v1791
      %1865 = vmatpush1.bf16.msra.mxu0 %v1790
      %1866 = vmatprep.subr.bf16.mxu0 %v1795
      %1867 = vmatpush1.bf16.msra.mxu0 %v1794
      %1868 = vmatprep.subr.bf16.mxu0 %v1799
      %1869 = vmatpush1.bf16.msra.mxu0 %v1798
      %1870 = vmatprep.subr.bf16.mxu0 0
      %1871 = vmatpush1.bf16.msra.mxu0 0
      %1872 = vmatprep.subr.bf16.mxu0 0
      %1873 = vmatpush1.bf16.msra.mxu0 0
      %1874 = vmatprep.subr.bf16.mxu0 0
      %1875 = vmatpush1.bf16.msra.mxu0 0
      %1876 = vmatprep.subr.bf16.mxu0 0
      %1877 = vmatpush1.bf16.msra.mxu0 0
      %1878 = vmatprep.subr.bf16.mxu0 0
      %1879 = vmatpush1.bf16.msra.mxu0 0
      %1880 = vmatprep.subr.bf16.mxu0 0
      %1881 = vmatpush1.bf16.msra.mxu0 0
      %1882 = vmatprep.subr.bf16.mxu0 0
      %1883 = vmatpush1.bf16.msra.mxu0 0
      %1884 = vmatprep.subr.bf16.mxu0 0
      %1885 = vmatpush1.bf16.msra.mxu0 0
      %1886 = vmatprep.subr.bf16.mxu0 0
      %1887 = vmatpush1.bf16.msra.mxu0 0
      %1888 = vmatprep.subr.bf16.mxu0 0
      %1889 = vmatpush1.bf16.msra.mxu0 0
      %1890 = vmatprep.subr.bf16.mxu0 0
      %1891 = vmatpush1.bf16.msra.mxu0 0
      %1892 = vmatprep.subr.bf16.mxu0 0
      %1893 = vmatpush1.bf16.msra.mxu0 0
      %1894 = vmatprep.mubr.bf16.mxu0 0
      %1895 = vmatmul.mubr.bf16.gmra.mrb[0].mxu0 %v1817
      %v1896 = vpop.f32.mrb[0].mxu0
      %v1897 = vadd.f32 %v1727, %v1896
      %v1898 = vpop.f32.mrb[0].mxu0
      %v1899 = vadd.f32 %v1731, %v1898
      %v1900 = vpop.f32.mrb[0].mxu0
      %v1901 = vadd.f32 %v1727, %v1900
      %v1902 = vpop.f32.mrb[0].mxu0
      %v1903 = vadd.f32 %v1731, %v1902
      %1904 = vdwg.mxu0
      %1905 = vst [vmem:[#allocation3] sm:$0x3f] -inf
      %1906 = vst [vmem:[#allocation3 + $0x8] sm:$0x3f] -inf
      %1907 = vst [vmem:[#allocation3 + $0x10] sm:$0x3f] -inf
      %1908 = vst [vmem:[#allocation3 + $0x18] sm:$0x3f] -inf
      %1909 = vst [vmem:[#allocation3 + $0x20] sm:$0x3f] -inf
      %1910 = vst [vmem:[#allocation3 + $0x28] sm:$0x3f] -inf
      %1911 = vst [vmem:[#allocation3 + $0x30] sm:$0x3f] -inf
      %1912 = vst [vmem:[#allocation3 + $0x38] sm:$0x3f] -inf
      %1913 = vst [vmem:[#allocation3 + $0x40] sm:$0x3f] -inf
      %1914 = vst [vmem:[#allocation3 + $0x48] sm:$0x3f] -inf
      %1915 = vst [vmem:[#allocation3 + $0x50] sm:$0x3f] -inf
      %1916 = vst [vmem:[#allocation3 + $0x58] sm:$0x3f] -inf
      %1917 = vst [vmem:[#allocation3 + $0x60] sm:$0x3f] -inf
      %1918 = vst [vmem:[#allocation3 + $0x68] sm:$0x3f] -inf
      %1919 = vst [vmem:[#allocation3 + $0x70] sm:$0x3f] -inf
      %1920 = vst [vmem:[#allocation3 + $0x78] sm:$0x3f] -inf
      %1921 = vst [vmem:[#allocation3 + $0x80] sm:$0x3f] -inf
      %1922 = vst [vmem:[#allocation3 + $0x88] sm:$0x3f] -inf
      %1923 = vst [vmem:[#allocation3 + $0x90] sm:$0x3f] -inf
      %1924 = vst [vmem:[#allocation3 + $0x98] sm:$0x3f] -inf
      %1925 = vst [vmem:[#allocation3 + $0xa0] sm:$0x3f] -inf
      %1926 = vst [vmem:[#allocation3 + $0xa8] sm:$0x3f] -inf
      %1927 = vst [vmem:[#allocation3 + $0xb0] sm:$0x3f] -inf
      %1928 = vst [vmem:[#allocation3 + $0xb8] sm:$0x3f] -inf
      %v1937 = vcombine.low %v1854, %v1856
      %v1938 = vcombine.high %v1854, %v1856
      %v1939 = vcombine.low %v1897, %v1899
      %v1940 = vcombine.high %v1897, %v1899
      %v1941 = vcombine.low %v1858, %v1860
      %v1942 = vcombine.high %v1858, %v1860
      %v1943 = vcombine.low %v1901, %v1903
      %v1944 = vcombine.high %v1901, %v1903
      %v1945 = vcombine.high %v1937, %v1937
      %v1946 = vcombine.high %v1939, %v1939
      %v1947 = vcombine.high %v1938, %v1938
      %v1948 = vcombine.high %v1940, %v1940
      %v1949 = vcombine.high %v1941, %v1941
      %v1950 = vcombine.high %v1943, %v1943
      %v1951 = vcombine.high %v1942, %v1942
      %v1952 = vcombine.high %v1944, %v1944
      %v1953 = vrot.slane %v1937, 7
      %v1954 = vrot.slane %v1945, 7
      %v1955 = vrot.slane %v1939, 7
      %v1956 = vrot.slane %v1946, 7
      %v1957 = vrot.slane %v1938, 7
      %v1958 = vrot.slane %v1947, 7
      %v1959 = vrot.slane %v1940, 7
      %v1960 = vrot.slane %v1948, 7
      %v1961 = vrot.slane %v1941, 7
      %v1962 = vrot.slane %v1949, 7
      %v1963 = vrot.slane %v1943, 7
      %v1964 = vrot.slane %v1950, 7
      %v1965 = vrot.slane %v1942, 7
      %v1966 = vrot.slane %v1951, 7
      %v1967 = vrot.slane %v1944, 7
      %v1968 = vrot.slane %v1952, 7
      %s1985 = scalar_lea.vmem [#allocation3], 32
      %1986 = vst [vmem:[%s1985] sm:$0x1e] %v1953
      %1987 = vst [vmem:[%s1985 + $0x8] sm:$0x1e] %v1954
      %1988 = vst [vmem:[%s1985 + $0x10] sm:$0x1e] %v1955
      %1989 = vst [vmem:[%s1985 + $0x18] sm:$0x1e] %v1956
      %1990 = vst [vmem:[%s1985 + $0x20] sm:$0x1e] %v1957
      %1991 = vst [vmem:[%s1985 + $0x28] sm:$0x1e] %v1958
      %1992 = vst [vmem:[%s1985 + $0x30] sm:$0x1e] %v1959
      %1993 = vst [vmem:[%s1985 + $0x38] sm:$0x1e] %v1960
      %1994 = vst [vmem:[%s1985 + $0x40] sm:$0x1e] %v1961
      %1995 = vst [vmem:[%s1985 + $0x48] sm:$0x1e] %v1962
      %1996 = vst [vmem:[%s1985 + $0x50] sm:$0x1e] %v1963
      %1997 = vst [vmem:[%s1985 + $0x58] sm:$0x1e] %v1964
      %1998 = vst [vmem:[%s1985 + $0x60] sm:$0x1e] %v1965
      %1999 = vst [vmem:[%s1985 + $0x68] sm:$0x1e] %v1966
      %2000 = vst [vmem:[%s1985 + $0x70] sm:$0x1e] %v1967
      %2001 = vst [vmem:[%s1985 + $0x78] sm:$0x1e] %v1968
      %v2002 = vld [vmem:[#allocation3] sm:$0xf]
      %v2003 = vld [vmem:[#allocation3 + $0x8] sm:$0xf]
      %v2004 = vld [vmem:[#allocation3 + $0x10] sm:$0xf]
      %v2005 = vld [vmem:[#allocation3 + $0x18] sm:$0xf]
      %v2006 = vld [vmem:[#allocation3 + $0x40] sm:$0xf]
      %v2007 = vld [vmem:[#allocation3 + $0x48] sm:$0xf]
      %v2008 = vld [vmem:[#allocation3 + $0x50] sm:$0xf]
      %v2009 = vld [vmem:[#allocation3 + $0x58] sm:$0xf]
      %v2010 = vld [vmem:[#allocation3] sm:$0x1e]
      %v2011 = vld [vmem:[#allocation3 + $0x8] sm:$0x1e]
      %v2012 = vld [vmem:[#allocation3 + $0x10] sm:$0x1e]
      %v2013 = vld [vmem:[#allocation3 + $0x18] sm:$0x1e]
      %v2014 = vld [vmem:[#allocation3 + $0x40] sm:$0x1e]
      %v2015 = vld [vmem:[#allocation3 + $0x48] sm:$0x1e]
      %v2016 = vld [vmem:[#allocation3 + $0x50] sm:$0x1e]
      %v2017 = vld [vmem:[#allocation3 + $0x58] sm:$0x1e]
      %v2026 = vrot.slane %v2010, 1
      %v2027 = vrot.slane %v2011, 1
      %v2028 = vrot.slane %v2012, 1
      %v2029 = vrot.slane %v2013, 1
      %v2030 = vrot.slane %v2014, 1
      %v2031 = vrot.slane %v2015, 1
      %v2032 = vrot.slane %v2016, 1
      %v2033 = vrot.slane %v2017, 1
      %v2042 = vmax.f32 %v2002, %v2026
      %v2043 = vmax.f32 %v2003, %v2027
      %v2044 = vmax.f32 %v2004, %v2028
      %v2045 = vmax.f32 %v2005, %v2029
      %v2046 = vmax.f32 %v2006, %v2030
      %v2047 = vmax.f32 %v2007, %v2031
      %v2048 = vmax.f32 %v2008, %v2032
      %v2049 = vmax.f32 %v2009, %v2033
      %v2050 = vld [vmem:[#allocation3] sm:$0x3c]
      %v2051 = vld [vmem:[#allocation3 + $0x8] sm:$0x3c]
      %v2052 = vld [vmem:[#allocation3 + $0x10] sm:$0x3c]
      %v2053 = vld [vmem:[#allocation3 + $0x18] sm:$0x3c]
      %v2054 = vld [vmem:[#allocation3 + $0x40] sm:$0x3c]
      %v2055 = vld [vmem:[#allocation3 + $0x48] sm:$0x3c]
      %v2056 = vld [vmem:[#allocation3 + $0x50] sm:$0x3c]
      %v2057 = vld [vmem:[#allocation3 + $0x58] sm:$0x3c]
      %v2066 = vrot.slane %v2050, 2
      %v2067 = vrot.slane %v2051, 2
      %v2068 = vrot.slane %v2052, 2
      %v2069 = vrot.slane %v2053, 2
      %v2070 = vrot.slane %v2054, 2
      %v2071 = vrot.slane %v2055, 2
      %v2072 = vrot.slane %v2056, 2
      %v2073 = vrot.slane %v2057, 2
      %v2082 = vmax.f32 %v2042, %v2066
      %v2083 = vmax.f32 %v2043, %v2067
      %v2084 = vmax.f32 %v2044, %v2068
      %v2085 = vmax.f32 %v2045, %v2069
      %v2086 = vmax.f32 %v2046, %v2070
      %v2087 = vmax.f32 %v2047, %v2071
      %v2088 = vmax.f32 %v2048, %v2072
      %v2089 = vmax.f32 %v2049, %v2073
      %v2090 = vld [vmem:[%s1985] sm:$0xf]
      %v2091 = vld [vmem:[%s1985 + $0x8] sm:$0xf]
      %v2092 = vld [vmem:[%s1985 + $0x10] sm:$0xf]
      %v2093 = vld [vmem:[%s1985 + $0x18] sm:$0xf]
      %v2094 = vld [vmem:[%s1985 + $0x40] sm:$0xf]
      %v2095 = vld [vmem:[%s1985 + $0x48] sm:$0xf]
      %v2096 = vld [vmem:[%s1985 + $0x50] sm:$0xf]
      %v2097 = vld [vmem:[%s1985 + $0x58] sm:$0xf]
      %v2098 = vmax.f32 %v2082, %v2090
      %v2099 = vmax.f32 %v2083, %v2091
      %v2100 = vmax.f32 %v2084, %v2092
      %v2101 = vmax.f32 %v2085, %v2093
      %v2102 = vmax.f32 %v2086, %v2094
      %v2103 = vmax.f32 %v2087, %v2095
      %v2104 = vmax.f32 %v2088, %v2096
      %v2105 = vmax.f32 %v2089, %v2097
      %v2106 = vld [vmem:[%s1985] sm:$0x1e]
      %v2107 = vld [vmem:[%s1985 + $0x8] sm:$0x1e]
      %v2108 = vld [vmem:[%s1985 + $0x10] sm:$0x1e]
      %v2109 = vld [vmem:[%s1985 + $0x18] sm:$0x1e]
      %v2110 = vld [vmem:[%s1985 + $0x40] sm:$0x1e]
      %v2111 = vld [vmem:[%s1985 + $0x48] sm:$0x1e]
      %v2112 = vld [vmem:[%s1985 + $0x50] sm:$0x1e]
      %v2113 = vld [vmem:[%s1985 + $0x58] sm:$0x1e]
      %v2122 = vrot.slane %v2106, 1
      %v2123 = vrot.slane %v2107, 1
      %v2124 = vrot.slane %v2108, 1
      %v2125 = vrot.slane %v2109, 1
      %v2126 = vrot.slane %v2110, 1
      %v2127 = vrot.slane %v2111, 1
      %v2128 = vrot.slane %v2112, 1
      %v2129 = vrot.slane %v2113, 1
      %v2138 = vmax.f32 %v2098, %v2122
      %v2139 = vmax.f32 %v2099, %v2123
      %v2140 = vmax.f32 %v2100, %v2124
      %v2141 = vmax.f32 %v2101, %v2125
      %v2142 = vmax.f32 %v2102, %v2126
      %v2143 = vmax.f32 %v2103, %v2127
      %v2144 = vmax.f32 %v2104, %v2128
      %v2145 = vmax.f32 %v2105, %v2129
      %v2146 = vld [vmem:[%s1985] sm:$0x3c]
      %v2147 = vld [vmem:[%s1985 + $0x8] sm:$0x3c]
      %v2148 = vld [vmem:[%s1985 + $0x10] sm:$0x3c]
      %v2149 = vld [vmem:[%s1985 + $0x18] sm:$0x3c]
      %v2150 = vld [vmem:[%s1985 + $0x40] sm:$0x3c]
      %v2151 = vld [vmem:[%s1985 + $0x48] sm:$0x3c]
      %v2152 = vld [vmem:[%s1985 + $0x50] sm:$0x3c]
      %v2153 = vld [vmem:[%s1985 + $0x58] sm:$0x3c]
      %v2162 = vrot.slane %v2146, 2
      %v2163 = vrot.slane %v2147, 2
      %v2164 = vrot.slane %v2148, 2
      %v2165 = vrot.slane %v2149, 2
      %v2166 = vrot.slane %v2150, 2
      %v2167 = vrot.slane %v2151, 2
      %v2168 = vrot.slane %v2152, 2
      %v2169 = vrot.slane %v2153, 2
      %v2178 = vmax.f32 %v2138, %v2162
      %v2179 = vmax.f32 %v2139, %v2163
      %v2180 = vmax.f32 %v2140, %v2164
      %v2181 = vmax.f32 %v2141, %v2165
      %v2182 = vmax.f32 %v2142, %v2166
      %v2183 = vmax.f32 %v2143, %v2167
      %v2184 = vmax.f32 %v2144, %v2168
      %v2185 = vmax.f32 %v2145, %v2169
      %s2186 = scalar_lea.vmem [#allocation3], 64
      %v2187 = vld [vmem:[%s2186] sm:$0xf]
      %v2188 = vld [vmem:[%s2186 + $0x8] sm:$0xf]
      %v2189 = vld [vmem:[%s2186 + $0x10] sm:$0xf]
      %v2190 = vld [vmem:[%s2186 + $0x18] sm:$0xf]
      %v2191 = vld [vmem:[%s2186 + $0x40] sm:$0xf]
      %v2192 = vld [vmem:[%s2186 + $0x48] sm:$0xf]
      %v2193 = vld [vmem:[%s2186 + $0x50] sm:$0xf]
      %v2194 = vld [vmem:[%s2186 + $0x58] sm:$0xf]
      %v2195 = vmax.f32 %v2178, %v2187
      %v2196 = vmax.f32 %v2179, %v2188
      %v2197 = vmax.f32 %v2180, %v2189
      %v2198 = vmax.f32 %v2181, %v2190
      %v2199 = vmax.f32 %v2182, %v2191
      %v2200 = vmax.f32 %v2183, %v2192
      %v2201 = vmax.f32 %v2184, %v2193
      %v2202 = vmax.f32 %v2185, %v2194
      %v2203 = vld [vmem:[%s2186] sm:$0x1e]
      %v2204 = vld [vmem:[%s2186 + $0x8] sm:$0x1e]
      %v2205 = vld [vmem:[%s2186 + $0x10] sm:$0x1e]
      %v2206 = vld [vmem:[%s2186 + $0x18] sm:$0x1e]
      %v2207 = vld [vmem:[%s2186 + $0x40] sm:$0x1e]
      %v2208 = vld [vmem:[%s2186 + $0x48] sm:$0x1e]
      %v2209 = vld [vmem:[%s2186 + $0x50] sm:$0x1e]
      %v2210 = vld [vmem:[%s2186 + $0x58] sm:$0x1e]
      %v2219 = vrot.slane %v2203, 1
      %v2220 = vrot.slane %v2204, 1
      %v2221 = vrot.slane %v2205, 1
      %v2222 = vrot.slane %v2206, 1
      %v2223 = vrot.slane %v2207, 1
      %v2224 = vrot.slane %v2208, 1
      %v2225 = vrot.slane %v2209, 1
      %v2226 = vrot.slane %v2210, 1
      %v2235 = vmax.f32 %v2195, %v2219
      %v2236 = vmax.f32 %v2196, %v2220
      %v2237 = vmax.f32 %v2197, %v2221
      %v2238 = vmax.f32 %v2198, %v2222
      %v2239 = vmax.f32 %v2199, %v2223
      %v2240 = vmax.f32 %v2200, %v2224
      %v2241 = vmax.f32 %v2201, %v2225
      %v2242 = vmax.f32 %v2202, %v2226
      %v2243 = vld [vmem:[%s2186] sm:$0x3c]
      %v2244 = vld [vmem:[%s2186 + $0x8] sm:$0x3c]
      %v2245 = vld [vmem:[%s2186 + $0x10] sm:$0x3c]
      %v2246 = vld [vmem:[%s2186 + $0x18] sm:$0x3c]
      %v2247 = vld [vmem:[%s2186 + $0x40] sm:$0x3c]
      %v2248 = vld [vmem:[%s2186 + $0x48] sm:$0x3c]
      %v2249 = vld [vmem:[%s2186 + $0x50] sm:$0x3c]
      %v2250 = vld [vmem:[%s2186 + $0x58] sm:$0x3c]
      %v2259 = vrot.slane %v2243, 2
      %v2260 = vrot.slane %v2244, 2
      %v2261 = vrot.slane %v2245, 2
      %v2262 = vrot.slane %v2246, 2
      %v2263 = vrot.slane %v2247, 2
      %v2264 = vrot.slane %v2248, 2
      %v2265 = vrot.slane %v2249, 2
      %v2266 = vrot.slane %v2250, 2
      %v2275 = vmax.f32 %v2235, %v2259
      %v2276 = vmax.f32 %v2236, %v2260
      %v2277 = vmax.f32 %v2237, %v2261
      %v2278 = vmax.f32 %v2238, %v2262
      %v2279 = vmax.f32 %v2239, %v2263
      %v2280 = vmax.f32 %v2240, %v2264
      %v2281 = vmax.f32 %v2241, %v2265
      %v2282 = vmax.f32 %v2242, %v2266
      %v2291 = vrot.slane %v2275, 1
      %v2292 = vrot.slane %v2276, 1
      %v2293 = vrot.slane %v2277, 1
      %v2294 = vrot.slane %v2278, 1
      %v2295 = vrot.slane %v2279, 1
      %v2296 = vrot.slane %v2280, 1
      %v2297 = vrot.slane %v2281, 1
      %v2298 = vrot.slane %v2282, 1
      %vm2307 = vcmask 1040384
      %v2308 = vsel %vm2307, %v2275, %v2291
      %v2309 = vsel %vm2307, %v2276, %v2292
      %v2310 = vsel %vm2307, %v2277, %v2293
      %v2311 = vsel %vm2307, %v2278, %v2294
      %v2312 = vsel %vm2307, %v2279, %v2295
      %v2313 = vsel %vm2307, %v2280, %v2296
      %v2314 = vsel %vm2307, %v2281, %v2297
      %v2315 = vsel %vm2307, %v2282, %v2298
      %v2324 = vcombine.low %v2308, %v2309
      %v2325 = vcombine.low %v2310, %v2311
      %v2327 = vunpack.c.l.s4 1983009808
      %v2328 = vunpack.c.0.s8 %v2327
      %v2329 = vlaneseq
      %v2330 = vshrl.u32 %v2329, 7
      %v2331 = vsub.s32 %v2328, %v2330
      %v2332 = vrot.slane %v2324, %v2331
      %v2334 = vunpack.c.l.s4 1983009808
      %v2335 = vunpack.c.0.s8 %v2334
      %v2336 = vlaneseq
      %v2337 = vshrl.u32 %v2336, 7
      %v2338 = vsub.s32 %v2335, %v2337
      %v2339 = vrot.slane %v2325, %v2338
      %v2340 = vcombine.low %v2332, %v2339
      %v2341 = vcombine.low %v2312, %v2313
      %v2342 = vcombine.low %v2314, %v2315
      %v2344 = vunpack.c.l.s4 1983009808
      %v2345 = vunpack.c.0.s8 %v2344
      %v2346 = vlaneseq
      %v2347 = vshrl.u32 %v2346, 7
      %v2348 = vsub.s32 %v2345, %v2347
      %v2349 = vrot.slane %v2341, %v2348
      %v2351 = vunpack.c.l.s4 1983009808
      %v2352 = vunpack.c.0.s8 %v2351
      %v2353 = vlaneseq
      %v2354 = vshrl.u32 %v2353, 7
      %v2355 = vsub.s32 %v2352, %v2354
      %v2356 = vrot.slane %v2342, %v2355
      %v2357 = vcombine.low %v2349, %v2356
      %v2361 = vunpack.c.l.s4 1983009808
      %v2362 = vunpack.c.0.s8 %v2361
      %v2363 = vlaneseq
      %v2364 = vshrl.u32 %v2363, 7
      %v2365 = vsub.s32 %v2362, %v2364
      %v2366 = vrot.slane %v334, %v2365
      %v2368 = vunpack.c.l.s4 1983009808
      %v2369 = vunpack.c.0.s8 %v2368
      %v2370 = vlaneseq
      %v2371 = vshrl.u32 %v2370, 7
      %v2372 = vsub.s32 %v2369, %v2371
      %v2373 = vrot.slane %v335, %v2372
      %v2375 = vunpack.c.l.s4 1983009808
      %v2376 = vunpack.c.0.s8 %v2375
      %v2377 = vlaneseq
      %v2378 = vshrl.u32 %v2377, 7
      %v2379 = vsub.s32 %v2376, %v2378
      %v2380 = vrot.slane %v2366, %v2379
      %v2381 = vcombine.high %v2380, %v2380
      %v2383 = vunpack.c.l.s4 1983009808
      %v2384 = vunpack.c.0.s8 %v2383
      %v2385 = vlaneseq
      %v2386 = vshrl.u32 %v2385, 7
      %v2387 = vsub.s32 %v2384, %v2386
      %v2388 = vrot.slane %v2373, %v2387
      %v2389 = vcombine.high %v2388, %v2388
      %v2395 = vshll.u32 %v2380, 16
      %v2397 = vrot.slane %v2395, 1
      %v2399 = vshll.u32 %v2381, 16
      %v2401 = vrot.slane %v2399, 1
      %v2403 = vshll.u32 %v2388, 16
      %v2405 = vrot.slane %v2403, 1
      %v2407 = vshll.u32 %v2389, 16
      %v2409 = vrot.slane %v2407, 1
      %vm2414 = vsmask.f32 256
      %vm2415 = vmand %vm748, %vm2414
      %v2416 = vsel %vm2415, %v2380, %v2397
      %v2417 = vsel %vm2415, %v2381, %v2401
      %v2418 = vsel %vm2415, %v2388, %v2405
      %v2419 = vsel %vm2415, %v2389, %v2409
      %v2424 = vcombine.low %v2416, %v2417
      %v2426 = vunpack.c.l.s4 1966171168
      %v2427 = vunpack.c.0.s8 %v2426
      %v2428 = vlaneseq
      %v2429 = vshrl.u32 %v2428, 7
      %v2430 = vsub.s32 %v2427, %v2429
      %v2431 = vrot.slane %v2424, %v2430
      %v2433 = vunpack.c.l.s4 1966171168
      %v2434 = vunpack.c.0.s8 %v2433
      %v2435 = vlaneseq
      %v2436 = vshrl.u32 %v2435, 7
      %v2437 = vsub.s32 %v2434, %v2436
      %v2438 = vrot.slane %v2431, %v2437
      %v2439 = vcombine.low %v2418, %v2419
      %v2441 = vunpack.c.l.s4 1966171168
      %v2442 = vunpack.c.0.s8 %v2441
      %v2443 = vlaneseq
      %v2444 = vshrl.u32 %v2443, 7
      %v2445 = vsub.s32 %v2442, %v2444
      %v2446 = vrot.slane %v2439, %v2445
      %v2448 = vunpack.c.l.s4 1966171168
      %v2449 = vunpack.c.0.s8 %v2448
      %v2450 = vlaneseq
      %v2451 = vshrl.u32 %v2450, 7
      %v2452 = vsub.s32 %v2449, %v2451
      %v2453 = vrot.slane %v2446, %v2452
      %v2454 = vld [vmem:[%s3] sm:$0xff]
      %v2455 = vld [vmem:[%s3 + $0x8] sm:$0xff]
      %v2456 = vld [vmem:[%s3 + $0x10] sm:$0xff]
      %v2457 = vld [vmem:[%s3 + $0x18] sm:$0xff]
      %v2458 = vld [vmem:[%s3 + $0x20] sm:$0xff]
      %v2459 = vld [vmem:[%s3 + $0x28] sm:$0xff]
      %v2460 = vld [vmem:[%s3 + $0x30] sm:$0xff]
      %v2461 = vld [vmem:[%s3 + $0x38] sm:$0xff]
      %v2462 = vld [vmem:[%s3 + $0x40] sm:$0xff]
      %v2463 = vld [vmem:[%s3 + $0x48] sm:$0xff]
      %v2464 = vld [vmem:[%s3 + $0x50] sm:$0xff]
      %v2465 = vld [vmem:[%s3 + $0x58] sm:$0xff]
      %v2466 = vld [vmem:[%s3 + $0x60] sm:$0xff]
      %v2467 = vld [vmem:[%s3 + $0x68] sm:$0xff]
      %v2468 = vld [vmem:[%s3 + $0x70] sm:$0xff]
      %v2469 = vld [vmem:[%s3 + $0x78] sm:$0xff]
      %v2470 = vld [vmem:[%s3 + $0x80] sm:$0xff]
      %v2471 = vld [vmem:[%s3 + $0x88] sm:$0xff]
      %v2472 = vld [vmem:[%s3 + $0x90] sm:$0xff]
      %v2473 = vld [vmem:[%s3 + $0x98] sm:$0xff]
      %v2474 = vld [vmem:[%s3 + $0xa0] sm:$0xff]
      %v2475 = vld [vmem:[%s3 + $0xa8] sm:$0xff]
      %v2476 = vld [vmem:[%s3 + $0xb0] sm:$0xff]
      %v2477 = vld [vmem:[%s3 + $0xb8] sm:$0xff]
      %v2478 = vld [vmem:[%s3 + $0xc0] sm:$0xff]
      %v2479 = vld [vmem:[%s3 + $0xc8] sm:$0xff]
      %v2480 = vld [vmem:[%s3 + $0xd0] sm:$0xff]
      %v2481 = vld [vmem:[%s3 + $0xd8] sm:$0xff]
      %v2482 = vld [vmem:[%s3 + $0xe0] sm:$0xff]
      %v2483 = vld [vmem:[%s3 + $0xe8] sm:$0xff]
      %v2484 = vld [vmem:[%s3 + $0xf0] sm:$0xff]
      %v2485 = vld [vmem:[%s3 + $0xf8] sm:$0xff]
      %v2486 = vld [vmem:[%s3 + $0x100] sm:$0xff]
      %v2487 = vld [vmem:[%s3 + $0x108] sm:$0xff]
      %v2488 = vld [vmem:[%s3 + $0x110] sm:$0xff]
      %v2489 = vld [vmem:[%s3 + $0x118] sm:$0xff]
      %v2490 = vld [vmem:[%s3 + $0x120] sm:$0xff]
      %v2491 = vld [vmem:[%s3 + $0x128] sm:$0xff]
      %v2492 = vld [vmem:[%s3 + $0x130] sm:$0xff]
      %v2493 = vld [vmem:[%s3 + $0x138] sm:$0xff]
      %v2494 = vld [vmem:[%s3 + $0x140] sm:$0xff]
      %v2495 = vld [vmem:[%s3 + $0x148] sm:$0xff]
      %v2496 = vld [vmem:[%s3 + $0x150] sm:$0xff]
      %v2497 = vld [vmem:[%s3 + $0x158] sm:$0xff]
      %v2498 = vld [vmem:[%s3 + $0x160] sm:$0xff]
      %v2499 = vld [vmem:[%s3 + $0x168] sm:$0xff]
      %v2500 = vld [vmem:[%s3 + $0x170] sm:$0xff]
      %v2501 = vld [vmem:[%s3 + $0x178] sm:$0xff]
      %v2502 = vld [vmem:[%s3 + $0x180] sm:$0xff]
      %v2503 = vld [vmem:[%s3 + $0x188] sm:$0xff]
      %v2504 = vld [vmem:[%s3 + $0x190] sm:$0xff]
      %v2505 = vld [vmem:[%s3 + $0x198] sm:$0xff]
      %v2506 = vld [vmem:[%s3 + $0x1a0] sm:$0xff]
      %v2507 = vld [vmem:[%s3 + $0x1a8] sm:$0xff]
      %v2508 = vld [vmem:[%s3 + $0x1b0] sm:$0xff]
      %v2509 = vld [vmem:[%s3 + $0x1b8] sm:$0xff]
      %v2510 = vld [vmem:[%s3 + $0x1c0] sm:$0xff]
      %v2511 = vld [vmem:[%s3 + $0x1c8] sm:$0xff]
      %v2512 = vld [vmem:[%s3 + $0x1d0] sm:$0xff]
      %v2513 = vld [vmem:[%s3 + $0x1d8] sm:$0xff]
      %v2514 = vld [vmem:[%s3 + $0x1e0] sm:$0xff]
      %v2515 = vld [vmem:[%s3 + $0x1e8] sm:$0xff]
      %v2516 = vld [vmem:[%s3 + $0x1f0] sm:$0xff]
      %v2517 = vld [vmem:[%s3 + $0x1f8] sm:$0xff]
      %v2518 = vld [vmem:[%s4] sm:$0xf]
      %v2520 = vlaneseq
      %v2521 = vshrl.u32 %v2520, 7
      %v2522 = vsub.s32 0, %v2521
      %v2523 = vrot.slane %v2518, %v2522
      %v2524 = vlaneseq
      %v2525 = vshrl.u32 %v2524, 7
      %v2526 = vsub.s32 1, %v2525
      %v2527 = vrot.slane %v2518, %v2526
      %v2528 = vlaneseq
      %v2529 = vshrl.u32 %v2528, 7
      %v2530 = vsub.s32 2, %v2529
      %v2531 = vrot.slane %v2518, %v2530
      %v2532 = vlaneseq
      %v2533 = vshrl.u32 %v2532, 7
      %v2534 = vsub.s32 3, %v2533
      %v2535 = vrot.slane %v2518, %v2534
      %v2540 = vcombine.low %v2438, %v2453
      %v2542 = vunpack.c.l.s4 1966171168
      %v2543 = vunpack.c.0.s8 %v2542
      %v2544 = vlaneseq
      %v2545 = vshrl.u32 %v2544, 7
      %v2546 = vsub.s32 %v2543, %v2545
      %v2547 = vrot.slane %v2540, %v2546
      %v2548 = vcombine.high %v2547, %v2547
      %v2550 = vunpack.c.l.s4 1966171168
      %v2551 = vunpack.c.0.s8 %v2550
      %v2552 = vlaneseq
      %v2553 = vshrl.u32 %v2552, 7
      %v2554 = vsub.s32 %v2551, %v2553
      %v2555 = vrot.slane %v2547, %v2554
      %v2557 = vunpack.c.l.s4 1966171168
      %v2558 = vunpack.c.0.s8 %v2557
      %v2559 = vlaneseq
      %v2560 = vshrl.u32 %v2559, 7
      %v2561 = vsub.s32 %v2558, %v2560
      %v2562 = vrot.slane %v2548, %v2561
      %v2629 = vunpack.c.l.b16 %v2454
      %v2630 = vunpack.c.h.b16 %v2454
      %v2631 = vunpack.c.l.b16 %v2455
      %v2632 = vunpack.c.h.b16 %v2455
      %v2633 = vunpack.c.l.b16 %v2456
      %v2634 = vunpack.c.h.b16 %v2456
      %v2635 = vunpack.c.l.b16 %v2457
      %v2636 = vunpack.c.h.b16 %v2457
      %v2637 = vunpack.c.l.b16 %v2458
      %v2638 = vunpack.c.h.b16 %v2458
      %v2639 = vunpack.c.l.b16 %v2459
      %v2640 = vunpack.c.h.b16 %v2459
      %v2641 = vunpack.c.l.b16 %v2460
      %v2642 = vunpack.c.h.b16 %v2460
      %v2643 = vunpack.c.l.b16 %v2461
      %v2644 = vunpack.c.h.b16 %v2461
      %v2645 = vunpack.c.l.b16 %v2462
      %v2646 = vunpack.c.h.b16 %v2462
      %v2647 = vunpack.c.l.b16 %v2463
      %v2648 = vunpack.c.h.b16 %v2463
      %v2649 = vunpack.c.l.b16 %v2464
      %v2650 = vunpack.c.h.b16 %v2464
      %v2651 = vunpack.c.l.b16 %v2465
      %v2652 = vunpack.c.h.b16 %v2465
      %v2653 = vunpack.c.l.b16 %v2466
      %v2654 = vunpack.c.h.b16 %v2466
      %v2655 = vunpack.c.l.b16 %v2467
      %v2656 = vunpack.c.h.b16 %v2467
      %v2657 = vunpack.c.l.b16 %v2468
      %v2658 = vunpack.c.h.b16 %v2468
      %v2659 = vunpack.c.l.b16 %v2469
      %v2660 = vunpack.c.h.b16 %v2469
      %v2661 = vunpack.c.l.b16 %v2470
      %v2662 = vunpack.c.h.b16 %v2470
      %v2663 = vunpack.c.l.b16 %v2471
      %v2664 = vunpack.c.h.b16 %v2471
      %v2665 = vunpack.c.l.b16 %v2472
      %v2666 = vunpack.c.h.b16 %v2472
      %v2667 = vunpack.c.l.b16 %v2473
      %v2668 = vunpack.c.h.b16 %v2473
      %v2669 = vunpack.c.l.b16 %v2474
      %v2670 = vunpack.c.h.b16 %v2474
      %v2671 = vunpack.c.l.b16 %v2475
      %v2672 = vunpack.c.h.b16 %v2475
      %v2673 = vunpack.c.l.b16 %v2476
      %v2674 = vunpack.c.h.b16 %v2476
      %v2675 = vunpack.c.l.b16 %v2477
      %v2676 = vunpack.c.h.b16 %v2477
      %v2677 = vunpack.c.l.b16 %v2478
      %v2678 = vunpack.c.h.b16 %v2478
      %v2679 = vunpack.c.l.b16 %v2479
      %v2680 = vunpack.c.h.b16 %v2479
      %v2681 = vunpack.c.l.b16 %v2480
      %v2682 = vunpack.c.h.b16 %v2480
      %v2683 = vunpack.c.l.b16 %v2481
      %v2684 = vunpack.c.h.b16 %v2481
      %v2685 = vunpack.c.l.b16 %v2482
      %v2686 = vunpack.c.h.b16 %v2482
      %v2687 = vunpack.c.l.b16 %v2483
      %v2688 = vunpack.c.h.b16 %v2483
      %v2689 = vunpack.c.l.b16 %v2484
      %v2690 = vunpack.c.h.b16 %v2484
      %v2691 = vunpack.c.l.b16 %v2485
      %v2692 = vunpack.c.h.b16 %v2485
      %v2693 = vunpack.c.l.b16 %v2486
      %v2694 = vunpack.c.h.b16 %v2486
      %v2695 = vunpack.c.l.b16 %v2487
      %v2696 = vunpack.c.h.b16 %v2487
      %v2697 = vunpack.c.l.b16 %v2488
      %v2698 = vunpack.c.h.b16 %v2488
      %v2699 = vunpack.c.l.b16 %v2489
      %v2700 = vunpack.c.h.b16 %v2489
      %v2701 = vunpack.c.l.b16 %v2490
      %v2702 = vunpack.c.h.b16 %v2490
      %v2703 = vunpack.c.l.b16 %v2491
      %v2704 = vunpack.c.h.b16 %v2491
      %v2705 = vunpack.c.l.b16 %v2492
      %v2706 = vunpack.c.h.b16 %v2492
      %v2707 = vunpack.c.l.b16 %v2493
      %v2708 = vunpack.c.h.b16 %v2493
      %v2709 = vunpack.c.l.b16 %v2494
      %v2710 = vunpack.c.h.b16 %v2494
      %v2711 = vunpack.c.l.b16 %v2495
      %v2712 = vunpack.c.h.b16 %v2495
      %v2713 = vunpack.c.l.b16 %v2496
      %v2714 = vunpack.c.h.b16 %v2496
      %v2715 = vunpack.c.l.b16 %v2497
      %v2716 = vunpack.c.h.b16 %v2497
      %v2717 = vunpack.c.l.b16 %v2498
      %v2718 = vunpack.c.h.b16 %v2498
      %v2719 = vunpack.c.l.b16 %v2499
      %v2720 = vunpack.c.h.b16 %v2499
      %v2721 = vunpack.c.l.b16 %v2500
      %v2722 = vunpack.c.h.b16 %v2500
      %v2723 = vunpack.c.l.b16 %v2501
      %v2724 = vunpack.c.h.b16 %v2501
      %v2725 = vunpack.c.l.b16 %v2502
      %v2726 = vunpack.c.h.b16 %v2502
      %v2727 = vunpack.c.l.b16 %v2503
      %v2728 = vunpack.c.h.b16 %v2503
      %v2729 = vunpack.c.l.b16 %v2504
      %v2730 = vunpack.c.h.b16 %v2504
      %v2731 = vunpack.c.l.b16 %v2505
      %v2732 = vunpack.c.h.b16 %v2505
      %v2733 = vunpack.c.l.b16 %v2506
      %v2734 = vunpack.c.h.b16 %v2506
      %v2735 = vunpack.c.l.b16 %v2507
      %v2736 = vunpack.c.h.b16 %v2507
      %v2737 = vunpack.c.l.b16 %v2508
      %v2738 = vunpack.c.h.b16 %v2508
      %v2739 = vunpack.c.l.b16 %v2509
      %v2740 = vunpack.c.h.b16 %v2509
      %v2741 = vunpack.c.l.b16 %v2510
      %v2742 = vunpack.c.h.b16 %v2510
      %v2743 = vunpack.c.l.b16 %v2511
      %v2744 = vunpack.c.h.b16 %v2511
      %v2745 = vunpack.c.l.b16 %v2512
      %v2746 = vunpack.c.h.b16 %v2512
      %v2747 = vunpack.c.l.b16 %v2513
      %v2748 = vunpack.c.h.b16 %v2513
      %v2749 = vunpack.c.l.b16 %v2514
      %v2750 = vunpack.c.h.b16 %v2514
      %v2751 = vunpack.c.l.b16 %v2515
      %v2752 = vunpack.c.h.b16 %v2515
      %v2753 = vunpack.c.l.b16 %v2516
      %v2754 = vunpack.c.h.b16 %v2516
      %v2755 = vunpack.c.l.b16 %v2517
      %v2756 = vunpack.c.h.b16 %v2517
      %v2757 = vpack.c.b16 %v2633, %v2629
      %v2758 = vpack.c.b16 %v2634, %v2630
      %v2759 = vpack.c.b16 %v2635, %v2631
      %v2760 = vpack.c.b16 %v2636, %v2632
      %v2761 = vpack.c.b16 %v2641, %v2637
      %v2762 = vpack.c.b16 %v2642, %v2638
      %v2763 = vpack.c.b16 %v2643, %v2639
      %v2764 = vpack.c.b16 %v2644, %v2640
      %v2765 = vpack.c.b16 %v2649, %v2645
      %v2766 = vpack.c.b16 %v2650, %v2646
      %v2767 = vpack.c.b16 %v2651, %v2647
      %v2768 = vpack.c.b16 %v2652, %v2648
      %v2769 = vpack.c.b16 %v2657, %v2653
      %v2770 = vpack.c.b16 %v2658, %v2654
      %v2771 = vpack.c.b16 %v2659, %v2655
      %v2772 = vpack.c.b16 %v2660, %v2656
      %v2773 = vpack.c.b16 %v2665, %v2661
      %v2774 = vpack.c.b16 %v2666, %v2662
      %v2775 = vpack.c.b16 %v2667, %v2663
      %v2776 = vpack.c.b16 %v2668, %v2664
      %v2777 = vpack.c.b16 %v2673, %v2669
      %v2778 = vpack.c.b16 %v2674, %v2670
      %v2779 = vpack.c.b16 %v2675, %v2671
      %v2780 = vpack.c.b16 %v2676, %v2672
      %v2781 = vpack.c.b16 %v2681, %v2677
      %v2782 = vpack.c.b16 %v2682, %v2678
      %v2783 = vpack.c.b16 %v2683, %v2679
      %v2784 = vpack.c.b16 %v2684, %v2680
      %v2785 = vpack.c.b16 %v2689, %v2685
      %v2786 = vpack.c.b16 %v2690, %v2686
      %v2787 = vpack.c.b16 %v2691, %v2687
      %v2788 = vpack.c.b16 %v2692, %v2688
      %v2789 = vpack.c.b16 %v2697, %v2693
      %v2790 = vpack.c.b16 %v2698, %v2694
      %v2791 = vpack.c.b16 %v2699, %v2695
      %v2792 = vpack.c.b16 %v2700, %v2696
      %v2793 = vpack.c.b16 %v2705, %v2701
      %v2794 = vpack.c.b16 %v2706, %v2702
      %v2795 = vpack.c.b16 %v2707, %v2703
      %v2796 = vpack.c.b16 %v2708, %v2704
      %v2797 = vpack.c.b16 %v2713, %v2709
      %v2798 = vpack.c.b16 %v2714, %v2710
      %v2799 = vpack.c.b16 %v2715, %v2711
      %v2800 = vpack.c.b16 %v2716, %v2712
      %v2801 = vpack.c.b16 %v2721, %v2717
      %v2802 = vpack.c.b16 %v2722, %v2718
      %v2803 = vpack.c.b16 %v2723, %v2719
      %v2804 = vpack.c.b16 %v2724, %v2720
      %v2805 = vpack.c.b16 %v2729, %v2725
      %v2806 = vpack.c.b16 %v2730, %v2726
      %v2807 = vpack.c.b16 %v2731, %v2727
      %v2808 = vpack.c.b16 %v2732, %v2728
      %v2809 = vpack.c.b16 %v2737, %v2733
      %v2810 = vpack.c.b16 %v2738, %v2734
      %v2811 = vpack.c.b16 %v2739, %v2735
      %v2812 = vpack.c.b16 %v2740, %v2736
      %v2813 = vpack.c.b16 %v2745, %v2741
      %v2814 = vpack.c.b16 %v2746, %v2742
      %v2815 = vpack.c.b16 %v2747, %v2743
      %v2816 = vpack.c.b16 %v2748, %v2744
      %v2817 = vpack.c.b16 %v2753, %v2749
      %v2818 = vpack.c.b16 %v2754, %v2750
      %v2819 = vpack.c.b16 %v2755, %v2751
      %v2820 = vpack.c.b16 %v2756, %v2752
      %2885 = vmatprep.subr.bf16.mxu0 %v2758
      %2886 = vmatpush1.bf16.msra.mxu0 %v2757
      %2887 = vmatprep.subr.bf16.mxu0 %v2762
      %2888 = vmatpush1.bf16.msra.mxu0 %v2761
      %2889 = vmatprep.subr.bf16.mxu0 %v2766
      %2890 = vmatpush1.bf16.msra.mxu0 %v2765
      %2891 = vmatprep.subr.bf16.mxu0 %v2770
      %2892 = vmatpush1.bf16.msra.mxu0 %v2769
      %2893 = vmatprep.subr.bf16.mxu0 %v2774
      %2894 = vmatpush1.bf16.msra.mxu0 %v2773
      %2895 = vmatprep.subr.bf16.mxu0 %v2778
      %2896 = vmatpush1.bf16.msra.mxu0 %v2777
      %2897 = vmatprep.subr.bf16.mxu0 %v2782
      %2898 = vmatpush1.bf16.msra.mxu0 %v2781
      %2899 = vmatprep.subr.bf16.mxu0 %v2786
      %2900 = vmatpush1.bf16.msra.mxu0 %v2785
      %2901 = vmatprep.subr.bf16.mxu0 %v2790
      %2902 = vmatpush1.bf16.msra.mxu0 %v2789
      %2903 = vmatprep.subr.bf16.mxu0 %v2794
      %2904 = vmatpush1.bf16.msra.mxu0 %v2793
      %2905 = vmatprep.subr.bf16.mxu0 %v2798
      %2906 = vmatpush1.bf16.msra.mxu0 %v2797
      %2907 = vmatprep.subr.bf16.mxu0 %v2802
      %2908 = vmatpush1.bf16.msra.mxu0 %v2801
      %2909 = vmatprep.subr.bf16.mxu0 %v2806
      %2910 = vmatpush1.bf16.msra.mxu0 %v2805
      %2911 = vmatprep.subr.bf16.mxu0 %v2810
      %2912 = vmatpush1.bf16.msra.mxu0 %v2809
      %2913 = vmatprep.subr.bf16.mxu0 %v2814
      %2914 = vmatpush1.bf16.msra.mxu0 %v2813
      %2915 = vmatprep.subr.bf16.mxu0 %v2818
      %2916 = vmatpush1.bf16.msra.mxu0 %v2817
      %2917 = vmatprep.mubr.bf16.mxu0 %v2562
      %2918 = vmatmul.mubr.bf16.gmra.mrb[0].mxu0 %v2555
      %v2919 = vpop.f32.mrb[0].mxu0
      %v2920 = vadd.f32 %v2523, %v2919
      %v2921 = vpop.f32.mrb[0].mxu0
      %v2922 = vadd.f32 %v2527, %v2921
      %v2923 = vpop.f32.mrb[0].mxu0
      %v2924 = vpop.f32.mrb[0].mxu0
      %2925 = vdwg.mxu0
      %2926 = vmatprep.subr.bf16.mxu0 %v2760
      %2927 = vmatpush1.bf16.msra.mxu0 %v2759
      %2928 = vmatprep.subr.bf16.mxu0 %v2764
      %2929 = vmatpush1.bf16.msra.mxu0 %v2763
      %2930 = vmatprep.subr.bf16.mxu0 %v2768
      %2931 = vmatpush1.bf16.msra.mxu0 %v2767
      %2932 = vmatprep.subr.bf16.mxu0 %v2772
      %2933 = vmatpush1.bf16.msra.mxu0 %v2771
      %2934 = vmatprep.subr.bf16.mxu0 %v2776
      %2935 = vmatpush1.bf16.msra.mxu0 %v2775
      %2936 = vmatprep.subr.bf16.mxu0 %v2780
      %2937 = vmatpush1.bf16.msra.mxu0 %v2779
      %2938 = vmatprep.subr.bf16.mxu0 %v2784
      %2939 = vmatpush1.bf16.msra.mxu0 %v2783
      %2940 = vmatprep.subr.bf16.mxu0 %v2788
      %2941 = vmatpush1.bf16.msra.mxu0 %v2787
      %2942 = vmatprep.subr.bf16.mxu0 %v2792
      %2943 = vmatpush1.bf16.msra.mxu0 %v2791
      %2944 = vmatprep.subr.bf16.mxu0 %v2796
      %2945 = vmatpush1.bf16.msra.mxu0 %v2795
      %2946 = vmatprep.subr.bf16.mxu0 %v2800
      %2947 = vmatpush1.bf16.msra.mxu0 %v2799
      %2948 = vmatprep.subr.bf16.mxu0 %v2804
      %2949 = vmatpush1.bf16.msra.mxu0 %v2803
      %2950 = vmatprep.subr.bf16.mxu0 %v2808
      %2951 = vmatpush1.bf16.msra.mxu0 %v2807
      %2952 = vmatprep.subr.bf16.mxu0 %v2812
      %2953 = vmatpush1.bf16.msra.mxu0 %v2811
      %2954 = vmatprep.subr.bf16.mxu0 %v2816
      %2955 = vmatpush1.bf16.msra.mxu0 %v2815
      %2956 = vmatprep.subr.bf16.mxu0 %v2820
      %2957 = vmatpush1.bf16.msra.mxu0 %v2819
      %2958 = vmatprep.mubr.bf16.mxu0 %v2562
      %2959 = vmatmul.mubr.bf16.gmra.mrb[0].mxu0 %v2555
      %v2960 = vpop.f32.mrb[0].mxu0
      %v2961 = vadd.f32 %v2531, %v2960
      %v2962 = vpop.f32.mrb[0].mxu0
      %v2963 = vadd.f32 %v2535, %v2962
      %v2964 = vpop.f32.mrb[0].mxu0
      %v2965 = vpop.f32.mrb[0].mxu0
      %2966 = vdwg.mxu0
      %v2971 = vcombine.low %v2920, %v2922
      %v2972 = vcombine.low %v2961, %v2963
      %v2974 = vunpack.c.l.s4 1983009808
      %v2975 = vunpack.c.0.s8 %v2974
      %v2976 = vlaneseq
      %v2977 = vshrl.u32 %v2976, 7
      %v2978 = vsub.s32 %v2975, %v2977
      %v2979 = vrot.slane %v2971, %v2978
      %v2981 = vunpack.c.l.s4 1983009808
      %v2982 = vunpack.c.0.s8 %v2981
      %v2983 = vlaneseq
      %v2984 = vshrl.u32 %v2983, 7
      %v2985 = vsub.s32 %v2982, %v2984
      %v2986 = vrot.slane %v2972, %v2985
      %v2987 = vcombine.low %v2979, %v2986
      %v2988 = vcombine.high %v2979, %v2986
      %v2991 = vadd.f32 %v2340, %v2987
      %v2992 = vadd.f32 %v2357, %v2988
      %v2993 = vmax.f32 %v2991, 0.0
      %v2994 = vmax.f32 %v2992, 0.0
      %v2997 = vcombine.low %v2993, %v2994
      %v2998 = vcombine.high %v2993, %v2994
      %v3000 = vunpack.c.l.s4 1983009808
      %v3001 = vunpack.c.0.s8 %v3000
      %v3002 = vlaneseq
      %v3003 = vshrl.u32 %v3002, 7
      %v3004 = vsub.s32 %v3001, %v3003
      %v3005 = vrot.slane %v2997, %v3004
      %v3007 = vunpack.c.l.s4 1983009808
      %v3008 = vunpack.c.0.s8 %v3007
      %v3009 = vlaneseq
      %v3010 = vshrl.u32 %v3009, 7
      %v3011 = vsub.s32 %v3008, %v3010
      %v3012 = vrot.slane %v2998, %v3011
      %v3013 = vcombine.high %v3005, %v3005
      %v3014 = vcombine.high %v3012, %v3012
      %v3019 = vpack.c.bf16 %v3005, %v3005
      %v3020 = vpack.c.bf16 %v3013, %v3013
      %v3021 = vpack.c.bf16 %v3012, %v3012
      %v3022 = vpack.c.bf16 %v3014, %v3014
      %v3027 = vcombine.low %v3019, %v3020
      %v3028 = vcombine.low %v3021, %v3022
      %v3030 = vunpack.c.l.s4 1983009808
      %v3031 = vunpack.c.0.s8 %v3030
      %v3032 = vlaneseq
      %v3033 = vshrl.u32 %v3032, 7
      %v3034 = vsub.s32 %v3031, %v3033
      %v3035 = vrot.slane %v3027, %v3034
      %v3037 = vunpack.c.l.s4 1983009808
      %v3038 = vunpack.c.0.s8 %v3037
      %v3039 = vlaneseq
      %v3040 = vshrl.u32 %v3039, 7
      %v3041 = vsub.s32 %v3038, %v3040
      %v3042 = vrot.slane %v3028, %v3041
      %v3043 = vcombine.low %v3035, %v3042
      %3045 = vst [vmem:[%s332] sm:$0xff] %v3043
      %p3046 = scmp.lt.s32.totalorder %s20, 1
      %s3047 = scalar_select %p3046, %s20, 1
      %s3048 = smul.addr %s3047, 4
      %s3049 = smul.addr %s3048, 2
      %s3050 = scalar_lea.vmem %s9, %s3049
      // Predicated region
      $region57: #{skipnet_forward.10} parent=55 // pred_check
        %p3051 = pneg %p232
      $region58: #{skipnet_forward.10} parent=55 // pred_check_branch
        %3053 = sbr.rel (%p3051) target = $region60
      $region59: #{skipnet_forward.10} parent=55 // pred_region
        _
      $region60: #{skipnet_forward.10} parent=55 // pred_fallthru
        _
    $region56: #{skipnet_forward.10} parent=5 // pred_fallthru
      _
    %p3054 = scmp.le.s32.totalorder 2, %s15
    // Predicated region
    $region61: #{skipnet_forward.10} parent=5 // pred_check
      %p3055 = pneg %p3054
    $region62: #{skipnet_forward.10} parent=5 // pred_check_branch
      %3057 = sbr.rel (%p3055) target = $region64
    $region63: #{skipnet_forward.10} parent=5 // pred_region
      %s3058 = ssub.s32 %s15, 2
      // Predicated region
      $region65: #{skipnet_forward.10} parent=63 // pred_check
        %p3059 = pneg %p238
      $region66: #{skipnet_forward.10} parent=63 // pred_check_branch
        %3061 = sbr.rel (%p3059) target = $region68
      $region67: #{skipnet_forward.10} parent=63 // pred_region
        %p3062 = scmp.lt.s32.totalorder %s21, 1
        %s3063 = scalar_select %p3062, %s21, 1
        %s3064 = smul.addr %s3063, 4
        %s3065 = smul.addr %s3064, 2
        %s3066 = scalar_lea.vmem %s9, %s3065
      $region68: #{skipnet_forward.10} parent=63 // pred_fallthru
        _
    $region64: #{skipnet_forward.10} parent=5 // pred_fallthru
      _
  $region6: #{skipnet_forward.10} parent=0 // loop_footer
    %s19 = sadd.s32 1, %s15
  $region7: #{skipnet_forward.10} parent=0 // loop_footer_branch
    %14 = sbr.rel target = $region3
  $region8: #{skipnet_forward.10} parent=0 // loop_exit
    _

</llo_original>
